<compile_context>
chip_gen: v6e
topology: v6e:2x2x1
jax: 0.10.0
libtpu: 0.0.40
codegen_flags: <defaults>
</compile_context>

<pallas_src>
import functools

import jax
import jax.numpy as jnp
from jax.experimental import pallas as pl
from jax.experimental.pallas import tpu as pltpu

EPS = 1e-6        # Normalize == nn.GroupNorm(num_groups=32, C, eps=1e-6, affine=True)
NUM_GROUPS = 32


# ----------------------------------------------------------------------------
# Pass 1: GroupNorm statistics — per (batch, spatial-tile) partial sum/sumsq.
# Both grid axes are independent ('parallel','parallel'); combine is in JAX.
# ----------------------------------------------------------------------------
def _gn_stats_kernel(x_ref, sum_ref, sq_ref):
    x = x_ref[0]                                          # (C, tn) f32
    sum_ref[0, 0] = jnp.sum(x, axis=1, keepdims=True)     # (C, 1)
    sq_ref[0, 0] = jnp.sum(x * x, axis=1, keepdims=True)  # (C, 1)


# ----------------------------------------------------------------------------
# Pass 2: normalize + fused QKV projection (1x1x1 convs == channel matmul).
# C**-0.5 is pre-folded into wq/bq in the wrapper.
# ----------------------------------------------------------------------------
def _norm_qkv_kernel(x_ref, scale_ref, shift_ref, wqkv_ref, bqkv_ref,
                     q_ref, k_ref, v_ref, *, c):
    x = x_ref[0]                                                  # (C, tn) f32
    h = (x * scale_ref[0] + shift_ref[0]).astype(jnp.bfloat16)    # GroupNorm affine
    qkv = jax.lax.dot_general(
        wqkv_ref[...], h, (((1,), (0,)), ((), ())),
        preferred_element_type=jnp.float32) + bqkv_ref[...]       # (3C, tn) f32
    q_ref[0] = jnp.transpose(qkv[:c]).astype(jnp.bfloat16)        # (tn, C) row-major
    k_ref[0] = qkv[c:2 * c].astype(jnp.bfloat16)                  # (C, tn) chan-major
    v_ref[0] = qkv[2 * c:].astype(jnp.bfloat16)                   # (C, tn) chan-major


# ----------------------------------------------------------------------------
# Pass 3: flash attention (online softmax) + output projection + residual.
# ----------------------------------------------------------------------------
def _flash_attn_proj_kernel(q_ref, k_ref, v_ref, x_ref, wp_ref, bp_ref,
                            out_ref, m_sc, l_sc, acc_sc,
                            *, tk, n_true, needs_mask):
    ki = pl.program_id(2)

    @pl.when(ki == 0)
    def _():
        m_sc[...] = jnp.full_like(m_sc, -jnp.inf)
        l_sc[...] = jnp.zeros_like(l_sc)
        acc_sc[...] = jnp.zeros_like(acc_sc)

    q = q_ref[0]                          # (tq, C) bf16, already scaled by C**-0.5
    k = k_ref[0]                          # (C, tk) bf16
    v = v_ref[0]                          # (C, tk) bf16

    # logits: contract the channel axis directly (no explicit k.T)
    s = jax.lax.dot_general(q, k, (((1,), (0,)), ((), ())),
                            preferred_element_type=jnp.float32)   # (tq, tk) f32
    if needs_mask:   # only emitted when N was padded up to a multiple of 128
        col = ki * tk + jax.lax.broadcasted_iota(jnp.int32, s.shape, 1)
        s = jnp.where(col < n_true, s, jnp.float32(-1e30))

    m_prev = m_sc[...]                                            # (tq, 1) f32
    m_new = jnp.maximum(m_prev, jnp.max(s, axis=1, keepdims=True))
    alpha = jnp.exp(m_prev - m_new)
    p = jnp.exp(s - m_new)                                        # (tq, tk) f32
    l_sc[...] = alpha * l_sc[...] + jnp.sum(p, axis=1, keepdims=True)
    acc_sc[...] = alpha * acc_sc[...] + jax.lax.dot_general(
        p.astype(jnp.bfloat16), v, (((1,), (1,)), ((), ())),
        preferred_element_type=jnp.float32)                       # (tq, C)
    m_sc[...] = m_new

    @pl.when(ki == pl.num_programs(2) - 1)
    def _():
        inv_l = pl.reciprocal(l_sc[...], approx=True)             # EUP reciprocal
        o = (acc_sc[...] * inv_l).astype(jnp.bfloat16)            # (tq, C)
        proj = jax.lax.dot_general(wp_ref[...], o, (((1,), (1,)), ((), ())),
                                   preferred_element_type=jnp.float32)  # (C, tq)
        out_ref[0] = x_ref[0] + proj + bp_ref[...]                # residual add


# ----------------------------------------------------------------------------
# Wrapper
# ----------------------------------------------------------------------------
def _vmem_budget_bytes():
    """Scoped VMEM limit, derived from the chip (v7x 64 MiB vs v5e/v6e 128 MiB)."""
    try:
        cap = int(pltpu.get_tpu_info().vmem_capacity_bytes)
    except Exception:
        cap = 64 * 1024 * 1024          # conservative (v7x per-core) fallback
    return min((cap * 3) // 4, 96 * 1024 * 1024)


@functools.partial(jax.jit, static_argnames=("num_groups",))
def attn_block_pallas(x_ncdhw, params, num_groups=NUM_GROUPS):
    B, C, D, H, W = x_ncdhw.shape
    N = D * H * W
    G = num_groups
    assert C % G == 0 and C % 8 == 0

    # NCDHW-native channel-major layout: (B, C, N).  No wrapper transposes.
    x = x_ncdhw.reshape(B, C, N).astype(jnp.float32)

    # Pad the spatial axis to a multiple of 128 (lane-dense tiling); padded
    # KV columns are masked in the flash kernel, padded outputs sliced off.
    N_pad = ((N + 127) // 128) * 128
    needs_mask = N_pad != N
    if needs_mask:
        x = jnp.pad(x, ((0, 0), (0, 0), (0, N_pad - N)))

    budget = _vmem_budget_bytes()
    usable = int(budget * 0.8)          # headroom for compiler temporaries

    def fits_pass12(tn):
        return (2 * C * tn * 4          # x blocks (double-buffered)
                + 4 * C * tn * 4        # qkv f32 / h temporaries
                + 6 * tn * C * 2        # q/k/v bf16 outputs (double-buffered)
                + 2 * 3 * C * C * 2     # fused QKV weight (double-buffered)
                + (2 << 20)) <= usable

    def fits_pass3(tq, tk):
        return (2 * tq * C * 2          # q bf16
                + 4 * tk * C * 2        # k + v bf16
                + 2 * tq * C * 4        # x residual f32
                + 2 * tq * C * 4        # out f32
                + 2 * C * C * 2         # W_proj
                + tq * C * 4            # acc scratch
                + 3 * tq * tk * 4       # s / p f32 temporaries
                + (2 << 20)) <= usable

    def largest_tile(n, candidates, fits):
        for t in candidates:
            if n % t == 0 and fits(t):
                return t
        return 128                      # n is a multiple of 128 by construction

    tn = largest_tile(N_pad, (2048, 1024, 512, 256, 128), fits_pass12)
    tq, tk = 128, 128
    for cq in (1024, 512, 256, 128):    # prefer the largest q tile (HBM lever)
        if N_pad % cq != 0:
            continue
        picked = None
        for ck in (512, 256, 128):
            if N_pad % ck == 0 and fits_pass3(cq, ck):
                picked = ck
                break
        if picked is not None:
            tq, tk = cq, picked
            break

    def compiler(sems):
        return pltpu.CompilerParams(dimension_semantics=sems,
                                    vmem_limit_bytes=budget)

    # ---- pass 1: GroupNorm stats (per-tile partials, fully parallel grid) ----
    n_stats = N_pad // tn
    psum, psq = pl.pallas_call(
        _gn_stats_kernel,
        out_shape=(jax.ShapeDtypeStruct((B, n_stats, C, 1), jnp.float32),
                   jax.ShapeDtypeStruct((B, n_stats, C, 1), jnp.float32)),
        grid_spec=pltpu.PrefetchScalarGridSpec(
            num_scalar_prefetch=0,
            grid=(B, n_stats),
            in_specs=[pl.BlockSpec((1, C, tn), lambda b, n: (b, 0, n))],
            out_specs=(pl.BlockSpec((1, 1, C, 1), lambda b, n: (b, n, 0, 0)),
                       pl.BlockSpec((1, 1, C, 1), lambda b, n: (b, n, 0, 0))),
        ),
        compiler_params=compiler(("parallel", "parallel")),
    )(x)

    # Tiny cross-tile + per-group combine (O(B*C)) in plain JAX.  Single-pass
    # sum/sumsq in f32; padded columns are zero so they do not bias the stats.
    cnt = jnp.float32(N * (C // G))          # true N, not padded
    sum_c = psum.sum(axis=1).reshape(B, C)
    sq_c = psq.sum(axis=1).reshape(B, C)
    sum_g = sum_c.reshape(B, G, C // G).sum(axis=2)          # (B, G)
    sq_g = sq_c.reshape(B, G, C // G).sum(axis=2)
    mean_g = sum_g / cnt
    var_g = jnp.maximum(sq_g / cnt - mean_g * mean_g, 0.0)
    rstd_g = jax.lax.rsqrt(var_g + EPS)
    gamma = params["gamma"].astype(jnp.float32)[None, :]     # (1, C)
    beta = params["beta"].astype(jnp.float32)[None, :]
    mean_c = jnp.repeat(mean_g, C // G, axis=1)              # (B, C)
    rstd_c = jnp.repeat(rstd_g, C // G, axis=1)
    scale = (rstd_c * gamma).reshape(B, C, 1)
    shift = (beta - mean_c * rstd_c * gamma).reshape(B, C, 1)

    # Fused QKV weights (Conv3d 1x1x1 weight == (Cout, Cin) matrix), bf16 for
    # the MXU.  C**-0.5 is folded into wq/bq here (one-time op on constants).
    q_scale = jnp.float32(float(C) ** -0.5)
    w_qkv = jnp.concatenate(
        [params["wq"].astype(jnp.float32) * q_scale,
         params["wk"].astype(jnp.float32),
         params["wv"].astype(jnp.float32)], axis=0).astype(jnp.bfloat16)   # (3C, C)
    b_qkv = jnp.concatenate(
        [params["bq"].astype(jnp.float32) * q_scale,
         params["bk"].astype(jnp.float32),
         params["bv"].astype(jnp.float32)], axis=0).reshape(3 * C, 1)      # f32
    wp = params["wp"].astype(jnp.bfloat16)                                 # (C, C)
    bp = params["bp"].astype(jnp.float32).reshape(C, 1)

    # ---- pass 2: normalize + fused QKV projection ----
    q, k, v = pl.pallas_call(
        functools.partial(_norm_qkv_kernel, c=C),
        out_shape=(jax.ShapeDtypeStruct((B, N_pad, C), jnp.bfloat16),   # q row-major
                   jax.ShapeDtypeStruct((B, C, N_pad), jnp.bfloat16),   # k chan-major
                   jax.ShapeDtypeStruct((B, C, N_pad), jnp.bfloat16)),  # v chan-major
        grid_spec=pltpu.PrefetchScalarGridSpec(
            num_scalar_prefetch=0,
            grid=(B, N_pad // tn),
            in_specs=[
                pl.BlockSpec((1, C, tn), lambda b, n: (b, 0, n)),   # x
                pl.BlockSpec((1, C, 1), lambda b, n: (b, 0, 0)),    # scale
                pl.BlockSpec((1, C, 1), lambda b, n: (b, 0, 0)),    # shift
                pl.BlockSpec((3 * C, C), lambda b, n: (0, 0)),      # W_qkv
                pl.BlockSpec((3 * C, 1), lambda b, n: (0, 0)),      # b_qkv
            ],
            out_specs=(pl.BlockSpec((1, tn, C), lambda b, n: (b, n, 0)),
                       pl.BlockSpec((1, C, tn), lambda b, n: (b, 0, n)),
                       pl.BlockSpec((1, C, tn), lambda b, n: (b, 0, n))),
        ),
        compiler_params=compiler(("parallel", "parallel")),
    )(x, scale, shift, w_qkv, b_qkv)

    # ---- pass 3: flash attention + proj_out + residual ----
    n_q, n_kv = N_pad // tq, N_pad // tk
    cost = pl.CostEstimate(
        flops=int(B * (4 * N_pad * N_pad * C + 2 * N_pad * C * C)),
        transcendentals=int(B * N_pad * N_pad),
        bytes_accessed=int(B * N_pad * C * 2              # q (bf16)
                           + 2 * B * N_pad * C * 2 * n_q  # k, v re-read per q tile
                           + 2 * B * N_pad * C * 4        # x in, out
                           + 2 * C * C))

    out = pl.pallas_call(
        functools.partial(_flash_attn_proj_kernel,
                          tk=tk, n_true=N, needs_mask=needs_mask),
        out_shape=jax.ShapeDtypeStruct((B, C, N_pad), jnp.float32),
        grid_spec=pltpu.PrefetchScalarGridSpec(
            num_scalar_prefetch=0,
            grid=(B, n_q, n_kv),
            in_specs=[
                pl.BlockSpec((1, tq, C), lambda b, qi, ki: (b, qi, 0)),  # q
                pl.BlockSpec((1, C, tk), lambda b, qi, ki: (b, 0, ki)),  # k
                pl.BlockSpec((1, C, tk), lambda b, qi, ki: (b, 0, ki)),  # v
                pl.BlockSpec((1, C, tq), lambda b, qi, ki: (b, 0, qi)),  # x (residual)
                pl.BlockSpec((C, C), lambda b, qi, ki: (0, 0)),          # W_proj
                pl.BlockSpec((C, 1), lambda b, qi, ki: (0, 0)),          # b_proj
            ],
            out_specs=pl.BlockSpec((1, C, tq), lambda b, qi, ki: (b, 0, qi)),
            scratch_shapes=[pltpu.VMEM((tq, 1), jnp.float32),    # m
                            pltpu.VMEM((tq, 1), jnp.float32),    # l
                            pltpu.VMEM((tq, C), jnp.float32)],   # acc
        ),
        compiler_params=compiler(("parallel", "parallel", "arbitrary")),
        cost_estimate=cost,
    )(q, k, v, x, wp, bp)

    if needs_mask:
        out = out[:, :, :N]
    return out.reshape(B, C, D, H, W)


# ----------------------------------------------------------------------------
# Pure-JAX reference mirroring the PyTorch forward (NCDHW).
# ----------------------------------------------------------------------------
def attn_block_reference(x, params, num_groups):
    B, C, D, H, W = x.shape
    N = D * H * W
    G = num_groups
    xr = x.reshape(B, G, C // G, N)
    mean = xr.mean(axis=(2, 3), keepdims=True)
    var = xr.var(axis=(2, 3), keepdims=True)
    h = ((xr - mean) / jnp.sqrt(var + EPS)).reshape(B, C, N)
    h = h * params["gamma"][None, :, None] + params["beta"][None, :, None]

    def proj(z, w, b):
        return jnp.einsum("oc,bcn->bon", w, z) + b[None, :, None]

    q = proj(h, params["wq"], params["bq"])
    k = proj(h, params["wk"], params["bk"])
    v = proj(h, params["wv"], params["bv"])
    w_ = jnp.einsum("bcn,bcm->bnm", q, k) * (float(C) ** -0.5)
    w_ = jax.nn.softmax(w_, axis=2)
    h_ = jnp.einsum("bcm,bnm->bcn", v, w_)
    h_ = proj(h_, params["wp"], params["bp"])
    return x + h_.reshape(B, C, D, H, W)


if __name__ == "__main__":
    # Small but tiling-exercising shapes: N = D*H*W = 512; C = 64 satisfies
    # GroupNorm(32, C).
    B, C, D, H, W = 2, 64, 2, 16, 16

    key = jax.random.PRNGKey(0)
    keys = jax.random.split(key, 11)
    x = jax.random.normal(keys[0], (B, C, D, H, W), dtype=jnp.float32)

    def winit(k):
        return 0.05 * jax.random.normal(k, (C, C), dtype=jnp.float32)

    def binit(k):
        return 0.05 * jax.random.normal(k, (C,), dtype=jnp.float32)

    params = {
        "gamma": 1.0 + 0.1 * jax.random.normal(keys[1], (C,), dtype=jnp.float32),
        "beta": 0.1 * jax.random.normal(keys[2], (C,), dtype=jnp.float32),
        "wq": winit(keys[3]), "bq": binit(keys[4]),
        "wk": winit(keys[5]), "bk": binit(keys[6]),
        "wv": winit(keys[7]), "bv": binit(keys[8]),
        "wp": winit(keys[9]), "bp": binit(keys[10]),
    }

    out = attn_block_pallas(x, params, num_groups=NUM_GROUPS)
    out = jax.block_until_ready(out)

    ref = attn_block_reference(x, params, NUM_GROUPS)
    assert out.shape == (B, C, D, H, W)
    # bf16 MXU inputs (with f32 accumulation + f32 softmax stats) => looser
    # tolerance than a pure-f32 kernel.
    max_err = float(jnp.max(jnp.abs(out - ref)))
    assert jnp.allclose(out, ref, rtol=5e-2, atol=5e-2), f"mismatch: {max_err}"

    print("KERNEL_OK")
</pallas_src>

<mosaic_0001>
module attributes {stable_mosaic.version = 11 : i64} {
  func.func @_gn_stats_kernel(%arg0: i32, %arg1: i32, %arg2: memref<1x64x512xf32, #tpu.memory_space<vmem>>, %arg3: memref<1x1x64x1xf32, #tpu.memory_space<vmem>>, %arg4: memref<1x1x64x1xf32, #tpu.memory_space<vmem>>) attributes {dimension_semantics = [#tpu.dimension_semantics<parallel>, #tpu.dimension_semantics<parallel>], iteration_bounds = array<i64: 2, 1>, scalar_prefetch = 0 : i64, scratch_operands = 0 : i64, tpu.core_type = #tpu.core_type<tc>, window_params = [{transform_indices = @transform_0, window_bounds = array<i64: 1, 64, 512>}, {transform_indices = @transform_1, window_bounds = array<i64: 1, 1, 64, 1>}, {transform_indices = @transform_2, window_bounds = array<i64: 1, 1, 64, 1>}]} {
    %c0 = arith.constant 0 : index
    %c0_0 = arith.constant 0 : index
    %c0_1 = arith.constant 0 : index
    %0 = vector.load %arg2[%c0, %c0_0, %c0_1] : memref<1x64x512xf32, #tpu.memory_space<vmem>>, vector<1x64x512xf32>
    %1 = vector.shape_cast %0 : vector<1x64x512xf32> to vector<64x512xf32>
    %cst = arith.constant dense<0.000000e+00> : vector<64xf32>
    %2 = vector.multi_reduction <add>, %1, %cst [1] : vector<64x512xf32> to vector<64xf32>
    %3 = vector.shape_cast %2 : vector<64xf32> to vector<64x1xf32>
    %c0_2 = arith.constant 0 : index
    %c0_3 = arith.constant 0 : index
    %c0_4 = arith.constant 0 : index
    %c0_5 = arith.constant 0 : index
    %4 = vector.load %arg3[%c0_2, %c0_3, %c0_4, %c0_5] : memref<1x1x64x1xf32, #tpu.memory_space<vmem>>, vector<1x1x64x1xf32>
    %5 = vector.shape_cast %4 : vector<1x1x64x1xf32> to vector<64x1xf32>
    %6 = vector.shape_cast %3 : vector<64x1xf32> to vector<1x1x64x1xf32>
    tpu.vector_store %arg3[%c0_2, %c0_3, %c0_4, %c0_5], %6 {strides = array<i32>} : memref<1x1x64x1xf32, #tpu.memory_space<vmem>>, vector<1x1x64x1xf32>,
    %7 = arith.mulf %1, %1 : vector<64x512xf32>
    %cst_6 = arith.constant dense<0.000000e+00> : vector<64xf32>
    %8 = vector.multi_reduction <add>, %7, %cst_6 [1] : vector<64x512xf32> to vector<64xf32>
    %9 = vector.shape_cast %8 : vector<64xf32> to vector<64x1xf32>
    %c0_7 = arith.constant 0 : index
    %c0_8 = arith.constant 0 : index
    %c0_9 = arith.constant 0 : index
    %c0_10 = arith.constant 0 : index
    %10 = vector.load %arg4[%c0_7, %c0_8, %c0_9, %c0_10] : memref<1x1x64x1xf32, #tpu.memory_space<vmem>>, vector<1x1x64x1xf32>
    %11 = vector.shape_cast %10 : vector<1x1x64x1xf32> to vector<64x1xf32>
    %12 = vector.shape_cast %9 : vector<64x1xf32> to vector<1x1x64x1xf32>
    tpu.vector_store %arg4[%c0_7, %c0_8, %c0_9, %c0_10], %12 {strides = array<i32>} : memref<1x1x64x1xf32, #tpu.memory_space<vmem>>, vector<1x1x64x1xf32>,
    return
  }
  func.func @transform_0(%arg0: i32, %arg1: i32) -> (i32, i32, i32) {
    %c0_i32 = arith.constant 0 : i32
    %c0_i32_0 = arith.constant 0 : i32
    return %arg0, %c0_i32, %arg1 : i32, i32, i32
  }
  func.func @transform_1(%arg0: i32, %arg1: i32) -> (i32, i32, i32, i32) {
    %c0_i32 = arith.constant 0 : i32
    %c0_i32_0 = arith.constant 0 : i32
    %c0_i32_1 = arith.constant 0 : i32
    return %arg0, %arg1, %c0_i32, %c0_i32_0 : i32, i32, i32, i32
  }
  func.func @transform_2(%arg0: i32, %arg1: i32) -> (i32, i32, i32, i32) {
    %c0_i32 = arith.constant 0 : i32
    %c0_i32_0 = arith.constant 0 : i32
    %c0_i32_1 = arith.constant 0 : i32
    return %arg0, %arg1, %c0_i32, %c0_i32_0 : i32, i32, i32, i32
  }
}

module attributes {stable_mosaic.version = 11 : i64} {
  func.func @_norm_qkv_kernel(%arg0: i32, %arg1: i32, %arg2: memref<1x64x512xf32, #tpu.memory_space<vmem>>, %arg3: memref<1x64x1xf32, #tpu.memory_space<vmem>>, %arg4: memref<1x64x1xf32, #tpu.memory_space<vmem>>, %arg5: memref<192x64xbf16, #tpu.memory_space<vmem>>, %arg6: memref<192x1xf32, #tpu.memory_space<vmem>>, %arg7: memref<1x512x64xbf16, #tpu.memory_space<vmem>>, %arg8: memref<1x64x512xbf16, #tpu.memory_space<vmem>>, %arg9: memref<1x64x512xbf16, #tpu.memory_space<vmem>>) attributes {dimension_semantics = [#tpu.dimension_semantics<parallel>, #tpu.dimension_semantics<parallel>], iteration_bounds = array<i64: 2, 1>, scalar_prefetch = 0 : i64, scratch_operands = 0 : i64, tpu.core_type = #tpu.core_type<tc>, window_params = [{transform_indices = @transform_0, window_bounds = array<i64: 1, 64, 512>}, {transform_indices = @transform_1, window_bounds = array<i64: 1, 64, 1>}, {transform_indices = @transform_2, window_bounds = array<i64: 1, 64, 1>}, {pipeline_mode = #tpu.pipeline_mode<synchronous>, transform_indices = @transform_3, window_bounds = array<i64: 192, 64>}, {pipeline_mode = #tpu.pipeline_mode<synchronous>, transform_indices = @transform_4, window_bounds = array<i64: 192, 1>}, {transform_indices = @transform_5, window_bounds = array<i64: 1, 512, 64>}, {transform_indices = @transform_6, window_bounds = array<i64: 1, 64, 512>}, {transform_indices = @transform_7, window_bounds = array<i64: 1, 64, 512>}]} {
    %c0 = arith.constant 0 : index
    %c0_0 = arith.constant 0 : index
    %c0_1 = arith.constant 0 : index
    %0 = vector.load %arg2[%c0, %c0_0, %c0_1] : memref<1x64x512xf32, #tpu.memory_space<vmem>>, vector<1x64x512xf32>
    %1 = vector.shape_cast %0 : vector<1x64x512xf32> to vector<64x512xf32>
    %c0_2 = arith.constant 0 : index
    %c0_3 = arith.constant 0 : index
    %c0_4 = arith.constant 0 : index
    %2 = vector.load %arg3[%c0_2, %c0_3, %c0_4] : memref<1x64x1xf32, #tpu.memory_space<vmem>>, vector<1x64x1xf32>
    %3 = vector.shape_cast %2 : vector<1x64x1xf32> to vector<64x1xf32>
    %4 = vector.broadcast %3 : vector<64x1xf32> to vector<64x512xf32>
    %5 = arith.mulf %1, %4 : vector<64x512xf32>
    %c0_5 = arith.constant 0 : index
    %c0_6 = arith.constant 0 : index
    %c0_7 = arith.constant 0 : index
    %6 = vector.load %arg4[%c0_5, %c0_6, %c0_7] : memref<1x64x1xf32, #tpu.memory_space<vmem>>, vector<1x64x1xf32>
    %7 = vector.shape_cast %6 : vector<1x64x1xf32> to vector<64x1xf32>
    %8 = vector.broadcast %7 : vector<64x1xf32> to vector<64x512xf32>
    %9 = arith.addf %5, %8 : vector<64x512xf32>
    %10 = arith.truncf %9 : vector<64x512xf32> to vector<64x512xbf16>
    %c0_8 = arith.constant 0 : index
    %c0_9 = arith.constant 0 : index
    %11 = vector.load %arg5[%c0_8, %c0_9] : memref<192x64xbf16, #tpu.memory_space<vmem>>, vector<192x64xbf16>
    %cst = arith.constant dense<0.000000e+00> : vector<192x512xf32>
    %12 = tpu.matmul %11, %10, %cst {dimension_numbers = #tpu.dot_dimension_numbers<[1], [0], [0], [1], [0, 0, 1, 1], [], []>} : vector<192x64xbf16>, vector<64x512xbf16>, vector<192x512xf32> -> vector<192x512xf32>
    %c0_10 = arith.constant 0 : index
    %c0_11 = arith.constant 0 : index
    %13 = vector.load %arg6[%c0_10, %c0_11] : memref<192x1xf32, #tpu.memory_space<vmem>>, vector<192x1xf32>
    %14 = vector.broadcast %13 : vector<192x1xf32> to vector<192x512xf32>
    %15 = arith.addf %12, %14 : vector<192x512xf32>
    %16 = vector.extract_strided_slice %15 {offsets = [0, 0], sizes = [64, 512], strides = [1, 1]} : vector<192x512xf32> to vector<64x512xf32>
    %17 = tpu.transpose %16, [1, 0] : vector<64x512xf32> -> vector<512x64xf32>
    %18 = arith.truncf %17 : vector<512x64xf32> to vector<512x64xbf16>
    %c0_12 = arith.constant 0 : index
    %c0_13 = arith.constant 0 : index
    %c0_14 = arith.constant 0 : index
    %19 = vector.load %arg7[%c0_12, %c0_13, %c0_14] : memref<1x512x64xbf16, #tpu.memory_space<vmem>>, vector<1x512x64xbf16>
    %20 = vector.shape_cast %19 : vector<1x512x64xbf16> to vector<512x64xbf16>
    %21 = vector.shape_cast %18 : vector<512x64xbf16> to vector<1x512x64xbf16>
    tpu.vector_store %arg7[%c0_12, %c0_13, %c0_14], %21 {strides = array<i32>} : memref<1x512x64xbf16, #tpu.memory_space<vmem>>, vector<1x512x64xbf16>,
    %22 = vector.extract_strided_slice %15 {offsets = [64, 0], sizes = [64, 512], strides = [1, 1]} : vector<192x512xf32> to vector<64x512xf32>
    %23 = arith.truncf %22 : vector<64x512xf32> to vector<64x512xbf16>
    %c0_15 = arith.constant 0 : index
    %c0_16 = arith.constant 0 : index
    %c0_17 = arith.constant 0 : index
    %24 = vector.load %arg8[%c0_15, %c0_16, %c0_17] : memref<1x64x512xbf16, #tpu.memory_space<vmem>>, vector<1x64x512xbf16>
    %25 = vector.shape_cast %24 : vector<1x64x512xbf16> to vector<64x512xbf16>
    %26 = vector.shape_cast %23 : vector<64x512xbf16> to vector<1x64x512xbf16>
    tpu.vector_store %arg8[%c0_15, %c0_16, %c0_17], %26 {strides = array<i32>} : memref<1x64x512xbf16, #tpu.memory_space<vmem>>, vector<1x64x512xbf16>,
    %27 = vector.extract_strided_slice %15 {offsets = [128, 0], sizes = [64, 512], strides = [1, 1]} : vector<192x512xf32> to vector<64x512xf32>
    %28 = arith.truncf %27 : vector<64x512xf32> to vector<64x512xbf16>
    %c0_18 = arith.constant 0 : index
    %c0_19 = arith.constant 0 : index
    %c0_20 = arith.constant 0 : index
    %29 = vector.load %arg9[%c0_18, %c0_19, %c0_20] : memref<1x64x512xbf16, #tpu.memory_space<vmem>>, vector<1x64x512xbf16>
    %30 = vector.shape_cast %29 : vector<1x64x512xbf16> to vector<64x512xbf16>
    %31 = vector.shape_cast %28 : vector<64x512xbf16> to vector<1x64x512xbf16>
    tpu.vector_store %arg9[%c0_18, %c0_19, %c0_20], %31 {strides = array<i32>} : memref<1x64x512xbf16, #tpu.memory_space<vmem>>, vector<1x64x512xbf16>,
    return
  }
  func.func @transform_0(%arg0: i32, %arg1: i32) -> (i32, i32, i32) {
    %c0_i32 = arith.constant 0 : i32
    %c0_i32_0 = arith.constant 0 : i32
    return %arg0, %c0_i32, %arg1 : i32, i32, i32
  }
  func.func @transform_1(%arg0: i32, %arg1: i32) -> (i32, i32, i32) {
    %c0_i32 = arith.constant 0 : i32
    %c0_i32_0 = arith.constant 0 : i32
    %c0_i32_1 = arith.constant 0 : i32
    return %arg0, %c0_i32, %c0_i32_0 : i32, i32, i32
  }
  func.func @transform_2(%arg0: i32, %arg1: i32) -> (i32, i32, i32) {
    %c0_i32 = arith.constant 0 : i32
    %c0_i32_0 = arith.constant 0 : i32
    %c0_i32_1 = arith.constant 0 : i32
    return %arg0, %c0_i32, %c0_i32_0 : i32, i32, i32
  }
  func.func @transform_3(%arg0: i32, %arg1: i32) -> (i32, i32) {
    %c0_i32 = arith.constant 0 : i32
    %c0_i32_0 = arith.constant 0 : i32
    %c0_i32_1 = arith.constant 0 : i32
    return %c0_i32, %c0_i32_0 : i32, i32
  }
  func.func @transform_4(%arg0: i32, %arg1: i32) -> (i32, i32) {
    %c0_i32 = arith.constant 0 : i32
    %c0_i32_0 = arith.constant 0 : i32
    %c0_i32_1 = arith.constant 0 : i32
    return %c0_i32, %c0_i32_0 : i32, i32
  }
  func.func @transform_5(%arg0: i32, %arg1: i32) -> (i32, i32, i32) {
    %c0_i32 = arith.constant 0 : i32
    %c0_i32_0 = arith.constant 0 : i32
    return %arg0, %arg1, %c0_i32 : i32, i32, i32
  }
  func.func @transform_6(%arg0: i32, %arg1: i32) -> (i32, i32, i32) {
    %c0_i32 = arith.constant 0 : i32
    %c0_i32_0 = arith.constant 0 : i32
    return %arg0, %c0_i32, %arg1 : i32, i32, i32
  }
  func.func @transform_7(%arg0: i32, %arg1: i32) -> (i32, i32, i32) {
    %c0_i32 = arith.constant 0 : i32
    %c0_i32_0 = arith.constant 0 : i32
    return %arg0, %c0_i32, %arg1 : i32, i32, i32
  }
}

module attributes {stable_mosaic.version = 11 : i64} {
  func.func @_flash_attn_proj_kernel(%arg0: i32, %arg1: i32, %arg2: i32, %arg3: memref<1x512x64xbf16, #tpu.memory_space<vmem>>, %arg4: memref<1x64x512xbf16, #tpu.memory_space<vmem>>, %arg5: memref<1x64x512xbf16, #tpu.memory_space<vmem>>, %arg6: memref<1x64x512xf32, #tpu.memory_space<vmem>>, %arg7: memref<64x64xbf16, #tpu.memory_space<vmem>>, %arg8: memref<64x1xf32, #tpu.memory_space<vmem>>, %arg9: memref<1x64x512xf32, #tpu.memory_space<vmem>>, %arg10: memref<512x1xf32, #tpu.memory_space<vmem>>, %arg11: memref<512x1xf32, #tpu.memory_space<vmem>>, %arg12: memref<512x64xf32, #tpu.memory_space<vmem>>) attributes {dimension_semantics = [#tpu.dimension_semantics<parallel>, #tpu.dimension_semantics<parallel>, #tpu.dimension_semantics<arbitrary>], iteration_bounds = array<i64: 2, 1, 1>, scalar_prefetch = 0 : i64, scratch_operands = 3 : i64, tpu.core_type = #tpu.core_type<tc>, window_params = [{transform_indices = @transform_0, window_bounds = array<i64: 1, 512, 64>}, {transform_indices = @transform_1, window_bounds = array<i64: 1, 64, 512>}, {transform_indices = @transform_2, window_bounds = array<i64: 1, 64, 512>}, {transform_indices = @transform_3, window_bounds = array<i64: 1, 64, 512>}, {pipeline_mode = #tpu.pipeline_mode<synchronous>, transform_indices = @transform_4, window_bounds = array<i64: 64, 64>}, {pipeline_mode = #tpu.pipeline_mode<synchronous>, transform_indices = @transform_5, window_bounds = array<i64: 64, 1>}, {transform_indices = @transform_6, window_bounds = array<i64: 1, 64, 512>}]} {
    %c0_i32 = arith.constant 0 : i32
    %0 = arith.cmpi eq, %arg2, %c0_i32 : i32
    %1 = arith.extui %0 : i1 to i32
    %c0_i32_0 = arith.constant 0 : i32
    %2 = arith.cmpi ne, %1, %c0_i32_0 : i32
    scf.if %2 {
      %cst_26 = arith.constant 0xFF800000 : f32
      %36 = vector.broadcast %cst_26 : f32 to vector<512x1xf32>
      %c0_27 = arith.constant 0 : index
      %c0_28 = arith.constant 0 : index
      %37 = vector.load %arg10[%c0_27, %c0_28] : memref<512x1xf32, #tpu.memory_space<vmem>>, vector<512x1xf32>
      tpu.vector_store %arg10[%c0_27, %c0_28], %36 {strides = array<i32>} : memref<512x1xf32, #tpu.memory_space<vmem>>, vector<512x1xf32>,
      %cst_29 = arith.constant 0.000000e+00 : f32
      %38 = vector.broadcast %cst_29 : f32 to vector<512x1xf32>
      %c0_30 = arith.constant 0 : index
      %c0_31 = arith.constant 0 : index
      %39 = vector.load %arg11[%c0_30, %c0_31] : memref<512x1xf32, #tpu.memory_space<vmem>>, vector<512x1xf32>
      tpu.vector_store %arg11[%c0_30, %c0_31], %38 {strides = array<i32>} : memref<512x1xf32, #tpu.memory_space<vmem>>, vector<512x1xf32>,
      %cst_32 = arith.constant 0.000000e+00 : f32
      %40 = vector.broadcast %cst_32 : f32 to vector<512x64xf32>
      %c0_33 = arith.constant 0 : index
      %c0_34 = arith.constant 0 : index
      %41 = vector.load %arg12[%c0_33, %c0_34] : memref<512x64xf32, #tpu.memory_space<vmem>>, vector<512x64xf32>
      tpu.vector_store %arg12[%c0_33, %c0_34], %40 {strides = array<i32>} : memref<512x64xf32, #tpu.memory_space<vmem>>, vector<512x64xf32>,
    } else {
    }
    %c0 = arith.constant 0 : index
    %c0_1 = arith.constant 0 : index
    %c0_2 = arith.constant 0 : index
    %3 = vector.load %arg3[%c0, %c0_1, %c0_2] : memref<1x512x64xbf16, #tpu.memory_space<vmem>>, vector<1x512x64xbf16>
    %4 = vector.shape_cast %3 : vector<1x512x64xbf16> to vector<512x64xbf16>
    %c0_3 = arith.constant 0 : index
    %c0_4 = arith.constant 0 : index
    %c0_5 = arith.constant 0 : index
    %5 = vector.load %arg4[%c0_3, %c0_4, %c0_5] : memref<1x64x512xbf16, #tpu.memory_space<vmem>>, vector<1x64x512xbf16>
    %6 = vector.shape_cast %5 : vector<1x64x512xbf16> to vector<64x512xbf16>
    %c0_6 = arith.constant 0 : index
    %c0_7 = arith.constant 0 : index
    %c0_8 = arith.constant 0 : index
    %7 = vector.load %arg5[%c0_6, %c0_7, %c0_8] : memref<1x64x512xbf16, #tpu.memory_space<vmem>>, vector<1x64x512xbf16>
    %8 = vector.shape_cast %7 : vector<1x64x512xbf16> to vector<64x512xbf16>
    %cst = arith.constant dense<0.000000e+00> : vector<512x512xf32>
    %9 = tpu.matmul %4, %6, %cst {dimension_numbers = #tpu.dot_dimension_numbers<[1], [0], [0], [1], [0, 0, 1, 1], [], []>} : vector<512x64xbf16>, vector<64x512xbf16>, vector<512x512xf32> -> vector<512x512xf32>
    %c0_9 = arith.constant 0 : index
    %c0_10 = arith.constant 0 : index
    %10 = vector.load %arg10[%c0_9, %c0_10] : memref<512x1xf32, #tpu.memory_space<vmem>>, vector<512x1xf32>
    %cst_11 = arith.constant dense<0xFF800000> : vector<512xf32>
    %11 = vector.multi_reduction <maximumf>, %9, %cst_11 [1] : vector<512x512xf32> to vector<512xf32>
    %12 = vector.shape_cast %11 : vector<512xf32> to vector<512x1xf32>
    %13 = arith.maximumf %10, %12 : vector<512x1xf32>
    %14 = arith.subf %10, %13 : vector<512x1xf32>
    %15 = math.exp %14 : vector<512x1xf32>
    %16 = vector.broadcast %13 : vector<512x1xf32> to vector<512x512xf32>
    %17 = arith.subf %9, %16 : vector<512x512xf32>
    %18 = math.exp %17 : vector<512x512xf32>
    %c0_12 = arith.constant 0 : index
    %c0_13 = arith.constant 0 : index
    %19 = vector.load %arg11[%c0_12, %c0_13] : memref<512x1xf32, #tpu.memory_space<vmem>>, vector<512x1xf32>
    %20 = arith.mulf %15, %19 : vector<512x1xf32>
    %cst_14 = arith.constant dense<0.000000e+00> : vector<512xf32>
    %21 = vector.multi_reduction <add>, %18, %cst_14 [1] : vector<512x512xf32> to vector<512xf32>
    %22 = vector.shape_cast %21 : vector<512xf32> to vector<512x1xf32>
    %23 = arith.addf %20, %22 : vector<512x1xf32>
    %c0_15 = arith.constant 0 : index
    %c0_16 = arith.constant 0 : index
    %24 = vector.load %arg11[%c0_15, %c0_16] : memref<512x1xf32, #tpu.memory_space<vmem>>, vector<512x1xf32>
    tpu.vector_store %arg11[%c0_15, %c0_16], %23 {strides = array<i32>} : memref<512x1xf32, #tpu.memory_space<vmem>>, vector<512x1xf32>,
    %c0_17 = arith.constant 0 : index
    %c0_18 = arith.constant 0 : index
    %25 = vector.load %arg12[%c0_17, %c0_18] : memref<512x64xf32, #tpu.memory_space<vmem>>, vector<512x64xf32>
    %26 = vector.broadcast %15 : vector<512x1xf32> to vector<512x64xf32>
    %27 = arith.mulf %26, %25 : vector<512x64xf32>
    %28 = arith.truncf %18 : vector<512x512xf32> to vector<512x512xbf16>
    %cst_19 = arith.constant dense<0.000000e+00> : vector<512x64xf32>
    %29 = tpu.matmul %28, %8, %cst_19 {dimension_numbers = #tpu.dot_dimension_numbers<[1], [1], [0], [0], [0, 0, 1, 0], [], []>} : vector<512x512xbf16>, vector<64x512xbf16>, vector<512x64xf32> -> vector<512x64xf32>
    %30 = arith.addf %27, %29 : vector<512x64xf32>
    %c0_20 = arith.constant 0 : index
    %c0_21 = arith.constant 0 : index
    %31 = vector.load %arg12[%c0_20, %c0_21] : memref<512x64xf32, #tpu.memory_space<vmem>>, vector<512x64xf32>
    tpu.vector_store %arg12[%c0_20, %c0_21], %30 {strides = array<i32>} : memref<512x64xf32, #tpu.memory_space<vmem>>, vector<512x64xf32>,
    %c0_22 = arith.constant 0 : index
    %c0_23 = arith.constant 0 : index
    %32 = vector.load %arg10[%c0_22, %c0_23] : memref<512x1xf32, #tpu.memory_space<vmem>>, vector<512x1xf32>
    tpu.vector_store %arg10[%c0_22, %c0_23], %13 {strides = array<i32>} : memref<512x1xf32, #tpu.memory_space<vmem>>, vector<512x1xf32>,
    %c0_i32_24 = arith.constant 0 : i32
    %33 = arith.cmpi eq, %arg2, %c0_i32_24 : i32
    %34 = arith.extui %33 : i1 to i32
    %c0_i32_25 = arith.constant 0 : i32
    %35 = arith.cmpi ne, %34, %c0_i32_25 : i32
    scf.if %35 {
      %c0_26 = arith.constant 0 : index
      %c0_27 = arith.constant 0 : index
      %36 = vector.load %arg11[%c0_26, %c0_27] : memref<512x1xf32, #tpu.memory_space<vmem>>, vector<512x1xf32>
      %37 = tpu.reciprocal %36 {approx = true} : vector<512x1xf32> -> vector<512x1xf32>
      %c0_28 = arith.constant 0 : index
      %c0_29 = arith.constant 0 : index
      %38 = vector.load %arg12[%c0_28, %c0_29] : memref<512x64xf32, #tpu.memory_space<vmem>>, vector<512x64xf32>
      %39 = vector.broadcast %37 : vector<512x1xf32> to vector<512x64xf32>
      %40 = arith.mulf %38, %39 : vector<512x64xf32>
      %41 = arith.truncf %40 : vector<512x64xf32> to vector<512x64xbf16>
      %c0_30 = arith.constant 0 : index
      %c0_31 = arith.constant 0 : index
      %42 = vector.load %arg7[%c0_30, %c0_31] : memref<64x64xbf16, #tpu.memory_space<vmem>>, vector<64x64xbf16>
      %cst_32 = arith.constant dense<0.000000e+00> : vector<64x512xf32>
      %43 = tpu.matmul %42, %41, %cst_32 {dimension_numbers = #tpu.dot_dimension_numbers<[1], [1], [0], [0], [0, 0, 1, 0], [], []>} : vector<64x64xbf16>, vector<512x64xbf16>, vector<64x512xf32> -> vector<64x512xf32>
      %c0_33 = arith.constant 0 : index
      %c0_34 = arith.constant 0 : index
      %c0_35 = arith.constant 0 : index
      %44 = vector.load %arg6[%c0_33, %c0_34, %c0_35] : memref<1x64x512xf32, #tpu.memory_space<vmem>>, vector<1x64x512xf32>
      %45 = vector.shape_cast %44 : vector<1x64x512xf32> to vector<64x512xf32>
      %46 = arith.addf %45, %43 : vector<64x512xf32>
      %c0_36 = arith.constant 0 : index
      %c0_37 = arith.constant 0 : index
      %47 = vector.load %arg8[%c0_36, %c0_37] : memref<64x1xf32, #tpu.memory_space<vmem>>, vector<64x1xf32>
      %48 = vector.broadcast %47 : vector<64x1xf32> to vector<64x512xf32>
      %49 = arith.addf %46, %48 : vector<64x512xf32>
      %c0_38 = arith.constant 0 : index
      %c0_39 = arith.constant 0 : index
      %c0_40 = arith.constant 0 : index
      %50 = vector.load %arg9[%c0_38, %c0_39, %c0_40] : memref<1x64x512xf32, #tpu.memory_space<vmem>>, vector<1x64x512xf32>
      %51 = vector.shape_cast %50 : vector<1x64x512xf32> to vector<64x512xf32>
      %52 = vector.shape_cast %49 : vector<64x512xf32> to vector<1x64x512xf32>
      tpu.vector_store %arg9[%c0_38, %c0_39, %c0_40], %52 {strides = array<i32>} : memref<1x64x512xf32, #tpu.memory_space<vmem>>, vector<1x64x512xf32>,
    } else {
    }
    return
  }
  func.func @transform_0(%arg0: i32, %arg1: i32, %arg2: i32) -> (i32, i32, i32) {
    %c0_i32 = arith.constant 0 : i32
    %c0_i32_0 = arith.constant 0 : i32
    return %arg0, %arg1, %c0_i32 : i32, i32, i32
  }
  func.func @transform_1(%arg0: i32, %arg1: i32, %arg2: i32) -> (i32, i32, i32) {
    %c0_i32 = arith.constant 0 : i32
    %c0_i32_0 = arith.constant 0 : i32
    return %arg0, %c0_i32, %arg2 : i32, i32, i32
  }
  func.func @transform_2(%arg0: i32, %arg1: i32, %arg2: i32) -> (i32, i32, i32) {
    %c0_i32 = arith.constant 0 : i32
    %c0_i32_0 = arith.constant 0 : i32
    return %arg0, %c0_i32, %arg2 : i32, i32, i32
  }
  func.func @transform_3(%arg0: i32, %arg1: i32, %arg2: i32) -> (i32, i32, i32) {
    %c0_i32 = arith.constant 0 : i32
    %c0_i32_0 = arith.constant 0 : i32
    return %arg0, %c0_i32, %arg1 : i32, i32, i32
  }
  func.func @transform_4(%arg0: i32, %arg1: i32, %arg2: i32) -> (i32, i32) {
    %c0_i32 = arith.constant 0 : i32
    %c0_i32_0 = arith.constant 0 : i32
    %c0_i32_1 = arith.constant 0 : i32
    return %c0_i32, %c0_i32_0 : i32, i32
  }
  func.func @transform_5(%arg0: i32, %arg1: i32, %arg2: i32) -> (i32, i32) {
    %c0_i32 = arith.constant 0 : i32
    %c0_i32_0 = arith.constant 0 : i32
    %c0_i32_1 = arith.constant 0 : i32
    return %c0_i32, %c0_i32_0 : i32, i32
  }
  func.func @transform_6(%arg0: i32, %arg1: i32, %arg2: i32) -> (i32, i32, i32) {
    %c0_i32 = arith.constant 0 : i32
    %c0_i32_0 = arith.constant 0 : i32
    return %arg0, %c0_i32, %arg1 : i32, i32, i32
  }
}

</mosaic_0001>

<llo_original>
// kernel: attn_block_pallas.3
$region0: #{attn_block_pallas.3}
  #allocation0 [shape = 'u32[]', space=smem, size = 0x4, offset = 0x4, fixed_abs, tag = 'smem constant byte address 0x4 - core index']
  #allocation1 [shape = 'u32[144,128]{1,0:T(1,128)}', space=vmem, size = 0x12000, scoped, tag = 'internal scratch']
  %s0 = inlined_call_operand.vmem [shape: f32[2,64,512], index: 0, kind: input, shape index: {}]
  %s1 = inlined_call_operand.vmem [shape: f32[2,1,64,1], index: 1, kind: output, shape index: {0}]
  %s2 = inlined_call_operand.vmem [shape: f32[2,1,64,1], index: 2, kind: output, shape index: {1}]
  %3 = xla_tuple %s1, %s2
  %s4 = sld [smem:[#allocation0]]
  $region45: #{attn_block_pallas.3} parent=0
    _
  %s6 = ssub.s32 1, %s4
  %s7 = scalar_select 0, %s6, %s4
  loop: start=0, step=1, limit=4
  $region2: #{attn_block_pallas.3} parent=0 // loop_pre_header
    _
  $region3: #{attn_block_pallas.3} parent=0 // loop_header
    %s9 = sphi 0, %s13
    %p10 = scmp.ge.s32.totalorder %s9, 4
    %s16 = sphi 0, %s28
    %s17 = sphi 0, %s24
    %s18 = sphi 0, %s16
    %s19 = sphi 0, %s17
    %s20 = sphi 0, %s18
    %s21 = sphi 0, %s19
    %s33 = sphi 0, %s35
    %s36 = sphi 0, %s33
    %s37 = sphi 0, %s36
    %s53 = sphi 0, %s37
    %s61 = sphi 0, %s63
    %s64 = sphi 0, %s61
    %s65 = sphi 0, %s64
    %s81 = sphi 0, %s65
    %s89 = sphi 0, %s91
    %s92 = sphi 0, %s89
    %s93 = sphi 0, %s92
    %s109 = sphi 0, %s93
  $region4: #{attn_block_pallas.3} parent=0 // loop_header_branch
    %12 = sbr.rel (%p10) target = $region8
  $region5: #{attn_block_pallas.3} parent=0 // loop_body
    %s14 = ssub.s32 %s9, 1
    %s15 = ssub.s32 %s9, 2
    %s22 = sadd.s32 1, %s17
    %p23 = scmp.ge.s32.totalorder %s22, 1
    %s24 = scalar_select %p23, 0, %s22
    %s25 = sadd.s32 1, %s16
    %s26 = scalar_select %p23, %s25, %s16
    %p27 = scmp.ge.s32.totalorder %s26, 2
    %s28 = scalar_select %p27, 0, %s26
    %s29 = ssub.s32 %s16, %s28
    %s30 = ssub.s32 %s17, %s24
    %s31 = sor.u32 %s29, %s30
    %p32 = scmp.eq.s32.totalorder %s31, 0
    %s34 = sadd.s32 %s33, 1
    %s35 = scalar_select %p32, %s33, %s34
    %p38 = pneg %p32
    %p39 = scmp.eq.s32.totalorder %s9, 1
    %p40 = por %p38, %p39
    %p41 = scmp.ne.s32.totalorder %s33, %s36
    %p42 = scmp.eq.s32.totalorder %s9, 0
    %p43 = por %p41, %p42
    %p44 = scmp.ne.s32.totalorder %s33, %s36
    %p45 = scmp.eq.s32.totalorder %s14, 1
    %p46 = por %p44, %p45
    %p47 = scmp.ne.s32.totalorder %s36, %s37
    %p48 = scmp.eq.s32.totalorder %s14, 0
    %p49 = por %p47, %p48
    %p50 = scmp.ne.s32.totalorder %s36, %s37
    %p51 = scmp.eq.s32.totalorder %s15, 1
    %p52 = por %p50, %p51
    %p54 = scmp.ne.s32.totalorder %s37, %s53
    %p55 = scmp.eq.s32.totalorder %s15, 0
    %p56 = por %p54, %p55
    %s57 = ssub.s32 %s16, %s28
    %s58 = ssub.s32 %s17, %s24
    %s59 = sor.u32 %s57, %s58
    %p60 = scmp.eq.s32.totalorder %s59, 0
    %s62 = sadd.s32 %s61, 1
    %s63 = scalar_select %p60, %s61, %s62
    %p66 = pneg %p60
    %p67 = scmp.eq.s32.totalorder %s9, 1
    %p68 = por %p66, %p67
    %p69 = scmp.ne.s32.totalorder %s61, %s64
    %p70 = scmp.eq.s32.totalorder %s9, 0
    %p71 = por %p69, %p70
    %p72 = scmp.ne.s32.totalorder %s61, %s64
    %p73 = scmp.eq.s32.totalorder %s14, 1
    %p74 = por %p72, %p73
    %p75 = scmp.ne.s32.totalorder %s64, %s65
    %p76 = scmp.eq.s32.totalorder %s14, 0
    %p77 = por %p75, %p76
    %p78 = scmp.ne.s32.totalorder %s64, %s65
    %p79 = scmp.eq.s32.totalorder %s15, 1
    %p80 = por %p78, %p79
    %p82 = scmp.ne.s32.totalorder %s65, %s81
    %p83 = scmp.eq.s32.totalorder %s15, 0
    %p84 = por %p82, %p83
    %s85 = ssub.s32 %s16, %s28
    %s86 = ssub.s32 %s17, %s24
    %s87 = sor.u32 %s85, %s86
    %p88 = scmp.eq.s32.totalorder %s87, 0
    %s90 = sadd.s32 %s89, 1
    %s91 = scalar_select %p88, %s89, %s90
    %p94 = pneg %p88
    %p95 = scmp.eq.s32.totalorder %s9, 1
    %p96 = por %p94, %p95
    %p97 = scmp.ne.s32.totalorder %s89, %s92
    %p98 = scmp.eq.s32.totalorder %s9, 0
    %p99 = por %p97, %p98
    %p100 = scmp.ne.s32.totalorder %s89, %s92
    %p101 = scmp.eq.s32.totalorder %s14, 1
    %p102 = por %p100, %p101
    %p103 = scmp.ne.s32.totalorder %s92, %s93
    %p104 = scmp.eq.s32.totalorder %s14, 0
    %p105 = por %p103, %p104
    %p106 = scmp.ne.s32.totalorder %s92, %s93
    %p107 = scmp.eq.s32.totalorder %s15, 1
    %p108 = por %p106, %p107
    %p110 = scmp.ne.s32.totalorder %s93, %s109
    %p111 = scmp.eq.s32.totalorder %s15, 0
    %p112 = por %p110, %p111
    %p113 = scmp.le.s32.totalorder 1, %s9
    %p114 = scmp.lt.s32.totalorder %s9, 3
    %p115 = pnand %p113, %p114
    %p116 = pneg %p115
    // Predicated region
    $region9: #{attn_block_pallas.3} parent=5 // pred_check
      _
    $region10: #{attn_block_pallas.3} parent=5 // pred_check_branch
      %118 = sbr.rel (%p115) target = $region12
    $region11: #{attn_block_pallas.3} parent=5 // pred_region
      %s119 = ssub.s32 %s9, 1
    $region12: #{attn_block_pallas.3} parent=5 // pred_fallthru
      _
    %p120 = scmp.lt.s32.totalorder %s9, 2
    // Predicated region
    $region13: #{attn_block_pallas.3} parent=5 // pred_check
      %p121 = pneg %p120
    $region14: #{attn_block_pallas.3} parent=5 // pred_check_branch
      %123 = sbr.rel (%p121) target = $region16
    $region15: #{attn_block_pallas.3} parent=5 // pred_region
      // Predicated region
      $region17: #{attn_block_pallas.3} parent=15 // pred_check
        %p124 = pneg %p43
      $region18: #{attn_block_pallas.3} parent=15 // pred_check_branch
        %126 = sbr.rel (%p124) target = $region20
      $region19: #{attn_block_pallas.3} parent=15 // pred_region
        %s127 = smul.u32 4, %s17
        %p128 = scmp.lt.s32.totalorder %s16, 1
        %s129 = scalar_select %p128, %s16, 1
        %p130 = scmp.lt.s32.totalorder %s127, 3
        %s131 = scalar_select %p130, %s127, 3
        %s132 = smul.addr %s129, 32
        %s133 = sadd.s32 %s131, %s132
        %s134 = smul.addr %s133, 8
        %s135 = scalar_lea.vmem %s0, %s134
        %s136 = smul.u32 4, %s17
      $region20: #{attn_block_pallas.3} parent=15 // pred_fallthru
        _
    $region16: #{attn_block_pallas.3} parent=5 // pred_fallthru
      _
    %p137 = scmp.le.s32.totalorder 1, %s9
    %p138 = scmp.lt.s32.totalorder %s9, 3
    %p139 = pnand %p137, %p138
    %p140 = pneg %p139
    // Predicated region
    $region21: #{attn_block_pallas.3} parent=5 // pred_check
      _
    $region22: #{attn_block_pallas.3} parent=5 // pred_check_branch
      %142 = sbr.rel (%p139) target = $region24
    $region23: #{attn_block_pallas.3} parent=5 // pred_region
      %s143 = ssub.s32 %s9, 1
      %s144 = smul.u32 4, %s19
      %p145 = scmp.lt.s32.totalorder %s18, 1
      %s146 = scalar_select %p145, %s18, 1
      %p147 = scmp.lt.s32.totalorder %s144, 3
      %s148 = scalar_select %p147, %s144, 3
      %s149 = smul.addr %s146, 32
      %s150 = sadd.s32 %s148, %s149
      %s151 = smul.addr %s150, 8
      %s152 = scalar_lea.vmem %s0, %s151
      %p153 = pneg %p49
      %p154 = pneg %p46
      %p155 = pneg %p77
      %p156 = pneg %p74
      %p157 = scmp.lt.s32.totalorder %s18, 1
      %s158 = scalar_select %p157, %s18, 1
      %p159 = scmp.lt.s32.totalorder %s19, 0
      %s160 = scalar_select %p159, %s19, 0
      %s161 = smul.addr %s160, 8
      %s162 = smul.addr %s158, 8
      %s163 = sadd.s32 %s161, %s162
      %s164 = smul.addr %s163, 8
      %s165 = scalar_lea.vmem %s1, %s164
      %p166 = pneg %p105
      %p167 = pneg %p102
      %p168 = scmp.lt.s32.totalorder %s18, 1
      %s169 = scalar_select %p168, %s18, 1
      %p170 = scmp.lt.s32.totalorder %s19, 0
      %s171 = scalar_select %p170, %s19, 0
      %s172 = smul.addr %s171, 8
      %s173 = smul.addr %s169, 8
      %s174 = sadd.s32 %s172, %s173
      %s175 = smul.addr %s174, 8
      %s176 = scalar_lea.vmem %s2, %s175
      %s177 = smul.u32 4, %s19
      %p178 = scmp.lt.s32.totalorder %s18, 1
      %s179 = scalar_select %p178, %s18, 1
      %p180 = scmp.lt.s32.totalorder %s177, 3
      %s181 = scalar_select %p180, %s177, 3
      %s182 = smul.addr %s179, 32
      %s183 = sadd.s32 %s181, %s182
      %s184 = smul.addr %s183, 8
      %s185 = scalar_lea.vmem %s0, %s184
      %s186 = smul.u32 4, %s19
      %p187 = scmp.lt.s32.totalorder %s18, 1
      %s188 = scalar_select %p187, %s18, 1
      %p189 = scmp.lt.s32.totalorder %s19, 0
      %s190 = scalar_select %p189, %s19, 0
      %s191 = smul.addr %s190, 8
      %s192 = smul.addr %s188, 8
      %s193 = sadd.s32 %s191, %s192
      %s194 = smul.addr %s193, 8
      %s195 = scalar_lea.vmem %s1, %s194
      %p196 = scmp.lt.s32.totalorder %s18, 1
      %s197 = scalar_select %p196, %s18, 1
      %p198 = scmp.lt.s32.totalorder %s19, 0
      %s199 = scalar_select %p198, %s19, 0
      %s200 = smul.addr %s199, 8
      %s201 = smul.addr %s197, 8
      %s202 = sadd.s32 %s200, %s201
      %s203 = smul.addr %s202, 8
      %s204 = scalar_lea.vmem %s2, %s203
      %v205 = vld [vmem:[%s185] sm:$0xff]
      %v206 = vld [vmem:[%s185 + $0x8] sm:$0xff]
      %v207 = vld [vmem:[%s185 + $0x10] sm:$0xff]
      %v208 = vld [vmem:[%s185 + $0x18] sm:$0xff]
      %v209 = vld [vmem:[%s185 + $0x20] sm:$0xff]
      %v210 = vld [vmem:[%s185 + $0x28] sm:$0xff]
      %v211 = vld [vmem:[%s185 + $0x30] sm:$0xff]
      %v212 = vld [vmem:[%s185 + $0x38] sm:$0xff]
      %v213 = vld [vmem:[%s185 + $0x40] sm:$0xff]
      %v214 = vld [vmem:[%s185 + $0x48] sm:$0xff]
      %v215 = vld [vmem:[%s185 + $0x50] sm:$0xff]
      %v216 = vld [vmem:[%s185 + $0x58] sm:$0xff]
      %v217 = vld [vmem:[%s185 + $0x60] sm:$0xff]
      %v218 = vld [vmem:[%s185 + $0x68] sm:$0xff]
      %v219 = vld [vmem:[%s185 + $0x70] sm:$0xff]
      %v220 = vld [vmem:[%s185 + $0x78] sm:$0xff]
      %v221 = vld [vmem:[%s185 + $0x80] sm:$0xff]
      %v222 = vld [vmem:[%s185 + $0x88] sm:$0xff]
      %v223 = vld [vmem:[%s185 + $0x90] sm:$0xff]
      %v224 = vld [vmem:[%s185 + $0x98] sm:$0xff]
      %v225 = vld [vmem:[%s185 + $0xa0] sm:$0xff]
      %v226 = vld [vmem:[%s185 + $0xa8] sm:$0xff]
      %v227 = vld [vmem:[%s185 + $0xb0] sm:$0xff]
      %v228 = vld [vmem:[%s185 + $0xb8] sm:$0xff]
      %v229 = vld [vmem:[%s185 + $0xc0] sm:$0xff]
      %v230 = vld [vmem:[%s185 + $0xc8] sm:$0xff]
      %v231 = vld [vmem:[%s185 + $0xd0] sm:$0xff]
      %v232 = vld [vmem:[%s185 + $0xd8] sm:$0xff]
      %v233 = vld [vmem:[%s185 + $0xe0] sm:$0xff]
      %v234 = vld [vmem:[%s185 + $0xe8] sm:$0xff]
      %v235 = vld [vmem:[%s185 + $0xf0] sm:$0xff]
      %v236 = vld [vmem:[%s185 + $0xf8] sm:$0xff]
      %v237 = vadd.f32 %v205, %v206
      %v238 = vadd.f32 %v237, %v207
      %v239 = vadd.f32 %v238, %v208
      %240 = vadd.xlane.f32.xlu0 %v239
      %v241 = vpop.xlane.xlu0 %240
      %v242 = vadd.f32 %v209, %v210
      %v243 = vadd.f32 %v242, %v211
      %v244 = vadd.f32 %v243, %v212
      %245 = vadd.xlane.f32.xlu0 %v244
      %v246 = vpop.xlane.xlu0 %245
      %v247 = vadd.f32 %v213, %v214
      %v248 = vadd.f32 %v247, %v215
      %v249 = vadd.f32 %v248, %v216
      %250 = vadd.xlane.f32.xlu0 %v249
      %v251 = vpop.xlane.xlu0 %250
      %v252 = vadd.f32 %v217, %v218
      %v253 = vadd.f32 %v252, %v219
      %v254 = vadd.f32 %v253, %v220
      %255 = vadd.xlane.f32.xlu0 %v254
      %v256 = vpop.xlane.xlu0 %255
      %v257 = vadd.f32 %v221, %v222
      %v258 = vadd.f32 %v257, %v223
      %v259 = vadd.f32 %v258, %v224
      %260 = vadd.xlane.f32.xlu0 %v259
      %v261 = vpop.xlane.xlu0 %260
      %v262 = vadd.f32 %v225, %v226
      %v263 = vadd.f32 %v262, %v227
      %v264 = vadd.f32 %v263, %v228
      %265 = vadd.xlane.f32.xlu0 %v264
      %v266 = vpop.xlane.xlu0 %265
      %v267 = vadd.f32 %v229, %v230
      %v268 = vadd.f32 %v267, %v231
      %v269 = vadd.f32 %v268, %v232
      %270 = vadd.xlane.f32.xlu0 %v269
      %v271 = vpop.xlane.xlu0 %270
      %v272 = vadd.f32 %v233, %v234
      %v273 = vadd.f32 %v272, %v235
      %v274 = vadd.f32 %v273, %v236
      %275 = vadd.xlane.f32.xlu0 %v274
      %v276 = vpop.xlane.xlu0 %275
      %vm277 = vcmask 7168
      %278 = vst.msk [vmem:[%s195] sm:$0xff] %vm277, %v241
      %279 = vst.msk [vmem:[%s195 + $0x8] sm:$0xff] %vm277, %v246
      %280 = vst.msk [vmem:[%s195 + $0x10] sm:$0xff] %vm277, %v251
      %281 = vst.msk [vmem:[%s195 + $0x18] sm:$0xff] %vm277, %v256
      %282 = vst.msk [vmem:[%s195 + $0x20] sm:$0xff] %vm277, %v261
      %283 = vst.msk [vmem:[%s195 + $0x28] sm:$0xff] %vm277, %v266
      %284 = vst.msk [vmem:[%s195 + $0x30] sm:$0xff] %vm277, %v271
      %285 = vst.msk [vmem:[%s195 + $0x38] sm:$0xff] %vm277, %v276
      %v286 = vmul.f32 %v205, %v205
      %v287 = vmul.f32 %v206, %v206
      %v288 = vmul.f32 %v207, %v207
      %v289 = vmul.f32 %v208, %v208
      %v290 = vmul.f32 %v209, %v209
      %v291 = vmul.f32 %v210, %v210
      %v292 = vmul.f32 %v211, %v211
      %v293 = vmul.f32 %v212, %v212
      %v294 = vmul.f32 %v213, %v213
      %v295 = vmul.f32 %v214, %v214
      %v296 = vmul.f32 %v215, %v215
      %v297 = vmul.f32 %v216, %v216
      %v298 = vmul.f32 %v217, %v217
      %v299 = vmul.f32 %v218, %v218
      %v300 = vmul.f32 %v219, %v219
      %v301 = vmul.f32 %v220, %v220
      %v302 = vmul.f32 %v221, %v221
      %v303 = vmul.f32 %v222, %v222
      %v304 = vmul.f32 %v223, %v223
      %v305 = vmul.f32 %v224, %v224
      %v306 = vmul.f32 %v225, %v225
      %v307 = vmul.f32 %v226, %v226
      %v308 = vmul.f32 %v227, %v227
      %v309 = vmul.f32 %v228, %v228
      %v310 = vmul.f32 %v229, %v229
      %v311 = vmul.f32 %v230, %v230
      %v312 = vmul.f32 %v231, %v231
      %v313 = vmul.f32 %v232, %v232
      %v314 = vmul.f32 %v233, %v233
      %v315 = vmul.f32 %v234, %v234
      %v316 = vmul.f32 %v235, %v235
      %v317 = vmul.f32 %v236, %v236
      %v318 = vadd.f32 %v286, %v287
      %v319 = vadd.f32 %v318, %v288
      %v320 = vadd.f32 %v319, %v289
      %321 = vadd.xlane.f32.xlu0 %v320
      %v322 = vpop.xlane.xlu0 %321
      %v323 = vadd.f32 %v290, %v291
      %v324 = vadd.f32 %v323, %v292
      %v325 = vadd.f32 %v324, %v293
      %326 = vadd.xlane.f32.xlu0 %v325
      %v327 = vpop.xlane.xlu0 %326
      %v328 = vadd.f32 %v294, %v295
      %v329 = vadd.f32 %v328, %v296
      %v330 = vadd.f32 %v329, %v297
      %331 = vadd.xlane.f32.xlu0 %v330
      %v332 = vpop.xlane.xlu0 %331
      %v333 = vadd.f32 %v298, %v299
      %v334 = vadd.f32 %v333, %v300
      %v335 = vadd.f32 %v334, %v301
      %336 = vadd.xlane.f32.xlu0 %v335
      %v337 = vpop.xlane.xlu0 %336
      %v338 = vadd.f32 %v302, %v303
      %v339 = vadd.f32 %v338, %v304
      %v340 = vadd.f32 %v339, %v305
      %341 = vadd.xlane.f32.xlu0 %v340
      %v342 = vpop.xlane.xlu0 %341
      %v343 = vadd.f32 %v306, %v307
      %v344 = vadd.f32 %v343, %v308
      %v345 = vadd.f32 %v344, %v309
      %346 = vadd.xlane.f32.xlu0 %v345
      %v347 = vpop.xlane.xlu0 %346
      %v348 = vadd.f32 %v310, %v311
      %v349 = vadd.f32 %v348, %v312
      %v350 = vadd.f32 %v349, %v313
      %351 = vadd.xlane.f32.xlu0 %v350
      %v352 = vpop.xlane.xlu0 %351
      %v353 = vadd.f32 %v314, %v315
      %v354 = vadd.f32 %v353, %v316
      %v355 = vadd.f32 %v354, %v317
      %356 = vadd.xlane.f32.xlu0 %v355
      %v357 = vpop.xlane.xlu0 %356
      %358 = vst.msk [vmem:[%s204] sm:$0xff] %vm277, %v322
      %359 = vst.msk [vmem:[%s204 + $0x8] sm:$0xff] %vm277, %v327
      %360 = vst.msk [vmem:[%s204 + $0x10] sm:$0xff] %vm277, %v332
      %361 = vst.msk [vmem:[%s204 + $0x18] sm:$0xff] %vm277, %v337
      %362 = vst.msk [vmem:[%s204 + $0x20] sm:$0xff] %vm277, %v342
      %363 = vst.msk [vmem:[%s204 + $0x28] sm:$0xff] %vm277, %v347
      %364 = vst.msk [vmem:[%s204 + $0x30] sm:$0xff] %vm277, %v352
      %365 = vst.msk [vmem:[%s204 + $0x38] sm:$0xff] %vm277, %v357
      %p366 = scmp.lt.s32.totalorder %s18, 1
      %s367 = scalar_select %p366, %s18, 1
      %p368 = scmp.lt.s32.totalorder %s19, 0
      %s369 = scalar_select %p368, %s19, 0
      %s370 = smul.addr %s369, 8
      %s371 = smul.addr %s367, 8
      %s372 = sadd.s32 %s370, %s371
      %s373 = smul.addr %s372, 8
      %s374 = scalar_lea.vmem %s1, %s373
      %p375 = scmp.lt.s32.totalorder %s18, 1
      %s376 = scalar_select %p375, %s18, 1
      %p377 = scmp.lt.s32.totalorder %s19, 0
      %s378 = scalar_select %p377, %s19, 0
      %s379 = smul.addr %s378, 8
      %s380 = smul.addr %s376, 8
      %s381 = sadd.s32 %s379, %s380
      %s382 = smul.addr %s381, 8
      %s383 = scalar_lea.vmem %s2, %s382
      // Predicated region
      $region25: #{attn_block_pallas.3} parent=23 // pred_check
        %p384 = pneg %p74
      $region26: #{attn_block_pallas.3} parent=23 // pred_check_branch
        %386 = sbr.rel (%p384) target = $region28
      $region27: #{attn_block_pallas.3} parent=23 // pred_region
        _
      $region28: #{attn_block_pallas.3} parent=23 // pred_fallthru
        _
      // Predicated region
      $region29: #{attn_block_pallas.3} parent=23 // pred_check
        %p387 = pneg %p102
      $region30: #{attn_block_pallas.3} parent=23 // pred_check_branch
        %389 = sbr.rel (%p387) target = $region32
      $region31: #{attn_block_pallas.3} parent=23 // pred_region
        _
      $region32: #{attn_block_pallas.3} parent=23 // pred_fallthru
        _
    $region24: #{attn_block_pallas.3} parent=5 // pred_fallthru
      _
    %p390 = scmp.le.s32.totalorder 2, %s9
    // Predicated region
    $region33: #{attn_block_pallas.3} parent=5 // pred_check
      %p391 = pneg %p390
    $region34: #{attn_block_pallas.3} parent=5 // pred_check_branch
      %393 = sbr.rel (%p391) target = $region36
    $region35: #{attn_block_pallas.3} parent=5 // pred_region
      %s394 = ssub.s32 %s9, 2
      // Predicated region
      $region37: #{attn_block_pallas.3} parent=35 // pred_check
        %p395 = pneg %p80
      $region38: #{attn_block_pallas.3} parent=35 // pred_check_branch
        %397 = sbr.rel (%p395) target = $region40
      $region39: #{attn_block_pallas.3} parent=35 // pred_region
        %p398 = scmp.lt.s32.totalorder %s20, 1
        %s399 = scalar_select %p398, %s20, 1
        %p400 = scmp.lt.s32.totalorder %s21, 0
        %s401 = scalar_select %p400, %s21, 0
        %s402 = smul.addr %s401, 8
        %s403 = smul.addr %s399, 8
        %s404 = sadd.s32 %s402, %s403
        %s405 = smul.addr %s404, 8
        %s406 = scalar_lea.vmem %s1, %s405
      $region40: #{attn_block_pallas.3} parent=35 // pred_fallthru
        _
      // Predicated region
      $region41: #{attn_block_pallas.3} parent=35 // pred_check
        %p407 = pneg %p108
      $region42: #{attn_block_pallas.3} parent=35 // pred_check_branch
        %409 = sbr.rel (%p407) target = $region44
      $region43: #{attn_block_pallas.3} parent=35 // pred_region
        %p410 = scmp.lt.s32.totalorder %s20, 1
        %s411 = scalar_select %p410, %s20, 1
        %p412 = scmp.lt.s32.totalorder %s21, 0
        %s413 = scalar_select %p412, %s21, 0
        %s414 = smul.addr %s413, 8
        %s415 = smul.addr %s411, 8
        %s416 = sadd.s32 %s414, %s415
        %s417 = smul.addr %s416, 8
        %s418 = scalar_lea.vmem %s2, %s417
      $region44: #{attn_block_pallas.3} parent=35 // pred_fallthru
        _
    $region36: #{attn_block_pallas.3} parent=5 // pred_fallthru
      _
  $region6: #{attn_block_pallas.3} parent=0 // loop_footer
    %s13 = sadd.s32 1, %s9
  $region7: #{attn_block_pallas.3} parent=0 // loop_footer_branch
    %8 = sbr.rel target = $region3
  $region8: #{attn_block_pallas.3} parent=0 // loop_exit
    _

// kernel: attn_block_pallas.4
$region0: #{attn_block_pallas.4}
  #allocation0 [shape = 'u32[]', space=smem, size = 0x4, offset = 0x4, fixed_abs, tag = 'smem constant byte address 0x4 - core index']
  #allocation1 [shape = 'u32[144,128]{1,0:T(1,128)}', space=vmem, size = 0x12000, scoped, tag = 'internal scratch']
  %s0 = inlined_call_operand.vmem [shape: f32[2,64,512], index: 0, kind: input, shape index: {}]
  %s1 = inlined_call_operand.vmem [shape: f32[2,64,1], index: 1, kind: input, shape index: {}]
  %s2 = inlined_call_operand.vmem [shape: f32[2,64,1], index: 2, kind: input, shape index: {}]
  %s3 = inlined_call_operand.vmem [shape: bf16[192,64], index: 3, kind: input, shape index: {}]
  %s4 = inlined_call_operand.vmem [shape: f32[192,1], index: 4, kind: input, shape index: {}]
  %s5 = inlined_call_operand.vmem [shape: bf16[2,512,64], index: 5, kind: output, shape index: {0}]
  %s6 = inlined_call_operand.vmem [shape: bf16[2,64,512], index: 6, kind: output, shape index: {1}]
  %s7 = inlined_call_operand.vmem [shape: bf16[2,64,512], index: 7, kind: output, shape index: {2}]
  %8 = xla_tuple %s5, %s6, %s7
  %s9 = sld [smem:[#allocation0]]
  $region69: #{attn_block_pallas.4} parent=0
    _
  %s11 = ssub.s32 1, %s9
  %s12 = scalar_select 0, %s11, %s9
  loop: start=0, step=1, limit=4
  $region2: #{attn_block_pallas.4} parent=0 // loop_pre_header
    _
  $region3: #{attn_block_pallas.4} parent=0 // loop_header
    %s14 = sphi 0, %s18
    %p15 = scmp.ge.s32.totalorder %s14, 4
    %s21 = sphi 0, %s33
    %s22 = sphi 0, %s29
    %s23 = sphi 0, %s21
    %s24 = sphi 0, %s22
    %s25 = sphi 0, %s23
    %s26 = sphi 0, %s24
    %s38 = sphi 0, %s40
    %s41 = sphi 0, %s38
    %s42 = sphi 0, %s41
    %s58 = sphi 0, %s42
    %s64 = sphi 0, %s66
    %s67 = sphi 0, %s64
    %s68 = sphi 0, %s67
    %s84 = sphi 0, %s68
    %s90 = sphi 0, %s92
    %s93 = sphi 0, %s90
    %s94 = sphi 0, %s93
    %s110 = sphi 0, %s94
    %s114 = sphi 0, %s114
    %s116 = sphi 0, %s114
    %s117 = sphi 0, %s116
    %s131 = sphi 0, %s117
    %s135 = sphi 0, %s135
    %s137 = sphi 0, %s135
    %s138 = sphi 0, %s137
    %s152 = sphi 0, %s138
    %s160 = sphi 0, %s162
    %s163 = sphi 0, %s160
    %s164 = sphi 0, %s163
    %s180 = sphi 0, %s164
    %s188 = sphi 0, %s190
    %s191 = sphi 0, %s188
    %s192 = sphi 0, %s191
    %s208 = sphi 0, %s192
    %s216 = sphi 0, %s218
    %s219 = sphi 0, %s216
    %s220 = sphi 0, %s219
    %s236 = sphi 0, %s220
  $region4: #{attn_block_pallas.4} parent=0 // loop_header_branch
    %17 = sbr.rel (%p15) target = $region8
  $region5: #{attn_block_pallas.4} parent=0 // loop_body
    %s19 = ssub.s32 %s14, 1
    %s20 = ssub.s32 %s14, 2
    %s27 = sadd.s32 1, %s22
    %p28 = scmp.ge.s32.totalorder %s27, 1
    %s29 = scalar_select %p28, 0, %s27
    %s30 = sadd.s32 1, %s21
    %s31 = scalar_select %p28, %s30, %s21
    %p32 = scmp.ge.s32.totalorder %s31, 2
    %s33 = scalar_select %p32, 0, %s31
    %s34 = ssub.s32 %s21, %s33
    %s35 = ssub.s32 %s22, %s29
    %s36 = sor.u32 %s34, %s35
    %p37 = scmp.eq.s32.totalorder %s36, 0
    %s39 = sadd.s32 %s38, 1
    %s40 = scalar_select %p37, %s38, %s39
    %p43 = pneg %p37
    %p44 = scmp.eq.s32.totalorder %s14, 1
    %p45 = por %p43, %p44
    %p46 = scmp.ne.s32.totalorder %s38, %s41
    %p47 = scmp.eq.s32.totalorder %s14, 0
    %p48 = por %p46, %p47
    %p49 = scmp.ne.s32.totalorder %s38, %s41
    %p50 = scmp.eq.s32.totalorder %s19, 1
    %p51 = por %p49, %p50
    %p52 = scmp.ne.s32.totalorder %s41, %s42
    %p53 = scmp.eq.s32.totalorder %s19, 0
    %p54 = por %p52, %p53
    %p55 = scmp.ne.s32.totalorder %s41, %s42
    %p56 = scmp.eq.s32.totalorder %s20, 1
    %p57 = por %p55, %p56
    %p59 = scmp.ne.s32.totalorder %s42, %s58
    %p60 = scmp.eq.s32.totalorder %s20, 0
    %p61 = por %p59, %p60
    %s62 = ssub.s32 %s21, %s33
    %p63 = scmp.eq.s32.totalorder %s62, 0
    %s65 = sadd.s32 %s64, 1
    %s66 = scalar_select %p63, %s64, %s65
    %p69 = pneg %p63
    %p70 = scmp.eq.s32.totalorder %s14, 1
    %p71 = por %p69, %p70
    %p72 = scmp.ne.s32.totalorder %s64, %s67
    %p73 = scmp.eq.s32.totalorder %s14, 0
    %p74 = por %p72, %p73
    %p75 = scmp.ne.s32.totalorder %s64, %s67
    %p76 = scmp.eq.s32.totalorder %s19, 1
    %p77 = por %p75, %p76
    %p78 = scmp.ne.s32.totalorder %s67, %s68
    %p79 = scmp.eq.s32.totalorder %s19, 0
    %p80 = por %p78, %p79
    %p81 = scmp.ne.s32.totalorder %s67, %s68
    %p82 = scmp.eq.s32.totalorder %s20, 1
    %p83 = por %p81, %p82
    %p85 = scmp.ne.s32.totalorder %s68, %s84
    %p86 = scmp.eq.s32.totalorder %s20, 0
    %p87 = por %p85, %p86
    %s88 = ssub.s32 %s21, %s33
    %p89 = scmp.eq.s32.totalorder %s88, 0
    %s91 = sadd.s32 %s90, 1
    %s92 = scalar_select %p89, %s90, %s91
    %p95 = pneg %p89
    %p96 = scmp.eq.s32.totalorder %s14, 1
    %p97 = por %p95, %p96
    %p98 = scmp.ne.s32.totalorder %s90, %s93
    %p99 = scmp.eq.s32.totalorder %s14, 0
    %p100 = por %p98, %p99
    %p101 = scmp.ne.s32.totalorder %s90, %s93
    %p102 = scmp.eq.s32.totalorder %s19, 1
    %p103 = por %p101, %p102
    %p104 = scmp.ne.s32.totalorder %s93, %s94
    %p105 = scmp.eq.s32.totalorder %s19, 0
    %p106 = por %p104, %p105
    %p107 = scmp.ne.s32.totalorder %s93, %s94
    %p108 = scmp.eq.s32.totalorder %s20, 1
    %p109 = por %p107, %p108
    %p111 = scmp.ne.s32.totalorder %s94, %s110
    %p112 = scmp.eq.s32.totalorder %s20, 0
    %p113 = por %p111, %p112
    %s115 = sadd.s32 %s114, 1
    %p118 = scmp.eq.s32.totalorder %s14, 1
    %p119 = scmp.ne.s32.totalorder %s114, %s116
    %p120 = scmp.eq.s32.totalorder %s14, 0
    %p121 = por %p119, %p120
    %p122 = scmp.ne.s32.totalorder %s114, %s116
    %p123 = scmp.eq.s32.totalorder %s19, 1
    %p124 = por %p122, %p123
    %p125 = scmp.ne.s32.totalorder %s116, %s117
    %p126 = scmp.eq.s32.totalorder %s19, 0
    %p127 = por %p125, %p126
    %p128 = scmp.ne.s32.totalorder %s116, %s117
    %p129 = scmp.eq.s32.totalorder %s20, 1
    %p130 = por %p128, %p129
    %p132 = scmp.ne.s32.totalorder %s117, %s131
    %p133 = scmp.eq.s32.totalorder %s20, 0
    %p134 = por %p132, %p133
    %s136 = sadd.s32 %s135, 1
    %p139 = scmp.eq.s32.totalorder %s14, 1
    %p140 = scmp.ne.s32.totalorder %s135, %s137
    %p141 = scmp.eq.s32.totalorder %s14, 0
    %p142 = por %p140, %p141
    %p143 = scmp.ne.s32.totalorder %s135, %s137
    %p144 = scmp.eq.s32.totalorder %s19, 1
    %p145 = por %p143, %p144
    %p146 = scmp.ne.s32.totalorder %s137, %s138
    %p147 = scmp.eq.s32.totalorder %s19, 0
    %p148 = por %p146, %p147
    %p149 = scmp.ne.s32.totalorder %s137, %s138
    %p150 = scmp.eq.s32.totalorder %s20, 1
    %p151 = por %p149, %p150
    %p153 = scmp.ne.s32.totalorder %s138, %s152
    %p154 = scmp.eq.s32.totalorder %s20, 0
    %p155 = por %p153, %p154
    %s156 = ssub.s32 %s21, %s33
    %s157 = ssub.s32 %s22, %s29
    %s158 = sor.u32 %s156, %s157
    %p159 = scmp.eq.s32.totalorder %s158, 0
    %s161 = sadd.s32 %s160, 1
    %s162 = scalar_select %p159, %s160, %s161
    %p165 = pneg %p159
    %p166 = scmp.eq.s32.totalorder %s14, 1
    %p167 = por %p165, %p166
    %p168 = scmp.ne.s32.totalorder %s160, %s163
    %p169 = scmp.eq.s32.totalorder %s14, 0
    %p170 = por %p168, %p169
    %p171 = scmp.ne.s32.totalorder %s160, %s163
    %p172 = scmp.eq.s32.totalorder %s19, 1
    %p173 = por %p171, %p172
    %p174 = scmp.ne.s32.totalorder %s163, %s164
    %p175 = scmp.eq.s32.totalorder %s19, 0
    %p176 = por %p174, %p175
    %p177 = scmp.ne.s32.totalorder %s163, %s164
    %p178 = scmp.eq.s32.totalorder %s20, 1
    %p179 = por %p177, %p178
    %p181 = scmp.ne.s32.totalorder %s164, %s180
    %p182 = scmp.eq.s32.totalorder %s20, 0
    %p183 = por %p181, %p182
    %s184 = ssub.s32 %s21, %s33
    %s185 = ssub.s32 %s22, %s29
    %s186 = sor.u32 %s184, %s185
    %p187 = scmp.eq.s32.totalorder %s186, 0
    %s189 = sadd.s32 %s188, 1
    %s190 = scalar_select %p187, %s188, %s189
    %p193 = pneg %p187
    %p194 = scmp.eq.s32.totalorder %s14, 1
    %p195 = por %p193, %p194
    %p196 = scmp.ne.s32.totalorder %s188, %s191
    %p197 = scmp.eq.s32.totalorder %s14, 0
    %p198 = por %p196, %p197
    %p199 = scmp.ne.s32.totalorder %s188, %s191
    %p200 = scmp.eq.s32.totalorder %s19, 1
    %p201 = por %p199, %p200
    %p202 = scmp.ne.s32.totalorder %s191, %s192
    %p203 = scmp.eq.s32.totalorder %s19, 0
    %p204 = por %p202, %p203
    %p205 = scmp.ne.s32.totalorder %s191, %s192
    %p206 = scmp.eq.s32.totalorder %s20, 1
    %p207 = por %p205, %p206
    %p209 = scmp.ne.s32.totalorder %s192, %s208
    %p210 = scmp.eq.s32.totalorder %s20, 0
    %p211 = por %p209, %p210
    %s212 = ssub.s32 %s21, %s33
    %s213 = ssub.s32 %s22, %s29
    %s214 = sor.u32 %s212, %s213
    %p215 = scmp.eq.s32.totalorder %s214, 0
    %s217 = sadd.s32 %s216, 1
    %s218 = scalar_select %p215, %s216, %s217
    %p221 = pneg %p215
    %p222 = scmp.eq.s32.totalorder %s14, 1
    %p223 = por %p221, %p222
    %p224 = scmp.ne.s32.totalorder %s216, %s219
    %p225 = scmp.eq.s32.totalorder %s14, 0
    %p226 = por %p224, %p225
    %p227 = scmp.ne.s32.totalorder %s216, %s219
    %p228 = scmp.eq.s32.totalorder %s19, 1
    %p229 = por %p227, %p228
    %p230 = scmp.ne.s32.totalorder %s219, %s220
    %p231 = scmp.eq.s32.totalorder %s19, 0
    %p232 = por %p230, %p231
    %p233 = scmp.ne.s32.totalorder %s219, %s220
    %p234 = scmp.eq.s32.totalorder %s20, 1
    %p235 = por %p233, %p234
    %p237 = scmp.ne.s32.totalorder %s220, %s236
    %p238 = scmp.eq.s32.totalorder %s20, 0
    %p239 = por %p237, %p238
    %p240 = scmp.le.s32.totalorder 1, %s14
    %p241 = scmp.lt.s32.totalorder %s14, 3
    %p242 = pnand %p240, %p241
    %p243 = pneg %p242
    // Predicated region
    $region9: #{attn_block_pallas.4} parent=5 // pred_check
      _
    $region10: #{attn_block_pallas.4} parent=5 // pred_check_branch
      %245 = sbr.rel (%p242) target = $region12
    $region11: #{attn_block_pallas.4} parent=5 // pred_region
      %s246 = ssub.s32 %s14, 1
      // Predicated region
      $region13: #{attn_block_pallas.4} parent=11 // pred_check
        %p247 = pneg %p127
      $region14: #{attn_block_pallas.4} parent=11 // pred_check_branch
        %249 = sbr.rel (%p247) target = $region16
      $region15: #{attn_block_pallas.4} parent=11 // pred_region
        _
      $region16: #{attn_block_pallas.4} parent=11 // pred_fallthru
        _
      // Predicated region
      $region17: #{attn_block_pallas.4} parent=11 // pred_check
        %p250 = pneg %p148
      $region18: #{attn_block_pallas.4} parent=11 // pred_check_branch
        %252 = sbr.rel (%p250) target = $region20
      $region19: #{attn_block_pallas.4} parent=11 // pred_region
        _
      $region20: #{attn_block_pallas.4} parent=11 // pred_fallthru
        _
    $region12: #{attn_block_pallas.4} parent=5 // pred_fallthru
      _
    %p253 = scmp.lt.s32.totalorder %s14, 2
    // Predicated region
    $region21: #{attn_block_pallas.4} parent=5 // pred_check
      %p254 = pneg %p253
    $region22: #{attn_block_pallas.4} parent=5 // pred_check_branch
      %256 = sbr.rel (%p254) target = $region24
    $region23: #{attn_block_pallas.4} parent=5 // pred_region
      // Predicated region
      $region25: #{attn_block_pallas.4} parent=23 // pred_check
        %p257 = pneg %p48
      $region26: #{attn_block_pallas.4} parent=23 // pred_check_branch
        %259 = sbr.rel (%p257) target = $region28
      $region27: #{attn_block_pallas.4} parent=23 // pred_region
        %s260 = smul.u32 4, %s22
        %p261 = scmp.lt.s32.totalorder %s21, 1
        %s262 = scalar_select %p261, %s21, 1
        %p263 = scmp.lt.s32.totalorder %s260, 3
        %s264 = scalar_select %p263, %s260, 3
        %s265 = smul.addr %s262, 32
        %s266 = sadd.s32 %s264, %s265
        %s267 = smul.addr %s266, 8
        %s268 = scalar_lea.vmem %s0, %s267
        %s269 = smul.u32 4, %s22
      $region28: #{attn_block_pallas.4} parent=23 // pred_fallthru
        _
      // Predicated region
      $region29: #{attn_block_pallas.4} parent=23 // pred_check
        %p270 = pneg %p74
      $region30: #{attn_block_pallas.4} parent=23 // pred_check_branch
        %272 = sbr.rel (%p270) target = $region32
      $region31: #{attn_block_pallas.4} parent=23 // pred_region
        %p273 = scmp.lt.s32.totalorder %s21, 1
        %s274 = scalar_select %p273, %s21, 1
        %s275 = smul.addr %s274, 8
        %s276 = smul.addr %s275, 8
        %s277 = scalar_lea.vmem %s1, %s276
      $region32: #{attn_block_pallas.4} parent=23 // pred_fallthru
        _
      // Predicated region
      $region33: #{attn_block_pallas.4} parent=23 // pred_check
        %p278 = pneg %p100
      $region34: #{attn_block_pallas.4} parent=23 // pred_check_branch
        %280 = sbr.rel (%p278) target = $region36
      $region35: #{attn_block_pallas.4} parent=23 // pred_region
        %p281 = scmp.lt.s32.totalorder %s21, 1
        %s282 = scalar_select %p281, %s21, 1
        %s283 = smul.addr %s282, 8
        %s284 = smul.addr %s283, 8
        %s285 = scalar_lea.vmem %s2, %s284
      $region36: #{attn_block_pallas.4} parent=23 // pred_fallthru
        _
    $region24: #{attn_block_pallas.4} parent=5 // pred_fallthru
      _
    %p286 = scmp.le.s32.totalorder 1, %s14
    %p287 = scmp.lt.s32.totalorder %s14, 3
    %p288 = pnand %p286, %p287
    %p289 = pneg %p288
    // Predicated region
    $region37: #{attn_block_pallas.4} parent=5 // pred_check
      _
    $region38: #{attn_block_pallas.4} parent=5 // pred_check_branch
      %291 = sbr.rel (%p288) target = $region40
    $region39: #{attn_block_pallas.4} parent=5 // pred_region
      %s292 = ssub.s32 %s14, 1
      %s293 = smul.u32 4, %s24
      %p294 = scmp.lt.s32.totalorder %s23, 1
      %s295 = scalar_select %p294, %s23, 1
      %p296 = scmp.lt.s32.totalorder %s293, 3
      %s297 = scalar_select %p296, %s293, 3
      %s298 = smul.addr %s295, 32
      %s299 = sadd.s32 %s297, %s298
      %s300 = smul.addr %s299, 8
      %s301 = scalar_lea.vmem %s0, %s300
      %p302 = pneg %p54
      %p303 = pneg %p51
      %p304 = scmp.lt.s32.totalorder %s23, 1
      %s305 = scalar_select %p304, %s23, 1
      %s306 = smul.addr %s305, 8
      %s307 = smul.addr %s306, 8
      %s308 = scalar_lea.vmem %s1, %s307
      %p309 = pneg %p80
      %p310 = pneg %p77
      %p311 = scmp.lt.s32.totalorder %s23, 1
      %s312 = scalar_select %p311, %s23, 1
      %s313 = smul.addr %s312, 8
      %s314 = smul.addr %s313, 8
      %s315 = scalar_lea.vmem %s2, %s314
      %p316 = pneg %p106
      %p317 = pneg %p103
      %p318 = pneg %p127
      %p319 = pneg %p124
      %p320 = pneg %p148
      %p321 = pneg %p145
      %p322 = pneg %p176
      %p323 = pneg %p173
      %s324 = smul.u32 64, %s24
      %p325 = scmp.lt.s32.totalorder %s23, 1
      %s326 = scalar_select %p325, %s23, 1
      %p327 = scmp.lt.s32.totalorder %s324, 63
      %s328 = scalar_select %p327, %s324, 63
      %s329 = smul.addr %s326, 64
      %s330 = sadd.s32 %s328, %s329
      %s331 = smul.addr %s330, 4
      %s332 = scalar_lea.vmem %s5, %s331
      %p333 = pneg %p204
      %p334 = pneg %p201
      %s335 = smul.u32 4, %s24
      %p336 = scmp.lt.s32.totalorder %s23, 1
      %s337 = scalar_select %p336, %s23, 1
      %p338 = scmp.lt.s32.totalorder %s335, 3
      %s339 = scalar_select %p338, %s335, 3
      %s340 = smul.addr %s337, 32
      %s341 = sadd.s32 %s339, %s340
      %s342 = smul.addr %s341, 4
      %s343 = scalar_lea.vmem %s6, %s342
      %p344 = pneg %p232
      %p345 = pneg %p229
      %s346 = smul.u32 4, %s24
      %p347 = scmp.lt.s32.totalorder %s23, 1
      %s348 = scalar_select %p347, %s23, 1
      %p349 = scmp.lt.s32.totalorder %s346, 3
      %s350 = scalar_select %p349, %s346, 3
      %s351 = smul.addr %s348, 32
      %s352 = sadd.s32 %s350, %s351
      %s353 = smul.addr %s352, 4
      %s354 = scalar_lea.vmem %s7, %s353
      %s355 = smul.u32 4, %s24
      %p356 = scmp.lt.s32.totalorder %s23, 1
      %s357 = scalar_select %p356, %s23, 1
      %p358 = scmp.lt.s32.totalorder %s355, 3
      %s359 = scalar_select %p358, %s355, 3
      %s360 = smul.addr %s357, 32
      %s361 = sadd.s32 %s359, %s360
      %s362 = smul.addr %s361, 8
      %s363 = scalar_lea.vmem %s0, %s362
      %s364 = smul.u32 4, %s24
      %p365 = scmp.lt.s32.totalorder %s23, 1
      %s366 = scalar_select %p365, %s23, 1
      %s367 = smul.addr %s366, 8
      %s368 = smul.addr %s367, 8
      %s369 = scalar_lea.vmem %s1, %s368
      %p370 = scmp.lt.s32.totalorder %s23, 1
      %s371 = scalar_select %p370, %s23, 1
      %s372 = smul.addr %s371, 8
      %s373 = smul.addr %s372, 8
      %s374 = scalar_lea.vmem %s2, %s373
      %s375 = smul.u32 64, %s24
      %p376 = scmp.lt.s32.totalorder %s23, 1
      %s377 = scalar_select %p376, %s23, 1
      %p378 = scmp.lt.s32.totalorder %s375, 63
      %s379 = scalar_select %p378, %s375, 63
      %s380 = smul.addr %s377, 64
      %s381 = sadd.s32 %s379, %s380
      %s382 = smul.addr %s381, 4
      %s383 = scalar_lea.vmem %s5, %s382
      %s384 = smul.u32 64, %s24
      %s385 = smul.u32 4, %s24
      %p386 = scmp.lt.s32.totalorder %s23, 1
      %s387 = scalar_select %p386, %s23, 1
      %p388 = scmp.lt.s32.totalorder %s385, 3
      %s389 = scalar_select %p388, %s385, 3
      %s390 = smul.addr %s387, 32
      %s391 = sadd.s32 %s389, %s390
      %s392 = smul.addr %s391, 4
      %s393 = scalar_lea.vmem %s6, %s392
      %s394 = smul.u32 4, %s24
      %s395 = smul.u32 4, %s24
      %p396 = scmp.lt.s32.totalorder %s23, 1
      %s397 = scalar_select %p396, %s23, 1
      %p398 = scmp.lt.s32.totalorder %s395, 3
      %s399 = scalar_select %p398, %s395, 3
      %s400 = smul.addr %s397, 32
      %s401 = sadd.s32 %s399, %s400
      %s402 = smul.addr %s401, 4
      %s403 = scalar_lea.vmem %s7, %s402
      %s404 = smul.u32 4, %s24
      %v406 = vld [vmem:[%s363] sm:$0xff]
      %v407 = vld [vmem:[%s363 + $0x8] sm:$0xff]
      %v408 = vld [vmem:[%s363 + $0x10] sm:$0xff]
      %v409 = vld [vmem:[%s363 + $0x18] sm:$0xff]
      %v410 = vld [vmem:[%s363 + $0x20] sm:$0xff]
      %v411 = vld [vmem:[%s363 + $0x28] sm:$0xff]
      %v412 = vld [vmem:[%s363 + $0x30] sm:$0xff]
      %v413 = vld [vmem:[%s363 + $0x38] sm:$0xff]
      %v414 = vld [vmem:[%s363 + $0x40] sm:$0xff]
      %v415 = vld [vmem:[%s363 + $0x48] sm:$0xff]
      %v416 = vld [vmem:[%s363 + $0x50] sm:$0xff]
      %v417 = vld [vmem:[%s363 + $0x58] sm:$0xff]
      %v418 = vld [vmem:[%s363 + $0x60] sm:$0xff]
      %v419 = vld [vmem:[%s363 + $0x68] sm:$0xff]
      %v420 = vld [vmem:[%s363 + $0x70] sm:$0xff]
      %v421 = vld [vmem:[%s363 + $0x78] sm:$0xff]
      %v422 = vld [vmem:[%s363 + $0x80] sm:$0xff]
      %v423 = vld [vmem:[%s363 + $0x88] sm:$0xff]
      %v424 = vld [vmem:[%s363 + $0x90] sm:$0xff]
      %v425 = vld [vmem:[%s363 + $0x98] sm:$0xff]
      %v426 = vld [vmem:[%s363 + $0xa0] sm:$0xff]
      %v427 = vld [vmem:[%s363 + $0xa8] sm:$0xff]
      %v428 = vld [vmem:[%s363 + $0xb0] sm:$0xff]
      %v429 = vld [vmem:[%s363 + $0xb8] sm:$0xff]
      %v430 = vld [vmem:[%s363 + $0xc0] sm:$0xff]
      %v431 = vld [vmem:[%s363 + $0xc8] sm:$0xff]
      %v432 = vld [vmem:[%s363 + $0xd0] sm:$0xff]
      %v433 = vld [vmem:[%s363 + $0xd8] sm:$0xff]
      %v434 = vld [vmem:[%s363 + $0xe0] sm:$0xff]
      %v435 = vld [vmem:[%s363 + $0xe8] sm:$0xff]
      %v436 = vld [vmem:[%s363 + $0xf0] sm:$0xff]
      %v437 = vld [vmem:[%s363 + $0xf8] sm:$0xff]
      %v438 = vld [vmem:[%s369] sm:$0xff]
      %v439 = vld [vmem:[%s369 + $0x8] sm:$0xff]
      %v440 = vld [vmem:[%s369 + $0x10] sm:$0xff]
      %v441 = vld [vmem:[%s369 + $0x18] sm:$0xff]
      %v442 = vld [vmem:[%s369 + $0x20] sm:$0xff]
      %v443 = vld [vmem:[%s369 + $0x28] sm:$0xff]
      %v444 = vld [vmem:[%s369 + $0x30] sm:$0xff]
      %v445 = vld [vmem:[%s369 + $0x38] sm:$0xff]
      %447 = vset.pattern.permute.xlu0 0
      %448 = vperm.xlu0 %447, %v438
      %v449 = vpop.permute.xlu0 %448
      %452 = vset.pattern.permute.xlu0 0
      %453 = vperm.xlu0 %452, %v439
      %v454 = vpop.permute.xlu0 %453
      %457 = vset.pattern.permute.xlu0 0
      %458 = vperm.xlu0 %457, %v440
      %v459 = vpop.permute.xlu0 %458
      %462 = vset.pattern.permute.xlu0 0
      %463 = vperm.xlu0 %462, %v441
      %v464 = vpop.permute.xlu0 %463
      %467 = vset.pattern.permute.xlu0 0
      %468 = vperm.xlu0 %467, %v442
      %v469 = vpop.permute.xlu0 %468
      %472 = vset.pattern.permute.xlu0 0
      %473 = vperm.xlu0 %472, %v443
      %v474 = vpop.permute.xlu0 %473
      %477 = vset.pattern.permute.xlu0 0
      %478 = vperm.xlu0 %477, %v444
      %v479 = vpop.permute.xlu0 %478
      %482 = vset.pattern.permute.xlu0 0
      %483 = vperm.xlu0 %482, %v445
      %v484 = vpop.permute.xlu0 %483
      %v486 = vmul.f32 %v406, %v449
      %v487 = vmul.f32 %v407, %v449
      %v488 = vmul.f32 %v408, %v449
      %v489 = vmul.f32 %v409, %v449
      %v490 = vmul.f32 %v410, %v454
      %v491 = vmul.f32 %v411, %v454
      %v492 = vmul.f32 %v412, %v454
      %v493 = vmul.f32 %v413, %v454
      %v494 = vmul.f32 %v414, %v459
      %v495 = vmul.f32 %v415, %v459
      %v496 = vmul.f32 %v416, %v459
      %v497 = vmul.f32 %v417, %v459
      %v498 = vmul.f32 %v418, %v464
      %v499 = vmul.f32 %v419, %v464
      %v500 = vmul.f32 %v420, %v464
      %v501 = vmul.f32 %v421, %v464
      %v502 = vmul.f32 %v422, %v469
      %v503 = vmul.f32 %v423, %v469
      %v504 = vmul.f32 %v424, %v469
      %v505 = vmul.f32 %v425, %v469
      %v506 = vmul.f32 %v426, %v474
      %v507 = vmul.f32 %v427, %v474
      %v508 = vmul.f32 %v428, %v474
      %v509 = vmul.f32 %v429, %v474
      %v510 = vmul.f32 %v430, %v479
      %v511 = vmul.f32 %v431, %v479
      %v512 = vmul.f32 %v432, %v479
      %v513 = vmul.f32 %v433, %v479
      %v514 = vmul.f32 %v434, %v484
      %v515 = vmul.f32 %v435, %v484
      %v516 = vmul.f32 %v436, %v484
      %v517 = vmul.f32 %v437, %v484
      %v518 = vld [vmem:[%s374] sm:$0xff]
      %v519 = vld [vmem:[%s374 + $0x8] sm:$0xff]
      %v520 = vld [vmem:[%s374 + $0x10] sm:$0xff]
      %v521 = vld [vmem:[%s374 + $0x18] sm:$0xff]
      %v522 = vld [vmem:[%s374 + $0x20] sm:$0xff]
      %v523 = vld [vmem:[%s374 + $0x28] sm:$0xff]
      %v524 = vld [vmem:[%s374 + $0x30] sm:$0xff]
      %v525 = vld [vmem:[%s374 + $0x38] sm:$0xff]
      %527 = vset.pattern.permute.xlu0 0
      %528 = vperm.xlu0 %527, %v518
      %v529 = vpop.permute.xlu0 %528
      %532 = vset.pattern.permute.xlu0 0
      %533 = vperm.xlu0 %532, %v519
      %v534 = vpop.permute.xlu0 %533
      %537 = vset.pattern.permute.xlu0 0
      %538 = vperm.xlu0 %537, %v520
      %v539 = vpop.permute.xlu0 %538
      %542 = vset.pattern.permute.xlu0 0
      %543 = vperm.xlu0 %542, %v521
      %v544 = vpop.permute.xlu0 %543
      %547 = vset.pattern.permute.xlu0 0
      %548 = vperm.xlu0 %547, %v522
      %v549 = vpop.permute.xlu0 %548
      %552 = vset.pattern.permute.xlu0 0
      %553 = vperm.xlu0 %552, %v523
      %v554 = vpop.permute.xlu0 %553
      %557 = vset.pattern.permute.xlu0 0
      %558 = vperm.xlu0 %557, %v524
      %v559 = vpop.permute.xlu0 %558
      %562 = vset.pattern.permute.xlu0 0
      %563 = vperm.xlu0 %562, %v525
      %v564 = vpop.permute.xlu0 %563
      %v566 = vadd.f32 %v486, %v529
      %v567 = vadd.f32 %v487, %v529
      %v568 = vadd.f32 %v488, %v529
      %v569 = vadd.f32 %v489, %v529
      %v570 = vadd.f32 %v490, %v534
      %v571 = vadd.f32 %v491, %v534
      %v572 = vadd.f32 %v492, %v534
      %v573 = vadd.f32 %v493, %v534
      %v574 = vadd.f32 %v494, %v539
      %v575 = vadd.f32 %v495, %v539
      %v576 = vadd.f32 %v496, %v539
      %v577 = vadd.f32 %v497, %v539
      %v578 = vadd.f32 %v498, %v544
      %v579 = vadd.f32 %v499, %v544
      %v580 = vadd.f32 %v500, %v544
      %v581 = vadd.f32 %v501, %v544
      %v582 = vadd.f32 %v502, %v549
      %v583 = vadd.f32 %v503, %v549
      %v584 = vadd.f32 %v504, %v549
      %v585 = vadd.f32 %v505, %v549
      %v586 = vadd.f32 %v506, %v554
      %v587 = vadd.f32 %v507, %v554
      %v588 = vadd.f32 %v508, %v554
      %v589 = vadd.f32 %v509, %v554
      %v590 = vadd.f32 %v510, %v559
      %v591 = vadd.f32 %v511, %v559
      %v592 = vadd.f32 %v512, %v559
      %v593 = vadd.f32 %v513, %v559
      %v594 = vadd.f32 %v514, %v564
      %v595 = vadd.f32 %v515, %v564
      %v596 = vadd.f32 %v516, %v564
      %v597 = vadd.f32 %v517, %v564
      %v598 = vpack.c.bf16 %v570, %v566
      %v599 = vpack.c.bf16 %v571, %v567
      %v600 = vpack.c.bf16 %v572, %v568
      %v601 = vpack.c.bf16 %v573, %v569
      %v602 = vpack.c.bf16 %v578, %v574
      %v603 = vpack.c.bf16 %v579, %v575
      %v604 = vpack.c.bf16 %v580, %v576
      %v605 = vpack.c.bf16 %v581, %v577
      %v606 = vpack.c.bf16 %v586, %v582
      %v607 = vpack.c.bf16 %v587, %v583
      %v608 = vpack.c.bf16 %v588, %v584
      %v609 = vpack.c.bf16 %v589, %v585
      %v610 = vpack.c.bf16 %v594, %v590
      %v611 = vpack.c.bf16 %v595, %v591
      %v612 = vpack.c.bf16 %v596, %v592
      %v613 = vpack.c.bf16 %v597, %v593
      %v614 = vld [vmem:[%s3] sm:$0xf]
      %v615 = vld [vmem:[%s3 + $0x4] sm:$0xf]
      %v616 = vld [vmem:[%s3 + $0x8] sm:$0xf]
      %v617 = vld [vmem:[%s3 + $0xc] sm:$0xf]
      %v618 = vld [vmem:[%s3 + $0x10] sm:$0xf]
      %v619 = vld [vmem:[%s3 + $0x14] sm:$0xf]
      %v620 = vld [vmem:[%s3 + $0x18] sm:$0xf]
      %v621 = vld [vmem:[%s3 + $0x1c] sm:$0xf]
      %v622 = vld [vmem:[%s3 + $0x20] sm:$0xf]
      %v623 = vld [vmem:[%s3 + $0x24] sm:$0xf]
      %v624 = vld [vmem:[%s3 + $0x28] sm:$0xf]
      %v625 = vld [vmem:[%s3 + $0x2c] sm:$0xf]
      %v626 = vld [vmem:[%s3 + $0x30] sm:$0xf]
      %v627 = vld [vmem:[%s3 + $0x34] sm:$0xf]
      %v628 = vld [vmem:[%s3 + $0x38] sm:$0xf]
      %v629 = vld [vmem:[%s3 + $0x3c] sm:$0xf]
      %v630 = vld [vmem:[%s3 + $0x40] sm:$0xf]
      %v631 = vld [vmem:[%s3 + $0x44] sm:$0xf]
      %v632 = vld [vmem:[%s3 + $0x48] sm:$0xf]
      %v633 = vld [vmem:[%s3 + $0x4c] sm:$0xf]
      %v634 = vld [vmem:[%s3 + $0x50] sm:$0xf]
      %v635 = vld [vmem:[%s3 + $0x54] sm:$0xf]
      %v636 = vld [vmem:[%s3 + $0x58] sm:$0xf]
      %v637 = vld [vmem:[%s3 + $0x5c] sm:$0xf]
      %v638 = vld [vmem:[%s4] sm:$0xff]
      %v639 = vld [vmem:[%s4 + $0x8] sm:$0xff]
      %v640 = vld [vmem:[%s4 + $0x10] sm:$0xff]
      %v641 = vld [vmem:[%s4 + $0x18] sm:$0xff]
      %v642 = vld [vmem:[%s4 + $0x20] sm:$0xff]
      %v643 = vld [vmem:[%s4 + $0x28] sm:$0xff]
      %v644 = vld [vmem:[%s4 + $0x30] sm:$0xff]
      %v645 = vld [vmem:[%s4 + $0x38] sm:$0xff]
      %v646 = vld [vmem:[%s4 + $0x40] sm:$0xff]
      %v647 = vld [vmem:[%s4 + $0x48] sm:$0xff]
      %v648 = vld [vmem:[%s4 + $0x50] sm:$0xff]
      %v649 = vld [vmem:[%s4 + $0x58] sm:$0xff]
      %v650 = vld [vmem:[%s4 + $0x60] sm:$0xff]
      %v651 = vld [vmem:[%s4 + $0x68] sm:$0xff]
      %v652 = vld [vmem:[%s4 + $0x70] sm:$0xff]
      %v653 = vld [vmem:[%s4 + $0x78] sm:$0xff]
      %v654 = vld [vmem:[%s4 + $0x80] sm:$0xff]
      %v655 = vld [vmem:[%s4 + $0x88] sm:$0xff]
      %v656 = vld [vmem:[%s4 + $0x90] sm:$0xff]
      %v657 = vld [vmem:[%s4 + $0x98] sm:$0xff]
      %v658 = vld [vmem:[%s4 + $0xa0] sm:$0xff]
      %v659 = vld [vmem:[%s4 + $0xa8] sm:$0xff]
      %v660 = vld [vmem:[%s4 + $0xb0] sm:$0xff]
      %v661 = vld [vmem:[%s4 + $0xb8] sm:$0xff]
      %663 = vset.pattern.permute.xlu0 0
      %664 = vperm.xlu0 %663, %v638
      %v665 = vpop.permute.xlu0 %664
      %668 = vset.pattern.permute.xlu0 0
      %669 = vperm.xlu0 %668, %v639
      %v670 = vpop.permute.xlu0 %669
      %673 = vset.pattern.permute.xlu0 0
      %674 = vperm.xlu0 %673, %v640
      %v675 = vpop.permute.xlu0 %674
      %678 = vset.pattern.permute.xlu0 0
      %679 = vperm.xlu0 %678, %v641
      %v680 = vpop.permute.xlu0 %679
      %683 = vset.pattern.permute.xlu0 0
      %684 = vperm.xlu0 %683, %v642
      %v685 = vpop.permute.xlu0 %684
      %688 = vset.pattern.permute.xlu0 0
      %689 = vperm.xlu0 %688, %v643
      %v690 = vpop.permute.xlu0 %689
      %693 = vset.pattern.permute.xlu0 0
      %694 = vperm.xlu0 %693, %v644
      %v695 = vpop.permute.xlu0 %694
      %698 = vset.pattern.permute.xlu0 0
      %699 = vperm.xlu0 %698, %v645
      %v700 = vpop.permute.xlu0 %699
      %703 = vset.pattern.permute.xlu0 0
      %704 = vperm.xlu0 %703, %v646
      %v705 = vpop.permute.xlu0 %704
      %708 = vset.pattern.permute.xlu0 0
      %709 = vperm.xlu0 %708, %v647
      %v710 = vpop.permute.xlu0 %709
      %713 = vset.pattern.permute.xlu0 0
      %714 = vperm.xlu0 %713, %v648
      %v715 = vpop.permute.xlu0 %714
      %718 = vset.pattern.permute.xlu0 0
      %719 = vperm.xlu0 %718, %v649
      %v720 = vpop.permute.xlu0 %719
      %723 = vset.pattern.permute.xlu0 0
      %724 = vperm.xlu0 %723, %v650
      %v725 = vpop.permute.xlu0 %724
      %728 = vset.pattern.permute.xlu0 0
      %729 = vperm.xlu0 %728, %v651
      %v730 = vpop.permute.xlu0 %729
      %733 = vset.pattern.permute.xlu0 0
      %734 = vperm.xlu0 %733, %v652
      %v735 = vpop.permute.xlu0 %734
      %738 = vset.pattern.permute.xlu0 0
      %739 = vperm.xlu0 %738, %v653
      %v740 = vpop.permute.xlu0 %739
      %743 = vset.pattern.permute.xlu0 0
      %744 = vperm.xlu0 %743, %v654
      %v745 = vpop.permute.xlu0 %744
      %748 = vset.pattern.permute.xlu0 0
      %749 = vperm.xlu0 %748, %v655
      %v750 = vpop.permute.xlu0 %749
      %753 = vset.pattern.permute.xlu0 0
      %754 = vperm.xlu0 %753, %v656
      %v755 = vpop.permute.xlu0 %754
      %758 = vset.pattern.permute.xlu0 0
      %759 = vperm.xlu0 %758, %v657
      %v760 = vpop.permute.xlu0 %759
      %763 = vset.pattern.permute.xlu0 0
      %764 = vperm.xlu0 %763, %v658
      %v765 = vpop.permute.xlu0 %764
      %768 = vset.pattern.permute.xlu0 0
      %769 = vperm.xlu0 %768, %v659
      %v770 = vpop.permute.xlu0 %769
      %773 = vset.pattern.permute.xlu0 0
      %774 = vperm.xlu0 %773, %v660
      %v775 = vpop.permute.xlu0 %774
      %778 = vset.pattern.permute.xlu0 0
      %779 = vperm.xlu0 %778, %v661
      %v780 = vpop.permute.xlu0 %779
      %v806 = vunpack.c.l.b16 %v614
      %v807 = vunpack.c.l.b16 %v615
      %v808 = vunpack.c.l.b16 %v616
      %v809 = vunpack.c.l.b16 %v617
      %v810 = vunpack.c.l.b16 %v618
      %v811 = vunpack.c.l.b16 %v619
      %v812 = vunpack.c.l.b16 %v620
      %v813 = vunpack.c.l.b16 %v621
      %v814 = vunpack.c.l.b16 %v622
      %v815 = vunpack.c.l.b16 %v623
      %v816 = vunpack.c.l.b16 %v624
      %v817 = vunpack.c.l.b16 %v625
      %v818 = vunpack.c.l.b16 %v626
      %v819 = vunpack.c.l.b16 %v627
      %v820 = vunpack.c.l.b16 %v628
      %v821 = vunpack.c.l.b16 %v629
      %v822 = vunpack.c.l.b16 %v630
      %v823 = vunpack.c.l.b16 %v631
      %v824 = vunpack.c.l.b16 %v632
      %v825 = vunpack.c.l.b16 %v633
      %v826 = vunpack.c.l.b16 %v634
      %v827 = vunpack.c.l.b16 %v635
      %v828 = vunpack.c.l.b16 %v636
      %v829 = vunpack.c.l.b16 %v637
      %v830 = vpack.c.b16 %v807, %v806
      %v831 = vpack.c.b16 %v809, %v808
      %v832 = vpack.c.b16 %v811, %v810
      %v833 = vpack.c.b16 %v813, %v812
      %v834 = vpack.c.b16 %v815, %v814
      %v835 = vpack.c.b16 %v817, %v816
      %v836 = vpack.c.b16 %v819, %v818
      %v837 = vpack.c.b16 %v821, %v820
      %v838 = vpack.c.b16 %v823, %v822
      %v839 = vpack.c.b16 %v825, %v824
      %v840 = vpack.c.b16 %v827, %v826
      %v841 = vpack.c.b16 %v829, %v828
      %vm842 = vcmask 523264
      %v844 = vsel %vm842, %v830, 0
      %v847 = vsel %vm842, %v831, 0
      %v850 = vsel %vm842, %v832, 0
      %v853 = vsel %vm842, %v833, 0
      %v856 = vsel %vm842, %v834, 0
      %v859 = vsel %vm842, %v835, 0
      %v862 = vsel %vm842, %v836, 0
      %v865 = vsel %vm842, %v837, 0
      %v868 = vsel %vm842, %v838, 0
      %v871 = vsel %vm842, %v839, 0
      %v874 = vsel %vm842, %v840, 0
      %v877 = vsel %vm842, %v841, 0
      %879 = vmatprep.subr.bf16.mxu0 0
      %880 = vmatpush1.bf16.msra.mxu0 0
      %881 = vmatprep.subr.bf16.mxu0 0
      %882 = vmatpush1.bf16.msra.mxu0 0
      %883 = vmatprep.subr.bf16.mxu0 0
      %884 = vmatpush1.bf16.msra.mxu0 0
      %885 = vmatprep.subr.bf16.mxu0 0
      %886 = vmatpush1.bf16.msra.mxu0 0
      %887 = vmatprep.subr.bf16.mxu0 %v611
      %888 = vmatpush1.bf16.msra.mxu0 %v610
      %889 = vmatprep.subr.bf16.mxu0 %v607
      %890 = vmatpush1.bf16.msra.mxu0 %v606
      %891 = vmatprep.subr.bf16.mxu0 %v603
      %892 = vmatpush1.bf16.msra.mxu0 %v602
      %893 = vmatprep.subr.bf16.mxu0 %v599
      %894 = vmatpush1.bf16.msra.mxu0 %v598
      %895 = vmatprep.subr.bf16.mxu0 0
      %896 = vmatpush2.bf16.msra.mxu0 0
      %897 = vmatprep.subr.bf16.mxu0 0
      %898 = vmatpush2.bf16.msra.mxu0 0
      %899 = vmatprep.subr.bf16.mxu0 0
      %900 = vmatpush2.bf16.msra.mxu0 0
      %901 = vmatprep.subr.bf16.mxu0 0
      %902 = vmatpush2.bf16.msra.mxu0 0
      %903 = vmatprep.subr.bf16.mxu0 0
      %904 = vmatpush2.bf16.msra.mxu0 0
      %905 = vmatprep.subr.bf16.mxu0 0
      %906 = vmatpush2.bf16.msra.mxu0 0
      %907 = vmatprep.subr.bf16.mxu0 0
      %908 = vmatpush2.bf16.msra.mxu0 0
      %909 = vmatprep.subr.bf16.mxu0 0
      %910 = vmatpush2.bf16.msra.mxu0 0
      %911 = vmatprep.mubr.bf16.mxu0 0
      %912 = vmatmul.mubr.bf16.gmra.mxu0 %v844
      %v913 = vpop.f32.mrf.mxu0
      %v914 = vadd.f32 %v665, %v913
      %v915 = vpop.f32.mrf.mxu0
      %v916 = vadd.f32 %v665, %v915
      %v917 = vpop.f32.mrf.mxu0
      %v918 = vadd.f32 %v670, %v917
      %v919 = vpop.f32.mrf.mxu0
      %v920 = vadd.f32 %v670, %v919
      %921 = vmatprep.mubr.bf16.mxu0 0
      %922 = vmatmul.mubr.bf16.gmra.mxu0 %v847
      %v923 = vpop.f32.mrf.mxu0
      %v924 = vadd.f32 %v675, %v923
      %v925 = vpop.f32.mrf.mxu0
      %v926 = vadd.f32 %v675, %v925
      %v927 = vpop.f32.mrf.mxu0
      %v928 = vadd.f32 %v680, %v927
      %v929 = vpop.f32.mrf.mxu0
      %v930 = vadd.f32 %v680, %v929
      %931 = vmatprep.mubr.bf16.mxu0 0
      %932 = vmatmul.mubr.bf16.gmra.mxu0 %v850
      %v933 = vpop.f32.mrf.mxu0
      %v934 = vadd.f32 %v685, %v933
      %v935 = vpop.f32.mrf.mxu0
      %v936 = vadd.f32 %v685, %v935
      %v937 = vpop.f32.mrf.mxu0
      %v938 = vadd.f32 %v690, %v937
      %v939 = vpop.f32.mrf.mxu0
      %v940 = vadd.f32 %v690, %v939
      %941 = vmatprep.mubr.bf16.mxu0 0
      %942 = vmatmul.mubr.bf16.gmra.mxu0 %v853
      %v943 = vpop.f32.mrf.mxu0
      %v944 = vadd.f32 %v695, %v943
      %v945 = vpop.f32.mrf.mxu0
      %v946 = vadd.f32 %v695, %v945
      %v947 = vpop.f32.mrf.mxu0
      %v948 = vadd.f32 %v700, %v947
      %v949 = vpop.f32.mrf.mxu0
      %v950 = vadd.f32 %v700, %v949
      %951 = vmatprep.mubr.bf16.mxu0 0
      %952 = vmatmul.mubr.bf16.gmra.mxu0 %v856
      %v953 = vpop.f32.mrf.mxu0
      %v954 = vadd.f32 %v705, %v953
      %v955 = vpop.f32.mrf.mxu0
      %v956 = vadd.f32 %v705, %v955
      %v957 = vpop.f32.mrf.mxu0
      %v958 = vadd.f32 %v710, %v957
      %v959 = vpop.f32.mrf.mxu0
      %v960 = vadd.f32 %v710, %v959
      %961 = vmatprep.mubr.bf16.mxu0 0
      %962 = vmatmul.mubr.bf16.gmra.mxu0 %v859
      %v963 = vpop.f32.mrf.mxu0
      %v964 = vadd.f32 %v715, %v963
      %v965 = vpop.f32.mrf.mxu0
      %v966 = vadd.f32 %v715, %v965
      %v967 = vpop.f32.mrf.mxu0
      %v968 = vadd.f32 %v720, %v967
      %v969 = vpop.f32.mrf.mxu0
      %v970 = vadd.f32 %v720, %v969
      %971 = vmatprep.mubr.bf16.mxu0 0
      %972 = vmatmul.mubr.bf16.gmra.mxu0 %v862
      %v973 = vpop.f32.mrf.mxu0
      %v974 = vadd.f32 %v725, %v973
      %v975 = vpop.f32.mrf.mxu0
      %v976 = vadd.f32 %v725, %v975
      %v977 = vpop.f32.mrf.mxu0
      %v978 = vadd.f32 %v730, %v977
      %v979 = vpop.f32.mrf.mxu0
      %v980 = vadd.f32 %v730, %v979
      %981 = vmatprep.mubr.bf16.mxu0 0
      %982 = vmatmul.mubr.bf16.gmra.mxu0 %v865
      %v983 = vpop.f32.mrf.mxu0
      %v984 = vadd.f32 %v735, %v983
      %v985 = vpop.f32.mrf.mxu0
      %v986 = vadd.f32 %v735, %v985
      %v987 = vpop.f32.mrf.mxu0
      %v988 = vadd.f32 %v740, %v987
      %v989 = vpop.f32.mrf.mxu0
      %v990 = vadd.f32 %v740, %v989
      %991 = vmatprep.mubr.bf16.mxu0 0
      %992 = vmatmul.mubr.bf16.gmra.mxu0 %v868
      %v993 = vpop.f32.mrf.mxu0
      %v994 = vadd.f32 %v745, %v993
      %v995 = vpop.f32.mrf.mxu0
      %v996 = vadd.f32 %v745, %v995
      %v997 = vpop.f32.mrf.mxu0
      %v998 = vadd.f32 %v750, %v997
      %v999 = vpop.f32.mrf.mxu0
      %v1000 = vadd.f32 %v750, %v999
      %1001 = vmatprep.mubr.bf16.mxu0 0
      %1002 = vmatmul.mubr.bf16.gmra.mxu0 %v871
      %v1003 = vpop.f32.mrf.mxu0
      %v1004 = vadd.f32 %v755, %v1003
      %v1005 = vpop.f32.mrf.mxu0
      %v1006 = vadd.f32 %v755, %v1005
      %v1007 = vpop.f32.mrf.mxu0
      %v1008 = vadd.f32 %v760, %v1007
      %v1009 = vpop.f32.mrf.mxu0
      %v1010 = vadd.f32 %v760, %v1009
      %1011 = vmatprep.mubr.bf16.mxu0 0
      %1012 = vmatmul.mubr.bf16.gmra.mxu0 %v874
      %v1013 = vpop.f32.mrf.mxu0
      %v1014 = vadd.f32 %v765, %v1013
      %v1015 = vpop.f32.mrf.mxu0
      %v1016 = vadd.f32 %v765, %v1015
      %v1017 = vpop.f32.mrf.mxu0
      %v1018 = vadd.f32 %v770, %v1017
      %v1019 = vpop.f32.mrf.mxu0
      %v1020 = vadd.f32 %v770, %v1019
      %1021 = vmatprep.mubr.bf16.mxu0 0
      %1022 = vmatmul.mubr.bf16.gmra.mxu0 %v877
      %v1023 = vpop.f32.mrf.mxu0
      %v1024 = vadd.f32 %v775, %v1023
      %v1025 = vpop.f32.mrf.mxu0
      %v1026 = vadd.f32 %v775, %v1025
      %v1027 = vpop.f32.mrf.mxu0
      %v1028 = vadd.f32 %v780, %v1027
      %v1029 = vpop.f32.mrf.mxu0
      %v1030 = vadd.f32 %v780, %v1029
      %1031 = vdwg.mxu0
      %1032 = vmatprep.subr.bf16.mxu0 0
      %1033 = vmatpush1.bf16.msra.mxu0 0
      %1034 = vmatprep.subr.bf16.mxu0 0
      %1035 = vmatpush1.bf16.msra.mxu0 0
      %1036 = vmatprep.subr.bf16.mxu0 0
      %1037 = vmatpush1.bf16.msra.mxu0 0
      %1038 = vmatprep.subr.bf16.mxu0 0
      %1039 = vmatpush1.bf16.msra.mxu0 0
      %1040 = vmatprep.subr.bf16.mxu0 %v613
      %1041 = vmatpush1.bf16.msra.mxu0 %v612
      %1042 = vmatprep.subr.bf16.mxu0 %v609
      %1043 = vmatpush1.bf16.msra.mxu0 %v608
      %1044 = vmatprep.subr.bf16.mxu0 %v605
      %1045 = vmatpush1.bf16.msra.mxu0 %v604
      %1046 = vmatprep.subr.bf16.mxu0 %v601
      %1047 = vmatpush1.bf16.msra.mxu0 %v600
      %1048 = vmatprep.subr.bf16.mxu0 0
      %1049 = vmatpush2.bf16.msra.mxu0 0
      %1050 = vmatprep.subr.bf16.mxu0 0
      %1051 = vmatpush2.bf16.msra.mxu0 0
      %1052 = vmatprep.subr.bf16.mxu0 0
      %1053 = vmatpush2.bf16.msra.mxu0 0
      %1054 = vmatprep.subr.bf16.mxu0 0
      %1055 = vmatpush2.bf16.msra.mxu0 0
      %1056 = vmatprep.subr.bf16.mxu0 0
      %1057 = vmatpush2.bf16.msra.mxu0 0
      %1058 = vmatprep.subr.bf16.mxu0 0
      %1059 = vmatpush2.bf16.msra.mxu0 0
      %1060 = vmatprep.subr.bf16.mxu0 0
      %1061 = vmatpush2.bf16.msra.mxu0 0
      %1062 = vmatprep.subr.bf16.mxu0 0
      %1063 = vmatpush2.bf16.msra.mxu0 0
      %1064 = vmatprep.mubr.bf16.mxu0 0
      %1065 = vmatmul.mubr.bf16.gmra.mxu0 %v844
      %v1066 = vpop.f32.mrf.mxu0
      %v1067 = vadd.f32 %v665, %v1066
      %v1068 = vpop.f32.mrf.mxu0
      %v1069 = vadd.f32 %v665, %v1068
      %v1070 = vpop.f32.mrf.mxu0
      %v1071 = vadd.f32 %v670, %v1070
      %v1072 = vpop.f32.mrf.mxu0
      %v1073 = vadd.f32 %v670, %v1072
      %1074 = vmatprep.mubr.bf16.mxu0 0
      %1075 = vmatmul.mubr.bf16.gmra.mxu0 %v847
      %v1076 = vpop.f32.mrf.mxu0
      %v1077 = vadd.f32 %v675, %v1076
      %v1078 = vpop.f32.mrf.mxu0
      %v1079 = vadd.f32 %v675, %v1078
      %v1080 = vpop.f32.mrf.mxu0
      %v1081 = vadd.f32 %v680, %v1080
      %v1082 = vpop.f32.mrf.mxu0
      %v1083 = vadd.f32 %v680, %v1082
      %1084 = vmatprep.mubr.bf16.mxu0 0
      %1085 = vmatmul.mubr.bf16.gmra.mxu0 %v850
      %v1086 = vpop.f32.mrf.mxu0
      %v1087 = vadd.f32 %v685, %v1086
      %v1088 = vpop.f32.mrf.mxu0
      %v1089 = vadd.f32 %v685, %v1088
      %v1090 = vpop.f32.mrf.mxu0
      %v1091 = vadd.f32 %v690, %v1090
      %v1092 = vpop.f32.mrf.mxu0
      %v1093 = vadd.f32 %v690, %v1092
      %1094 = vmatprep.mubr.bf16.mxu0 0
      %1095 = vmatmul.mubr.bf16.gmra.mxu0 %v853
      %v1096 = vpop.f32.mrf.mxu0
      %v1097 = vadd.f32 %v695, %v1096
      %v1098 = vpop.f32.mrf.mxu0
      %v1099 = vadd.f32 %v695, %v1098
      %v1100 = vpop.f32.mrf.mxu0
      %v1101 = vadd.f32 %v700, %v1100
      %v1102 = vpop.f32.mrf.mxu0
      %v1103 = vadd.f32 %v700, %v1102
      %1104 = vmatprep.mubr.bf16.mxu0 0
      %1105 = vmatmul.mubr.bf16.gmra.mxu0 %v856
      %v1106 = vpop.f32.mrf.mxu0
      %v1107 = vadd.f32 %v705, %v1106
      %v1108 = vpop.f32.mrf.mxu0
      %v1109 = vadd.f32 %v705, %v1108
      %v1110 = vpop.f32.mrf.mxu0
      %v1111 = vadd.f32 %v710, %v1110
      %v1112 = vpop.f32.mrf.mxu0
      %v1113 = vadd.f32 %v710, %v1112
      %1114 = vmatprep.mubr.bf16.mxu0 0
      %1115 = vmatmul.mubr.bf16.gmra.mxu0 %v859
      %v1116 = vpop.f32.mrf.mxu0
      %v1117 = vadd.f32 %v715, %v1116
      %v1118 = vpop.f32.mrf.mxu0
      %v1119 = vadd.f32 %v715, %v1118
      %v1120 = vpop.f32.mrf.mxu0
      %v1121 = vadd.f32 %v720, %v1120
      %v1122 = vpop.f32.mrf.mxu0
      %v1123 = vadd.f32 %v720, %v1122
      %1124 = vmatprep.mubr.bf16.mxu0 0
      %1125 = vmatmul.mubr.bf16.gmra.mxu0 %v862
      %v1126 = vpop.f32.mrf.mxu0
      %v1127 = vadd.f32 %v725, %v1126
      %v1128 = vpop.f32.mrf.mxu0
      %v1129 = vadd.f32 %v725, %v1128
      %v1130 = vpop.f32.mrf.mxu0
      %v1131 = vadd.f32 %v730, %v1130
      %v1132 = vpop.f32.mrf.mxu0
      %v1133 = vadd.f32 %v730, %v1132
      %1134 = vmatprep.mubr.bf16.mxu0 0
      %1135 = vmatmul.mubr.bf16.gmra.mxu0 %v865
      %v1136 = vpop.f32.mrf.mxu0
      %v1137 = vadd.f32 %v735, %v1136
      %v1138 = vpop.f32.mrf.mxu0
      %v1139 = vadd.f32 %v735, %v1138
      %v1140 = vpop.f32.mrf.mxu0
      %v1141 = vadd.f32 %v740, %v1140
      %v1142 = vpop.f32.mrf.mxu0
      %v1143 = vadd.f32 %v740, %v1142
      %1144 = vmatprep.mubr.bf16.mxu0 0
      %1145 = vmatmul.mubr.bf16.gmra.mxu0 %v868
      %v1146 = vpop.f32.mrf.mxu0
      %v1147 = vadd.f32 %v745, %v1146
      %v1148 = vpop.f32.mrf.mxu0
      %v1149 = vadd.f32 %v745, %v1148
      %v1150 = vpop.f32.mrf.mxu0
      %v1151 = vadd.f32 %v750, %v1150
      %v1152 = vpop.f32.mrf.mxu0
      %v1153 = vadd.f32 %v750, %v1152
      %1154 = vmatprep.mubr.bf16.mxu0 0
      %1155 = vmatmul.mubr.bf16.gmra.mxu0 %v871
      %v1156 = vpop.f32.mrf.mxu0
      %v1157 = vadd.f32 %v755, %v1156
      %v1158 = vpop.f32.mrf.mxu0
      %v1159 = vadd.f32 %v755, %v1158
      %v1160 = vpop.f32.mrf.mxu0
      %v1161 = vadd.f32 %v760, %v1160
      %v1162 = vpop.f32.mrf.mxu0
      %v1163 = vadd.f32 %v760, %v1162
      %1164 = vmatprep.mubr.bf16.mxu0 0
      %1165 = vmatmul.mubr.bf16.gmra.mxu0 %v874
      %v1166 = vpop.f32.mrf.mxu0
      %v1167 = vadd.f32 %v765, %v1166
      %v1168 = vpop.f32.mrf.mxu0
      %v1169 = vadd.f32 %v765, %v1168
      %v1170 = vpop.f32.mrf.mxu0
      %v1171 = vadd.f32 %v770, %v1170
      %v1172 = vpop.f32.mrf.mxu0
      %v1173 = vadd.f32 %v770, %v1172
      %1174 = vmatprep.mubr.bf16.mxu0 0
      %1175 = vmatmul.mubr.bf16.gmra.mxu0 %v877
      %v1176 = vpop.f32.mrf.mxu0
      %v1177 = vadd.f32 %v775, %v1176
      %v1178 = vpop.f32.mrf.mxu0
      %v1179 = vadd.f32 %v775, %v1178
      %v1180 = vpop.f32.mrf.mxu0
      %v1181 = vadd.f32 %v780, %v1180
      %v1182 = vpop.f32.mrf.mxu0
      %v1183 = vadd.f32 %v780, %v1182
      %1184 = vdwg.mxu0
      %1185 = vxpose.xlu0.b32.start [1/16] %v914, 128
      %1186 = vxpose.xlu0.b32.cont [2/16] %v918, 128
      %1187 = vxpose.xlu0.b32.cont [3/16] %v924, 128
      %1188 = vxpose.xlu0.b32.cont [4/16] %v928, 128
      %1189 = vxpose.xlu0.b32.cont [5/16] %v934, 128
      %1190 = vxpose.xlu0.b32.cont [6/16] %v938, 128
      %1191 = vxpose.xlu0.b32.cont [7/16] %v944, 128
      %1192 = vxpose.xlu0.b32.cont [8/16] %v948, 128
      %1193 = vxpose.xlu0.b32.cont [9/16] 0.0, 128
      %1194 = vxpose.xlu0.b32.cont [10/16] 0.0, 128
      %1195 = vxpose.xlu0.b32.cont [11/16] 0.0, 128
      %1196 = vxpose.xlu0.b32.cont [12/16] 0.0, 128
      %1197 = vxpose.xlu0.b32.cont [13/16] 0.0, 128
      %1198 = vxpose.xlu0.b32.cont [14/16] 0.0, 128
      %1199 = vxpose.xlu0.b32.cont [15/16] 0.0, 128
      %1200 = vxpose.xlu0.b32.end [16/16] 0.0, 128
      %v1201 = vpop.trf.xlu0
      %v1202 = vpop.trf.xlu0
      %v1203 = vpop.trf.xlu0
      %v1204 = vpop.trf.xlu0
      %v1205 = vpop.trf.xlu0
      %v1206 = vpop.trf.xlu0
      %v1207 = vpop.trf.xlu0
      %v1208 = vpop.trf.xlu0
      %v1209 = vpop.trf.xlu0
      %v1210 = vpop.trf.xlu0
      %v1211 = vpop.trf.xlu0
      %v1212 = vpop.trf.xlu0
      %v1213 = vpop.trf.xlu0
      %v1214 = vpop.trf.xlu0
      %v1215 = vpop.trf.xlu0
      %v1216 = vpop.trf.xlu0
      %1217 = vxpose.xlu0.b32.start [1/16] %v916, 128
      %1218 = vxpose.xlu0.b32.cont [2/16] %v920, 128
      %1219 = vxpose.xlu0.b32.cont [3/16] %v926, 128
      %1220 = vxpose.xlu0.b32.cont [4/16] %v930, 128
      %1221 = vxpose.xlu0.b32.cont [5/16] %v936, 128
      %1222 = vxpose.xlu0.b32.cont [6/16] %v940, 128
      %1223 = vxpose.xlu0.b32.cont [7/16] %v946, 128
      %1224 = vxpose.xlu0.b32.cont [8/16] %v950, 128
      %1225 = vxpose.xlu0.b32.cont [9/16] 0.0, 128
      %1226 = vxpose.xlu0.b32.cont [10/16] 0.0, 128
      %1227 = vxpose.xlu0.b32.cont [11/16] 0.0, 128
      %1228 = vxpose.xlu0.b32.cont [12/16] 0.0, 128
      %1229 = vxpose.xlu0.b32.cont [13/16] 0.0, 128
      %1230 = vxpose.xlu0.b32.cont [14/16] 0.0, 128
      %1231 = vxpose.xlu0.b32.cont [15/16] 0.0, 128
      %1232 = vxpose.xlu0.b32.end [16/16] 0.0, 128
      %v1233 = vpop.trf.xlu0
      %v1234 = vpop.trf.xlu0
      %v1235 = vpop.trf.xlu0
      %v1236 = vpop.trf.xlu0
      %v1237 = vpop.trf.xlu0
      %v1238 = vpop.trf.xlu0
      %v1239 = vpop.trf.xlu0
      %v1240 = vpop.trf.xlu0
      %v1241 = vpop.trf.xlu0
      %v1242 = vpop.trf.xlu0
      %v1243 = vpop.trf.xlu0
      %v1244 = vpop.trf.xlu0
      %v1245 = vpop.trf.xlu0
      %v1246 = vpop.trf.xlu0
      %v1247 = vpop.trf.xlu0
      %v1248 = vpop.trf.xlu0
      %1249 = vxpose.xlu0.b32.start [1/16] %v1067, 128
      %1250 = vxpose.xlu0.b32.cont [2/16] %v1071, 128
      %1251 = vxpose.xlu0.b32.cont [3/16] %v1077, 128
      %1252 = vxpose.xlu0.b32.cont [4/16] %v1081, 128
      %1253 = vxpose.xlu0.b32.cont [5/16] %v1087, 128
      %1254 = vxpose.xlu0.b32.cont [6/16] %v1091, 128
      %1255 = vxpose.xlu0.b32.cont [7/16] %v1097, 128
      %1256 = vxpose.xlu0.b32.cont [8/16] %v1101, 128
      %1257 = vxpose.xlu0.b32.cont [9/16] 0.0, 128
      %1258 = vxpose.xlu0.b32.cont [10/16] 0.0, 128
      %1259 = vxpose.xlu0.b32.cont [11/16] 0.0, 128
      %1260 = vxpose.xlu0.b32.cont [12/16] 0.0, 128
      %1261 = vxpose.xlu0.b32.cont [13/16] 0.0, 128
      %1262 = vxpose.xlu0.b32.cont [14/16] 0.0, 128
      %1263 = vxpose.xlu0.b32.cont [15/16] 0.0, 128
      %1264 = vxpose.xlu0.b32.end [16/16] 0.0, 128
      %v1265 = vpop.trf.xlu0
      %v1266 = vpop.trf.xlu0
      %v1267 = vpop.trf.xlu0
      %v1268 = vpop.trf.xlu0
      %v1269 = vpop.trf.xlu0
      %v1270 = vpop.trf.xlu0
      %v1271 = vpop.trf.xlu0
      %v1272 = vpop.trf.xlu0
      %v1273 = vpop.trf.xlu0
      %v1274 = vpop.trf.xlu0
      %v1275 = vpop.trf.xlu0
      %v1276 = vpop.trf.xlu0
      %v1277 = vpop.trf.xlu0
      %v1278 = vpop.trf.xlu0
      %v1279 = vpop.trf.xlu0
      %v1280 = vpop.trf.xlu0
      %1281 = vxpose.xlu0.b32.start [1/16] %v1069, 128
      %1282 = vxpose.xlu0.b32.cont [2/16] %v1073, 128
      %1283 = vxpose.xlu0.b32.cont [3/16] %v1079, 128
      %1284 = vxpose.xlu0.b32.cont [4/16] %v1083, 128
      %1285 = vxpose.xlu0.b32.cont [5/16] %v1089, 128
      %1286 = vxpose.xlu0.b32.cont [6/16] %v1093, 128
      %1287 = vxpose.xlu0.b32.cont [7/16] %v1099, 128
      %1288 = vxpose.xlu0.b32.cont [8/16] %v1103, 128
      %1289 = vxpose.xlu0.b32.cont [9/16] 0.0, 128
      %1290 = vxpose.xlu0.b32.cont [10/16] 0.0, 128
      %1291 = vxpose.xlu0.b32.cont [11/16] 0.0, 128
      %1292 = vxpose.xlu0.b32.cont [12/16] 0.0, 128
      %1293 = vxpose.xlu0.b32.cont [13/16] 0.0, 128
      %1294 = vxpose.xlu0.b32.cont [14/16] 0.0, 128
      %1295 = vxpose.xlu0.b32.cont [15/16] 0.0, 128
      %1296 = vxpose.xlu0.b32.end [16/16] 0.0, 128
      %v1297 = vpop.trf.xlu0
      %v1298 = vpop.trf.xlu0
      %v1299 = vpop.trf.xlu0
      %v1300 = vpop.trf.xlu0
      %v1301 = vpop.trf.xlu0
      %v1302 = vpop.trf.xlu0
      %v1303 = vpop.trf.xlu0
      %v1304 = vpop.trf.xlu0
      %v1305 = vpop.trf.xlu0
      %v1306 = vpop.trf.xlu0
      %v1307 = vpop.trf.xlu0
      %v1308 = vpop.trf.xlu0
      %v1309 = vpop.trf.xlu0
      %v1310 = vpop.trf.xlu0
      %v1311 = vpop.trf.xlu0
      %v1312 = vpop.trf.xlu0
      %v1313 = vpack.c.bf16 %v1202, %v1201
      %v1314 = vpack.c.bf16 %v1204, %v1203
      %v1315 = vpack.c.bf16 %v1206, %v1205
      %v1316 = vpack.c.bf16 %v1208, %v1207
      %v1317 = vpack.c.bf16 %v1210, %v1209
      %v1318 = vpack.c.bf16 %v1212, %v1211
      %v1319 = vpack.c.bf16 %v1214, %v1213
      %v1320 = vpack.c.bf16 %v1216, %v1215
      %v1321 = vpack.c.bf16 %v1234, %v1233
      %v1322 = vpack.c.bf16 %v1236, %v1235
      %v1323 = vpack.c.bf16 %v1238, %v1237
      %v1324 = vpack.c.bf16 %v1240, %v1239
      %v1325 = vpack.c.bf16 %v1242, %v1241
      %v1326 = vpack.c.bf16 %v1244, %v1243
      %v1327 = vpack.c.bf16 %v1246, %v1245
      %v1328 = vpack.c.bf16 %v1248, %v1247
      %v1329 = vpack.c.bf16 %v1266, %v1265
      %v1330 = vpack.c.bf16 %v1268, %v1267
      %v1331 = vpack.c.bf16 %v1270, %v1269
      %v1332 = vpack.c.bf16 %v1272, %v1271
      %v1333 = vpack.c.bf16 %v1274, %v1273
      %v1334 = vpack.c.bf16 %v1276, %v1275
      %v1335 = vpack.c.bf16 %v1278, %v1277
      %v1336 = vpack.c.bf16 %v1280, %v1279
      %v1337 = vpack.c.bf16 %v1298, %v1297
      %v1338 = vpack.c.bf16 %v1300, %v1299
      %v1339 = vpack.c.bf16 %v1302, %v1301
      %v1340 = vpack.c.bf16 %v1304, %v1303
      %v1341 = vpack.c.bf16 %v1306, %v1305
      %v1342 = vpack.c.bf16 %v1308, %v1307
      %v1343 = vpack.c.bf16 %v1310, %v1309
      %v1344 = vpack.c.bf16 %v1312, %v1311
      %v1377 = vunpack.c.l.b16 %v1313
      %v1378 = vunpack.c.h.b16 %v1313
      %v1379 = vunpack.c.l.b16 %v1314
      %v1380 = vunpack.c.h.b16 %v1314
      %v1381 = vunpack.c.l.b16 %v1315
      %v1382 = vunpack.c.h.b16 %v1315
      %v1383 = vunpack.c.l.b16 %v1316
      %v1384 = vunpack.c.h.b16 %v1316
      %v1385 = vunpack.c.l.b16 %v1317
      %v1386 = vunpack.c.h.b16 %v1317
      %v1387 = vunpack.c.l.b16 %v1318
      %v1388 = vunpack.c.h.b16 %v1318
      %v1389 = vunpack.c.l.b16 %v1319
      %v1390 = vunpack.c.h.b16 %v1319
      %v1391 = vunpack.c.l.b16 %v1320
      %v1392 = vunpack.c.h.b16 %v1320
      %v1393 = vunpack.c.l.b16 %v1321
      %v1394 = vunpack.c.h.b16 %v1321
      %v1395 = vunpack.c.l.b16 %v1322
      %v1396 = vunpack.c.h.b16 %v1322
      %v1397 = vunpack.c.l.b16 %v1323
      %v1398 = vunpack.c.h.b16 %v1323
      %v1399 = vunpack.c.l.b16 %v1324
      %v1400 = vunpack.c.h.b16 %v1324
      %v1401 = vunpack.c.l.b16 %v1325
      %v1402 = vunpack.c.h.b16 %v1325
      %v1403 = vunpack.c.l.b16 %v1326
      %v1404 = vunpack.c.h.b16 %v1326
      %v1405 = vunpack.c.l.b16 %v1327
      %v1406 = vunpack.c.h.b16 %v1327
      %v1407 = vunpack.c.l.b16 %v1328
      %v1408 = vunpack.c.h.b16 %v1328
      %v1409 = vunpack.c.l.b16 %v1329
      %v1410 = vunpack.c.h.b16 %v1329
      %v1411 = vunpack.c.l.b16 %v1330
      %v1412 = vunpack.c.h.b16 %v1330
      %v1413 = vunpack.c.l.b16 %v1331
      %v1414 = vunpack.c.h.b16 %v1331
      %v1415 = vunpack.c.l.b16 %v1332
      %v1416 = vunpack.c.h.b16 %v1332
      %v1417 = vunpack.c.l.b16 %v1333
      %v1418 = vunpack.c.h.b16 %v1333
      %v1419 = vunpack.c.l.b16 %v1334
      %v1420 = vunpack.c.h.b16 %v1334
      %v1421 = vunpack.c.l.b16 %v1335
      %v1422 = vunpack.c.h.b16 %v1335
      %v1423 = vunpack.c.l.b16 %v1336
      %v1424 = vunpack.c.h.b16 %v1336
      %v1425 = vunpack.c.l.b16 %v1337
      %v1426 = vunpack.c.h.b16 %v1337
      %v1427 = vunpack.c.l.b16 %v1338
      %v1428 = vunpack.c.h.b16 %v1338
      %v1429 = vunpack.c.l.b16 %v1339
      %v1430 = vunpack.c.h.b16 %v1339
      %v1431 = vunpack.c.l.b16 %v1340
      %v1432 = vunpack.c.h.b16 %v1340
      %v1433 = vunpack.c.l.b16 %v1341
      %v1434 = vunpack.c.h.b16 %v1341
      %v1435 = vunpack.c.l.b16 %v1342
      %v1436 = vunpack.c.h.b16 %v1342
      %v1437 = vunpack.c.l.b16 %v1343
      %v1438 = vunpack.c.h.b16 %v1343
      %v1439 = vunpack.c.l.b16 %v1344
      %v1440 = vunpack.c.h.b16 %v1344
      %v1441 = vpack.c.b16 %v1377, %v1377
      %v1442 = vpack.c.b16 %v1378, %v1378
      %v1443 = vpack.c.b16 %v1379, %v1379
      %v1444 = vpack.c.b16 %v1380, %v1380
      %v1445 = vpack.c.b16 %v1381, %v1381
      %v1446 = vpack.c.b16 %v1382, %v1382
      %v1447 = vpack.c.b16 %v1383, %v1383
      %v1448 = vpack.c.b16 %v1384, %v1384
      %v1449 = vpack.c.b16 %v1385, %v1385
      %v1450 = vpack.c.b16 %v1386, %v1386
      %v1451 = vpack.c.b16 %v1387, %v1387
      %v1452 = vpack.c.b16 %v1388, %v1388
      %v1453 = vpack.c.b16 %v1389, %v1389
      %v1454 = vpack.c.b16 %v1390, %v1390
      %v1455 = vpack.c.b16 %v1391, %v1391
      %v1456 = vpack.c.b16 %v1392, %v1392
      %v1457 = vpack.c.b16 %v1393, %v1393
      %v1458 = vpack.c.b16 %v1394, %v1394
      %v1459 = vpack.c.b16 %v1395, %v1395
      %v1460 = vpack.c.b16 %v1396, %v1396
      %v1461 = vpack.c.b16 %v1397, %v1397
      %v1462 = vpack.c.b16 %v1398, %v1398
      %v1463 = vpack.c.b16 %v1399, %v1399
      %v1464 = vpack.c.b16 %v1400, %v1400
      %v1465 = vpack.c.b16 %v1401, %v1401
      %v1466 = vpack.c.b16 %v1402, %v1402
      %v1467 = vpack.c.b16 %v1403, %v1403
      %v1468 = vpack.c.b16 %v1404, %v1404
      %v1469 = vpack.c.b16 %v1405, %v1405
      %v1470 = vpack.c.b16 %v1406, %v1406
      %v1471 = vpack.c.b16 %v1407, %v1407
      %v1472 = vpack.c.b16 %v1408, %v1408
      %v1473 = vpack.c.b16 %v1409, %v1409
      %v1474 = vpack.c.b16 %v1410, %v1410
      %v1475 = vpack.c.b16 %v1411, %v1411
      %v1476 = vpack.c.b16 %v1412, %v1412
      %v1477 = vpack.c.b16 %v1413, %v1413
      %v1478 = vpack.c.b16 %v1414, %v1414
      %v1479 = vpack.c.b16 %v1415, %v1415
      %v1480 = vpack.c.b16 %v1416, %v1416
      %v1481 = vpack.c.b16 %v1417, %v1417
      %v1482 = vpack.c.b16 %v1418, %v1418
      %v1483 = vpack.c.b16 %v1419, %v1419
      %v1484 = vpack.c.b16 %v1420, %v1420
      %v1485 = vpack.c.b16 %v1421, %v1421
      %v1486 = vpack.c.b16 %v1422, %v1422
      %v1487 = vpack.c.b16 %v1423, %v1423
      %v1488 = vpack.c.b16 %v1424, %v1424
      %v1489 = vpack.c.b16 %v1425, %v1425
      %v1490 = vpack.c.b16 %v1426, %v1426
      %v1491 = vpack.c.b16 %v1427, %v1427
      %v1492 = vpack.c.b16 %v1428, %v1428
      %v1493 = vpack.c.b16 %v1429, %v1429
      %v1494 = vpack.c.b16 %v1430, %v1430
      %v1495 = vpack.c.b16 %v1431, %v1431
      %v1496 = vpack.c.b16 %v1432, %v1432
      %v1497 = vpack.c.b16 %v1433, %v1433
      %v1498 = vpack.c.b16 %v1434, %v1434
      %v1499 = vpack.c.b16 %v1435, %v1435
      %v1500 = vpack.c.b16 %v1436, %v1436
      %v1501 = vpack.c.b16 %v1437, %v1437
      %v1502 = vpack.c.b16 %v1438, %v1438
      %v1503 = vpack.c.b16 %v1439, %v1439
      %v1504 = vpack.c.b16 %v1440, %v1440
      %vm1569 = vcmask 519168
      %1570 = vst.msk [vmem:[%s383] sm:$0xf] %vm1569, %v1441
      %1571 = vst.msk [vmem:[%s383 + $0x4] sm:$0xf] %vm1569, %v1442
      %1572 = vst.msk [vmem:[%s383 + $0x8] sm:$0xf] %vm1569, %v1443
      %1573 = vst.msk [vmem:[%s383 + $0xc] sm:$0xf] %vm1569, %v1444
      %1574 = vst.msk [vmem:[%s383 + $0x10] sm:$0xf] %vm1569, %v1445
      %1575 = vst.msk [vmem:[%s383 + $0x14] sm:$0xf] %vm1569, %v1446
      %1576 = vst.msk [vmem:[%s383 + $0x18] sm:$0xf] %vm1569, %v1447
      %1577 = vst.msk [vmem:[%s383 + $0x1c] sm:$0xf] %vm1569, %v1448
      %1578 = vst.msk [vmem:[%s383 + $0x20] sm:$0xf] %vm1569, %v1449
      %1579 = vst.msk [vmem:[%s383 + $0x24] sm:$0xf] %vm1569, %v1450
      %1580 = vst.msk [vmem:[%s383 + $0x28] sm:$0xf] %vm1569, %v1451
      %1581 = vst.msk [vmem:[%s383 + $0x2c] sm:$0xf] %vm1569, %v1452
      %1582 = vst.msk [vmem:[%s383 + $0x30] sm:$0xf] %vm1569, %v1453
      %1583 = vst.msk [vmem:[%s383 + $0x34] sm:$0xf] %vm1569, %v1454
      %1584 = vst.msk [vmem:[%s383 + $0x38] sm:$0xf] %vm1569, %v1455
      %1585 = vst.msk [vmem:[%s383 + $0x3c] sm:$0xf] %vm1569, %v1456
      %1586 = vst.msk [vmem:[%s383 + $0x40] sm:$0xf] %vm1569, %v1457
      %1587 = vst.msk [vmem:[%s383 + $0x44] sm:$0xf] %vm1569, %v1458
      %1588 = vst.msk [vmem:[%s383 + $0x48] sm:$0xf] %vm1569, %v1459
      %1589 = vst.msk [vmem:[%s383 + $0x4c] sm:$0xf] %vm1569, %v1460
      %1590 = vst.msk [vmem:[%s383 + $0x50] sm:$0xf] %vm1569, %v1461
      %1591 = vst.msk [vmem:[%s383 + $0x54] sm:$0xf] %vm1569, %v1462
      %1592 = vst.msk [vmem:[%s383 + $0x58] sm:$0xf] %vm1569, %v1463
      %1593 = vst.msk [vmem:[%s383 + $0x5c] sm:$0xf] %vm1569, %v1464
      %1594 = vst.msk [vmem:[%s383 + $0x60] sm:$0xf] %vm1569, %v1465
      %1595 = vst.msk [vmem:[%s383 + $0x64] sm:$0xf] %vm1569, %v1466
      %1596 = vst.msk [vmem:[%s383 + $0x68] sm:$0xf] %vm1569, %v1467
      %1597 = vst.msk [vmem:[%s383 + $0x6c] sm:$0xf] %vm1569, %v1468
      %1598 = vst.msk [vmem:[%s383 + $0x70] sm:$0xf] %vm1569, %v1469
      %1599 = vst.msk [vmem:[%s383 + $0x74] sm:$0xf] %vm1569, %v1470
      %1600 = vst.msk [vmem:[%s383 + $0x78] sm:$0xf] %vm1569, %v1471
      %1601 = vst.msk [vmem:[%s383 + $0x7c] sm:$0xf] %vm1569, %v1472
      %1602 = vst.msk [vmem:[%s383 + $0x80] sm:$0xf] %vm1569, %v1473
      %1603 = vst.msk [vmem:[%s383 + $0x84] sm:$0xf] %vm1569, %v1474
      %1604 = vst.msk [vmem:[%s383 + $0x88] sm:$0xf] %vm1569, %v1475
      %1605 = vst.msk [vmem:[%s383 + $0x8c] sm:$0xf] %vm1569, %v1476
      %1606 = vst.msk [vmem:[%s383 + $0x90] sm:$0xf] %vm1569, %v1477
      %1607 = vst.msk [vmem:[%s383 + $0x94] sm:$0xf] %vm1569, %v1478
      %1608 = vst.msk [vmem:[%s383 + $0x98] sm:$0xf] %vm1569, %v1479
      %1609 = vst.msk [vmem:[%s383 + $0x9c] sm:$0xf] %vm1569, %v1480
      %1610 = vst.msk [vmem:[%s383 + $0xa0] sm:$0xf] %vm1569, %v1481
      %1611 = vst.msk [vmem:[%s383 + $0xa4] sm:$0xf] %vm1569, %v1482
      %1612 = vst.msk [vmem:[%s383 + $0xa8] sm:$0xf] %vm1569, %v1483
      %1613 = vst.msk [vmem:[%s383 + $0xac] sm:$0xf] %vm1569, %v1484
      %1614 = vst.msk [vmem:[%s383 + $0xb0] sm:$0xf] %vm1569, %v1485
      %1615 = vst.msk [vmem:[%s383 + $0xb4] sm:$0xf] %vm1569, %v1486
      %1616 = vst.msk [vmem:[%s383 + $0xb8] sm:$0xf] %vm1569, %v1487
      %1617 = vst.msk [vmem:[%s383 + $0xbc] sm:$0xf] %vm1569, %v1488
      %1618 = vst.msk [vmem:[%s383 + $0xc0] sm:$0xf] %vm1569, %v1489
      %1619 = vst.msk [vmem:[%s383 + $0xc4] sm:$0xf] %vm1569, %v1490
      %1620 = vst.msk [vmem:[%s383 + $0xc8] sm:$0xf] %vm1569, %v1491
      %1621 = vst.msk [vmem:[%s383 + $0xcc] sm:$0xf] %vm1569, %v1492
      %1622 = vst.msk [vmem:[%s383 + $0xd0] sm:$0xf] %vm1569, %v1493
      %1623 = vst.msk [vmem:[%s383 + $0xd4] sm:$0xf] %vm1569, %v1494
      %1624 = vst.msk [vmem:[%s383 + $0xd8] sm:$0xf] %vm1569, %v1495
      %1625 = vst.msk [vmem:[%s383 + $0xdc] sm:$0xf] %vm1569, %v1496
      %1626 = vst.msk [vmem:[%s383 + $0xe0] sm:$0xf] %vm1569, %v1497
      %1627 = vst.msk [vmem:[%s383 + $0xe4] sm:$0xf] %vm1569, %v1498
      %1628 = vst.msk [vmem:[%s383 + $0xe8] sm:$0xf] %vm1569, %v1499
      %1629 = vst.msk [vmem:[%s383 + $0xec] sm:$0xf] %vm1569, %v1500
      %1630 = vst.msk [vmem:[%s383 + $0xf0] sm:$0xf] %vm1569, %v1501
      %1631 = vst.msk [vmem:[%s383 + $0xf4] sm:$0xf] %vm1569, %v1502
      %1632 = vst.msk [vmem:[%s383 + $0xf8] sm:$0xf] %vm1569, %v1503
      %1633 = vst.msk [vmem:[%s383 + $0xfc] sm:$0xf] %vm1569, %v1504
      %v1634 = vpack.c.bf16 %v958, %v954
      %v1635 = vpack.c.bf16 %v960, %v956
      %v1636 = vpack.c.bf16 %v1111, %v1107
      %v1637 = vpack.c.bf16 %v1113, %v1109
      %v1638 = vpack.c.bf16 %v968, %v964
      %v1639 = vpack.c.bf16 %v970, %v966
      %v1640 = vpack.c.bf16 %v1121, %v1117
      %v1641 = vpack.c.bf16 %v1123, %v1119
      %v1642 = vpack.c.bf16 %v978, %v974
      %v1643 = vpack.c.bf16 %v980, %v976
      %v1644 = vpack.c.bf16 %v1131, %v1127
      %v1645 = vpack.c.bf16 %v1133, %v1129
      %v1646 = vpack.c.bf16 %v988, %v984
      %v1647 = vpack.c.bf16 %v990, %v986
      %v1648 = vpack.c.bf16 %v1141, %v1137
      %v1649 = vpack.c.bf16 %v1143, %v1139
      %v1666 = vunpack.c.l.b16 %v1634
      %v1667 = vunpack.c.l.b16 %v1635
      %v1668 = vunpack.c.l.b16 %v1636
      %v1669 = vunpack.c.l.b16 %v1637
      %v1670 = vunpack.c.h.b16 %v1634
      %v1671 = vunpack.c.h.b16 %v1635
      %v1672 = vunpack.c.h.b16 %v1636
      %v1673 = vunpack.c.h.b16 %v1637
      %v1674 = vunpack.c.l.b16 %v1638
      %v1675 = vunpack.c.l.b16 %v1639
      %v1676 = vunpack.c.l.b16 %v1640
      %v1677 = vunpack.c.l.b16 %v1641
      %v1678 = vunpack.c.h.b16 %v1638
      %v1679 = vunpack.c.h.b16 %v1639
      %v1680 = vunpack.c.h.b16 %v1640
      %v1681 = vunpack.c.h.b16 %v1641
      %v1682 = vunpack.c.l.b16 %v1642
      %v1683 = vunpack.c.l.b16 %v1643
      %v1684 = vunpack.c.l.b16 %v1644
      %v1685 = vunpack.c.l.b16 %v1645
      %v1686 = vunpack.c.h.b16 %v1642
      %v1687 = vunpack.c.h.b16 %v1643
      %v1688 = vunpack.c.h.b16 %v1644
      %v1689 = vunpack.c.h.b16 %v1645
      %v1690 = vunpack.c.l.b16 %v1646
      %v1691 = vunpack.c.l.b16 %v1647
      %v1692 = vunpack.c.l.b16 %v1648
      %v1693 = vunpack.c.l.b16 %v1649
      %v1694 = vunpack.c.h.b16 %v1646
      %v1695 = vunpack.c.h.b16 %v1647
      %v1696 = vunpack.c.h.b16 %v1648
      %v1697 = vunpack.c.h.b16 %v1649
      %v1698 = vpack.c.b16 %v1667, %v1666
      %v1699 = vpack.c.b16 %v1669, %v1668
      %v1700 = vpack.c.b16 %v1671, %v1670
      %v1701 = vpack.c.b16 %v1673, %v1672
      %v1702 = vpack.c.b16 %v1675, %v1674
      %v1703 = vpack.c.b16 %v1677, %v1676
      %v1704 = vpack.c.b16 %v1679, %v1678
      %v1705 = vpack.c.b16 %v1681, %v1680
      %v1706 = vpack.c.b16 %v1683, %v1682
      %v1707 = vpack.c.b16 %v1685, %v1684
      %v1708 = vpack.c.b16 %v1687, %v1686
      %v1709 = vpack.c.b16 %v1689, %v1688
      %v1710 = vpack.c.b16 %v1691, %v1690
      %v1711 = vpack.c.b16 %v1693, %v1692
      %v1712 = vpack.c.b16 %v1695, %v1694
      %v1713 = vpack.c.b16 %v1697, %v1696
      %1730 = vst [vmem:[%s393] sm:$0xff] %v1698
      %1731 = vst [vmem:[%s393 + $0x8] sm:$0xff] %v1699
      %1732 = vst [vmem:[%s393 + $0x10] sm:$0xff] %v1700
      %1733 = vst [vmem:[%s393 + $0x18] sm:$0xff] %v1701
      %1734 = vst [vmem:[%s393 + $0x20] sm:$0xff] %v1702
      %1735 = vst [vmem:[%s393 + $0x28] sm:$0xff] %v1703
      %1736 = vst [vmem:[%s393 + $0x30] sm:$0xff] %v1704
      %1737 = vst [vmem:[%s393 + $0x38] sm:$0xff] %v1705
      %1738 = vst [vmem:[%s393 + $0x40] sm:$0xff] %v1706
      %1739 = vst [vmem:[%s393 + $0x48] sm:$0xff] %v1707
      %1740 = vst [vmem:[%s393 + $0x50] sm:$0xff] %v1708
      %1741 = vst [vmem:[%s393 + $0x58] sm:$0xff] %v1709
      %1742 = vst [vmem:[%s393 + $0x60] sm:$0xff] %v1710
      %1743 = vst [vmem:[%s393 + $0x68] sm:$0xff] %v1711
      %1744 = vst [vmem:[%s393 + $0x70] sm:$0xff] %v1712
      %1745 = vst [vmem:[%s393 + $0x78] sm:$0xff] %v1713
      %v1746 = vpack.c.bf16 %v998, %v994
      %v1747 = vpack.c.bf16 %v1000, %v996
      %v1748 = vpack.c.bf16 %v1151, %v1147
      %v1749 = vpack.c.bf16 %v1153, %v1149
      %v1750 = vpack.c.bf16 %v1008, %v1004
      %v1751 = vpack.c.bf16 %v1010, %v1006
      %v1752 = vpack.c.bf16 %v1161, %v1157
      %v1753 = vpack.c.bf16 %v1163, %v1159
      %v1754 = vpack.c.bf16 %v1018, %v1014
      %v1755 = vpack.c.bf16 %v1020, %v1016
      %v1756 = vpack.c.bf16 %v1171, %v1167
      %v1757 = vpack.c.bf16 %v1173, %v1169
      %v1758 = vpack.c.bf16 %v1028, %v1024
      %v1759 = vpack.c.bf16 %v1030, %v1026
      %v1760 = vpack.c.bf16 %v1181, %v1177
      %v1761 = vpack.c.bf16 %v1183, %v1179
      %v1778 = vunpack.c.l.b16 %v1746
      %v1779 = vunpack.c.l.b16 %v1747
      %v1780 = vunpack.c.l.b16 %v1748
      %v1781 = vunpack.c.l.b16 %v1749
      %v1782 = vunpack.c.h.b16 %v1746
      %v1783 = vunpack.c.h.b16 %v1747
      %v1784 = vunpack.c.h.b16 %v1748
      %v1785 = vunpack.c.h.b16 %v1749
      %v1786 = vunpack.c.l.b16 %v1750
      %v1787 = vunpack.c.l.b16 %v1751
      %v1788 = vunpack.c.l.b16 %v1752
      %v1789 = vunpack.c.l.b16 %v1753
      %v1790 = vunpack.c.h.b16 %v1750
      %v1791 = vunpack.c.h.b16 %v1751
      %v1792 = vunpack.c.h.b16 %v1752
      %v1793 = vunpack.c.h.b16 %v1753
      %v1794 = vunpack.c.l.b16 %v1754
      %v1795 = vunpack.c.l.b16 %v1755
      %v1796 = vunpack.c.l.b16 %v1756
      %v1797 = vunpack.c.l.b16 %v1757
      %v1798 = vunpack.c.h.b16 %v1754
      %v1799 = vunpack.c.h.b16 %v1755
      %v1800 = vunpack.c.h.b16 %v1756
      %v1801 = vunpack.c.h.b16 %v1757
      %v1802 = vunpack.c.l.b16 %v1758
      %v1803 = vunpack.c.l.b16 %v1759
      %v1804 = vunpack.c.l.b16 %v1760
      %v1805 = vunpack.c.l.b16 %v1761
      %v1806 = vunpack.c.h.b16 %v1758
      %v1807 = vunpack.c.h.b16 %v1759
      %v1808 = vunpack.c.h.b16 %v1760
      %v1809 = vunpack.c.h.b16 %v1761
      %v1810 = vpack.c.b16 %v1779, %v1778
      %v1811 = vpack.c.b16 %v1781, %v1780
      %v1812 = vpack.c.b16 %v1783, %v1782
      %v1813 = vpack.c.b16 %v1785, %v1784
      %v1814 = vpack.c.b16 %v1787, %v1786
      %v1815 = vpack.c.b16 %v1789, %v1788
      %v1816 = vpack.c.b16 %v1791, %v1790
      %v1817 = vpack.c.b16 %v1793, %v1792
      %v1818 = vpack.c.b16 %v1795, %v1794
      %v1819 = vpack.c.b16 %v1797, %v1796
      %v1820 = vpack.c.b16 %v1799, %v1798
      %v1821 = vpack.c.b16 %v1801, %v1800
      %v1822 = vpack.c.b16 %v1803, %v1802
      %v1823 = vpack.c.b16 %v1805, %v1804
      %v1824 = vpack.c.b16 %v1807, %v1806
      %v1825 = vpack.c.b16 %v1809, %v1808
      %1842 = vst [vmem:[%s403] sm:$0xff] %v1810
      %1843 = vst [vmem:[%s403 + $0x8] sm:$0xff] %v1811
      %1844 = vst [vmem:[%s403 + $0x10] sm:$0xff] %v1812
      %1845 = vst [vmem:[%s403 + $0x18] sm:$0xff] %v1813
      %1846 = vst [vmem:[%s403 + $0x20] sm:$0xff] %v1814
      %1847 = vst [vmem:[%s403 + $0x28] sm:$0xff] %v1815
      %1848 = vst [vmem:[%s403 + $0x30] sm:$0xff] %v1816
      %1849 = vst [vmem:[%s403 + $0x38] sm:$0xff] %v1817
      %1850 = vst [vmem:[%s403 + $0x40] sm:$0xff] %v1818
      %1851 = vst [vmem:[%s403 + $0x48] sm:$0xff] %v1819
      %1852 = vst [vmem:[%s403 + $0x50] sm:$0xff] %v1820
      %1853 = vst [vmem:[%s403 + $0x58] sm:$0xff] %v1821
      %1854 = vst [vmem:[%s403 + $0x60] sm:$0xff] %v1822
      %1855 = vst [vmem:[%s403 + $0x68] sm:$0xff] %v1823
      %1856 = vst [vmem:[%s403 + $0x70] sm:$0xff] %v1824
      %1857 = vst [vmem:[%s403 + $0x78] sm:$0xff] %v1825
      %s1858 = smul.u32 64, %s24
      %p1859 = scmp.lt.s32.totalorder %s23, 1
      %s1860 = scalar_select %p1859, %s23, 1
      %p1861 = scmp.lt.s32.totalorder %s1858, 63
      %s1862 = scalar_select %p1861, %s1858, 63
      %s1863 = smul.addr %s1860, 64
      %s1864 = sadd.s32 %s1862, %s1863
      %s1865 = smul.addr %s1864, 4
      %s1866 = scalar_lea.vmem %s5, %s1865
      %s1867 = smul.u32 4, %s24
      %p1868 = scmp.lt.s32.totalorder %s23, 1
      %s1869 = scalar_select %p1868, %s23, 1
      %p1870 = scmp.lt.s32.totalorder %s1867, 3
      %s1871 = scalar_select %p1870, %s1867, 3
      %s1872 = smul.addr %s1869, 32
      %s1873 = sadd.s32 %s1871, %s1872
      %s1874 = smul.addr %s1873, 4
      %s1875 = scalar_lea.vmem %s6, %s1874
      %s1876 = smul.u32 4, %s24
      %p1877 = scmp.lt.s32.totalorder %s23, 1
      %s1878 = scalar_select %p1877, %s23, 1
      %p1879 = scmp.lt.s32.totalorder %s1876, 3
      %s1880 = scalar_select %p1879, %s1876, 3
      %s1881 = smul.addr %s1878, 32
      %s1882 = sadd.s32 %s1880, %s1881
      %s1883 = smul.addr %s1882, 4
      %s1884 = scalar_lea.vmem %s7, %s1883
      // Predicated region
      $region41: #{attn_block_pallas.4} parent=39 // pred_check
        %p1885 = pneg %p173
      $region42: #{attn_block_pallas.4} parent=39 // pred_check_branch
        %1887 = sbr.rel (%p1885) target = $region44
      $region43: #{attn_block_pallas.4} parent=39 // pred_region
        %s1888 = smul.u32 64, %s24
      $region44: #{attn_block_pallas.4} parent=39 // pred_fallthru
        _
      // Predicated region
      $region45: #{attn_block_pallas.4} parent=39 // pred_check
        %p1889 = pneg %p201
      $region46: #{attn_block_pallas.4} parent=39 // pred_check_branch
        %1891 = sbr.rel (%p1889) target = $region48
      $region47: #{attn_block_pallas.4} parent=39 // pred_region
        %s1892 = smul.u32 4, %s24
      $region48: #{attn_block_pallas.4} parent=39 // pred_fallthru
        _
      // Predicated region
      $region49: #{attn_block_pallas.4} parent=39 // pred_check
        %p1893 = pneg %p229
      $region50: #{attn_block_pallas.4} parent=39 // pred_check_branch
        %1895 = sbr.rel (%p1893) target = $region52
      $region51: #{attn_block_pallas.4} parent=39 // pred_region
        %s1896 = smul.u32 4, %s24
      $region52: #{attn_block_pallas.4} parent=39 // pred_fallthru
        _
    $region40: #{attn_block_pallas.4} parent=5 // pred_fallthru
      _
    %p1897 = scmp.le.s32.totalorder 2, %s14
    // Predicated region
    $region53: #{attn_block_pallas.4} parent=5 // pred_check
      %p1898 = pneg %p1897
    $region54: #{attn_block_pallas.4} parent=5 // pred_check_branch
      %1900 = sbr.rel (%p1898) target = $region56
    $region55: #{attn_block_pallas.4} parent=5 // pred_region
      %s1901 = ssub.s32 %s14, 2
      // Predicated region
      $region57: #{attn_block_pallas.4} parent=55 // pred_check
        %p1902 = pneg %p179
      $region58: #{attn_block_pallas.4} parent=55 // pred_check_branch
        %1904 = sbr.rel (%p1902) target = $region60
      $region59: #{attn_block_pallas.4} parent=55 // pred_region
        %s1905 = smul.u32 64, %s26
        %p1906 = scmp.lt.s32.totalorder %s25, 1
        %s1907 = scalar_select %p1906, %s25, 1
        %p1908 = scmp.lt.s32.totalorder %s1905, 63
        %s1909 = scalar_select %p1908, %s1905, 63
        %s1910 = smul.addr %s1907, 64
        %s1911 = sadd.s32 %s1909, %s1910
        %s1912 = smul.addr %s1911, 4
        %s1913 = scalar_lea.vmem %s5, %s1912
      $region60: #{attn_block_pallas.4} parent=55 // pred_fallthru
        _
      // Predicated region
      $region61: #{attn_block_pallas.4} parent=55 // pred_check
        %p1914 = pneg %p207
      $region62: #{attn_block_pallas.4} parent=55 // pred_check_branch
        %1916 = sbr.rel (%p1914) target = $region64
      $region63: #{attn_block_pallas.4} parent=55 // pred_region
        %s1917 = smul.u32 4, %s26
        %p1918 = scmp.lt.s32.totalorder %s25, 1
        %s1919 = scalar_select %p1918, %s25, 1
        %p1920 = scmp.lt.s32.totalorder %s1917, 3
        %s1921 = scalar_select %p1920, %s1917, 3
        %s1922 = smul.addr %s1919, 32
        %s1923 = sadd.s32 %s1921, %s1922
        %s1924 = smul.addr %s1923, 4
        %s1925 = scalar_lea.vmem %s6, %s1924
      $region64: #{attn_block_pallas.4} parent=55 // pred_fallthru
        _
      // Predicated region
      $region65: #{attn_block_pallas.4} parent=55 // pred_check
        %p1926 = pneg %p235
      $region66: #{attn_block_pallas.4} parent=55 // pred_check_branch
        %1928 = sbr.rel (%p1926) target = $region68
      $region67: #{attn_block_pallas.4} parent=55 // pred_region
        %s1929 = smul.u32 4, %s26
        %p1930 = scmp.lt.s32.totalorder %s25, 1
        %s1931 = scalar_select %p1930, %s25, 1
        %p1932 = scmp.lt.s32.totalorder %s1929, 3
        %s1933 = scalar_select %p1932, %s1929, 3
        %s1934 = smul.addr %s1931, 32
        %s1935 = sadd.s32 %s1933, %s1934
        %s1936 = smul.addr %s1935, 4
        %s1937 = scalar_lea.vmem %s7, %s1936
      $region68: #{attn_block_pallas.4} parent=55 // pred_fallthru
        _
    $region56: #{attn_block_pallas.4} parent=5 // pred_fallthru
      _
  $region6: #{attn_block_pallas.4} parent=0 // loop_footer
    %s18 = sadd.s32 1, %s14
  $region7: #{attn_block_pallas.4} parent=0 // loop_footer_branch
    %13 = sbr.rel target = $region3
  $region8: #{attn_block_pallas.4} parent=0 // loop_exit
    _

// kernel: attn_block_pallas.5
$region0: #{attn_block_pallas.5}
  #allocation0 [shape = 'u32[]', space=smem, size = 0x4, offset = 0x4, fixed_abs, tag = 'smem constant byte address 0x4 - core index']
  #allocation1 [shape = 'u32[144,128]{1,0:T(1,128)}', space=vmem, size = 0x12000, scoped, tag = 'internal scratch']
  #allocation2 [shape = 'f32[512,1]{1,0:T(8,128)}', space=vmem, size = 0x40000, scoped, tag = 'scratch operand']
  #allocation3 [shape = 'f32[512,1]{1,0:T(8,128)}', space=vmem, size = 0x40000, scoped, tag = 'scratch operand']
  #allocation4 [shape = 'f32[512,64]{1,0:T(8,128)}', space=vmem, size = 0x40000, scoped, tag = 'scratch operand']
  %s0 = inlined_call_operand.vmem [shape: bf16[2,512,64], index: 0, kind: input, shape index: {}]
  %s1 = inlined_call_operand.vmem [shape: bf16[2,64,512], index: 1, kind: input, shape index: {}]
  %s2 = inlined_call_operand.vmem [shape: bf16[2,64,512], index: 2, kind: input, shape index: {}]
  %s3 = inlined_call_operand.vmem [shape: f32[2,64,512], index: 3, kind: input, shape index: {}]
  %s4 = inlined_call_operand.vmem [shape: bf16[64,64], index: 4, kind: input, shape index: {}]
  %s5 = inlined_call_operand.vmem [shape: f32[64,1], index: 5, kind: input, shape index: {}]
  %s6 = inlined_call_operand.vmem [shape: f32[2,64,512], index: 6, kind: output, shape index: {}]
  %s7 = sld [smem:[#allocation0]]
  $region65: #{attn_block_pallas.5} parent=0
    _
  %s9 = ssub.s32 1, %s7
  %s10 = scalar_select 0, %s9, %s7
  loop: start=0, step=1, limit=4
  $region2: #{attn_block_pallas.5} parent=0 // loop_pre_header
    _
  $region3: #{attn_block_pallas.5} parent=0 // loop_header
    %s12 = sphi 0, %s16
    %p13 = scmp.ge.s32.totalorder %s12, 4
    %s19 = sphi 0, %s38
    %s20 = sphi 0, %s34
    %s21 = sphi 0, %s30
    %s22 = sphi 0, %s19
    %s23 = sphi 0, %s20
    %s24 = sphi 0, %s21
    %s25 = sphi 0, %s22
    %s26 = sphi 0, %s23
    %s27 = sphi 0, %s24
    %s43 = sphi 0, %s45
    %s46 = sphi 0, %s43
    %s47 = sphi 0, %s46
    %s63 = sphi 0, %s47
    %s71 = sphi 0, %s73
    %s74 = sphi 0, %s71
    %s75 = sphi 0, %s74
    %s91 = sphi 0, %s75
    %s99 = sphi 0, %s101
    %s102 = sphi 0, %s99
    %s103 = sphi 0, %s102
    %s119 = sphi 0, %s103
    %s127 = sphi 0, %s129
    %s130 = sphi 0, %s127
    %s131 = sphi 0, %s130
    %s147 = sphi 0, %s131
    %s151 = sphi 0, %s151
    %s153 = sphi 0, %s151
    %s154 = sphi 0, %s153
    %s168 = sphi 0, %s154
    %s172 = sphi 0, %s172
    %s174 = sphi 0, %s172
    %s175 = sphi 0, %s174
    %s189 = sphi 0, %s175
    %s197 = sphi 0, %s199
    %s200 = sphi 0, %s197
    %s201 = sphi 0, %s200
    %s217 = sphi 0, %s201
  $region4: #{attn_block_pallas.5} parent=0 // loop_header_branch
    %15 = sbr.rel (%p13) target = $region8
  $region5: #{attn_block_pallas.5} parent=0 // loop_body
    %s17 = ssub.s32 %s12, 1
    %s18 = ssub.s32 %s12, 2
    %s28 = sadd.s32 1, %s21
    %p29 = scmp.ge.s32.totalorder %s28, 1
    %s30 = scalar_select %p29, 0, %s28
    %s31 = sadd.s32 1, %s20
    %s32 = scalar_select %p29, %s31, %s20
    %p33 = scmp.ge.s32.totalorder %s32, 1
    %s34 = scalar_select %p33, 0, %s32
    %s35 = sadd.s32 1, %s19
    %s36 = scalar_select %p33, %s35, %s19
    %p37 = scmp.ge.s32.totalorder %s36, 2
    %s38 = scalar_select %p37, 0, %s36
    %s39 = ssub.s32 %s19, %s38
    %s40 = ssub.s32 %s20, %s34
    %s41 = sor.u32 %s39, %s40
    %p42 = scmp.eq.s32.totalorder %s41, 0
    %s44 = sadd.s32 %s43, 1
    %s45 = scalar_select %p42, %s43, %s44
    %p48 = pneg %p42
    %p49 = scmp.eq.s32.totalorder %s12, 1
    %p50 = por %p48, %p49
    %p51 = scmp.ne.s32.totalorder %s43, %s46
    %p52 = scmp.eq.s32.totalorder %s12, 0
    %p53 = por %p51, %p52
    %p54 = scmp.ne.s32.totalorder %s43, %s46
    %p55 = scmp.eq.s32.totalorder %s17, 1
    %p56 = por %p54, %p55
    %p57 = scmp.ne.s32.totalorder %s46, %s47
    %p58 = scmp.eq.s32.totalorder %s17, 0
    %p59 = por %p57, %p58
    %p60 = scmp.ne.s32.totalorder %s46, %s47
    %p61 = scmp.eq.s32.totalorder %s18, 1
    %p62 = por %p60, %p61
    %p64 = scmp.ne.s32.totalorder %s47, %s63
    %p65 = scmp.eq.s32.totalorder %s18, 0
    %p66 = por %p64, %p65
    %s67 = ssub.s32 %s19, %s38
    %s68 = ssub.s32 %s21, %s30
    %s69 = sor.u32 %s67, %s68
    %p70 = scmp.eq.s32.totalorder %s69, 0
    %s72 = sadd.s32 %s71, 1
    %s73 = scalar_select %p70, %s71, %s72
    %p76 = pneg %p70
    %p77 = scmp.eq.s32.totalorder %s12, 1
    %p78 = por %p76, %p77
    %p79 = scmp.ne.s32.totalorder %s71, %s74
    %p80 = scmp.eq.s32.totalorder %s12, 0
    %p81 = por %p79, %p80
    %p82 = scmp.ne.s32.totalorder %s71, %s74
    %p83 = scmp.eq.s32.totalorder %s17, 1
    %p84 = por %p82, %p83
    %p85 = scmp.ne.s32.totalorder %s74, %s75
    %p86 = scmp.eq.s32.totalorder %s17, 0
    %p87 = por %p85, %p86
    %p88 = scmp.ne.s32.totalorder %s74, %s75
    %p89 = scmp.eq.s32.totalorder %s18, 1
    %p90 = por %p88, %p89
    %p92 = scmp.ne.s32.totalorder %s75, %s91
    %p93 = scmp.eq.s32.totalorder %s18, 0
    %p94 = por %p92, %p93
    %s95 = ssub.s32 %s19, %s38
    %s96 = ssub.s32 %s21, %s30
    %s97 = sor.u32 %s95, %s96
    %p98 = scmp.eq.s32.totalorder %s97, 0
    %s100 = sadd.s32 %s99, 1
    %s101 = scalar_select %p98, %s99, %s100
    %p104 = pneg %p98
    %p105 = scmp.eq.s32.totalorder %s12, 1
    %p106 = por %p104, %p105
    %p107 = scmp.ne.s32.totalorder %s99, %s102
    %p108 = scmp.eq.s32.totalorder %s12, 0
    %p109 = por %p107, %p108
    %p110 = scmp.ne.s32.totalorder %s99, %s102
    %p111 = scmp.eq.s32.totalorder %s17, 1
    %p112 = por %p110, %p111
    %p113 = scmp.ne.s32.totalorder %s102, %s103
    %p114 = scmp.eq.s32.totalorder %s17, 0
    %p115 = por %p113, %p114
    %p116 = scmp.ne.s32.totalorder %s102, %s103
    %p117 = scmp.eq.s32.totalorder %s18, 1
    %p118 = por %p116, %p117
    %p120 = scmp.ne.s32.totalorder %s103, %s119
    %p121 = scmp.eq.s32.totalorder %s18, 0
    %p122 = por %p120, %p121
    %s123 = ssub.s32 %s19, %s38
    %s124 = ssub.s32 %s20, %s34
    %s125 = sor.u32 %s123, %s124
    %p126 = scmp.eq.s32.totalorder %s125, 0
    %s128 = sadd.s32 %s127, 1
    %s129 = scalar_select %p126, %s127, %s128
    %p132 = pneg %p126
    %p133 = scmp.eq.s32.totalorder %s12, 1
    %p134 = por %p132, %p133
    %p135 = scmp.ne.s32.totalorder %s127, %s130
    %p136 = scmp.eq.s32.totalorder %s12, 0
    %p137 = por %p135, %p136
    %p138 = scmp.ne.s32.totalorder %s127, %s130
    %p139 = scmp.eq.s32.totalorder %s17, 1
    %p140 = por %p138, %p139
    %p141 = scmp.ne.s32.totalorder %s130, %s131
    %p142 = scmp.eq.s32.totalorder %s17, 0
    %p143 = por %p141, %p142
    %p144 = scmp.ne.s32.totalorder %s130, %s131
    %p145 = scmp.eq.s32.totalorder %s18, 1
    %p146 = por %p144, %p145
    %p148 = scmp.ne.s32.totalorder %s131, %s147
    %p149 = scmp.eq.s32.totalorder %s18, 0
    %p150 = por %p148, %p149
    %s152 = sadd.s32 %s151, 1
    %p155 = scmp.eq.s32.totalorder %s12, 1
    %p156 = scmp.ne.s32.totalorder %s151, %s153
    %p157 = scmp.eq.s32.totalorder %s12, 0
    %p158 = por %p156, %p157
    %p159 = scmp.ne.s32.totalorder %s151, %s153
    %p160 = scmp.eq.s32.totalorder %s17, 1
    %p161 = por %p159, %p160
    %p162 = scmp.ne.s32.totalorder %s153, %s154
    %p163 = scmp.eq.s32.totalorder %s17, 0
    %p164 = por %p162, %p163
    %p165 = scmp.ne.s32.totalorder %s153, %s154
    %p166 = scmp.eq.s32.totalorder %s18, 1
    %p167 = por %p165, %p166
    %p169 = scmp.ne.s32.totalorder %s154, %s168
    %p170 = scmp.eq.s32.totalorder %s18, 0
    %p171 = por %p169, %p170
    %s173 = sadd.s32 %s172, 1
    %p176 = scmp.eq.s32.totalorder %s12, 1
    %p177 = scmp.ne.s32.totalorder %s172, %s174
    %p178 = scmp.eq.s32.totalorder %s12, 0
    %p179 = por %p177, %p178
    %p180 = scmp.ne.s32.totalorder %s172, %s174
    %p181 = scmp.eq.s32.totalorder %s17, 1
    %p182 = por %p180, %p181
    %p183 = scmp.ne.s32.totalorder %s174, %s175
    %p184 = scmp.eq.s32.totalorder %s17, 0
    %p185 = por %p183, %p184
    %p186 = scmp.ne.s32.totalorder %s174, %s175
    %p187 = scmp.eq.s32.totalorder %s18, 1
    %p188 = por %p186, %p187
    %p190 = scmp.ne.s32.totalorder %s175, %s189
    %p191 = scmp.eq.s32.totalorder %s18, 0
    %p192 = por %p190, %p191
    %s193 = ssub.s32 %s19, %s38
    %s194 = ssub.s32 %s20, %s34
    %s195 = sor.u32 %s193, %s194
    %p196 = scmp.eq.s32.totalorder %s195, 0
    %s198 = sadd.s32 %s197, 1
    %s199 = scalar_select %p196, %s197, %s198
    %p202 = pneg %p196
    %p203 = scmp.eq.s32.totalorder %s12, 1
    %p204 = por %p202, %p203
    %p205 = scmp.ne.s32.totalorder %s197, %s200
    %p206 = scmp.eq.s32.totalorder %s12, 0
    %p207 = por %p205, %p206
    %p208 = scmp.ne.s32.totalorder %s197, %s200
    %p209 = scmp.eq.s32.totalorder %s17, 1
    %p210 = por %p208, %p209
    %p211 = scmp.ne.s32.totalorder %s200, %s201
    %p212 = scmp.eq.s32.totalorder %s17, 0
    %p213 = por %p211, %p212
    %p214 = scmp.ne.s32.totalorder %s200, %s201
    %p215 = scmp.eq.s32.totalorder %s18, 1
    %p216 = por %p214, %p215
    %p218 = scmp.ne.s32.totalorder %s201, %s217
    %p219 = scmp.eq.s32.totalorder %s18, 0
    %p220 = por %p218, %p219
    %p221 = scmp.le.s32.totalorder 1, %s12
    %p222 = scmp.lt.s32.totalorder %s12, 3
    %p223 = pnand %p221, %p222
    %p224 = pneg %p223
    // Predicated region
    $region9: #{attn_block_pallas.5} parent=5 // pred_check
      _
    $region10: #{attn_block_pallas.5} parent=5 // pred_check_branch
      %226 = sbr.rel (%p223) target = $region12
    $region11: #{attn_block_pallas.5} parent=5 // pred_region
      %s227 = ssub.s32 %s12, 1
      // Predicated region
      $region13: #{attn_block_pallas.5} parent=11 // pred_check
        %p228 = pneg %p164
      $region14: #{attn_block_pallas.5} parent=11 // pred_check_branch
        %230 = sbr.rel (%p228) target = $region16
      $region15: #{attn_block_pallas.5} parent=11 // pred_region
        _
      $region16: #{attn_block_pallas.5} parent=11 // pred_fallthru
        _
      // Predicated region
      $region17: #{attn_block_pallas.5} parent=11 // pred_check
        %p231 = pneg %p185
      $region18: #{attn_block_pallas.5} parent=11 // pred_check_branch
        %233 = sbr.rel (%p231) target = $region20
      $region19: #{attn_block_pallas.5} parent=11 // pred_region
        _
      $region20: #{attn_block_pallas.5} parent=11 // pred_fallthru
        _
    $region12: #{attn_block_pallas.5} parent=5 // pred_fallthru
      _
    %p234 = scmp.lt.s32.totalorder %s12, 2
    // Predicated region
    $region21: #{attn_block_pallas.5} parent=5 // pred_check
      %p235 = pneg %p234
    $region22: #{attn_block_pallas.5} parent=5 // pred_check_branch
      %237 = sbr.rel (%p235) target = $region24
    $region23: #{attn_block_pallas.5} parent=5 // pred_region
      // Predicated region
      $region25: #{attn_block_pallas.5} parent=23 // pred_check
        %p238 = pneg %p53
      $region26: #{attn_block_pallas.5} parent=23 // pred_check_branch
        %240 = sbr.rel (%p238) target = $region28
      $region27: #{attn_block_pallas.5} parent=23 // pred_region
        %s241 = smul.u32 64, %s20
        %p242 = scmp.lt.s32.totalorder %s19, 1
        %s243 = scalar_select %p242, %s19, 1
        %p244 = scmp.lt.s32.totalorder %s241, 63
        %s245 = scalar_select %p244, %s241, 63
        %s246 = smul.addr %s243, 64
        %s247 = sadd.s32 %s245, %s246
        %s248 = smul.addr %s247, 4
        %s249 = scalar_lea.vmem %s0, %s248
        %s250 = smul.u32 64, %s20
      $region28: #{attn_block_pallas.5} parent=23 // pred_fallthru
        _
      // Predicated region
      $region29: #{attn_block_pallas.5} parent=23 // pred_check
        %p251 = pneg %p81
      $region30: #{attn_block_pallas.5} parent=23 // pred_check_branch
        %253 = sbr.rel (%p251) target = $region32
      $region31: #{attn_block_pallas.5} parent=23 // pred_region
        %s254 = smul.u32 4, %s21
        %p255 = scmp.lt.s32.totalorder %s19, 1
        %s256 = scalar_select %p255, %s19, 1
        %p257 = scmp.lt.s32.totalorder %s254, 3
        %s258 = scalar_select %p257, %s254, 3
        %s259 = smul.addr %s256, 32
        %s260 = sadd.s32 %s258, %s259
        %s261 = smul.addr %s260, 4
        %s262 = scalar_lea.vmem %s1, %s261
        %s263 = smul.u32 4, %s21
      $region32: #{attn_block_pallas.5} parent=23 // pred_fallthru
        _
      // Predicated region
      $region33: #{attn_block_pallas.5} parent=23 // pred_check
        %p264 = pneg %p109
      $region34: #{attn_block_pallas.5} parent=23 // pred_check_branch
        %266 = sbr.rel (%p264) target = $region36
      $region35: #{attn_block_pallas.5} parent=23 // pred_region
        %s267 = smul.u32 4, %s21
        %p268 = scmp.lt.s32.totalorder %s19, 1
        %s269 = scalar_select %p268, %s19, 1
        %p270 = scmp.lt.s32.totalorder %s267, 3
        %s271 = scalar_select %p270, %s267, 3
        %s272 = smul.addr %s269, 32
        %s273 = sadd.s32 %s271, %s272
        %s274 = smul.addr %s273, 4
        %s275 = scalar_lea.vmem %s2, %s274
        %s276 = smul.u32 4, %s21
      $region36: #{attn_block_pallas.5} parent=23 // pred_fallthru
        _
      // Predicated region
      $region37: #{attn_block_pallas.5} parent=23 // pred_check
        %p277 = pneg %p137
      $region38: #{attn_block_pallas.5} parent=23 // pred_check_branch
        %279 = sbr.rel (%p277) target = $region40
      $region39: #{attn_block_pallas.5} parent=23 // pred_region
        %s280 = smul.u32 4, %s20
        %p281 = scmp.lt.s32.totalorder %s19, 1
        %s282 = scalar_select %p281, %s19, 1
        %p283 = scmp.lt.s32.totalorder %s280, 3
        %s284 = scalar_select %p283, %s280, 3
        %s285 = smul.addr %s282, 32
        %s286 = sadd.s32 %s284, %s285
        %s287 = smul.addr %s286, 8
        %s288 = scalar_lea.vmem %s3, %s287
        %s289 = smul.u32 4, %s20
      $region40: #{attn_block_pallas.5} parent=23 // pred_fallthru
        _
    $region24: #{attn_block_pallas.5} parent=5 // pred_fallthru
      _
    %p290 = scmp.le.s32.totalorder 1, %s12
    %p291 = scmp.lt.s32.totalorder %s12, 3
    %p292 = pnand %p290, %p291
    %p293 = pneg %p292
    // Predicated region
    $region41: #{attn_block_pallas.5} parent=5 // pred_check
      _
    $region42: #{attn_block_pallas.5} parent=5 // pred_check_branch
      %295 = sbr.rel (%p292) target = $region44
    $region43: #{attn_block_pallas.5} parent=5 // pred_region
      %s296 = ssub.s32 %s12, 1
      %s297 = smul.u32 64, %s23
      %p298 = scmp.lt.s32.totalorder %s22, 1
      %s299 = scalar_select %p298, %s22, 1
      %p300 = scmp.lt.s32.totalorder %s297, 63
      %s301 = scalar_select %p300, %s297, 63
      %s302 = smul.addr %s299, 64
      %s303 = sadd.s32 %s301, %s302
      %s304 = smul.addr %s303, 4
      %s305 = scalar_lea.vmem %s0, %s304
      %p306 = pneg %p59
      %p307 = pneg %p56
      %s308 = smul.u32 4, %s24
      %p309 = scmp.lt.s32.totalorder %s22, 1
      %s310 = scalar_select %p309, %s22, 1
      %p311 = scmp.lt.s32.totalorder %s308, 3
      %s312 = scalar_select %p311, %s308, 3
      %s313 = smul.addr %s310, 32
      %s314 = sadd.s32 %s312, %s313
      %s315 = smul.addr %s314, 4
      %s316 = scalar_lea.vmem %s1, %s315
      %p317 = pneg %p87
      %p318 = pneg %p84
      %s319 = smul.u32 4, %s24
      %p320 = scmp.lt.s32.totalorder %s22, 1
      %s321 = scalar_select %p320, %s22, 1
      %p322 = scmp.lt.s32.totalorder %s319, 3
      %s323 = scalar_select %p322, %s319, 3
      %s324 = smul.addr %s321, 32
      %s325 = sadd.s32 %s323, %s324
      %s326 = smul.addr %s325, 4
      %s327 = scalar_lea.vmem %s2, %s326
      %p328 = pneg %p115
      %p329 = pneg %p112
      %s330 = smul.u32 4, %s23
      %p331 = scmp.lt.s32.totalorder %s22, 1
      %s332 = scalar_select %p331, %s22, 1
      %p333 = scmp.lt.s32.totalorder %s330, 3
      %s334 = scalar_select %p333, %s330, 3
      %s335 = smul.addr %s332, 32
      %s336 = sadd.s32 %s334, %s335
      %s337 = smul.addr %s336, 8
      %s338 = scalar_lea.vmem %s3, %s337
      %p339 = pneg %p143
      %p340 = pneg %p140
      %p341 = pneg %p164
      %p342 = pneg %p161
      %p343 = pneg %p185
      %p344 = pneg %p182
      %p345 = pneg %p213
      %p346 = pneg %p210
      %s347 = smul.u32 4, %s23
      %p348 = scmp.lt.s32.totalorder %s22, 1
      %s349 = scalar_select %p348, %s22, 1
      %p350 = scmp.lt.s32.totalorder %s347, 3
      %s351 = scalar_select %p350, %s347, 3
      %s352 = smul.addr %s349, 32
      %s353 = sadd.s32 %s351, %s352
      %s354 = smul.addr %s353, 8
      %s355 = scalar_lea.vmem %s6, %s354
      %s356 = smul.u32 64, %s23
      %p357 = scmp.lt.s32.totalorder %s22, 1
      %s358 = scalar_select %p357, %s22, 1
      %p359 = scmp.lt.s32.totalorder %s356, 63
      %s360 = scalar_select %p359, %s356, 63
      %s361 = smul.addr %s358, 64
      %s362 = sadd.s32 %s360, %s361
      %s363 = smul.addr %s362, 4
      %s364 = scalar_lea.vmem %s0, %s363
      %s365 = smul.u32 64, %s23
      %s366 = smul.u32 4, %s24
      %p367 = scmp.lt.s32.totalorder %s22, 1
      %s368 = scalar_select %p367, %s22, 1
      %p369 = scmp.lt.s32.totalorder %s366, 3
      %s370 = scalar_select %p369, %s366, 3
      %s371 = smul.addr %s368, 32
      %s372 = sadd.s32 %s370, %s371
      %s373 = smul.addr %s372, 4
      %s374 = scalar_lea.vmem %s1, %s373
      %s375 = smul.u32 4, %s24
      %s376 = smul.u32 4, %s24
      %p377 = scmp.lt.s32.totalorder %s22, 1
      %s378 = scalar_select %p377, %s22, 1
      %p379 = scmp.lt.s32.totalorder %s376, 3
      %s380 = scalar_select %p379, %s376, 3
      %s381 = smul.addr %s378, 32
      %s382 = sadd.s32 %s380, %s381
      %s383 = smul.addr %s382, 4
      %s384 = scalar_lea.vmem %s2, %s383
      %s385 = smul.u32 4, %s24
      %s386 = smul.u32 4, %s23
      %p387 = scmp.lt.s32.totalorder %s22, 1
      %s388 = scalar_select %p387, %s22, 1
      %p389 = scmp.lt.s32.totalorder %s386, 3
      %s390 = scalar_select %p389, %s386, 3
      %s391 = smul.addr %s388, 32
      %s392 = sadd.s32 %s390, %s391
      %s393 = smul.addr %s392, 8
      %s394 = scalar_lea.vmem %s3, %s393
      %s395 = smul.u32 4, %s23
      %s396 = smul.u32 4, %s23
      %p397 = scmp.lt.s32.totalorder %s22, 1
      %s398 = scalar_select %p397, %s22, 1
      %p399 = scmp.lt.s32.totalorder %s396, 3
      %s400 = scalar_select %p399, %s396, 3
      %s401 = smul.addr %s398, 32
      %s402 = sadd.s32 %s400, %s401
      %s403 = smul.addr %s402, 8
      %s404 = scalar_lea.vmem %s6, %s403
      %s405 = smul.u32 4, %s23
      %p407 = scmp.eq.s32.totalorder %s24, 0
      // Predicated region
      $region45: #{attn_block_pallas.5} parent=43 // pred_check
        %p408 = pneg %p407
      $region46: #{attn_block_pallas.5} parent=43 // pred_check_branch
        %410 = sbr.rel (%p408) target = $region48
      $region47: #{attn_block_pallas.5} parent=43 // pred_region
        %vm411 = vcmask 7168
        %412 = vst.msk [vmem:[#allocation2] sm:$0xff] %vm411, -inf
        %413 = vst.msk [vmem:[#allocation2 + $0x8] sm:$0xff] %vm411, -inf
        %414 = vst.msk [vmem:[#allocation2 + $0x10] sm:$0xff] %vm411, -inf
        %415 = vst.msk [vmem:[#allocation2 + $0x18] sm:$0xff] %vm411, -inf
        %416 = vst.msk [vmem:[#allocation2 + $0x20] sm:$0xff] %vm411, -inf
        %417 = vst.msk [vmem:[#allocation2 + $0x28] sm:$0xff] %vm411, -inf
        %418 = vst.msk [vmem:[#allocation2 + $0x30] sm:$0xff] %vm411, -inf
        %419 = vst.msk [vmem:[#allocation2 + $0x38] sm:$0xff] %vm411, -inf
        %420 = vst.msk [vmem:[#allocation2 + $0x40] sm:$0xff] %vm411, -inf
        %421 = vst.msk [vmem:[#allocation2 + $0x48] sm:$0xff] %vm411, -inf
        %422 = vst.msk [vmem:[#allocation2 + $0x50] sm:$0xff] %vm411, -inf
        %423 = vst.msk [vmem:[#allocation2 + $0x58] sm:$0xff] %vm411, -inf
        %424 = vst.msk [vmem:[#allocation2 + $0x60] sm:$0xff] %vm411, -inf
        %425 = vst.msk [vmem:[#allocation2 + $0x68] sm:$0xff] %vm411, -inf
        %426 = vst.msk [vmem:[#allocation2 + $0x70] sm:$0xff] %vm411, -inf
        %427 = vst.msk [vmem:[#allocation2 + $0x78] sm:$0xff] %vm411, -inf
        %428 = vst.msk [vmem:[#allocation2 + $0x80] sm:$0xff] %vm411, -inf
        %429 = vst.msk [vmem:[#allocation2 + $0x88] sm:$0xff] %vm411, -inf
        %430 = vst.msk [vmem:[#allocation2 + $0x90] sm:$0xff] %vm411, -inf
        %431 = vst.msk [vmem:[#allocation2 + $0x98] sm:$0xff] %vm411, -inf
        %432 = vst.msk [vmem:[#allocation2 + $0xa0] sm:$0xff] %vm411, -inf
        %433 = vst.msk [vmem:[#allocation2 + $0xa8] sm:$0xff] %vm411, -inf
        %434 = vst.msk [vmem:[#allocation2 + $0xb0] sm:$0xff] %vm411, -inf
        %435 = vst.msk [vmem:[#allocation2 + $0xb8] sm:$0xff] %vm411, -inf
        %436 = vst.msk [vmem:[#allocation2 + $0xc0] sm:$0xff] %vm411, -inf
        %437 = vst.msk [vmem:[#allocation2 + $0xc8] sm:$0xff] %vm411, -inf
        %438 = vst.msk [vmem:[#allocation2 + $0xd0] sm:$0xff] %vm411, -inf
        %439 = vst.msk [vmem:[#allocation2 + $0xd8] sm:$0xff] %vm411, -inf
        %440 = vst.msk [vmem:[#allocation2 + $0xe0] sm:$0xff] %vm411, -inf
        %441 = vst.msk [vmem:[#allocation2 + $0xe8] sm:$0xff] %vm411, -inf
        %442 = vst.msk [vmem:[#allocation2 + $0xf0] sm:$0xff] %vm411, -inf
        %443 = vst.msk [vmem:[#allocation2 + $0xf8] sm:$0xff] %vm411, -inf
        %444 = vst.msk [vmem:[#allocation2 + $0x100] sm:$0xff] %vm411, -inf
        %445 = vst.msk [vmem:[#allocation2 + $0x108] sm:$0xff] %vm411, -inf
        %446 = vst.msk [vmem:[#allocation2 + $0x110] sm:$0xff] %vm411, -inf
        %447 = vst.msk [vmem:[#allocation2 + $0x118] sm:$0xff] %vm411, -inf
        %448 = vst.msk [vmem:[#allocation2 + $0x120] sm:$0xff] %vm411, -inf
        %449 = vst.msk [vmem:[#allocation2 + $0x128] sm:$0xff] %vm411, -inf
        %450 = vst.msk [vmem:[#allocation2 + $0x130] sm:$0xff] %vm411, -inf
        %451 = vst.msk [vmem:[#allocation2 + $0x138] sm:$0xff] %vm411, -inf
        %452 = vst.msk [vmem:[#allocation2 + $0x140] sm:$0xff] %vm411, -inf
        %453 = vst.msk [vmem:[#allocation2 + $0x148] sm:$0xff] %vm411, -inf
        %454 = vst.msk [vmem:[#allocation2 + $0x150] sm:$0xff] %vm411, -inf
        %455 = vst.msk [vmem:[#allocation2 + $0x158] sm:$0xff] %vm411, -inf
        %456 = vst.msk [vmem:[#allocation2 + $0x160] sm:$0xff] %vm411, -inf
        %457 = vst.msk [vmem:[#allocation2 + $0x168] sm:$0xff] %vm411, -inf
        %458 = vst.msk [vmem:[#allocation2 + $0x170] sm:$0xff] %vm411, -inf
        %459 = vst.msk [vmem:[#allocation2 + $0x178] sm:$0xff] %vm411, -inf
        %460 = vst.msk [vmem:[#allocation2 + $0x180] sm:$0xff] %vm411, -inf
        %461 = vst.msk [vmem:[#allocation2 + $0x188] sm:$0xff] %vm411, -inf
        %462 = vst.msk [vmem:[#allocation2 + $0x190] sm:$0xff] %vm411, -inf
        %463 = vst.msk [vmem:[#allocation2 + $0x198] sm:$0xff] %vm411, -inf
        %464 = vst.msk [vmem:[#allocation2 + $0x1a0] sm:$0xff] %vm411, -inf
        %465 = vst.msk [vmem:[#allocation2 + $0x1a8] sm:$0xff] %vm411, -inf
        %466 = vst.msk [vmem:[#allocation2 + $0x1b0] sm:$0xff] %vm411, -inf
        %467 = vst.msk [vmem:[#allocation2 + $0x1b8] sm:$0xff] %vm411, -inf
        %468 = vst.msk [vmem:[#allocation2 + $0x1c0] sm:$0xff] %vm411, -inf
        %469 = vst.msk [vmem:[#allocation2 + $0x1c8] sm:$0xff] %vm411, -inf
        %470 = vst.msk [vmem:[#allocation2 + $0x1d0] sm:$0xff] %vm411, -inf
        %471 = vst.msk [vmem:[#allocation2 + $0x1d8] sm:$0xff] %vm411, -inf
        %472 = vst.msk [vmem:[#allocation2 + $0x1e0] sm:$0xff] %vm411, -inf
        %473 = vst.msk [vmem:[#allocation2 + $0x1e8] sm:$0xff] %vm411, -inf
        %474 = vst.msk [vmem:[#allocation2 + $0x1f0] sm:$0xff] %vm411, -inf
        %475 = vst.msk [vmem:[#allocation2 + $0x1f8] sm:$0xff] %vm411, -inf
        %476 = vst.msk [vmem:[#allocation3] sm:$0xff] %vm411, 0.0
        %477 = vst.msk [vmem:[#allocation3 + $0x8] sm:$0xff] %vm411, 0.0
        %478 = vst.msk [vmem:[#allocation3 + $0x10] sm:$0xff] %vm411, 0.0
        %479 = vst.msk [vmem:[#allocation3 + $0x18] sm:$0xff] %vm411, 0.0
        %480 = vst.msk [vmem:[#allocation3 + $0x20] sm:$0xff] %vm411, 0.0
        %481 = vst.msk [vmem:[#allocation3 + $0x28] sm:$0xff] %vm411, 0.0
        %482 = vst.msk [vmem:[#allocation3 + $0x30] sm:$0xff] %vm411, 0.0
        %483 = vst.msk [vmem:[#allocation3 + $0x38] sm:$0xff] %vm411, 0.0
        %484 = vst.msk [vmem:[#allocation3 + $0x40] sm:$0xff] %vm411, 0.0
        %485 = vst.msk [vmem:[#allocation3 + $0x48] sm:$0xff] %vm411, 0.0
        %486 = vst.msk [vmem:[#allocation3 + $0x50] sm:$0xff] %vm411, 0.0
        %487 = vst.msk [vmem:[#allocation3 + $0x58] sm:$0xff] %vm411, 0.0
        %488 = vst.msk [vmem:[#allocation3 + $0x60] sm:$0xff] %vm411, 0.0
        %489 = vst.msk [vmem:[#allocation3 + $0x68] sm:$0xff] %vm411, 0.0
        %490 = vst.msk [vmem:[#allocation3 + $0x70] sm:$0xff] %vm411, 0.0
        %491 = vst.msk [vmem:[#allocation3 + $0x78] sm:$0xff] %vm411, 0.0
        %492 = vst.msk [vmem:[#allocation3 + $0x80] sm:$0xff] %vm411, 0.0
        %493 = vst.msk [vmem:[#allocation3 + $0x88] sm:$0xff] %vm411, 0.0
        %494 = vst.msk [vmem:[#allocation3 + $0x90] sm:$0xff] %vm411, 0.0
        %495 = vst.msk [vmem:[#allocation3 + $0x98] sm:$0xff] %vm411, 0.0
        %496 = vst.msk [vmem:[#allocation3 + $0xa0] sm:$0xff] %vm411, 0.0
        %497 = vst.msk [vmem:[#allocation3 + $0xa8] sm:$0xff] %vm411, 0.0
        %498 = vst.msk [vmem:[#allocation3 + $0xb0] sm:$0xff] %vm411, 0.0
        %499 = vst.msk [vmem:[#allocation3 + $0xb8] sm:$0xff] %vm411, 0.0
        %500 = vst.msk [vmem:[#allocation3 + $0xc0] sm:$0xff] %vm411, 0.0
        %501 = vst.msk [vmem:[#allocation3 + $0xc8] sm:$0xff] %vm411, 0.0
        %502 = vst.msk [vmem:[#allocation3 + $0xd0] sm:$0xff] %vm411, 0.0
        %503 = vst.msk [vmem:[#allocation3 + $0xd8] sm:$0xff] %vm411, 0.0
        %504 = vst.msk [vmem:[#allocation3 + $0xe0] sm:$0xff] %vm411, 0.0
        %505 = vst.msk [vmem:[#allocation3 + $0xe8] sm:$0xff] %vm411, 0.0
        %506 = vst.msk [vmem:[#allocation3 + $0xf0] sm:$0xff] %vm411, 0.0
        %507 = vst.msk [vmem:[#allocation3 + $0xf8] sm:$0xff] %vm411, 0.0
        %508 = vst.msk [vmem:[#allocation3 + $0x100] sm:$0xff] %vm411, 0.0
        %509 = vst.msk [vmem:[#allocation3 + $0x108] sm:$0xff] %vm411, 0.0
        %510 = vst.msk [vmem:[#allocation3 + $0x110] sm:$0xff] %vm411, 0.0
        %511 = vst.msk [vmem:[#allocation3 + $0x118] sm:$0xff] %vm411, 0.0
        %512 = vst.msk [vmem:[#allocation3 + $0x120] sm:$0xff] %vm411, 0.0
        %513 = vst.msk [vmem:[#allocation3 + $0x128] sm:$0xff] %vm411, 0.0
        %514 = vst.msk [vmem:[#allocation3 + $0x130] sm:$0xff] %vm411, 0.0
        %515 = vst.msk [vmem:[#allocation3 + $0x138] sm:$0xff] %vm411, 0.0
        %516 = vst.msk [vmem:[#allocation3 + $0x140] sm:$0xff] %vm411, 0.0
        %517 = vst.msk [vmem:[#allocation3 + $0x148] sm:$0xff] %vm411, 0.0
        %518 = vst.msk [vmem:[#allocation3 + $0x150] sm:$0xff] %vm411, 0.0
        %519 = vst.msk [vmem:[#allocation3 + $0x158] sm:$0xff] %vm411, 0.0
        %520 = vst.msk [vmem:[#allocation3 + $0x160] sm:$0xff] %vm411, 0.0
        %521 = vst.msk [vmem:[#allocation3 + $0x168] sm:$0xff] %vm411, 0.0
        %522 = vst.msk [vmem:[#allocation3 + $0x170] sm:$0xff] %vm411, 0.0
        %523 = vst.msk [vmem:[#allocation3 + $0x178] sm:$0xff] %vm411, 0.0
        %524 = vst.msk [vmem:[#allocation3 + $0x180] sm:$0xff] %vm411, 0.0
        %525 = vst.msk [vmem:[#allocation3 + $0x188] sm:$0xff] %vm411, 0.0
        %526 = vst.msk [vmem:[#allocation3 + $0x190] sm:$0xff] %vm411, 0.0
        %527 = vst.msk [vmem:[#allocation3 + $0x198] sm:$0xff] %vm411, 0.0
        %528 = vst.msk [vmem:[#allocation3 + $0x1a0] sm:$0xff] %vm411, 0.0
        %529 = vst.msk [vmem:[#allocation3 + $0x1a8] sm:$0xff] %vm411, 0.0
        %530 = vst.msk [vmem:[#allocation3 + $0x1b0] sm:$0xff] %vm411, 0.0
        %531 = vst.msk [vmem:[#allocation3 + $0x1b8] sm:$0xff] %vm411, 0.0
        %532 = vst.msk [vmem:[#allocation3 + $0x1c0] sm:$0xff] %vm411, 0.0
        %533 = vst.msk [vmem:[#allocation3 + $0x1c8] sm:$0xff] %vm411, 0.0
        %534 = vst.msk [vmem:[#allocation3 + $0x1d0] sm:$0xff] %vm411, 0.0
        %535 = vst.msk [vmem:[#allocation3 + $0x1d8] sm:$0xff] %vm411, 0.0
        %536 = vst.msk [vmem:[#allocation3 + $0x1e0] sm:$0xff] %vm411, 0.0
        %537 = vst.msk [vmem:[#allocation3 + $0x1e8] sm:$0xff] %vm411, 0.0
        %538 = vst.msk [vmem:[#allocation3 + $0x1f0] sm:$0xff] %vm411, 0.0
        %539 = vst.msk [vmem:[#allocation3 + $0x1f8] sm:$0xff] %vm411, 0.0
        %vm540 = vcmask 523264
        %541 = vst.msk [vmem:[#allocation4] sm:$0xff] %vm540, 0.0
        %542 = vst.msk [vmem:[#allocation4 + $0x8] sm:$0xff] %vm540, 0.0
        %543 = vst.msk [vmem:[#allocation4 + $0x10] sm:$0xff] %vm540, 0.0
        %544 = vst.msk [vmem:[#allocation4 + $0x18] sm:$0xff] %vm540, 0.0
        %545 = vst.msk [vmem:[#allocation4 + $0x20] sm:$0xff] %vm540, 0.0
        %546 = vst.msk [vmem:[#allocation4 + $0x28] sm:$0xff] %vm540, 0.0
        %547 = vst.msk [vmem:[#allocation4 + $0x30] sm:$0xff] %vm540, 0.0
        %548 = vst.msk [vmem:[#allocation4 + $0x38] sm:$0xff] %vm540, 0.0
        %549 = vst.msk [vmem:[#allocation4 + $0x40] sm:$0xff] %vm540, 0.0
        %550 = vst.msk [vmem:[#allocation4 + $0x48] sm:$0xff] %vm540, 0.0
        %551 = vst.msk [vmem:[#allocation4 + $0x50] sm:$0xff] %vm540, 0.0
        %552 = vst.msk [vmem:[#allocation4 + $0x58] sm:$0xff] %vm540, 0.0
        %553 = vst.msk [vmem:[#allocation4 + $0x60] sm:$0xff] %vm540, 0.0
        %554 = vst.msk [vmem:[#allocation4 + $0x68] sm:$0xff] %vm540, 0.0
        %555 = vst.msk [vmem:[#allocation4 + $0x70] sm:$0xff] %vm540, 0.0
        %556 = vst.msk [vmem:[#allocation4 + $0x78] sm:$0xff] %vm540, 0.0
        %557 = vst.msk [vmem:[#allocation4 + $0x80] sm:$0xff] %vm540, 0.0
        %558 = vst.msk [vmem:[#allocation4 + $0x88] sm:$0xff] %vm540, 0.0
        %559 = vst.msk [vmem:[#allocation4 + $0x90] sm:$0xff] %vm540, 0.0
        %560 = vst.msk [vmem:[#allocation4 + $0x98] sm:$0xff] %vm540, 0.0
        %561 = vst.msk [vmem:[#allocation4 + $0xa0] sm:$0xff] %vm540, 0.0
        %562 = vst.msk [vmem:[#allocation4 + $0xa8] sm:$0xff] %vm540, 0.0
        %563 = vst.msk [vmem:[#allocation4 + $0xb0] sm:$0xff] %vm540, 0.0
        %564 = vst.msk [vmem:[#allocation4 + $0xb8] sm:$0xff] %vm540, 0.0
        %565 = vst.msk [vmem:[#allocation4 + $0xc0] sm:$0xff] %vm540, 0.0
        %566 = vst.msk [vmem:[#allocation4 + $0xc8] sm:$0xff] %vm540, 0.0
        %567 = vst.msk [vmem:[#allocation4 + $0xd0] sm:$0xff] %vm540, 0.0
        %568 = vst.msk [vmem:[#allocation4 + $0xd8] sm:$0xff] %vm540, 0.0
        %569 = vst.msk [vmem:[#allocation4 + $0xe0] sm:$0xff] %vm540, 0.0
        %570 = vst.msk [vmem:[#allocation4 + $0xe8] sm:$0xff] %vm540, 0.0
        %571 = vst.msk [vmem:[#allocation4 + $0xf0] sm:$0xff] %vm540, 0.0
        %572 = vst.msk [vmem:[#allocation4 + $0xf8] sm:$0xff] %vm540, 0.0
        %573 = vst.msk [vmem:[#allocation4 + $0x100] sm:$0xff] %vm540, 0.0
        %574 = vst.msk [vmem:[#allocation4 + $0x108] sm:$0xff] %vm540, 0.0
        %575 = vst.msk [vmem:[#allocation4 + $0x110] sm:$0xff] %vm540, 0.0
        %576 = vst.msk [vmem:[#allocation4 + $0x118] sm:$0xff] %vm540, 0.0
        %577 = vst.msk [vmem:[#allocation4 + $0x120] sm:$0xff] %vm540, 0.0
        %578 = vst.msk [vmem:[#allocation4 + $0x128] sm:$0xff] %vm540, 0.0
        %579 = vst.msk [vmem:[#allocation4 + $0x130] sm:$0xff] %vm540, 0.0
        %580 = vst.msk [vmem:[#allocation4 + $0x138] sm:$0xff] %vm540, 0.0
        %581 = vst.msk [vmem:[#allocation4 + $0x140] sm:$0xff] %vm540, 0.0
        %582 = vst.msk [vmem:[#allocation4 + $0x148] sm:$0xff] %vm540, 0.0
        %583 = vst.msk [vmem:[#allocation4 + $0x150] sm:$0xff] %vm540, 0.0
        %584 = vst.msk [vmem:[#allocation4 + $0x158] sm:$0xff] %vm540, 0.0
        %585 = vst.msk [vmem:[#allocation4 + $0x160] sm:$0xff] %vm540, 0.0
        %586 = vst.msk [vmem:[#allocation4 + $0x168] sm:$0xff] %vm540, 0.0
        %587 = vst.msk [vmem:[#allocation4 + $0x170] sm:$0xff] %vm540, 0.0
        %588 = vst.msk [vmem:[#allocation4 + $0x178] sm:$0xff] %vm540, 0.0
        %589 = vst.msk [vmem:[#allocation4 + $0x180] sm:$0xff] %vm540, 0.0
        %590 = vst.msk [vmem:[#allocation4 + $0x188] sm:$0xff] %vm540, 0.0
        %591 = vst.msk [vmem:[#allocation4 + $0x190] sm:$0xff] %vm540, 0.0
        %592 = vst.msk [vmem:[#allocation4 + $0x198] sm:$0xff] %vm540, 0.0
        %593 = vst.msk [vmem:[#allocation4 + $0x1a0] sm:$0xff] %vm540, 0.0
        %594 = vst.msk [vmem:[#allocation4 + $0x1a8] sm:$0xff] %vm540, 0.0
        %595 = vst.msk [vmem:[#allocation4 + $0x1b0] sm:$0xff] %vm540, 0.0
        %596 = vst.msk [vmem:[#allocation4 + $0x1b8] sm:$0xff] %vm540, 0.0
        %597 = vst.msk [vmem:[#allocation4 + $0x1c0] sm:$0xff] %vm540, 0.0
        %598 = vst.msk [vmem:[#allocation4 + $0x1c8] sm:$0xff] %vm540, 0.0
        %599 = vst.msk [vmem:[#allocation4 + $0x1d0] sm:$0xff] %vm540, 0.0
        %600 = vst.msk [vmem:[#allocation4 + $0x1d8] sm:$0xff] %vm540, 0.0
        %601 = vst.msk [vmem:[#allocation4 + $0x1e0] sm:$0xff] %vm540, 0.0
        %602 = vst.msk [vmem:[#allocation4 + $0x1e8] sm:$0xff] %vm540, 0.0
        %603 = vst.msk [vmem:[#allocation4 + $0x1f0] sm:$0xff] %vm540, 0.0
        %604 = vst.msk [vmem:[#allocation4 + $0x1f8] sm:$0xff] %vm540, 0.0
      $region48: #{attn_block_pallas.5} parent=43 // pred_fallthru
        _
      %v605 = vld [vmem:[%s364] sm:$0xf]
      %v606 = vld [vmem:[%s364 + $0x4] sm:$0xf]
      %v607 = vld [vmem:[%s364 + $0x8] sm:$0xf]
      %v608 = vld [vmem:[%s364 + $0xc] sm:$0xf]
      %v609 = vld [vmem:[%s364 + $0x10] sm:$0xf]
      %v610 = vld [vmem:[%s364 + $0x14] sm:$0xf]
      %v611 = vld [vmem:[%s364 + $0x18] sm:$0xf]
      %v612 = vld [vmem:[%s364 + $0x1c] sm:$0xf]
      %v613 = vld [vmem:[%s364 + $0x20] sm:$0xf]
      %v614 = vld [vmem:[%s364 + $0x24] sm:$0xf]
      %v615 = vld [vmem:[%s364 + $0x28] sm:$0xf]
      %v616 = vld [vmem:[%s364 + $0x2c] sm:$0xf]
      %v617 = vld [vmem:[%s364 + $0x30] sm:$0xf]
      %v618 = vld [vmem:[%s364 + $0x34] sm:$0xf]
      %v619 = vld [vmem:[%s364 + $0x38] sm:$0xf]
      %v620 = vld [vmem:[%s364 + $0x3c] sm:$0xf]
      %v621 = vld [vmem:[%s364 + $0x40] sm:$0xf]
      %v622 = vld [vmem:[%s364 + $0x44] sm:$0xf]
      %v623 = vld [vmem:[%s364 + $0x48] sm:$0xf]
      %v624 = vld [vmem:[%s364 + $0x4c] sm:$0xf]
      %v625 = vld [vmem:[%s364 + $0x50] sm:$0xf]
      %v626 = vld [vmem:[%s364 + $0x54] sm:$0xf]
      %v627 = vld [vmem:[%s364 + $0x58] sm:$0xf]
      %v628 = vld [vmem:[%s364 + $0x5c] sm:$0xf]
      %v629 = vld [vmem:[%s364 + $0x60] sm:$0xf]
      %v630 = vld [vmem:[%s364 + $0x64] sm:$0xf]
      %v631 = vld [vmem:[%s364 + $0x68] sm:$0xf]
      %v632 = vld [vmem:[%s364 + $0x6c] sm:$0xf]
      %v633 = vld [vmem:[%s364 + $0x70] sm:$0xf]
      %v634 = vld [vmem:[%s364 + $0x74] sm:$0xf]
      %v635 = vld [vmem:[%s364 + $0x78] sm:$0xf]
      %v636 = vld [vmem:[%s364 + $0x7c] sm:$0xf]
      %v637 = vld [vmem:[%s364 + $0x80] sm:$0xf]
      %v638 = vld [vmem:[%s364 + $0x84] sm:$0xf]
      %v639 = vld [vmem:[%s364 + $0x88] sm:$0xf]
      %v640 = vld [vmem:[%s364 + $0x8c] sm:$0xf]
      %v641 = vld [vmem:[%s364 + $0x90] sm:$0xf]
      %v642 = vld [vmem:[%s364 + $0x94] sm:$0xf]
      %v643 = vld [vmem:[%s364 + $0x98] sm:$0xf]
      %v644 = vld [vmem:[%s364 + $0x9c] sm:$0xf]
      %v645 = vld [vmem:[%s364 + $0xa0] sm:$0xf]
      %v646 = vld [vmem:[%s364 + $0xa4] sm:$0xf]
      %v647 = vld [vmem:[%s364 + $0xa8] sm:$0xf]
      %v648 = vld [vmem:[%s364 + $0xac] sm:$0xf]
      %v649 = vld [vmem:[%s364 + $0xb0] sm:$0xf]
      %v650 = vld [vmem:[%s364 + $0xb4] sm:$0xf]
      %v651 = vld [vmem:[%s364 + $0xb8] sm:$0xf]
      %v652 = vld [vmem:[%s364 + $0xbc] sm:$0xf]
      %v653 = vld [vmem:[%s364 + $0xc0] sm:$0xf]
      %v654 = vld [vmem:[%s364 + $0xc4] sm:$0xf]
      %v655 = vld [vmem:[%s364 + $0xc8] sm:$0xf]
      %v656 = vld [vmem:[%s364 + $0xcc] sm:$0xf]
      %v657 = vld [vmem:[%s364 + $0xd0] sm:$0xf]
      %v658 = vld [vmem:[%s364 + $0xd4] sm:$0xf]
      %v659 = vld [vmem:[%s364 + $0xd8] sm:$0xf]
      %v660 = vld [vmem:[%s364 + $0xdc] sm:$0xf]
      %v661 = vld [vmem:[%s364 + $0xe0] sm:$0xf]
      %v662 = vld [vmem:[%s364 + $0xe4] sm:$0xf]
      %v663 = vld [vmem:[%s364 + $0xe8] sm:$0xf]
      %v664 = vld [vmem:[%s364 + $0xec] sm:$0xf]
      %v665 = vld [vmem:[%s364 + $0xf0] sm:$0xf]
      %v666 = vld [vmem:[%s364 + $0xf4] sm:$0xf]
      %v667 = vld [vmem:[%s364 + $0xf8] sm:$0xf]
      %v668 = vld [vmem:[%s364 + $0xfc] sm:$0xf]
      %v669 = vld [vmem:[%s374] sm:$0xff]
      %v670 = vld [vmem:[%s374 + $0x8] sm:$0xff]
      %v671 = vld [vmem:[%s374 + $0x10] sm:$0xff]
      %v672 = vld [vmem:[%s374 + $0x18] sm:$0xff]
      %v673 = vld [vmem:[%s374 + $0x20] sm:$0xff]
      %v674 = vld [vmem:[%s374 + $0x28] sm:$0xff]
      %v675 = vld [vmem:[%s374 + $0x30] sm:$0xff]
      %v676 = vld [vmem:[%s374 + $0x38] sm:$0xff]
      %v677 = vld [vmem:[%s374 + $0x40] sm:$0xff]
      %v678 = vld [vmem:[%s374 + $0x48] sm:$0xff]
      %v679 = vld [vmem:[%s374 + $0x50] sm:$0xff]
      %v680 = vld [vmem:[%s374 + $0x58] sm:$0xff]
      %v681 = vld [vmem:[%s374 + $0x60] sm:$0xff]
      %v682 = vld [vmem:[%s374 + $0x68] sm:$0xff]
      %v683 = vld [vmem:[%s374 + $0x70] sm:$0xff]
      %v684 = vld [vmem:[%s374 + $0x78] sm:$0xff]
      %v685 = vld [vmem:[%s384] sm:$0xff]
      %v686 = vld [vmem:[%s384 + $0x8] sm:$0xff]
      %v687 = vld [vmem:[%s384 + $0x10] sm:$0xff]
      %v688 = vld [vmem:[%s384 + $0x18] sm:$0xff]
      %v689 = vld [vmem:[%s384 + $0x20] sm:$0xff]
      %v690 = vld [vmem:[%s384 + $0x28] sm:$0xff]
      %v691 = vld [vmem:[%s384 + $0x30] sm:$0xff]
      %v692 = vld [vmem:[%s384 + $0x38] sm:$0xff]
      %v693 = vld [vmem:[%s384 + $0x40] sm:$0xff]
      %v694 = vld [vmem:[%s384 + $0x48] sm:$0xff]
      %v695 = vld [vmem:[%s384 + $0x50] sm:$0xff]
      %v696 = vld [vmem:[%s384 + $0x58] sm:$0xff]
      %v697 = vld [vmem:[%s384 + $0x60] sm:$0xff]
      %v698 = vld [vmem:[%s384 + $0x68] sm:$0xff]
      %v699 = vld [vmem:[%s384 + $0x70] sm:$0xff]
      %v700 = vld [vmem:[%s384 + $0x78] sm:$0xff]
      %v765 = vunpack.c.l.b16 %v605
      %v766 = vunpack.c.l.b16 %v606
      %v767 = vunpack.c.l.b16 %v607
      %v768 = vunpack.c.l.b16 %v608
      %v769 = vunpack.c.l.b16 %v609
      %v770 = vunpack.c.l.b16 %v610
      %v771 = vunpack.c.l.b16 %v611
      %v772 = vunpack.c.l.b16 %v612
      %v773 = vunpack.c.l.b16 %v613
      %v774 = vunpack.c.l.b16 %v614
      %v775 = vunpack.c.l.b16 %v615
      %v776 = vunpack.c.l.b16 %v616
      %v777 = vunpack.c.l.b16 %v617
      %v778 = vunpack.c.l.b16 %v618
      %v779 = vunpack.c.l.b16 %v619
      %v780 = vunpack.c.l.b16 %v620
      %v781 = vunpack.c.l.b16 %v621
      %v782 = vunpack.c.l.b16 %v622
      %v783 = vunpack.c.l.b16 %v623
      %v784 = vunpack.c.l.b16 %v624
      %v785 = vunpack.c.l.b16 %v625
      %v786 = vunpack.c.l.b16 %v626
      %v787 = vunpack.c.l.b16 %v627
      %v788 = vunpack.c.l.b16 %v628
      %v789 = vunpack.c.l.b16 %v629
      %v790 = vunpack.c.l.b16 %v630
      %v791 = vunpack.c.l.b16 %v631
      %v792 = vunpack.c.l.b16 %v632
      %v793 = vunpack.c.l.b16 %v633
      %v794 = vunpack.c.l.b16 %v634
      %v795 = vunpack.c.l.b16 %v635
      %v796 = vunpack.c.l.b16 %v636
      %v797 = vunpack.c.l.b16 %v637
      %v798 = vunpack.c.l.b16 %v638
      %v799 = vunpack.c.l.b16 %v639
      %v800 = vunpack.c.l.b16 %v640
      %v801 = vunpack.c.l.b16 %v641
      %v802 = vunpack.c.l.b16 %v642
      %v803 = vunpack.c.l.b16 %v643
      %v804 = vunpack.c.l.b16 %v644
      %v805 = vunpack.c.l.b16 %v645
      %v806 = vunpack.c.l.b16 %v646
      %v807 = vunpack.c.l.b16 %v647
      %v808 = vunpack.c.l.b16 %v648
      %v809 = vunpack.c.l.b16 %v649
      %v810 = vunpack.c.l.b16 %v650
      %v811 = vunpack.c.l.b16 %v651
      %v812 = vunpack.c.l.b16 %v652
      %v813 = vunpack.c.l.b16 %v653
      %v814 = vunpack.c.l.b16 %v654
      %v815 = vunpack.c.l.b16 %v655
      %v816 = vunpack.c.l.b16 %v656
      %v817 = vunpack.c.l.b16 %v657
      %v818 = vunpack.c.l.b16 %v658
      %v819 = vunpack.c.l.b16 %v659
      %v820 = vunpack.c.l.b16 %v660
      %v821 = vunpack.c.l.b16 %v661
      %v822 = vunpack.c.l.b16 %v662
      %v823 = vunpack.c.l.b16 %v663
      %v824 = vunpack.c.l.b16 %v664
      %v825 = vunpack.c.l.b16 %v665
      %v826 = vunpack.c.l.b16 %v666
      %v827 = vunpack.c.l.b16 %v667
      %v828 = vunpack.c.l.b16 %v668
      %v829 = vpack.c.b16 %v766, %v765
      %v830 = vpack.c.b16 %v768, %v767
      %v831 = vpack.c.b16 %v770, %v769
      %v832 = vpack.c.b16 %v772, %v771
      %v833 = vpack.c.b16 %v774, %v773
      %v834 = vpack.c.b16 %v776, %v775
      %v835 = vpack.c.b16 %v778, %v777
      %v836 = vpack.c.b16 %v780, %v779
      %v837 = vpack.c.b16 %v782, %v781
      %v838 = vpack.c.b16 %v784, %v783
      %v839 = vpack.c.b16 %v786, %v785
      %v840 = vpack.c.b16 %v788, %v787
      %v841 = vpack.c.b16 %v790, %v789
      %v842 = vpack.c.b16 %v792, %v791
      %v843 = vpack.c.b16 %v794, %v793
      %v844 = vpack.c.b16 %v796, %v795
      %v845 = vpack.c.b16 %v798, %v797
      %v846 = vpack.c.b16 %v800, %v799
      %v847 = vpack.c.b16 %v802, %v801
      %v848 = vpack.c.b16 %v804, %v803
      %v849 = vpack.c.b16 %v806, %v805
      %v850 = vpack.c.b16 %v808, %v807
      %v851 = vpack.c.b16 %v810, %v809
      %v852 = vpack.c.b16 %v812, %v811
      %v853 = vpack.c.b16 %v814, %v813
      %v854 = vpack.c.b16 %v816, %v815
      %v855 = vpack.c.b16 %v818, %v817
      %v856 = vpack.c.b16 %v820, %v819
      %v857 = vpack.c.b16 %v822, %v821
      %v858 = vpack.c.b16 %v824, %v823
      %v859 = vpack.c.b16 %v826, %v825
      %v860 = vpack.c.b16 %v828, %v827
      %v877 = vunpack.c.l.b16 %v669
      %v878 = vunpack.c.h.b16 %v669
      %v879 = vunpack.c.l.b16 %v670
      %v880 = vunpack.c.h.b16 %v670
      %v881 = vunpack.c.l.b16 %v671
      %v882 = vunpack.c.h.b16 %v671
      %v883 = vunpack.c.l.b16 %v672
      %v884 = vunpack.c.h.b16 %v672
      %v885 = vunpack.c.l.b16 %v673
      %v886 = vunpack.c.h.b16 %v673
      %v887 = vunpack.c.l.b16 %v674
      %v888 = vunpack.c.h.b16 %v674
      %v889 = vunpack.c.l.b16 %v675
      %v890 = vunpack.c.h.b16 %v675
      %v891 = vunpack.c.l.b16 %v676
      %v892 = vunpack.c.h.b16 %v676
      %v893 = vunpack.c.l.b16 %v677
      %v894 = vunpack.c.h.b16 %v677
      %v895 = vunpack.c.l.b16 %v678
      %v896 = vunpack.c.h.b16 %v678
      %v897 = vunpack.c.l.b16 %v679
      %v898 = vunpack.c.h.b16 %v679
      %v899 = vunpack.c.l.b16 %v680
      %v900 = vunpack.c.h.b16 %v680
      %v901 = vunpack.c.l.b16 %v681
      %v902 = vunpack.c.h.b16 %v681
      %v903 = vunpack.c.l.b16 %v682
      %v904 = vunpack.c.h.b16 %v682
      %v905 = vunpack.c.l.b16 %v683
      %v906 = vunpack.c.h.b16 %v683
      %v907 = vunpack.c.l.b16 %v684
      %v908 = vunpack.c.h.b16 %v684
      %v909 = vpack.c.b16 %v881, %v877
      %v910 = vpack.c.b16 %v882, %v878
      %v911 = vpack.c.b16 %v883, %v879
      %v912 = vpack.c.b16 %v884, %v880
      %v913 = vpack.c.b16 %v889, %v885
      %v914 = vpack.c.b16 %v890, %v886
      %v915 = vpack.c.b16 %v891, %v887
      %v916 = vpack.c.b16 %v892, %v888
      %v917 = vpack.c.b16 %v897, %v893
      %v918 = vpack.c.b16 %v898, %v894
      %v919 = vpack.c.b16 %v899, %v895
      %v920 = vpack.c.b16 %v900, %v896
      %v921 = vpack.c.b16 %v905, %v901
      %v922 = vpack.c.b16 %v906, %v902
      %v923 = vpack.c.b16 %v907, %v903
      %v924 = vpack.c.b16 %v908, %v904
      %vm941 = vcmask 523264
      %v943 = vsel %vm941, %v829, 0
      %v946 = vsel %vm941, %v830, 0
      %v949 = vsel %vm941, %v831, 0
      %v952 = vsel %vm941, %v832, 0
      %v955 = vsel %vm941, %v833, 0
      %v958 = vsel %vm941, %v834, 0
      %v961 = vsel %vm941, %v835, 0
      %v964 = vsel %vm941, %v836, 0
      %v967 = vsel %vm941, %v837, 0
      %v970 = vsel %vm941, %v838, 0
      %v973 = vsel %vm941, %v839, 0
      %v976 = vsel %vm941, %v840, 0
      %v979 = vsel %vm941, %v841, 0
      %v982 = vsel %vm941, %v842, 0
      %v985 = vsel %vm941, %v843, 0
      %v988 = vsel %vm941, %v844, 0
      %v991 = vsel %vm941, %v845, 0
      %v994 = vsel %vm941, %v846, 0
      %v997 = vsel %vm941, %v847, 0
      %v1000 = vsel %vm941, %v848, 0
      %v1003 = vsel %vm941, %v849, 0
      %v1006 = vsel %vm941, %v850, 0
      %v1009 = vsel %vm941, %v851, 0
      %v1012 = vsel %vm941, %v852, 0
      %v1015 = vsel %vm941, %v853, 0
      %v1018 = vsel %vm941, %v854, 0
      %v1021 = vsel %vm941, %v855, 0
      %v1024 = vsel %vm941, %v856, 0
      %v1027 = vsel %vm941, %v857, 0
      %v1030 = vsel %vm941, %v858, 0
      %v1033 = vsel %vm941, %v859, 0
      %v1036 = vsel %vm941, %v860, 0
      %1038 = vmatprep.subr.bf16.mxu0 0
      %1039 = vmatpush1.bf16.msra.mxu0 0
      %1040 = vmatprep.subr.bf16.mxu0 0
      %1041 = vmatpush1.bf16.msra.mxu0 0
      %1042 = vmatprep.subr.bf16.mxu0 0
      %1043 = vmatpush1.bf16.msra.mxu0 0
      %1044 = vmatprep.subr.bf16.mxu0 0
      %1045 = vmatpush1.bf16.msra.mxu0 0
      %1046 = vmatprep.subr.bf16.mxu0 %v922
      %1047 = vmatpush1.bf16.msra.mxu0 %v921
      %1048 = vmatprep.subr.bf16.mxu0 %v918
      %1049 = vmatpush1.bf16.msra.mxu0 %v917
      %1050 = vmatprep.subr.bf16.mxu0 %v914
      %1051 = vmatpush1.bf16.msra.mxu0 %v913
      %1052 = vmatprep.subr.bf16.mxu0 %v910
      %1053 = vmatpush1.bf16.msra.mxu0 %v909
      %1054 = vmatprep.subr.bf16.mxu0 0
      %1055 = vmatpush2.bf16.msra.mxu0 0
      %1056 = vmatprep.subr.bf16.mxu0 0
      %1057 = vmatpush2.bf16.msra.mxu0 0
      %1058 = vmatprep.subr.bf16.mxu0 0
      %1059 = vmatpush2.bf16.msra.mxu0 0
      %1060 = vmatprep.subr.bf16.mxu0 0
      %1061 = vmatpush2.bf16.msra.mxu0 0
      %1062 = vmatprep.subr.bf16.mxu0 0
      %1063 = vmatpush2.bf16.msra.mxu0 0
      %1064 = vmatprep.subr.bf16.mxu0 0
      %1065 = vmatpush2.bf16.msra.mxu0 0
      %1066 = vmatprep.subr.bf16.mxu0 0
      %1067 = vmatpush2.bf16.msra.mxu0 0
      %1068 = vmatprep.subr.bf16.mxu0 0
      %1069 = vmatpush2.bf16.msra.mxu0 0
      %1070 = vmatprep.mubr.bf16.mxu0 0
      %1071 = vmatmul.mubr.bf16.gmra.mxu0 %v943
      %v1072 = vpop.f32.mrf.mxu0
      %v1073 = vadd.f32 0.0, %v1072
      %v1074 = vpop.f32.mrf.mxu0
      %v1075 = vadd.f32 0.0, %v1074
      %v1076 = vpop.f32.mrf.mxu0
      %v1077 = vadd.f32 0.0, %v1076
      %v1078 = vpop.f32.mrf.mxu0
      %v1079 = vadd.f32 0.0, %v1078
      %1080 = vmatprep.mubr.bf16.mxu0 0
      %1081 = vmatmul.mubr.bf16.gmra.mxu0 %v946
      %v1082 = vpop.f32.mrf.mxu0
      %v1083 = vadd.f32 0.0, %v1082
      %v1084 = vpop.f32.mrf.mxu0
      %v1085 = vadd.f32 0.0, %v1084
      %v1086 = vpop.f32.mrf.mxu0
      %v1087 = vadd.f32 0.0, %v1086
      %v1088 = vpop.f32.mrf.mxu0
      %v1089 = vadd.f32 0.0, %v1088
      %1090 = vmatprep.mubr.bf16.mxu0 0
      %1091 = vmatmul.mubr.bf16.gmra.mxu0 %v949
      %v1092 = vpop.f32.mrf.mxu0
      %v1093 = vadd.f32 0.0, %v1092
      %v1094 = vpop.f32.mrf.mxu0
      %v1095 = vadd.f32 0.0, %v1094
      %v1096 = vpop.f32.mrf.mxu0
      %v1097 = vadd.f32 0.0, %v1096
      %v1098 = vpop.f32.mrf.mxu0
      %v1099 = vadd.f32 0.0, %v1098
      %1100 = vmatprep.mubr.bf16.mxu0 0
      %1101 = vmatmul.mubr.bf16.gmra.mxu0 %v952
      %v1102 = vpop.f32.mrf.mxu0
      %v1103 = vadd.f32 0.0, %v1102
      %v1104 = vpop.f32.mrf.mxu0
      %v1105 = vadd.f32 0.0, %v1104
      %v1106 = vpop.f32.mrf.mxu0
      %v1107 = vadd.f32 0.0, %v1106
      %v1108 = vpop.f32.mrf.mxu0
      %v1109 = vadd.f32 0.0, %v1108
      %1110 = vmatprep.mubr.bf16.mxu0 0
      %1111 = vmatmul.mubr.bf16.gmra.mxu0 %v955
      %v1112 = vpop.f32.mrf.mxu0
      %v1113 = vadd.f32 0.0, %v1112
      %v1114 = vpop.f32.mrf.mxu0
      %v1115 = vadd.f32 0.0, %v1114
      %v1116 = vpop.f32.mrf.mxu0
      %v1117 = vadd.f32 0.0, %v1116
      %v1118 = vpop.f32.mrf.mxu0
      %v1119 = vadd.f32 0.0, %v1118
      %1120 = vmatprep.mubr.bf16.mxu0 0
      %1121 = vmatmul.mubr.bf16.gmra.mxu0 %v958
      %v1122 = vpop.f32.mrf.mxu0
      %v1123 = vadd.f32 0.0, %v1122
      %v1124 = vpop.f32.mrf.mxu0
      %v1125 = vadd.f32 0.0, %v1124
      %v1126 = vpop.f32.mrf.mxu0
      %v1127 = vadd.f32 0.0, %v1126
      %v1128 = vpop.f32.mrf.mxu0
      %v1129 = vadd.f32 0.0, %v1128
      %1130 = vmatprep.mubr.bf16.mxu0 0
      %1131 = vmatmul.mubr.bf16.gmra.mxu0 %v961
      %v1132 = vpop.f32.mrf.mxu0
      %v1133 = vadd.f32 0.0, %v1132
      %v1134 = vpop.f32.mrf.mxu0
      %v1135 = vadd.f32 0.0, %v1134
      %v1136 = vpop.f32.mrf.mxu0
      %v1137 = vadd.f32 0.0, %v1136
      %v1138 = vpop.f32.mrf.mxu0
      %v1139 = vadd.f32 0.0, %v1138
      %1140 = vmatprep.mubr.bf16.mxu0 0
      %1141 = vmatmul.mubr.bf16.gmra.mxu0 %v964
      %v1142 = vpop.f32.mrf.mxu0
      %v1143 = vadd.f32 0.0, %v1142
      %v1144 = vpop.f32.mrf.mxu0
      %v1145 = vadd.f32 0.0, %v1144
      %v1146 = vpop.f32.mrf.mxu0
      %v1147 = vadd.f32 0.0, %v1146
      %v1148 = vpop.f32.mrf.mxu0
      %v1149 = vadd.f32 0.0, %v1148
      %1150 = vmatprep.mubr.bf16.mxu0 0
      %1151 = vmatmul.mubr.bf16.gmra.mxu0 %v967
      %v1152 = vpop.f32.mrf.mxu0
      %v1153 = vadd.f32 0.0, %v1152
      %v1154 = vpop.f32.mrf.mxu0
      %v1155 = vadd.f32 0.0, %v1154
      %v1156 = vpop.f32.mrf.mxu0
      %v1157 = vadd.f32 0.0, %v1156
      %v1158 = vpop.f32.mrf.mxu0
      %v1159 = vadd.f32 0.0, %v1158
      %1160 = vmatprep.mubr.bf16.mxu0 0
      %1161 = vmatmul.mubr.bf16.gmra.mxu0 %v970
      %v1162 = vpop.f32.mrf.mxu0
      %v1163 = vadd.f32 0.0, %v1162
      %v1164 = vpop.f32.mrf.mxu0
      %v1165 = vadd.f32 0.0, %v1164
      %v1166 = vpop.f32.mrf.mxu0
      %v1167 = vadd.f32 0.0, %v1166
      %v1168 = vpop.f32.mrf.mxu0
      %v1169 = vadd.f32 0.0, %v1168
      %1170 = vmatprep.mubr.bf16.mxu0 0
      %1171 = vmatmul.mubr.bf16.gmra.mxu0 %v973
      %v1172 = vpop.f32.mrf.mxu0
      %v1173 = vadd.f32 0.0, %v1172
      %v1174 = vpop.f32.mrf.mxu0
      %v1175 = vadd.f32 0.0, %v1174
      %v1176 = vpop.f32.mrf.mxu0
      %v1177 = vadd.f32 0.0, %v1176
      %v1178 = vpop.f32.mrf.mxu0
      %v1179 = vadd.f32 0.0, %v1178
      %1180 = vmatprep.mubr.bf16.mxu0 0
      %1181 = vmatmul.mubr.bf16.gmra.mxu0 %v976
      %v1182 = vpop.f32.mrf.mxu0
      %v1183 = vadd.f32 0.0, %v1182
      %v1184 = vpop.f32.mrf.mxu0
      %v1185 = vadd.f32 0.0, %v1184
      %v1186 = vpop.f32.mrf.mxu0
      %v1187 = vadd.f32 0.0, %v1186
      %v1188 = vpop.f32.mrf.mxu0
      %v1189 = vadd.f32 0.0, %v1188
      %1190 = vmatprep.mubr.bf16.mxu0 0
      %1191 = vmatmul.mubr.bf16.gmra.mxu0 %v979
      %v1192 = vpop.f32.mrf.mxu0
      %v1193 = vadd.f32 0.0, %v1192
      %v1194 = vpop.f32.mrf.mxu0
      %v1195 = vadd.f32 0.0, %v1194
      %v1196 = vpop.f32.mrf.mxu0
      %v1197 = vadd.f32 0.0, %v1196
      %v1198 = vpop.f32.mrf.mxu0
      %v1199 = vadd.f32 0.0, %v1198
      %1200 = vmatprep.mubr.bf16.mxu0 0
      %1201 = vmatmul.mubr.bf16.gmra.mxu0 %v982
      %v1202 = vpop.f32.mrf.mxu0
      %v1203 = vadd.f32 0.0, %v1202
      %v1204 = vpop.f32.mrf.mxu0
      %v1205 = vadd.f32 0.0, %v1204
      %v1206 = vpop.f32.mrf.mxu0
      %v1207 = vadd.f32 0.0, %v1206
      %v1208 = vpop.f32.mrf.mxu0
      %v1209 = vadd.f32 0.0, %v1208
      %1210 = vmatprep.mubr.bf16.mxu0 0
      %1211 = vmatmul.mubr.bf16.gmra.mxu0 %v985
      %v1212 = vpop.f32.mrf.mxu0
      %v1213 = vadd.f32 0.0, %v1212
      %v1214 = vpop.f32.mrf.mxu0
      %v1215 = vadd.f32 0.0, %v1214
      %v1216 = vpop.f32.mrf.mxu0
      %v1217 = vadd.f32 0.0, %v1216
      %v1218 = vpop.f32.mrf.mxu0
      %v1219 = vadd.f32 0.0, %v1218
      %1220 = vmatprep.mubr.bf16.mxu0 0
      %1221 = vmatmul.mubr.bf16.gmra.mxu0 %v988
      %v1222 = vpop.f32.mrf.mxu0
      %v1223 = vadd.f32 0.0, %v1222
      %v1224 = vpop.f32.mrf.mxu0
      %v1225 = vadd.f32 0.0, %v1224
      %v1226 = vpop.f32.mrf.mxu0
      %v1227 = vadd.f32 0.0, %v1226
      %v1228 = vpop.f32.mrf.mxu0
      %v1229 = vadd.f32 0.0, %v1228
      %1230 = vmatprep.mubr.bf16.mxu0 0
      %1231 = vmatmul.mubr.bf16.gmra.mxu0 %v991
      %v1232 = vpop.f32.mrf.mxu0
      %v1233 = vadd.f32 0.0, %v1232
      %v1234 = vpop.f32.mrf.mxu0
      %v1235 = vadd.f32 0.0, %v1234
      %v1236 = vpop.f32.mrf.mxu0
      %v1237 = vadd.f32 0.0, %v1236
      %v1238 = vpop.f32.mrf.mxu0
      %v1239 = vadd.f32 0.0, %v1238
      %1240 = vmatprep.mubr.bf16.mxu0 0
      %1241 = vmatmul.mubr.bf16.gmra.mxu0 %v994
      %v1242 = vpop.f32.mrf.mxu0
      %v1243 = vadd.f32 0.0, %v1242
      %v1244 = vpop.f32.mrf.mxu0
      %v1245 = vadd.f32 0.0, %v1244
      %v1246 = vpop.f32.mrf.mxu0
      %v1247 = vadd.f32 0.0, %v1246
      %v1248 = vpop.f32.mrf.mxu0
      %v1249 = vadd.f32 0.0, %v1248
      %1250 = vmatprep.mubr.bf16.mxu0 0
      %1251 = vmatmul.mubr.bf16.gmra.mxu0 %v997
      %v1252 = vpop.f32.mrf.mxu0
      %v1253 = vadd.f32 0.0, %v1252
      %v1254 = vpop.f32.mrf.mxu0
      %v1255 = vadd.f32 0.0, %v1254
      %v1256 = vpop.f32.mrf.mxu0
      %v1257 = vadd.f32 0.0, %v1256
      %v1258 = vpop.f32.mrf.mxu0
      %v1259 = vadd.f32 0.0, %v1258
      %1260 = vmatprep.mubr.bf16.mxu0 0
      %1261 = vmatmul.mubr.bf16.gmra.mxu0 %v1000
      %v1262 = vpop.f32.mrf.mxu0
      %v1263 = vadd.f32 0.0, %v1262
      %v1264 = vpop.f32.mrf.mxu0
      %v1265 = vadd.f32 0.0, %v1264
      %v1266 = vpop.f32.mrf.mxu0
      %v1267 = vadd.f32 0.0, %v1266
      %v1268 = vpop.f32.mrf.mxu0
      %v1269 = vadd.f32 0.0, %v1268
      %1270 = vmatprep.mubr.bf16.mxu0 0
      %1271 = vmatmul.mubr.bf16.gmra.mxu0 %v1003
      %v1272 = vpop.f32.mrf.mxu0
      %v1273 = vadd.f32 0.0, %v1272
      %v1274 = vpop.f32.mrf.mxu0
      %v1275 = vadd.f32 0.0, %v1274
      %v1276 = vpop.f32.mrf.mxu0
      %v1277 = vadd.f32 0.0, %v1276
      %v1278 = vpop.f32.mrf.mxu0
      %v1279 = vadd.f32 0.0, %v1278
      %1280 = vmatprep.mubr.bf16.mxu0 0
      %1281 = vmatmul.mubr.bf16.gmra.mxu0 %v1006
      %v1282 = vpop.f32.mrf.mxu0
      %v1283 = vadd.f32 0.0, %v1282
      %v1284 = vpop.f32.mrf.mxu0
      %v1285 = vadd.f32 0.0, %v1284
      %v1286 = vpop.f32.mrf.mxu0
      %v1287 = vadd.f32 0.0, %v1286
      %v1288 = vpop.f32.mrf.mxu0
      %v1289 = vadd.f32 0.0, %v1288
      %1290 = vmatprep.mubr.bf16.mxu0 0
      %1291 = vmatmul.mubr.bf16.gmra.mxu0 %v1009
      %v1292 = vpop.f32.mrf.mxu0
      %v1293 = vadd.f32 0.0, %v1292
      %v1294 = vpop.f32.mrf.mxu0
      %v1295 = vadd.f32 0.0, %v1294
      %v1296 = vpop.f32.mrf.mxu0
      %v1297 = vadd.f32 0.0, %v1296
      %v1298 = vpop.f32.mrf.mxu0
      %v1299 = vadd.f32 0.0, %v1298
      %1300 = vmatprep.mubr.bf16.mxu0 0
      %1301 = vmatmul.mubr.bf16.gmra.mxu0 %v1012
      %v1302 = vpop.f32.mrf.mxu0
      %v1303 = vadd.f32 0.0, %v1302
      %v1304 = vpop.f32.mrf.mxu0
      %v1305 = vadd.f32 0.0, %v1304
      %v1306 = vpop.f32.mrf.mxu0
      %v1307 = vadd.f32 0.0, %v1306
      %v1308 = vpop.f32.mrf.mxu0
      %v1309 = vadd.f32 0.0, %v1308
      %1310 = vmatprep.mubr.bf16.mxu0 0
      %1311 = vmatmul.mubr.bf16.gmra.mxu0 %v1015
      %v1312 = vpop.f32.mrf.mxu0
      %v1313 = vadd.f32 0.0, %v1312
      %v1314 = vpop.f32.mrf.mxu0
      %v1315 = vadd.f32 0.0, %v1314
      %v1316 = vpop.f32.mrf.mxu0
      %v1317 = vadd.f32 0.0, %v1316
      %v1318 = vpop.f32.mrf.mxu0
      %v1319 = vadd.f32 0.0, %v1318
      %1320 = vmatprep.mubr.bf16.mxu0 0
      %1321 = vmatmul.mubr.bf16.gmra.mxu0 %v1018
      %v1322 = vpop.f32.mrf.mxu0
      %v1323 = vadd.f32 0.0, %v1322
      %v1324 = vpop.f32.mrf.mxu0
      %v1325 = vadd.f32 0.0, %v1324
      %v1326 = vpop.f32.mrf.mxu0
      %v1327 = vadd.f32 0.0, %v1326
      %v1328 = vpop.f32.mrf.mxu0
      %v1329 = vadd.f32 0.0, %v1328
      %1330 = vmatprep.mubr.bf16.mxu0 0
      %1331 = vmatmul.mubr.bf16.gmra.mxu0 %v1021
      %v1332 = vpop.f32.mrf.mxu0
      %v1333 = vadd.f32 0.0, %v1332
      %v1334 = vpop.f32.mrf.mxu0
      %v1335 = vadd.f32 0.0, %v1334
      %v1336 = vpop.f32.mrf.mxu0
      %v1337 = vadd.f32 0.0, %v1336
      %v1338 = vpop.f32.mrf.mxu0
      %v1339 = vadd.f32 0.0, %v1338
      %1340 = vmatprep.mubr.bf16.mxu0 0
      %1341 = vmatmul.mubr.bf16.gmra.mxu0 %v1024
      %v1342 = vpop.f32.mrf.mxu0
      %v1343 = vadd.f32 0.0, %v1342
      %v1344 = vpop.f32.mrf.mxu0
      %v1345 = vadd.f32 0.0, %v1344
      %v1346 = vpop.f32.mrf.mxu0
      %v1347 = vadd.f32 0.0, %v1346
      %v1348 = vpop.f32.mrf.mxu0
      %v1349 = vadd.f32 0.0, %v1348
      %1350 = vmatprep.mubr.bf16.mxu0 0
      %1351 = vmatmul.mubr.bf16.gmra.mxu0 %v1027
      %v1352 = vpop.f32.mrf.mxu0
      %v1353 = vadd.f32 0.0, %v1352
      %v1354 = vpop.f32.mrf.mxu0
      %v1355 = vadd.f32 0.0, %v1354
      %v1356 = vpop.f32.mrf.mxu0
      %v1357 = vadd.f32 0.0, %v1356
      %v1358 = vpop.f32.mrf.mxu0
      %v1359 = vadd.f32 0.0, %v1358
      %1360 = vmatprep.mubr.bf16.mxu0 0
      %1361 = vmatmul.mubr.bf16.gmra.mxu0 %v1030
      %v1362 = vpop.f32.mrf.mxu0
      %v1363 = vadd.f32 0.0, %v1362
      %v1364 = vpop.f32.mrf.mxu0
      %v1365 = vadd.f32 0.0, %v1364
      %v1366 = vpop.f32.mrf.mxu0
      %v1367 = vadd.f32 0.0, %v1366
      %v1368 = vpop.f32.mrf.mxu0
      %v1369 = vadd.f32 0.0, %v1368
      %1370 = vmatprep.mubr.bf16.mxu0 0
      %1371 = vmatmul.mubr.bf16.gmra.mxu0 %v1033
      %v1372 = vpop.f32.mrf.mxu0
      %v1373 = vadd.f32 0.0, %v1372
      %v1374 = vpop.f32.mrf.mxu0
      %v1375 = vadd.f32 0.0, %v1374
      %v1376 = vpop.f32.mrf.mxu0
      %v1377 = vadd.f32 0.0, %v1376
      %v1378 = vpop.f32.mrf.mxu0
      %v1379 = vadd.f32 0.0, %v1378
      %1380 = vmatprep.mubr.bf16.mxu0 0
      %1381 = vmatmul.mubr.bf16.gmra.mxu0 %v1036
      %v1382 = vpop.f32.mrf.mxu0
      %v1383 = vadd.f32 0.0, %v1382
      %v1384 = vpop.f32.mrf.mxu0
      %v1385 = vadd.f32 0.0, %v1384
      %v1386 = vpop.f32.mrf.mxu0
      %v1387 = vadd.f32 0.0, %v1386
      %v1388 = vpop.f32.mrf.mxu0
      %v1389 = vadd.f32 0.0, %v1388
      %1390 = vdwg.mxu0
      %1391 = vmatprep.subr.bf16.mxu0 0
      %1392 = vmatpush1.bf16.msra.mxu0 0
      %1393 = vmatprep.subr.bf16.mxu0 0
      %1394 = vmatpush1.bf16.msra.mxu0 0
      %1395 = vmatprep.subr.bf16.mxu0 0
      %1396 = vmatpush1.bf16.msra.mxu0 0
      %1397 = vmatprep.subr.bf16.mxu0 0
      %1398 = vmatpush1.bf16.msra.mxu0 0
      %1399 = vmatprep.subr.bf16.mxu0 %v924
      %1400 = vmatpush1.bf16.msra.mxu0 %v923
      %1401 = vmatprep.subr.bf16.mxu0 %v920
      %1402 = vmatpush1.bf16.msra.mxu0 %v919
      %1403 = vmatprep.subr.bf16.mxu0 %v916
      %1404 = vmatpush1.bf16.msra.mxu0 %v915
      %1405 = vmatprep.subr.bf16.mxu0 %v912
      %1406 = vmatpush1.bf16.msra.mxu0 %v911
      %1407 = vmatprep.subr.bf16.mxu0 0
      %1408 = vmatpush2.bf16.msra.mxu0 0
      %1409 = vmatprep.subr.bf16.mxu0 0
      %1410 = vmatpush2.bf16.msra.mxu0 0
      %1411 = vmatprep.subr.bf16.mxu0 0
      %1412 = vmatpush2.bf16.msra.mxu0 0
      %1413 = vmatprep.subr.bf16.mxu0 0
      %1414 = vmatpush2.bf16.msra.mxu0 0
      %1415 = vmatprep.subr.bf16.mxu0 0
      %1416 = vmatpush2.bf16.msra.mxu0 0
      %1417 = vmatprep.subr.bf16.mxu0 0
      %1418 = vmatpush2.bf16.msra.mxu0 0
      %1419 = vmatprep.subr.bf16.mxu0 0
      %1420 = vmatpush2.bf16.msra.mxu0 0
      %1421 = vmatprep.subr.bf16.mxu0 0
      %1422 = vmatpush2.bf16.msra.mxu0 0
      %1423 = vmatprep.mubr.bf16.mxu0 0
      %1424 = vmatmul.mubr.bf16.gmra.mxu0 %v943
      %v1425 = vpop.f32.mrf.mxu0
      %v1426 = vadd.f32 0.0, %v1425
      %v1427 = vpop.f32.mrf.mxu0
      %v1428 = vadd.f32 0.0, %v1427
      %v1429 = vpop.f32.mrf.mxu0
      %v1430 = vadd.f32 0.0, %v1429
      %v1431 = vpop.f32.mrf.mxu0
      %v1432 = vadd.f32 0.0, %v1431
      %1433 = vmatprep.mubr.bf16.mxu0 0
      %1434 = vmatmul.mubr.bf16.gmra.mxu0 %v946
      %v1435 = vpop.f32.mrf.mxu0
      %v1436 = vadd.f32 0.0, %v1435
      %v1437 = vpop.f32.mrf.mxu0
      %v1438 = vadd.f32 0.0, %v1437
      %v1439 = vpop.f32.mrf.mxu0
      %v1440 = vadd.f32 0.0, %v1439
      %v1441 = vpop.f32.mrf.mxu0
      %v1442 = vadd.f32 0.0, %v1441
      %1443 = vmatprep.mubr.bf16.mxu0 0
      %1444 = vmatmul.mubr.bf16.gmra.mxu0 %v949
      %v1445 = vpop.f32.mrf.mxu0
      %v1446 = vadd.f32 0.0, %v1445
      %v1447 = vpop.f32.mrf.mxu0
      %v1448 = vadd.f32 0.0, %v1447
      %v1449 = vpop.f32.mrf.mxu0
      %v1450 = vadd.f32 0.0, %v1449
      %v1451 = vpop.f32.mrf.mxu0
      %v1452 = vadd.f32 0.0, %v1451
      %1453 = vmatprep.mubr.bf16.mxu0 0
      %1454 = vmatmul.mubr.bf16.gmra.mxu0 %v952
      %v1455 = vpop.f32.mrf.mxu0
      %v1456 = vadd.f32 0.0, %v1455
      %v1457 = vpop.f32.mrf.mxu0
      %v1458 = vadd.f32 0.0, %v1457
      %v1459 = vpop.f32.mrf.mxu0
      %v1460 = vadd.f32 0.0, %v1459
      %v1461 = vpop.f32.mrf.mxu0
      %v1462 = vadd.f32 0.0, %v1461
      %1463 = vmatprep.mubr.bf16.mxu0 0
      %1464 = vmatmul.mubr.bf16.gmra.mxu0 %v955
      %v1465 = vpop.f32.mrf.mxu0
      %v1466 = vadd.f32 0.0, %v1465
      %v1467 = vpop.f32.mrf.mxu0
      %v1468 = vadd.f32 0.0, %v1467
      %v1469 = vpop.f32.mrf.mxu0
      %v1470 = vadd.f32 0.0, %v1469
      %v1471 = vpop.f32.mrf.mxu0
      %v1472 = vadd.f32 0.0, %v1471
      %1473 = vmatprep.mubr.bf16.mxu0 0
      %1474 = vmatmul.mubr.bf16.gmra.mxu0 %v958
      %v1475 = vpop.f32.mrf.mxu0
      %v1476 = vadd.f32 0.0, %v1475
      %v1477 = vpop.f32.mrf.mxu0
      %v1478 = vadd.f32 0.0, %v1477
      %v1479 = vpop.f32.mrf.mxu0
      %v1480 = vadd.f32 0.0, %v1479
      %v1481 = vpop.f32.mrf.mxu0
      %v1482 = vadd.f32 0.0, %v1481
      %1483 = vmatprep.mubr.bf16.mxu0 0
      %1484 = vmatmul.mubr.bf16.gmra.mxu0 %v961
      %v1485 = vpop.f32.mrf.mxu0
      %v1486 = vadd.f32 0.0, %v1485
      %v1487 = vpop.f32.mrf.mxu0
      %v1488 = vadd.f32 0.0, %v1487
      %v1489 = vpop.f32.mrf.mxu0
      %v1490 = vadd.f32 0.0, %v1489
      %v1491 = vpop.f32.mrf.mxu0
      %v1492 = vadd.f32 0.0, %v1491
      %1493 = vmatprep.mubr.bf16.mxu0 0
      %1494 = vmatmul.mubr.bf16.gmra.mxu0 %v964
      %v1495 = vpop.f32.mrf.mxu0
      %v1496 = vadd.f32 0.0, %v1495
      %v1497 = vpop.f32.mrf.mxu0
      %v1498 = vadd.f32 0.0, %v1497
      %v1499 = vpop.f32.mrf.mxu0
      %v1500 = vadd.f32 0.0, %v1499
      %v1501 = vpop.f32.mrf.mxu0
      %v1502 = vadd.f32 0.0, %v1501
      %1503 = vmatprep.mubr.bf16.mxu0 0
      %1504 = vmatmul.mubr.bf16.gmra.mxu0 %v967
      %v1505 = vpop.f32.mrf.mxu0
      %v1506 = vadd.f32 0.0, %v1505
      %v1507 = vpop.f32.mrf.mxu0
      %v1508 = vadd.f32 0.0, %v1507
      %v1509 = vpop.f32.mrf.mxu0
      %v1510 = vadd.f32 0.0, %v1509
      %v1511 = vpop.f32.mrf.mxu0
      %v1512 = vadd.f32 0.0, %v1511
      %1513 = vmatprep.mubr.bf16.mxu0 0
      %1514 = vmatmul.mubr.bf16.gmra.mxu0 %v970
      %v1515 = vpop.f32.mrf.mxu0
      %v1516 = vadd.f32 0.0, %v1515
      %v1517 = vpop.f32.mrf.mxu0
      %v1518 = vadd.f32 0.0, %v1517
      %v1519 = vpop.f32.mrf.mxu0
      %v1520 = vadd.f32 0.0, %v1519
      %v1521 = vpop.f32.mrf.mxu0
      %v1522 = vadd.f32 0.0, %v1521
      %1523 = vmatprep.mubr.bf16.mxu0 0
      %1524 = vmatmul.mubr.bf16.gmra.mxu0 %v973
      %v1525 = vpop.f32.mrf.mxu0
      %v1526 = vadd.f32 0.0, %v1525
      %v1527 = vpop.f32.mrf.mxu0
      %v1528 = vadd.f32 0.0, %v1527
      %v1529 = vpop.f32.mrf.mxu0
      %v1530 = vadd.f32 0.0, %v1529
      %v1531 = vpop.f32.mrf.mxu0
      %v1532 = vadd.f32 0.0, %v1531
      %1533 = vmatprep.mubr.bf16.mxu0 0
      %1534 = vmatmul.mubr.bf16.gmra.mxu0 %v976
      %v1535 = vpop.f32.mrf.mxu0
      %v1536 = vadd.f32 0.0, %v1535
      %v1537 = vpop.f32.mrf.mxu0
      %v1538 = vadd.f32 0.0, %v1537
      %v1539 = vpop.f32.mrf.mxu0
      %v1540 = vadd.f32 0.0, %v1539
      %v1541 = vpop.f32.mrf.mxu0
      %v1542 = vadd.f32 0.0, %v1541
      %1543 = vmatprep.mubr.bf16.mxu0 0
      %1544 = vmatmul.mubr.bf16.gmra.mxu0 %v979
      %v1545 = vpop.f32.mrf.mxu0
      %v1546 = vadd.f32 0.0, %v1545
      %v1547 = vpop.f32.mrf.mxu0
      %v1548 = vadd.f32 0.0, %v1547
      %v1549 = vpop.f32.mrf.mxu0
      %v1550 = vadd.f32 0.0, %v1549
      %v1551 = vpop.f32.mrf.mxu0
      %v1552 = vadd.f32 0.0, %v1551
      %1553 = vmatprep.mubr.bf16.mxu0 0
      %1554 = vmatmul.mubr.bf16.gmra.mxu0 %v982
      %v1555 = vpop.f32.mrf.mxu0
      %v1556 = vadd.f32 0.0, %v1555
      %v1557 = vpop.f32.mrf.mxu0
      %v1558 = vadd.f32 0.0, %v1557
      %v1559 = vpop.f32.mrf.mxu0
      %v1560 = vadd.f32 0.0, %v1559
      %v1561 = vpop.f32.mrf.mxu0
      %v1562 = vadd.f32 0.0, %v1561
      %1563 = vmatprep.mubr.bf16.mxu0 0
      %1564 = vmatmul.mubr.bf16.gmra.mxu0 %v985
      %v1565 = vpop.f32.mrf.mxu0
      %v1566 = vadd.f32 0.0, %v1565
      %v1567 = vpop.f32.mrf.mxu0
      %v1568 = vadd.f32 0.0, %v1567
      %v1569 = vpop.f32.mrf.mxu0
      %v1570 = vadd.f32 0.0, %v1569
      %v1571 = vpop.f32.mrf.mxu0
      %v1572 = vadd.f32 0.0, %v1571
      %1573 = vmatprep.mubr.bf16.mxu0 0
      %1574 = vmatmul.mubr.bf16.gmra.mxu0 %v988
      %v1575 = vpop.f32.mrf.mxu0
      %v1576 = vadd.f32 0.0, %v1575
      %v1577 = vpop.f32.mrf.mxu0
      %v1578 = vadd.f32 0.0, %v1577
      %v1579 = vpop.f32.mrf.mxu0
      %v1580 = vadd.f32 0.0, %v1579
      %v1581 = vpop.f32.mrf.mxu0
      %v1582 = vadd.f32 0.0, %v1581
      %1583 = vmatprep.mubr.bf16.mxu0 0
      %1584 = vmatmul.mubr.bf16.gmra.mxu0 %v991
      %v1585 = vpop.f32.mrf.mxu0
      %v1586 = vadd.f32 0.0, %v1585
      %v1587 = vpop.f32.mrf.mxu0
      %v1588 = vadd.f32 0.0, %v1587
      %v1589 = vpop.f32.mrf.mxu0
      %v1590 = vadd.f32 0.0, %v1589
      %v1591 = vpop.f32.mrf.mxu0
      %v1592 = vadd.f32 0.0, %v1591
      %1593 = vmatprep.mubr.bf16.mxu0 0
      %1594 = vmatmul.mubr.bf16.gmra.mxu0 %v994
      %v1595 = vpop.f32.mrf.mxu0
      %v1596 = vadd.f32 0.0, %v1595
      %v1597 = vpop.f32.mrf.mxu0
      %v1598 = vadd.f32 0.0, %v1597
      %v1599 = vpop.f32.mrf.mxu0
      %v1600 = vadd.f32 0.0, %v1599
      %v1601 = vpop.f32.mrf.mxu0
      %v1602 = vadd.f32 0.0, %v1601
      %1603 = vmatprep.mubr.bf16.mxu0 0
      %1604 = vmatmul.mubr.bf16.gmra.mxu0 %v997
      %v1605 = vpop.f32.mrf.mxu0
      %v1606 = vadd.f32 0.0, %v1605
      %v1607 = vpop.f32.mrf.mxu0
      %v1608 = vadd.f32 0.0, %v1607
      %v1609 = vpop.f32.mrf.mxu0
      %v1610 = vadd.f32 0.0, %v1609
      %v1611 = vpop.f32.mrf.mxu0
      %v1612 = vadd.f32 0.0, %v1611
      %1613 = vmatprep.mubr.bf16.mxu0 0
      %1614 = vmatmul.mubr.bf16.gmra.mxu0 %v1000
      %v1615 = vpop.f32.mrf.mxu0
      %v1616 = vadd.f32 0.0, %v1615
      %v1617 = vpop.f32.mrf.mxu0
      %v1618 = vadd.f32 0.0, %v1617
      %v1619 = vpop.f32.mrf.mxu0
      %v1620 = vadd.f32 0.0, %v1619
      %v1621 = vpop.f32.mrf.mxu0
      %v1622 = vadd.f32 0.0, %v1621
      %1623 = vmatprep.mubr.bf16.mxu0 0
      %1624 = vmatmul.mubr.bf16.gmra.mxu0 %v1003
      %v1625 = vpop.f32.mrf.mxu0
      %v1626 = vadd.f32 0.0, %v1625
      %v1627 = vpop.f32.mrf.mxu0
      %v1628 = vadd.f32 0.0, %v1627
      %v1629 = vpop.f32.mrf.mxu0
      %v1630 = vadd.f32 0.0, %v1629
      %v1631 = vpop.f32.mrf.mxu0
      %v1632 = vadd.f32 0.0, %v1631
      %1633 = vmatprep.mubr.bf16.mxu0 0
      %1634 = vmatmul.mubr.bf16.gmra.mxu0 %v1006
      %v1635 = vpop.f32.mrf.mxu0
      %v1636 = vadd.f32 0.0, %v1635
      %v1637 = vpop.f32.mrf.mxu0
      %v1638 = vadd.f32 0.0, %v1637
      %v1639 = vpop.f32.mrf.mxu0
      %v1640 = vadd.f32 0.0, %v1639
      %v1641 = vpop.f32.mrf.mxu0
      %v1642 = vadd.f32 0.0, %v1641
      %1643 = vmatprep.mubr.bf16.mxu0 0
      %1644 = vmatmul.mubr.bf16.gmra.mxu0 %v1009
      %v1645 = vpop.f32.mrf.mxu0
      %v1646 = vadd.f32 0.0, %v1645
      %v1647 = vpop.f32.mrf.mxu0
      %v1648 = vadd.f32 0.0, %v1647
      %v1649 = vpop.f32.mrf.mxu0
      %v1650 = vadd.f32 0.0, %v1649
      %v1651 = vpop.f32.mrf.mxu0
      %v1652 = vadd.f32 0.0, %v1651
      %1653 = vmatprep.mubr.bf16.mxu0 0
      %1654 = vmatmul.mubr.bf16.gmra.mxu0 %v1012
      %v1655 = vpop.f32.mrf.mxu0
      %v1656 = vadd.f32 0.0, %v1655
      %v1657 = vpop.f32.mrf.mxu0
      %v1658 = vadd.f32 0.0, %v1657
      %v1659 = vpop.f32.mrf.mxu0
      %v1660 = vadd.f32 0.0, %v1659
      %v1661 = vpop.f32.mrf.mxu0
      %v1662 = vadd.f32 0.0, %v1661
      %1663 = vmatprep.mubr.bf16.mxu0 0
      %1664 = vmatmul.mubr.bf16.gmra.mxu0 %v1015
      %v1665 = vpop.f32.mrf.mxu0
      %v1666 = vadd.f32 0.0, %v1665
      %v1667 = vpop.f32.mrf.mxu0
      %v1668 = vadd.f32 0.0, %v1667
      %v1669 = vpop.f32.mrf.mxu0
      %v1670 = vadd.f32 0.0, %v1669
      %v1671 = vpop.f32.mrf.mxu0
      %v1672 = vadd.f32 0.0, %v1671
      %1673 = vmatprep.mubr.bf16.mxu0 0
      %1674 = vmatmul.mubr.bf16.gmra.mxu0 %v1018
      %v1675 = vpop.f32.mrf.mxu0
      %v1676 = vadd.f32 0.0, %v1675
      %v1677 = vpop.f32.mrf.mxu0
      %v1678 = vadd.f32 0.0, %v1677
      %v1679 = vpop.f32.mrf.mxu0
      %v1680 = vadd.f32 0.0, %v1679
      %v1681 = vpop.f32.mrf.mxu0
      %v1682 = vadd.f32 0.0, %v1681
      %1683 = vmatprep.mubr.bf16.mxu0 0
      %1684 = vmatmul.mubr.bf16.gmra.mxu0 %v1021
      %v1685 = vpop.f32.mrf.mxu0
      %v1686 = vadd.f32 0.0, %v1685
      %v1687 = vpop.f32.mrf.mxu0
      %v1688 = vadd.f32 0.0, %v1687
      %v1689 = vpop.f32.mrf.mxu0
      %v1690 = vadd.f32 0.0, %v1689
      %v1691 = vpop.f32.mrf.mxu0
      %v1692 = vadd.f32 0.0, %v1691
      %1693 = vmatprep.mubr.bf16.mxu0 0
      %1694 = vmatmul.mubr.bf16.gmra.mxu0 %v1024
      %v1695 = vpop.f32.mrf.mxu0
      %v1696 = vadd.f32 0.0, %v1695
      %v1697 = vpop.f32.mrf.mxu0
      %v1698 = vadd.f32 0.0, %v1697
      %v1699 = vpop.f32.mrf.mxu0
      %v1700 = vadd.f32 0.0, %v1699
      %v1701 = vpop.f32.mrf.mxu0
      %v1702 = vadd.f32 0.0, %v1701
      %1703 = vmatprep.mubr.bf16.mxu0 0
      %1704 = vmatmul.mubr.bf16.gmra.mxu0 %v1027
      %v1705 = vpop.f32.mrf.mxu0
      %v1706 = vadd.f32 0.0, %v1705
      %v1707 = vpop.f32.mrf.mxu0
      %v1708 = vadd.f32 0.0, %v1707
      %v1709 = vpop.f32.mrf.mxu0
      %v1710 = vadd.f32 0.0, %v1709
      %v1711 = vpop.f32.mrf.mxu0
      %v1712 = vadd.f32 0.0, %v1711
      %1713 = vmatprep.mubr.bf16.mxu0 0
      %1714 = vmatmul.mubr.bf16.gmra.mxu0 %v1030
      %v1715 = vpop.f32.mrf.mxu0
      %v1716 = vadd.f32 0.0, %v1715
      %v1717 = vpop.f32.mrf.mxu0
      %v1718 = vadd.f32 0.0, %v1717
      %v1719 = vpop.f32.mrf.mxu0
      %v1720 = vadd.f32 0.0, %v1719
      %v1721 = vpop.f32.mrf.mxu0
      %v1722 = vadd.f32 0.0, %v1721
      %1723 = vmatprep.mubr.bf16.mxu0 0
      %1724 = vmatmul.mubr.bf16.gmra.mxu0 %v1033
      %v1725 = vpop.f32.mrf.mxu0
      %v1726 = vadd.f32 0.0, %v1725
      %v1727 = vpop.f32.mrf.mxu0
      %v1728 = vadd.f32 0.0, %v1727
      %v1729 = vpop.f32.mrf.mxu0
      %v1730 = vadd.f32 0.0, %v1729
      %v1731 = vpop.f32.mrf.mxu0
      %v1732 = vadd.f32 0.0, %v1731
      %1733 = vmatprep.mubr.bf16.mxu0 0
      %1734 = vmatmul.mubr.bf16.gmra.mxu0 %v1036
      %v1735 = vpop.f32.mrf.mxu0
      %v1736 = vadd.f32 0.0, %v1735
      %v1737 = vpop.f32.mrf.mxu0
      %v1738 = vadd.f32 0.0, %v1737
      %v1739 = vpop.f32.mrf.mxu0
      %v1740 = vadd.f32 0.0, %v1739
      %v1741 = vpop.f32.mrf.mxu0
      %v1742 = vadd.f32 0.0, %v1741
      %1743 = vdwg.mxu0
      %v1744 = vld [vmem:[#allocation2] sm:$0xff]
      %v1745 = vld [vmem:[#allocation2 + $0x8] sm:$0xff]
      %v1746 = vld [vmem:[#allocation2 + $0x10] sm:$0xff]
      %v1747 = vld [vmem:[#allocation2 + $0x18] sm:$0xff]
      %v1748 = vld [vmem:[#allocation2 + $0x20] sm:$0xff]
      %v1749 = vld [vmem:[#allocation2 + $0x28] sm:$0xff]
      %v1750 = vld [vmem:[#allocation2 + $0x30] sm:$0xff]
      %v1751 = vld [vmem:[#allocation2 + $0x38] sm:$0xff]
      %v1752 = vld [vmem:[#allocation2 + $0x40] sm:$0xff]
      %v1753 = vld [vmem:[#allocation2 + $0x48] sm:$0xff]
      %v1754 = vld [vmem:[#allocation2 + $0x50] sm:$0xff]
      %v1755 = vld [vmem:[#allocation2 + $0x58] sm:$0xff]
      %v1756 = vld [vmem:[#allocation2 + $0x60] sm:$0xff]
      %v1757 = vld [vmem:[#allocation2 + $0x68] sm:$0xff]
      %v1758 = vld [vmem:[#allocation2 + $0x70] sm:$0xff]
      %v1759 = vld [vmem:[#allocation2 + $0x78] sm:$0xff]
      %v1760 = vld [vmem:[#allocation2 + $0x80] sm:$0xff]
      %v1761 = vld [vmem:[#allocation2 + $0x88] sm:$0xff]
      %v1762 = vld [vmem:[#allocation2 + $0x90] sm:$0xff]
      %v1763 = vld [vmem:[#allocation2 + $0x98] sm:$0xff]
      %v1764 = vld [vmem:[#allocation2 + $0xa0] sm:$0xff]
      %v1765 = vld [vmem:[#allocation2 + $0xa8] sm:$0xff]
      %v1766 = vld [vmem:[#allocation2 + $0xb0] sm:$0xff]
      %v1767 = vld [vmem:[#allocation2 + $0xb8] sm:$0xff]
      %v1768 = vld [vmem:[#allocation2 + $0xc0] sm:$0xff]
      %v1769 = vld [vmem:[#allocation2 + $0xc8] sm:$0xff]
      %v1770 = vld [vmem:[#allocation2 + $0xd0] sm:$0xff]
      %v1771 = vld [vmem:[#allocation2 + $0xd8] sm:$0xff]
      %v1772 = vld [vmem:[#allocation2 + $0xe0] sm:$0xff]
      %v1773 = vld [vmem:[#allocation2 + $0xe8] sm:$0xff]
      %v1774 = vld [vmem:[#allocation2 + $0xf0] sm:$0xff]
      %v1775 = vld [vmem:[#allocation2 + $0xf8] sm:$0xff]
      %v1776 = vld [vmem:[#allocation2 + $0x100] sm:$0xff]
      %v1777 = vld [vmem:[#allocation2 + $0x108] sm:$0xff]
      %v1778 = vld [vmem:[#allocation2 + $0x110] sm:$0xff]
      %v1779 = vld [vmem:[#allocation2 + $0x118] sm:$0xff]
      %v1780 = vld [vmem:[#allocation2 + $0x120] sm:$0xff]
      %v1781 = vld [vmem:[#allocation2 + $0x128] sm:$0xff]
      %v1782 = vld [vmem:[#allocation2 + $0x130] sm:$0xff]
      %v1783 = vld [vmem:[#allocation2 + $0x138] sm:$0xff]
      %v1784 = vld [vmem:[#allocation2 + $0x140] sm:$0xff]
      %v1785 = vld [vmem:[#allocation2 + $0x148] sm:$0xff]
      %v1786 = vld [vmem:[#allocation2 + $0x150] sm:$0xff]
      %v1787 = vld [vmem:[#allocation2 + $0x158] sm:$0xff]
      %v1788 = vld [vmem:[#allocation2 + $0x160] sm:$0xff]
      %v1789 = vld [vmem:[#allocation2 + $0x168] sm:$0xff]
      %v1790 = vld [vmem:[#allocation2 + $0x170] sm:$0xff]
      %v1791 = vld [vmem:[#allocation2 + $0x178] sm:$0xff]
      %v1792 = vld [vmem:[#allocation2 + $0x180] sm:$0xff]
      %v1793 = vld [vmem:[#allocation2 + $0x188] sm:$0xff]
      %v1794 = vld [vmem:[#allocation2 + $0x190] sm:$0xff]
      %v1795 = vld [vmem:[#allocation2 + $0x198] sm:$0xff]
      %v1796 = vld [vmem:[#allocation2 + $0x1a0] sm:$0xff]
      %v1797 = vld [vmem:[#allocation2 + $0x1a8] sm:$0xff]
      %v1798 = vld [vmem:[#allocation2 + $0x1b0] sm:$0xff]
      %v1799 = vld [vmem:[#allocation2 + $0x1b8] sm:$0xff]
      %v1800 = vld [vmem:[#allocation2 + $0x1c0] sm:$0xff]
      %v1801 = vld [vmem:[#allocation2 + $0x1c8] sm:$0xff]
      %v1802 = vld [vmem:[#allocation2 + $0x1d0] sm:$0xff]
      %v1803 = vld [vmem:[#allocation2 + $0x1d8] sm:$0xff]
      %v1804 = vld [vmem:[#allocation2 + $0x1e0] sm:$0xff]
      %v1805 = vld [vmem:[#allocation2 + $0x1e8] sm:$0xff]
      %v1806 = vld [vmem:[#allocation2 + $0x1f0] sm:$0xff]
      %v1807 = vld [vmem:[#allocation2 + $0x1f8] sm:$0xff]
      %v1808 = vmax.f32 %v1073, %v1075
      %v1809 = vmax.f32 %v1808, %v1426
      %v1810 = vmax.f32 %v1809, %v1428
      %1811 = vmax.xlane.f32.xlu0 %v1810
      %v1812 = vpop.xlane.xlu0 %1811
      %v1813 = vmax.f32 %v1077, %v1079
      %v1814 = vmax.f32 %v1813, %v1430
      %v1815 = vmax.f32 %v1814, %v1432
      %1816 = vmax.xlane.f32.xlu0 %v1815
      %v1817 = vpop.xlane.xlu0 %1816
      %v1818 = vmax.f32 %v1083, %v1085
      %v1819 = vmax.f32 %v1818, %v1436
      %v1820 = vmax.f32 %v1819, %v1438
      %1821 = vmax.xlane.f32.xlu0 %v1820
      %v1822 = vpop.xlane.xlu0 %1821
      %v1823 = vmax.f32 %v1087, %v1089
      %v1824 = vmax.f32 %v1823, %v1440
      %v1825 = vmax.f32 %v1824, %v1442
      %1826 = vmax.xlane.f32.xlu0 %v1825
      %v1827 = vpop.xlane.xlu0 %1826
      %v1828 = vmax.f32 %v1093, %v1095
      %v1829 = vmax.f32 %v1828, %v1446
      %v1830 = vmax.f32 %v1829, %v1448
      %1831 = vmax.xlane.f32.xlu0 %v1830
      %v1832 = vpop.xlane.xlu0 %1831
      %v1833 = vmax.f32 %v1097, %v1099
      %v1834 = vmax.f32 %v1833, %v1450
      %v1835 = vmax.f32 %v1834, %v1452
      %1836 = vmax.xlane.f32.xlu0 %v1835
      %v1837 = vpop.xlane.xlu0 %1836
      %v1838 = vmax.f32 %v1103, %v1105
      %v1839 = vmax.f32 %v1838, %v1456
      %v1840 = vmax.f32 %v1839, %v1458
      %1841 = vmax.xlane.f32.xlu0 %v1840
      %v1842 = vpop.xlane.xlu0 %1841
      %v1843 = vmax.f32 %v1107, %v1109
      %v1844 = vmax.f32 %v1843, %v1460
      %v1845 = vmax.f32 %v1844, %v1462
      %1846 = vmax.xlane.f32.xlu0 %v1845
      %v1847 = vpop.xlane.xlu0 %1846
      %v1848 = vmax.f32 %v1113, %v1115
      %v1849 = vmax.f32 %v1848, %v1466
      %v1850 = vmax.f32 %v1849, %v1468
      %1851 = vmax.xlane.f32.xlu0 %v1850
      %v1852 = vpop.xlane.xlu0 %1851
      %v1853 = vmax.f32 %v1117, %v1119
      %v1854 = vmax.f32 %v1853, %v1470
      %v1855 = vmax.f32 %v1854, %v1472
      %1856 = vmax.xlane.f32.xlu0 %v1855
      %v1857 = vpop.xlane.xlu0 %1856
      %v1858 = vmax.f32 %v1123, %v1125
      %v1859 = vmax.f32 %v1858, %v1476
      %v1860 = vmax.f32 %v1859, %v1478
      %1861 = vmax.xlane.f32.xlu0 %v1860
      %v1862 = vpop.xlane.xlu0 %1861
      %v1863 = vmax.f32 %v1127, %v1129
      %v1864 = vmax.f32 %v1863, %v1480
      %v1865 = vmax.f32 %v1864, %v1482
      %1866 = vmax.xlane.f32.xlu0 %v1865
      %v1867 = vpop.xlane.xlu0 %1866
      %v1868 = vmax.f32 %v1133, %v1135
      %v1869 = vmax.f32 %v1868, %v1486
      %v1870 = vmax.f32 %v1869, %v1488
      %1871 = vmax.xlane.f32.xlu0 %v1870
      %v1872 = vpop.xlane.xlu0 %1871
      %v1873 = vmax.f32 %v1137, %v1139
      %v1874 = vmax.f32 %v1873, %v1490
      %v1875 = vmax.f32 %v1874, %v1492
      %1876 = vmax.xlane.f32.xlu0 %v1875
      %v1877 = vpop.xlane.xlu0 %1876
      %v1878 = vmax.f32 %v1143, %v1145
      %v1879 = vmax.f32 %v1878, %v1496
      %v1880 = vmax.f32 %v1879, %v1498
      %1881 = vmax.xlane.f32.xlu0 %v1880
      %v1882 = vpop.xlane.xlu0 %1881
      %v1883 = vmax.f32 %v1147, %v1149
      %v1884 = vmax.f32 %v1883, %v1500
      %v1885 = vmax.f32 %v1884, %v1502
      %1886 = vmax.xlane.f32.xlu0 %v1885
      %v1887 = vpop.xlane.xlu0 %1886
      %v1888 = vmax.f32 %v1153, %v1155
      %v1889 = vmax.f32 %v1888, %v1506
      %v1890 = vmax.f32 %v1889, %v1508
      %1891 = vmax.xlane.f32.xlu0 %v1890
      %v1892 = vpop.xlane.xlu0 %1891
      %v1893 = vmax.f32 %v1157, %v1159
      %v1894 = vmax.f32 %v1893, %v1510
      %v1895 = vmax.f32 %v1894, %v1512
      %1896 = vmax.xlane.f32.xlu0 %v1895
      %v1897 = vpop.xlane.xlu0 %1896
      %v1898 = vmax.f32 %v1163, %v1165
      %v1899 = vmax.f32 %v1898, %v1516
      %v1900 = vmax.f32 %v1899, %v1518
      %1901 = vmax.xlane.f32.xlu0 %v1900
      %v1902 = vpop.xlane.xlu0 %1901
      %v1903 = vmax.f32 %v1167, %v1169
      %v1904 = vmax.f32 %v1903, %v1520
      %v1905 = vmax.f32 %v1904, %v1522
      %1906 = vmax.xlane.f32.xlu0 %v1905
      %v1907 = vpop.xlane.xlu0 %1906
      %v1908 = vmax.f32 %v1173, %v1175
      %v1909 = vmax.f32 %v1908, %v1526
      %v1910 = vmax.f32 %v1909, %v1528
      %1911 = vmax.xlane.f32.xlu0 %v1910
      %v1912 = vpop.xlane.xlu0 %1911
      %v1913 = vmax.f32 %v1177, %v1179
      %v1914 = vmax.f32 %v1913, %v1530
      %v1915 = vmax.f32 %v1914, %v1532
      %1916 = vmax.xlane.f32.xlu0 %v1915
      %v1917 = vpop.xlane.xlu0 %1916
      %v1918 = vmax.f32 %v1183, %v1185
      %v1919 = vmax.f32 %v1918, %v1536
      %v1920 = vmax.f32 %v1919, %v1538
      %1921 = vmax.xlane.f32.xlu0 %v1920
      %v1922 = vpop.xlane.xlu0 %1921
      %v1923 = vmax.f32 %v1187, %v1189
      %v1924 = vmax.f32 %v1923, %v1540
      %v1925 = vmax.f32 %v1924, %v1542
      %1926 = vmax.xlane.f32.xlu0 %v1925
      %v1927 = vpop.xlane.xlu0 %1926
      %v1928 = vmax.f32 %v1193, %v1195
      %v1929 = vmax.f32 %v1928, %v1546
      %v1930 = vmax.f32 %v1929, %v1548
      %1931 = vmax.xlane.f32.xlu0 %v1930
      %v1932 = vpop.xlane.xlu0 %1931
      %v1933 = vmax.f32 %v1197, %v1199
      %v1934 = vmax.f32 %v1933, %v1550
      %v1935 = vmax.f32 %v1934, %v1552
      %1936 = vmax.xlane.f32.xlu0 %v1935
      %v1937 = vpop.xlane.xlu0 %1936
      %v1938 = vmax.f32 %v1203, %v1205
      %v1939 = vmax.f32 %v1938, %v1556
      %v1940 = vmax.f32 %v1939, %v1558
      %1941 = vmax.xlane.f32.xlu0 %v1940
      %v1942 = vpop.xlane.xlu0 %1941
      %v1943 = vmax.f32 %v1207, %v1209
      %v1944 = vmax.f32 %v1943, %v1560
      %v1945 = vmax.f32 %v1944, %v1562
      %1946 = vmax.xlane.f32.xlu0 %v1945
      %v1947 = vpop.xlane.xlu0 %1946
      %v1948 = vmax.f32 %v1213, %v1215
      %v1949 = vmax.f32 %v1948, %v1566
      %v1950 = vmax.f32 %v1949, %v1568
      %1951 = vmax.xlane.f32.xlu0 %v1950
      %v1952 = vpop.xlane.xlu0 %1951
      %v1953 = vmax.f32 %v1217, %v1219
      %v1954 = vmax.f32 %v1953, %v1570
      %v1955 = vmax.f32 %v1954, %v1572
      %1956 = vmax.xlane.f32.xlu0 %v1955
      %v1957 = vpop.xlane.xlu0 %1956
      %v1958 = vmax.f32 %v1223, %v1225
      %v1959 = vmax.f32 %v1958, %v1576
      %v1960 = vmax.f32 %v1959, %v1578
      %1961 = vmax.xlane.f32.xlu0 %v1960
      %v1962 = vpop.xlane.xlu0 %1961
      %v1963 = vmax.f32 %v1227, %v1229
      %v1964 = vmax.f32 %v1963, %v1580
      %v1965 = vmax.f32 %v1964, %v1582
      %1966 = vmax.xlane.f32.xlu0 %v1965
      %v1967 = vpop.xlane.xlu0 %1966
      %v1968 = vmax.f32 %v1233, %v1235
      %v1969 = vmax.f32 %v1968, %v1586
      %v1970 = vmax.f32 %v1969, %v1588
      %1971 = vmax.xlane.f32.xlu0 %v1970
      %v1972 = vpop.xlane.xlu0 %1971
      %v1973 = vmax.f32 %v1237, %v1239
      %v1974 = vmax.f32 %v1973, %v1590
      %v1975 = vmax.f32 %v1974, %v1592
      %1976 = vmax.xlane.f32.xlu0 %v1975
      %v1977 = vpop.xlane.xlu0 %1976
      %v1978 = vmax.f32 %v1243, %v1245
      %v1979 = vmax.f32 %v1978, %v1596
      %v1980 = vmax.f32 %v1979, %v1598
      %1981 = vmax.xlane.f32.xlu0 %v1980
      %v1982 = vpop.xlane.xlu0 %1981
      %v1983 = vmax.f32 %v1247, %v1249
      %v1984 = vmax.f32 %v1983, %v1600
      %v1985 = vmax.f32 %v1984, %v1602
      %1986 = vmax.xlane.f32.xlu0 %v1985
      %v1987 = vpop.xlane.xlu0 %1986
      %v1988 = vmax.f32 %v1253, %v1255
      %v1989 = vmax.f32 %v1988, %v1606
      %v1990 = vmax.f32 %v1989, %v1608
      %1991 = vmax.xlane.f32.xlu0 %v1990
      %v1992 = vpop.xlane.xlu0 %1991
      %v1993 = vmax.f32 %v1257, %v1259
      %v1994 = vmax.f32 %v1993, %v1610
      %v1995 = vmax.f32 %v1994, %v1612
      %1996 = vmax.xlane.f32.xlu0 %v1995
      %v1997 = vpop.xlane.xlu0 %1996
      %v1998 = vmax.f32 %v1263, %v1265
      %v1999 = vmax.f32 %v1998, %v1616
      %v2000 = vmax.f32 %v1999, %v1618
      %2001 = vmax.xlane.f32.xlu0 %v2000
      %v2002 = vpop.xlane.xlu0 %2001
      %v2003 = vmax.f32 %v1267, %v1269
      %v2004 = vmax.f32 %v2003, %v1620
      %v2005 = vmax.f32 %v2004, %v1622
      %2006 = vmax.xlane.f32.xlu0 %v2005
      %v2007 = vpop.xlane.xlu0 %2006
      %v2008 = vmax.f32 %v1273, %v1275
      %v2009 = vmax.f32 %v2008, %v1626
      %v2010 = vmax.f32 %v2009, %v1628
      %2011 = vmax.xlane.f32.xlu0 %v2010
      %v2012 = vpop.xlane.xlu0 %2011
      %v2013 = vmax.f32 %v1277, %v1279
      %v2014 = vmax.f32 %v2013, %v1630
      %v2015 = vmax.f32 %v2014, %v1632
      %2016 = vmax.xlane.f32.xlu0 %v2015
      %v2017 = vpop.xlane.xlu0 %2016
      %v2018 = vmax.f32 %v1283, %v1285
      %v2019 = vmax.f32 %v2018, %v1636
      %v2020 = vmax.f32 %v2019, %v1638
      %2021 = vmax.xlane.f32.xlu0 %v2020
      %v2022 = vpop.xlane.xlu0 %2021
      %v2023 = vmax.f32 %v1287, %v1289
      %v2024 = vmax.f32 %v2023, %v1640
      %v2025 = vmax.f32 %v2024, %v1642
      %2026 = vmax.xlane.f32.xlu0 %v2025
      %v2027 = vpop.xlane.xlu0 %2026
      %v2028 = vmax.f32 %v1293, %v1295
      %v2029 = vmax.f32 %v2028, %v1646
      %v2030 = vmax.f32 %v2029, %v1648
      %2031 = vmax.xlane.f32.xlu0 %v2030
      %v2032 = vpop.xlane.xlu0 %2031
      %v2033 = vmax.f32 %v1297, %v1299
      %v2034 = vmax.f32 %v2033, %v1650
      %v2035 = vmax.f32 %v2034, %v1652
      %2036 = vmax.xlane.f32.xlu0 %v2035
      %v2037 = vpop.xlane.xlu0 %2036
      %v2038 = vmax.f32 %v1303, %v1305
      %v2039 = vmax.f32 %v2038, %v1656
      %v2040 = vmax.f32 %v2039, %v1658
      %2041 = vmax.xlane.f32.xlu0 %v2040
      %v2042 = vpop.xlane.xlu0 %2041
      %v2043 = vmax.f32 %v1307, %v1309
      %v2044 = vmax.f32 %v2043, %v1660
      %v2045 = vmax.f32 %v2044, %v1662
      %2046 = vmax.xlane.f32.xlu0 %v2045
      %v2047 = vpop.xlane.xlu0 %2046
      %v2048 = vmax.f32 %v1313, %v1315
      %v2049 = vmax.f32 %v2048, %v1666
      %v2050 = vmax.f32 %v2049, %v1668
      %2051 = vmax.xlane.f32.xlu0 %v2050
      %v2052 = vpop.xlane.xlu0 %2051
      %v2053 = vmax.f32 %v1317, %v1319
      %v2054 = vmax.f32 %v2053, %v1670
      %v2055 = vmax.f32 %v2054, %v1672
      %2056 = vmax.xlane.f32.xlu0 %v2055
      %v2057 = vpop.xlane.xlu0 %2056
      %v2058 = vmax.f32 %v1323, %v1325
      %v2059 = vmax.f32 %v2058, %v1676
      %v2060 = vmax.f32 %v2059, %v1678
      %2061 = vmax.xlane.f32.xlu0 %v2060
      %v2062 = vpop.xlane.xlu0 %2061
      %v2063 = vmax.f32 %v1327, %v1329
      %v2064 = vmax.f32 %v2063, %v1680
      %v2065 = vmax.f32 %v2064, %v1682
      %2066 = vmax.xlane.f32.xlu0 %v2065
      %v2067 = vpop.xlane.xlu0 %2066
      %v2068 = vmax.f32 %v1333, %v1335
      %v2069 = vmax.f32 %v2068, %v1686
      %v2070 = vmax.f32 %v2069, %v1688
      %2071 = vmax.xlane.f32.xlu0 %v2070
      %v2072 = vpop.xlane.xlu0 %2071
      %v2073 = vmax.f32 %v1337, %v1339
      %v2074 = vmax.f32 %v2073, %v1690
      %v2075 = vmax.f32 %v2074, %v1692
      %2076 = vmax.xlane.f32.xlu0 %v2075
      %v2077 = vpop.xlane.xlu0 %2076
      %v2078 = vmax.f32 %v1343, %v1345
      %v2079 = vmax.f32 %v2078, %v1696
      %v2080 = vmax.f32 %v2079, %v1698
      %2081 = vmax.xlane.f32.xlu0 %v2080
      %v2082 = vpop.xlane.xlu0 %2081
      %v2083 = vmax.f32 %v1347, %v1349
      %v2084 = vmax.f32 %v2083, %v1700
      %v2085 = vmax.f32 %v2084, %v1702
      %2086 = vmax.xlane.f32.xlu0 %v2085
      %v2087 = vpop.xlane.xlu0 %2086
      %v2088 = vmax.f32 %v1353, %v1355
      %v2089 = vmax.f32 %v2088, %v1706
      %v2090 = vmax.f32 %v2089, %v1708
      %2091 = vmax.xlane.f32.xlu0 %v2090
      %v2092 = vpop.xlane.xlu0 %2091
      %v2093 = vmax.f32 %v1357, %v1359
      %v2094 = vmax.f32 %v2093, %v1710
      %v2095 = vmax.f32 %v2094, %v1712
      %2096 = vmax.xlane.f32.xlu0 %v2095
      %v2097 = vpop.xlane.xlu0 %2096
      %v2098 = vmax.f32 %v1363, %v1365
      %v2099 = vmax.f32 %v2098, %v1716
      %v2100 = vmax.f32 %v2099, %v1718
      %2101 = vmax.xlane.f32.xlu0 %v2100
      %v2102 = vpop.xlane.xlu0 %2101
      %v2103 = vmax.f32 %v1367, %v1369
      %v2104 = vmax.f32 %v2103, %v1720
      %v2105 = vmax.f32 %v2104, %v1722
      %2106 = vmax.xlane.f32.xlu0 %v2105
      %v2107 = vpop.xlane.xlu0 %2106
      %v2108 = vmax.f32 %v1373, %v1375
      %v2109 = vmax.f32 %v2108, %v1726
      %v2110 = vmax.f32 %v2109, %v1728
      %2111 = vmax.xlane.f32.xlu0 %v2110
      %v2112 = vpop.xlane.xlu0 %2111
      %v2113 = vmax.f32 %v1377, %v1379
      %v2114 = vmax.f32 %v2113, %v1730
      %v2115 = vmax.f32 %v2114, %v1732
      %2116 = vmax.xlane.f32.xlu0 %v2115
      %v2117 = vpop.xlane.xlu0 %2116
      %v2118 = vmax.f32 %v1383, %v1385
      %v2119 = vmax.f32 %v2118, %v1736
      %v2120 = vmax.f32 %v2119, %v1738
      %2121 = vmax.xlane.f32.xlu0 %v2120
      %v2122 = vpop.xlane.xlu0 %2121
      %v2123 = vmax.f32 %v1387, %v1389
      %v2124 = vmax.f32 %v2123, %v1740
      %v2125 = vmax.f32 %v2124, %v1742
      %2126 = vmax.xlane.f32.xlu0 %v2125
      %v2127 = vpop.xlane.xlu0 %2126
      %v2128 = vmax.f32 %v1744, %v1812
      %v2129 = vmax.f32 %v1745, %v1817
      %v2130 = vmax.f32 %v1746, %v1822
      %v2131 = vmax.f32 %v1747, %v1827
      %v2132 = vmax.f32 %v1748, %v1832
      %v2133 = vmax.f32 %v1749, %v1837
      %v2134 = vmax.f32 %v1750, %v1842
      %v2135 = vmax.f32 %v1751, %v1847
      %v2136 = vmax.f32 %v1752, %v1852
      %v2137 = vmax.f32 %v1753, %v1857
      %v2138 = vmax.f32 %v1754, %v1862
      %v2139 = vmax.f32 %v1755, %v1867
      %v2140 = vmax.f32 %v1756, %v1872
      %v2141 = vmax.f32 %v1757, %v1877
      %v2142 = vmax.f32 %v1758, %v1882
      %v2143 = vmax.f32 %v1759, %v1887
      %v2144 = vmax.f32 %v1760, %v1892
      %v2145 = vmax.f32 %v1761, %v1897
      %v2146 = vmax.f32 %v1762, %v1902
      %v2147 = vmax.f32 %v1763, %v1907
      %v2148 = vmax.f32 %v1764, %v1912
      %v2149 = vmax.f32 %v1765, %v1917
      %v2150 = vmax.f32 %v1766, %v1922
      %v2151 = vmax.f32 %v1767, %v1927
      %v2152 = vmax.f32 %v1768, %v1932
      %v2153 = vmax.f32 %v1769, %v1937
      %v2154 = vmax.f32 %v1770, %v1942
      %v2155 = vmax.f32 %v1771, %v1947
      %v2156 = vmax.f32 %v1772, %v1952
      %v2157 = vmax.f32 %v1773, %v1957
      %v2158 = vmax.f32 %v1774, %v1962
      %v2159 = vmax.f32 %v1775, %v1967
      %v2160 = vmax.f32 %v1776, %v1972
      %v2161 = vmax.f32 %v1777, %v1977
      %v2162 = vmax.f32 %v1778, %v1982
      %v2163 = vmax.f32 %v1779, %v1987
      %v2164 = vmax.f32 %v1780, %v1992
      %v2165 = vmax.f32 %v1781, %v1997
      %v2166 = vmax.f32 %v1782, %v2002
      %v2167 = vmax.f32 %v1783, %v2007
      %v2168 = vmax.f32 %v1784, %v2012
      %v2169 = vmax.f32 %v1785, %v2017
      %v2170 = vmax.f32 %v1786, %v2022
      %v2171 = vmax.f32 %v1787, %v2027
      %v2172 = vmax.f32 %v1788, %v2032
      %v2173 = vmax.f32 %v1789, %v2037
      %v2174 = vmax.f32 %v1790, %v2042
      %v2175 = vmax.f32 %v1791, %v2047
      %v2176 = vmax.f32 %v1792, %v2052
      %v2177 = vmax.f32 %v1793, %v2057
      %v2178 = vmax.f32 %v1794, %v2062
      %v2179 = vmax.f32 %v1795, %v2067
      %v2180 = vmax.f32 %v1796, %v2072
      %v2181 = vmax.f32 %v1797, %v2077
      %v2182 = vmax.f32 %v1798, %v2082
      %v2183 = vmax.f32 %v1799, %v2087
      %v2184 = vmax.f32 %v1800, %v2092
      %v2185 = vmax.f32 %v1801, %v2097
      %v2186 = vmax.f32 %v1802, %v2102
      %v2187 = vmax.f32 %v1803, %v2107
      %v2188 = vmax.f32 %v1804, %v2112
      %v2189 = vmax.f32 %v1805, %v2117
      %v2190 = vmax.f32 %v1806, %v2122
      %v2191 = vmax.f32 %v1807, %v2127
      %v2192 = vsub.f32 %v1744, %v2128
      %v2193 = vsub.f32 %v1745, %v2129
      %v2194 = vsub.f32 %v1746, %v2130
      %v2195 = vsub.f32 %v1747, %v2131
      %v2196 = vsub.f32 %v1748, %v2132
      %v2197 = vsub.f32 %v1749, %v2133
      %v2198 = vsub.f32 %v1750, %v2134
      %v2199 = vsub.f32 %v1751, %v2135
      %v2200 = vsub.f32 %v1752, %v2136
      %v2201 = vsub.f32 %v1753, %v2137
      %v2202 = vsub.f32 %v1754, %v2138
      %v2203 = vsub.f32 %v1755, %v2139
      %v2204 = vsub.f32 %v1756, %v2140
      %v2205 = vsub.f32 %v1757, %v2141
      %v2206 = vsub.f32 %v1758, %v2142
      %v2207 = vsub.f32 %v1759, %v2143
      %v2208 = vsub.f32 %v1760, %v2144
      %v2209 = vsub.f32 %v1761, %v2145
      %v2210 = vsub.f32 %v1762, %v2146
      %v2211 = vsub.f32 %v1763, %v2147
      %v2212 = vsub.f32 %v1764, %v2148
      %v2213 = vsub.f32 %v1765, %v2149
      %v2214 = vsub.f32 %v1766, %v2150
      %v2215 = vsub.f32 %v1767, %v2151
      %v2216 = vsub.f32 %v1768, %v2152
      %v2217 = vsub.f32 %v1769, %v2153
      %v2218 = vsub.f32 %v1770, %v2154
      %v2219 = vsub.f32 %v1771, %v2155
      %v2220 = vsub.f32 %v1772, %v2156
      %v2221 = vsub.f32 %v1773, %v2157
      %v2222 = vsub.f32 %v1774, %v2158
      %v2223 = vsub.f32 %v1775, %v2159
      %v2224 = vsub.f32 %v1776, %v2160
      %v2225 = vsub.f32 %v1777, %v2161
      %v2226 = vsub.f32 %v1778, %v2162
      %v2227 = vsub.f32 %v1779, %v2163
      %v2228 = vsub.f32 %v1780, %v2164
      %v2229 = vsub.f32 %v1781, %v2165
      %v2230 = vsub.f32 %v1782, %v2166
      %v2231 = vsub.f32 %v1783, %v2167
      %v2232 = vsub.f32 %v1784, %v2168
      %v2233 = vsub.f32 %v1785, %v2169
      %v2234 = vsub.f32 %v1786, %v2170
      %v2235 = vsub.f32 %v1787, %v2171
      %v2236 = vsub.f32 %v1788, %v2172
      %v2237 = vsub.f32 %v1789, %v2173
      %v2238 = vsub.f32 %v1790, %v2174
      %v2239 = vsub.f32 %v1791, %v2175
      %v2240 = vsub.f32 %v1792, %v2176
      %v2241 = vsub.f32 %v1793, %v2177
      %v2242 = vsub.f32 %v1794, %v2178
      %v2243 = vsub.f32 %v1795, %v2179
      %v2244 = vsub.f32 %v1796, %v2180
      %v2245 = vsub.f32 %v1797, %v2181
      %v2246 = vsub.f32 %v1798, %v2182
      %v2247 = vsub.f32 %v1799, %v2183
      %v2248 = vsub.f32 %v1800, %v2184
      %v2249 = vsub.f32 %v1801, %v2185
      %v2250 = vsub.f32 %v1802, %v2186
      %v2251 = vsub.f32 %v1803, %v2187
      %v2252 = vsub.f32 %v1804, %v2188
      %v2253 = vsub.f32 %v1805, %v2189
      %v2254 = vsub.f32 %v1806, %v2190
      %v2255 = vsub.f32 %v1807, %v2191
      %v2256 = vmul.f32 %v2192, 1.442695
      %v2257 = vpow.pop %v2256
      %v2258 = vmul.f32 %v2193, 1.442695
      %v2259 = vpow.pop %v2258
      %v2260 = vmul.f32 %v2194, 1.442695
      %v2261 = vpow.pop %v2260
      %v2262 = vmul.f32 %v2195, 1.442695
      %v2263 = vpow.pop %v2262
      %v2264 = vmul.f32 %v2196, 1.442695
      %v2265 = vpow.pop %v2264
      %v2266 = vmul.f32 %v2197, 1.442695
      %v2267 = vpow.pop %v2266
      %v2268 = vmul.f32 %v2198, 1.442695
      %v2269 = vpow.pop %v2268
      %v2270 = vmul.f32 %v2199, 1.442695
      %v2271 = vpow.pop %v2270
      %v2272 = vmul.f32 %v2200, 1.442695
      %v2273 = vpow.pop %v2272
      %v2274 = vmul.f32 %v2201, 1.442695
      %v2275 = vpow.pop %v2274
      %v2276 = vmul.f32 %v2202, 1.442695
      %v2277 = vpow.pop %v2276
      %v2278 = vmul.f32 %v2203, 1.442695
      %v2279 = vpow.pop %v2278
      %v2280 = vmul.f32 %v2204, 1.442695
      %v2281 = vpow.pop %v2280
      %v2282 = vmul.f32 %v2205, 1.442695
      %v2283 = vpow.pop %v2282
      %v2284 = vmul.f32 %v2206, 1.442695
      %v2285 = vpow.pop %v2284
      %v2286 = vmul.f32 %v2207, 1.442695
      %v2287 = vpow.pop %v2286
      %v2288 = vmul.f32 %v2208, 1.442695
      %v2289 = vpow.pop %v2288
      %v2290 = vmul.f32 %v2209, 1.442695
      %v2291 = vpow.pop %v2290
      %v2292 = vmul.f32 %v2210, 1.442695
      %v2293 = vpow.pop %v2292
      %v2294 = vmul.f32 %v2211, 1.442695
      %v2295 = vpow.pop %v2294
      %v2296 = vmul.f32 %v2212, 1.442695
      %v2297 = vpow.pop %v2296
      %v2298 = vmul.f32 %v2213, 1.442695
      %v2299 = vpow.pop %v2298
      %v2300 = vmul.f32 %v2214, 1.442695
      %v2301 = vpow.pop %v2300
      %v2302 = vmul.f32 %v2215, 1.442695
      %v2303 = vpow.pop %v2302
      %v2304 = vmul.f32 %v2216, 1.442695
      %v2305 = vpow.pop %v2304
      %v2306 = vmul.f32 %v2217, 1.442695
      %v2307 = vpow.pop %v2306
      %v2308 = vmul.f32 %v2218, 1.442695
      %v2309 = vpow.pop %v2308
      %v2310 = vmul.f32 %v2219, 1.442695
      %v2311 = vpow.pop %v2310
      %v2312 = vmul.f32 %v2220, 1.442695
      %v2313 = vpow.pop %v2312
      %v2314 = vmul.f32 %v2221, 1.442695
      %v2315 = vpow.pop %v2314
      %v2316 = vmul.f32 %v2222, 1.442695
      %v2317 = vpow.pop %v2316
      %v2318 = vmul.f32 %v2223, 1.442695
      %v2319 = vpow.pop %v2318
      %v2320 = vmul.f32 %v2224, 1.442695
      %v2321 = vpow.pop %v2320
      %v2322 = vmul.f32 %v2225, 1.442695
      %v2323 = vpow.pop %v2322
      %v2324 = vmul.f32 %v2226, 1.442695
      %v2325 = vpow.pop %v2324
      %v2326 = vmul.f32 %v2227, 1.442695
      %v2327 = vpow.pop %v2326
      %v2328 = vmul.f32 %v2228, 1.442695
      %v2329 = vpow.pop %v2328
      %v2330 = vmul.f32 %v2229, 1.442695
      %v2331 = vpow.pop %v2330
      %v2332 = vmul.f32 %v2230, 1.442695
      %v2333 = vpow.pop %v2332
      %v2334 = vmul.f32 %v2231, 1.442695
      %v2335 = vpow.pop %v2334
      %v2336 = vmul.f32 %v2232, 1.442695
      %v2337 = vpow.pop %v2336
      %v2338 = vmul.f32 %v2233, 1.442695
      %v2339 = vpow.pop %v2338
      %v2340 = vmul.f32 %v2234, 1.442695
      %v2341 = vpow.pop %v2340
      %v2342 = vmul.f32 %v2235, 1.442695
      %v2343 = vpow.pop %v2342
      %v2344 = vmul.f32 %v2236, 1.442695
      %v2345 = vpow.pop %v2344
      %v2346 = vmul.f32 %v2237, 1.442695
      %v2347 = vpow.pop %v2346
      %v2348 = vmul.f32 %v2238, 1.442695
      %v2349 = vpow.pop %v2348
      %v2350 = vmul.f32 %v2239, 1.442695
      %v2351 = vpow.pop %v2350
      %v2352 = vmul.f32 %v2240, 1.442695
      %v2353 = vpow.pop %v2352
      %v2354 = vmul.f32 %v2241, 1.442695
      %v2355 = vpow.pop %v2354
      %v2356 = vmul.f32 %v2242, 1.442695
      %v2357 = vpow.pop %v2356
      %v2358 = vmul.f32 %v2243, 1.442695
      %v2359 = vpow.pop %v2358
      %v2360 = vmul.f32 %v2244, 1.442695
      %v2361 = vpow.pop %v2360
      %v2362 = vmul.f32 %v2245, 1.442695
      %v2363 = vpow.pop %v2362
      %v2364 = vmul.f32 %v2246, 1.442695
      %v2365 = vpow.pop %v2364
      %v2366 = vmul.f32 %v2247, 1.442695
      %v2367 = vpow.pop %v2366
      %v2368 = vmul.f32 %v2248, 1.442695
      %v2369 = vpow.pop %v2368
      %v2370 = vmul.f32 %v2249, 1.442695
      %v2371 = vpow.pop %v2370
      %v2372 = vmul.f32 %v2250, 1.442695
      %v2373 = vpow.pop %v2372
      %v2374 = vmul.f32 %v2251, 1.442695
      %v2375 = vpow.pop %v2374
      %v2376 = vmul.f32 %v2252, 1.442695
      %v2377 = vpow.pop %v2376
      %v2378 = vmul.f32 %v2253, 1.442695
      %v2379 = vpow.pop %v2378
      %v2380 = vmul.f32 %v2254, 1.442695
      %v2381 = vpow.pop %v2380
      %v2382 = vmul.f32 %v2255, 1.442695
      %v2383 = vpow.pop %v2382
      %2385 = vset.pattern.permute.xlu0 0
      %2386 = vperm.xlu0 %2385, %v2128
      %v2387 = vpop.permute.xlu0 %2386
      %2390 = vset.pattern.permute.xlu0 0
      %2391 = vperm.xlu0 %2390, %v2129
      %v2392 = vpop.permute.xlu0 %2391
      %2395 = vset.pattern.permute.xlu0 0
      %2396 = vperm.xlu0 %2395, %v2130
      %v2397 = vpop.permute.xlu0 %2396
      %2400 = vset.pattern.permute.xlu0 0
      %2401 = vperm.xlu0 %2400, %v2131
      %v2402 = vpop.permute.xlu0 %2401
      %2405 = vset.pattern.permute.xlu0 0
      %2406 = vperm.xlu0 %2405, %v2132
      %v2407 = vpop.permute.xlu0 %2406
      %2410 = vset.pattern.permute.xlu0 0
      %2411 = vperm.xlu0 %2410, %v2133
      %v2412 = vpop.permute.xlu0 %2411
      %2415 = vset.pattern.permute.xlu0 0
      %2416 = vperm.xlu0 %2415, %v2134
      %v2417 = vpop.permute.xlu0 %2416
      %2420 = vset.pattern.permute.xlu0 0
      %2421 = vperm.xlu0 %2420, %v2135
      %v2422 = vpop.permute.xlu0 %2421
      %2425 = vset.pattern.permute.xlu0 0
      %2426 = vperm.xlu0 %2425, %v2136
      %v2427 = vpop.permute.xlu0 %2426
      %2430 = vset.pattern.permute.xlu0 0
      %2431 = vperm.xlu0 %2430, %v2137
      %v2432 = vpop.permute.xlu0 %2431
      %2435 = vset.pattern.permute.xlu0 0
      %2436 = vperm.xlu0 %2435, %v2138
      %v2437 = vpop.permute.xlu0 %2436
      %2440 = vset.pattern.permute.xlu0 0
      %2441 = vperm.xlu0 %2440, %v2139
      %v2442 = vpop.permute.xlu0 %2441
      %2445 = vset.pattern.permute.xlu0 0
      %2446 = vperm.xlu0 %2445, %v2140
      %v2447 = vpop.permute.xlu0 %2446
      %2450 = vset.pattern.permute.xlu0 0
      %2451 = vperm.xlu0 %2450, %v2141
      %v2452 = vpop.permute.xlu0 %2451
      %2455 = vset.pattern.permute.xlu0 0
      %2456 = vperm.xlu0 %2455, %v2142
      %v2457 = vpop.permute.xlu0 %2456
      %2460 = vset.pattern.permute.xlu0 0
      %2461 = vperm.xlu0 %2460, %v2143
      %v2462 = vpop.permute.xlu0 %2461
      %2465 = vset.pattern.permute.xlu0 0
      %2466 = vperm.xlu0 %2465, %v2144
      %v2467 = vpop.permute.xlu0 %2466
      %2470 = vset.pattern.permute.xlu0 0
      %2471 = vperm.xlu0 %2470, %v2145
      %v2472 = vpop.permute.xlu0 %2471
      %2475 = vset.pattern.permute.xlu0 0
      %2476 = vperm.xlu0 %2475, %v2146
      %v2477 = vpop.permute.xlu0 %2476
      %2480 = vset.pattern.permute.xlu0 0
      %2481 = vperm.xlu0 %2480, %v2147
      %v2482 = vpop.permute.xlu0 %2481
      %2485 = vset.pattern.permute.xlu0 0
      %2486 = vperm.xlu0 %2485, %v2148
      %v2487 = vpop.permute.xlu0 %2486
      %2490 = vset.pattern.permute.xlu0 0
      %2491 = vperm.xlu0 %2490, %v2149
      %v2492 = vpop.permute.xlu0 %2491
      %2495 = vset.pattern.permute.xlu0 0
      %2496 = vperm.xlu0 %2495, %v2150
      %v2497 = vpop.permute.xlu0 %2496
      %2500 = vset.pattern.permute.xlu0 0
      %2501 = vperm.xlu0 %2500, %v2151
      %v2502 = vpop.permute.xlu0 %2501
      %2505 = vset.pattern.permute.xlu0 0
      %2506 = vperm.xlu0 %2505, %v2152
      %v2507 = vpop.permute.xlu0 %2506
      %2510 = vset.pattern.permute.xlu0 0
      %2511 = vperm.xlu0 %2510, %v2153
      %v2512 = vpop.permute.xlu0 %2511
      %2515 = vset.pattern.permute.xlu0 0
      %2516 = vperm.xlu0 %2515, %v2154
      %v2517 = vpop.permute.xlu0 %2516
      %2520 = vset.pattern.permute.xlu0 0
      %2521 = vperm.xlu0 %2520, %v2155
      %v2522 = vpop.permute.xlu0 %2521
      %2525 = vset.pattern.permute.xlu0 0
      %2526 = vperm.xlu0 %2525, %v2156
      %v2527 = vpop.permute.xlu0 %2526
      %2530 = vset.pattern.permute.xlu0 0
      %2531 = vperm.xlu0 %2530, %v2157
      %v2532 = vpop.permute.xlu0 %2531
      %2535 = vset.pattern.permute.xlu0 0
      %2536 = vperm.xlu0 %2535, %v2158
      %v2537 = vpop.permute.xlu0 %2536
      %2540 = vset.pattern.permute.xlu0 0
      %2541 = vperm.xlu0 %2540, %v2159
      %v2542 = vpop.permute.xlu0 %2541
      %2545 = vset.pattern.permute.xlu0 0
      %2546 = vperm.xlu0 %2545, %v2160
      %v2547 = vpop.permute.xlu0 %2546
      %2550 = vset.pattern.permute.xlu0 0
      %2551 = vperm.xlu0 %2550, %v2161
      %v2552 = vpop.permute.xlu0 %2551
      %2555 = vset.pattern.permute.xlu0 0
      %2556 = vperm.xlu0 %2555, %v2162
      %v2557 = vpop.permute.xlu0 %2556
      %2560 = vset.pattern.permute.xlu0 0
      %2561 = vperm.xlu0 %2560, %v2163
      %v2562 = vpop.permute.xlu0 %2561
      %2565 = vset.pattern.permute.xlu0 0
      %2566 = vperm.xlu0 %2565, %v2164
      %v2567 = vpop.permute.xlu0 %2566
      %2570 = vset.pattern.permute.xlu0 0
      %2571 = vperm.xlu0 %2570, %v2165
      %v2572 = vpop.permute.xlu0 %2571
      %2575 = vset.pattern.permute.xlu0 0
      %2576 = vperm.xlu0 %2575, %v2166
      %v2577 = vpop.permute.xlu0 %2576
      %2580 = vset.pattern.permute.xlu0 0
      %2581 = vperm.xlu0 %2580, %v2167
      %v2582 = vpop.permute.xlu0 %2581
      %2585 = vset.pattern.permute.xlu0 0
      %2586 = vperm.xlu0 %2585, %v2168
      %v2587 = vpop.permute.xlu0 %2586
      %2590 = vset.pattern.permute.xlu0 0
      %2591 = vperm.xlu0 %2590, %v2169
      %v2592 = vpop.permute.xlu0 %2591
      %2595 = vset.pattern.permute.xlu0 0
      %2596 = vperm.xlu0 %2595, %v2170
      %v2597 = vpop.permute.xlu0 %2596
      %2600 = vset.pattern.permute.xlu0 0
      %2601 = vperm.xlu0 %2600, %v2171
      %v2602 = vpop.permute.xlu0 %2601
      %2605 = vset.pattern.permute.xlu0 0
      %2606 = vperm.xlu0 %2605, %v2172
      %v2607 = vpop.permute.xlu0 %2606
      %2610 = vset.pattern.permute.xlu0 0
      %2611 = vperm.xlu0 %2610, %v2173
      %v2612 = vpop.permute.xlu0 %2611
      %2615 = vset.pattern.permute.xlu0 0
      %2616 = vperm.xlu0 %2615, %v2174
      %v2617 = vpop.permute.xlu0 %2616
      %2620 = vset.pattern.permute.xlu0 0
      %2621 = vperm.xlu0 %2620, %v2175
      %v2622 = vpop.permute.xlu0 %2621
      %2625 = vset.pattern.permute.xlu0 0
      %2626 = vperm.xlu0 %2625, %v2176
      %v2627 = vpop.permute.xlu0 %2626
      %2630 = vset.pattern.permute.xlu0 0
      %2631 = vperm.xlu0 %2630, %v2177
      %v2632 = vpop.permute.xlu0 %2631
      %2635 = vset.pattern.permute.xlu0 0
      %2636 = vperm.xlu0 %2635, %v2178
      %v2637 = vpop.permute.xlu0 %2636
      %2640 = vset.pattern.permute.xlu0 0
      %2641 = vperm.xlu0 %2640, %v2179
      %v2642 = vpop.permute.xlu0 %2641
      %2645 = vset.pattern.permute.xlu0 0
      %2646 = vperm.xlu0 %2645, %v2180
      %v2647 = vpop.permute.xlu0 %2646
      %2650 = vset.pattern.permute.xlu0 0
      %2651 = vperm.xlu0 %2650, %v2181
      %v2652 = vpop.permute.xlu0 %2651
      %2655 = vset.pattern.permute.xlu0 0
      %2656 = vperm.xlu0 %2655, %v2182
      %v2657 = vpop.permute.xlu0 %2656
      %2660 = vset.pattern.permute.xlu0 0
      %2661 = vperm.xlu0 %2660, %v2183
      %v2662 = vpop.permute.xlu0 %2661
      %2665 = vset.pattern.permute.xlu0 0
      %2666 = vperm.xlu0 %2665, %v2184
      %v2667 = vpop.permute.xlu0 %2666
      %2670 = vset.pattern.permute.xlu0 0
      %2671 = vperm.xlu0 %2670, %v2185
      %v2672 = vpop.permute.xlu0 %2671
      %2675 = vset.pattern.permute.xlu0 0
      %2676 = vperm.xlu0 %2675, %v2186
      %v2677 = vpop.permute.xlu0 %2676
      %2680 = vset.pattern.permute.xlu0 0
      %2681 = vperm.xlu0 %2680, %v2187
      %v2682 = vpop.permute.xlu0 %2681
      %2685 = vset.pattern.permute.xlu0 0
      %2686 = vperm.xlu0 %2685, %v2188
      %v2687 = vpop.permute.xlu0 %2686
      %2690 = vset.pattern.permute.xlu0 0
      %2691 = vperm.xlu0 %2690, %v2189
      %v2692 = vpop.permute.xlu0 %2691
      %2695 = vset.pattern.permute.xlu0 0
      %2696 = vperm.xlu0 %2695, %v2190
      %v2697 = vpop.permute.xlu0 %2696
      %2700 = vset.pattern.permute.xlu0 0
      %2701 = vperm.xlu0 %2700, %v2191
      %v2702 = vpop.permute.xlu0 %2701
      %v2704 = vsub.f32 %v1073, %v2387
      %v2705 = vsub.f32 %v1075, %v2387
      %v2706 = vsub.f32 %v1426, %v2387
      %v2707 = vsub.f32 %v1428, %v2387
      %v2708 = vsub.f32 %v1077, %v2392
      %v2709 = vsub.f32 %v1079, %v2392
      %v2710 = vsub.f32 %v1430, %v2392
      %v2711 = vsub.f32 %v1432, %v2392
      %v2712 = vsub.f32 %v1083, %v2397
      %v2713 = vsub.f32 %v1085, %v2397
      %v2714 = vsub.f32 %v1436, %v2397
      %v2715 = vsub.f32 %v1438, %v2397
      %v2716 = vsub.f32 %v1087, %v2402
      %v2717 = vsub.f32 %v1089, %v2402
      %v2718 = vsub.f32 %v1440, %v2402
      %v2719 = vsub.f32 %v1442, %v2402
      %v2720 = vsub.f32 %v1093, %v2407
      %v2721 = vsub.f32 %v1095, %v2407
      %v2722 = vsub.f32 %v1446, %v2407
      %v2723 = vsub.f32 %v1448, %v2407
      %v2724 = vsub.f32 %v1097, %v2412
      %v2725 = vsub.f32 %v1099, %v2412
      %v2726 = vsub.f32 %v1450, %v2412
      %v2727 = vsub.f32 %v1452, %v2412
      %v2728 = vsub.f32 %v1103, %v2417
      %v2729 = vsub.f32 %v1105, %v2417
      %v2730 = vsub.f32 %v1456, %v2417
      %v2731 = vsub.f32 %v1458, %v2417
      %v2732 = vsub.f32 %v1107, %v2422
      %v2733 = vsub.f32 %v1109, %v2422
      %v2734 = vsub.f32 %v1460, %v2422
      %v2735 = vsub.f32 %v1462, %v2422
      %v2736 = vsub.f32 %v1113, %v2427
      %v2737 = vsub.f32 %v1115, %v2427
      %v2738 = vsub.f32 %v1466, %v2427
      %v2739 = vsub.f32 %v1468, %v2427
      %v2740 = vsub.f32 %v1117, %v2432
      %v2741 = vsub.f32 %v1119, %v2432
      %v2742 = vsub.f32 %v1470, %v2432
      %v2743 = vsub.f32 %v1472, %v2432
      %v2744 = vsub.f32 %v1123, %v2437
      %v2745 = vsub.f32 %v1125, %v2437
      %v2746 = vsub.f32 %v1476, %v2437
      %v2747 = vsub.f32 %v1478, %v2437
      %v2748 = vsub.f32 %v1127, %v2442
      %v2749 = vsub.f32 %v1129, %v2442
      %v2750 = vsub.f32 %v1480, %v2442
      %v2751 = vsub.f32 %v1482, %v2442
      %v2752 = vsub.f32 %v1133, %v2447
      %v2753 = vsub.f32 %v1135, %v2447
      %v2754 = vsub.f32 %v1486, %v2447
      %v2755 = vsub.f32 %v1488, %v2447
      %v2756 = vsub.f32 %v1137, %v2452
      %v2757 = vsub.f32 %v1139, %v2452
      %v2758 = vsub.f32 %v1490, %v2452
      %v2759 = vsub.f32 %v1492, %v2452
      %v2760 = vsub.f32 %v1143, %v2457
      %v2761 = vsub.f32 %v1145, %v2457
      %v2762 = vsub.f32 %v1496, %v2457
      %v2763 = vsub.f32 %v1498, %v2457
      %v2764 = vsub.f32 %v1147, %v2462
      %v2765 = vsub.f32 %v1149, %v2462
      %v2766 = vsub.f32 %v1500, %v2462
      %v2767 = vsub.f32 %v1502, %v2462
      %v2768 = vsub.f32 %v1153, %v2467
      %v2769 = vsub.f32 %v1155, %v2467
      %v2770 = vsub.f32 %v1506, %v2467
      %v2771 = vsub.f32 %v1508, %v2467
      %v2772 = vsub.f32 %v1157, %v2472
      %v2773 = vsub.f32 %v1159, %v2472
      %v2774 = vsub.f32 %v1510, %v2472
      %v2775 = vsub.f32 %v1512, %v2472
      %v2776 = vsub.f32 %v1163, %v2477
      %v2777 = vsub.f32 %v1165, %v2477
      %v2778 = vsub.f32 %v1516, %v2477
      %v2779 = vsub.f32 %v1518, %v2477
      %v2780 = vsub.f32 %v1167, %v2482
      %v2781 = vsub.f32 %v1169, %v2482
      %v2782 = vsub.f32 %v1520, %v2482
      %v2783 = vsub.f32 %v1522, %v2482
      %v2784 = vsub.f32 %v1173, %v2487
      %v2785 = vsub.f32 %v1175, %v2487
      %v2786 = vsub.f32 %v1526, %v2487
      %v2787 = vsub.f32 %v1528, %v2487
      %v2788 = vsub.f32 %v1177, %v2492
      %v2789 = vsub.f32 %v1179, %v2492
      %v2790 = vsub.f32 %v1530, %v2492
      %v2791 = vsub.f32 %v1532, %v2492
      %v2792 = vsub.f32 %v1183, %v2497
      %v2793 = vsub.f32 %v1185, %v2497
      %v2794 = vsub.f32 %v1536, %v2497
      %v2795 = vsub.f32 %v1538, %v2497
      %v2796 = vsub.f32 %v1187, %v2502
      %v2797 = vsub.f32 %v1189, %v2502
      %v2798 = vsub.f32 %v1540, %v2502
      %v2799 = vsub.f32 %v1542, %v2502
      %v2800 = vsub.f32 %v1193, %v2507
      %v2801 = vsub.f32 %v1195, %v2507
      %v2802 = vsub.f32 %v1546, %v2507
      %v2803 = vsub.f32 %v1548, %v2507
      %v2804 = vsub.f32 %v1197, %v2512
      %v2805 = vsub.f32 %v1199, %v2512
      %v2806 = vsub.f32 %v1550, %v2512
      %v2807 = vsub.f32 %v1552, %v2512
      %v2808 = vsub.f32 %v1203, %v2517
      %v2809 = vsub.f32 %v1205, %v2517
      %v2810 = vsub.f32 %v1556, %v2517
      %v2811 = vsub.f32 %v1558, %v2517
      %v2812 = vsub.f32 %v1207, %v2522
      %v2813 = vsub.f32 %v1209, %v2522
      %v2814 = vsub.f32 %v1560, %v2522
      %v2815 = vsub.f32 %v1562, %v2522
      %v2816 = vsub.f32 %v1213, %v2527
      %v2817 = vsub.f32 %v1215, %v2527
      %v2818 = vsub.f32 %v1566, %v2527
      %v2819 = vsub.f32 %v1568, %v2527
      %v2820 = vsub.f32 %v1217, %v2532
      %v2821 = vsub.f32 %v1219, %v2532
      %v2822 = vsub.f32 %v1570, %v2532
      %v2823 = vsub.f32 %v1572, %v2532
      %v2824 = vsub.f32 %v1223, %v2537
      %v2825 = vsub.f32 %v1225, %v2537
      %v2826 = vsub.f32 %v1576, %v2537
      %v2827 = vsub.f32 %v1578, %v2537
      %v2828 = vsub.f32 %v1227, %v2542
      %v2829 = vsub.f32 %v1229, %v2542
      %v2830 = vsub.f32 %v1580, %v2542
      %v2831 = vsub.f32 %v1582, %v2542
      %v2832 = vsub.f32 %v1233, %v2547
      %v2833 = vsub.f32 %v1235, %v2547
      %v2834 = vsub.f32 %v1586, %v2547
      %v2835 = vsub.f32 %v1588, %v2547
      %v2836 = vsub.f32 %v1237, %v2552
      %v2837 = vsub.f32 %v1239, %v2552
      %v2838 = vsub.f32 %v1590, %v2552
      %v2839 = vsub.f32 %v1592, %v2552
      %v2840 = vsub.f32 %v1243, %v2557
      %v2841 = vsub.f32 %v1245, %v2557
      %v2842 = vsub.f32 %v1596, %v2557
      %v2843 = vsub.f32 %v1598, %v2557
      %v2844 = vsub.f32 %v1247, %v2562
      %v2845 = vsub.f32 %v1249, %v2562
      %v2846 = vsub.f32 %v1600, %v2562
      %v2847 = vsub.f32 %v1602, %v2562
      %v2848 = vsub.f32 %v1253, %v2567
      %v2849 = vsub.f32 %v1255, %v2567
      %v2850 = vsub.f32 %v1606, %v2567
      %v2851 = vsub.f32 %v1608, %v2567
      %v2852 = vsub.f32 %v1257, %v2572
      %v2853 = vsub.f32 %v1259, %v2572
      %v2854 = vsub.f32 %v1610, %v2572
      %v2855 = vsub.f32 %v1612, %v2572
      %v2856 = vsub.f32 %v1263, %v2577
      %v2857 = vsub.f32 %v1265, %v2577
      %v2858 = vsub.f32 %v1616, %v2577
      %v2859 = vsub.f32 %v1618, %v2577
      %v2860 = vsub.f32 %v1267, %v2582
      %v2861 = vsub.f32 %v1269, %v2582
      %v2862 = vsub.f32 %v1620, %v2582
      %v2863 = vsub.f32 %v1622, %v2582
      %v2864 = vsub.f32 %v1273, %v2587
      %v2865 = vsub.f32 %v1275, %v2587
      %v2866 = vsub.f32 %v1626, %v2587
      %v2867 = vsub.f32 %v1628, %v2587
      %v2868 = vsub.f32 %v1277, %v2592
      %v2869 = vsub.f32 %v1279, %v2592
      %v2870 = vsub.f32 %v1630, %v2592
      %v2871 = vsub.f32 %v1632, %v2592
      %v2872 = vsub.f32 %v1283, %v2597
      %v2873 = vsub.f32 %v1285, %v2597
      %v2874 = vsub.f32 %v1636, %v2597
      %v2875 = vsub.f32 %v1638, %v2597
      %v2876 = vsub.f32 %v1287, %v2602
      %v2877 = vsub.f32 %v1289, %v2602
      %v2878 = vsub.f32 %v1640, %v2602
      %v2879 = vsub.f32 %v1642, %v2602
      %v2880 = vsub.f32 %v1293, %v2607
      %v2881 = vsub.f32 %v1295, %v2607
      %v2882 = vsub.f32 %v1646, %v2607
      %v2883 = vsub.f32 %v1648, %v2607
      %v2884 = vsub.f32 %v1297, %v2612
      %v2885 = vsub.f32 %v1299, %v2612
      %v2886 = vsub.f32 %v1650, %v2612
      %v2887 = vsub.f32 %v1652, %v2612
      %v2888 = vsub.f32 %v1303, %v2617
      %v2889 = vsub.f32 %v1305, %v2617
      %v2890 = vsub.f32 %v1656, %v2617
      %v2891 = vsub.f32 %v1658, %v2617
      %v2892 = vsub.f32 %v1307, %v2622
      %v2893 = vsub.f32 %v1309, %v2622
      %v2894 = vsub.f32 %v1660, %v2622
      %v2895 = vsub.f32 %v1662, %v2622
      %v2896 = vsub.f32 %v1313, %v2627
      %v2897 = vsub.f32 %v1315, %v2627
      %v2898 = vsub.f32 %v1666, %v2627
      %v2899 = vsub.f32 %v1668, %v2627
      %v2900 = vsub.f32 %v1317, %v2632
      %v2901 = vsub.f32 %v1319, %v2632
      %v2902 = vsub.f32 %v1670, %v2632
      %v2903 = vsub.f32 %v1672, %v2632
      %v2904 = vsub.f32 %v1323, %v2637
      %v2905 = vsub.f32 %v1325, %v2637
      %v2906 = vsub.f32 %v1676, %v2637
      %v2907 = vsub.f32 %v1678, %v2637
      %v2908 = vsub.f32 %v1327, %v2642
      %v2909 = vsub.f32 %v1329, %v2642
      %v2910 = vsub.f32 %v1680, %v2642
      %v2911 = vsub.f32 %v1682, %v2642
      %v2912 = vsub.f32 %v1333, %v2647
      %v2913 = vsub.f32 %v1335, %v2647
      %v2914 = vsub.f32 %v1686, %v2647
      %v2915 = vsub.f32 %v1688, %v2647
      %v2916 = vsub.f32 %v1337, %v2652
      %v2917 = vsub.f32 %v1339, %v2652
      %v2918 = vsub.f32 %v1690, %v2652
      %v2919 = vsub.f32 %v1692, %v2652
      %v2920 = vsub.f32 %v1343, %v2657
      %v2921 = vsub.f32 %v1345, %v2657
      %v2922 = vsub.f32 %v1696, %v2657
      %v2923 = vsub.f32 %v1698, %v2657
      %v2924 = vsub.f32 %v1347, %v2662
      %v2925 = vsub.f32 %v1349, %v2662
      %v2926 = vsub.f32 %v1700, %v2662
      %v2927 = vsub.f32 %v1702, %v2662
      %v2928 = vsub.f32 %v1353, %v2667
      %v2929 = vsub.f32 %v1355, %v2667
      %v2930 = vsub.f32 %v1706, %v2667
      %v2931 = vsub.f32 %v1708, %v2667
      %v2932 = vsub.f32 %v1357, %v2672
      %v2933 = vsub.f32 %v1359, %v2672
      %v2934 = vsub.f32 %v1710, %v2672
      %v2935 = vsub.f32 %v1712, %v2672
      %v2936 = vsub.f32 %v1363, %v2677
      %v2937 = vsub.f32 %v1365, %v2677
      %v2938 = vsub.f32 %v1716, %v2677
      %v2939 = vsub.f32 %v1718, %v2677
      %v2940 = vsub.f32 %v1367, %v2682
      %v2941 = vsub.f32 %v1369, %v2682
      %v2942 = vsub.f32 %v1720, %v2682
      %v2943 = vsub.f32 %v1722, %v2682
      %v2944 = vsub.f32 %v1373, %v2687
      %v2945 = vsub.f32 %v1375, %v2687
      %v2946 = vsub.f32 %v1726, %v2687
      %v2947 = vsub.f32 %v1728, %v2687
      %v2948 = vsub.f32 %v1377, %v2692
      %v2949 = vsub.f32 %v1379, %v2692
      %v2950 = vsub.f32 %v1730, %v2692
      %v2951 = vsub.f32 %v1732, %v2692
      %v2952 = vsub.f32 %v1383, %v2697
      %v2953 = vsub.f32 %v1385, %v2697
      %v2954 = vsub.f32 %v1736, %v2697
      %v2955 = vsub.f32 %v1738, %v2697
      %v2956 = vsub.f32 %v1387, %v2702
      %v2957 = vsub.f32 %v1389, %v2702
      %v2958 = vsub.f32 %v1740, %v2702
      %v2959 = vsub.f32 %v1742, %v2702
      %v2960 = vmul.f32 %v2704, 1.442695
      %v2961 = vpow.pop %v2960
      %v2962 = vmul.f32 %v2705, 1.442695
      %v2963 = vpow.pop %v2962
      %v2964 = vmul.f32 %v2706, 1.442695
      %v2965 = vpow.pop %v2964
      %v2966 = vmul.f32 %v2707, 1.442695
      %v2967 = vpow.pop %v2966
      %v2968 = vmul.f32 %v2708, 1.442695
      %v2969 = vpow.pop %v2968
      %v2970 = vmul.f32 %v2709, 1.442695
      %v2971 = vpow.pop %v2970
      %v2972 = vmul.f32 %v2710, 1.442695
      %v2973 = vpow.pop %v2972
      %v2974 = vmul.f32 %v2711, 1.442695
      %v2975 = vpow.pop %v2974
      %v2976 = vmul.f32 %v2712, 1.442695
      %v2977 = vpow.pop %v2976
      %v2978 = vmul.f32 %v2713, 1.442695
      %v2979 = vpow.pop %v2978
      %v2980 = vmul.f32 %v2714, 1.442695
      %v2981 = vpow.pop %v2980
      %v2982 = vmul.f32 %v2715, 1.442695
      %v2983 = vpow.pop %v2982
      %v2984 = vmul.f32 %v2716, 1.442695
      %v2985 = vpow.pop %v2984
      %v2986 = vmul.f32 %v2717, 1.442695
      %v2987 = vpow.pop %v2986
      %v2988 = vmul.f32 %v2718, 1.442695
      %v2989 = vpow.pop %v2988
      %v2990 = vmul.f32 %v2719, 1.442695
      %v2991 = vpow.pop %v2990
      %v2992 = vmul.f32 %v2720, 1.442695
      %v2993 = vpow.pop %v2992
      %v2994 = vmul.f32 %v2721, 1.442695
      %v2995 = vpow.pop %v2994
      %v2996 = vmul.f32 %v2722, 1.442695
      %v2997 = vpow.pop %v2996
      %v2998 = vmul.f32 %v2723, 1.442695
      %v2999 = vpow.pop %v2998
      %v3000 = vmul.f32 %v2724, 1.442695
      %v3001 = vpow.pop %v3000
      %v3002 = vmul.f32 %v2725, 1.442695
      %v3003 = vpow.pop %v3002
      %v3004 = vmul.f32 %v2726, 1.442695
      %v3005 = vpow.pop %v3004
      %v3006 = vmul.f32 %v2727, 1.442695
      %v3007 = vpow.pop %v3006
      %v3008 = vmul.f32 %v2728, 1.442695
      %v3009 = vpow.pop %v3008
      %v3010 = vmul.f32 %v2729, 1.442695
      %v3011 = vpow.pop %v3010
      %v3012 = vmul.f32 %v2730, 1.442695
      %v3013 = vpow.pop %v3012
      %v3014 = vmul.f32 %v2731, 1.442695
      %v3015 = vpow.pop %v3014
      %v3016 = vmul.f32 %v2732, 1.442695
      %v3017 = vpow.pop %v3016
      %v3018 = vmul.f32 %v2733, 1.442695
      %v3019 = vpow.pop %v3018
      %v3020 = vmul.f32 %v2734, 1.442695
      %v3021 = vpow.pop %v3020
      %v3022 = vmul.f32 %v2735, 1.442695
      %v3023 = vpow.pop %v3022
      %v3024 = vmul.f32 %v2736, 1.442695
      %v3025 = vpow.pop %v3024
      %v3026 = vmul.f32 %v2737, 1.442695
      %v3027 = vpow.pop %v3026
      %v3028 = vmul.f32 %v2738, 1.442695
      %v3029 = vpow.pop %v3028
      %v3030 = vmul.f32 %v2739, 1.442695
      %v3031 = vpow.pop %v3030
      %v3032 = vmul.f32 %v2740, 1.442695
      %v3033 = vpow.pop %v3032
      %v3034 = vmul.f32 %v2741, 1.442695
      %v3035 = vpow.pop %v3034
      %v3036 = vmul.f32 %v2742, 1.442695
      %v3037 = vpow.pop %v3036
      %v3038 = vmul.f32 %v2743, 1.442695
      %v3039 = vpow.pop %v3038
      %v3040 = vmul.f32 %v2744, 1.442695
      %v3041 = vpow.pop %v3040
      %v3042 = vmul.f32 %v2745, 1.442695
      %v3043 = vpow.pop %v3042
      %v3044 = vmul.f32 %v2746, 1.442695
      %v3045 = vpow.pop %v3044
      %v3046 = vmul.f32 %v2747, 1.442695
      %v3047 = vpow.pop %v3046
      %v3048 = vmul.f32 %v2748, 1.442695
      %v3049 = vpow.pop %v3048
      %v3050 = vmul.f32 %v2749, 1.442695
      %v3051 = vpow.pop %v3050
      %v3052 = vmul.f32 %v2750, 1.442695
      %v3053 = vpow.pop %v3052
      %v3054 = vmul.f32 %v2751, 1.442695
      %v3055 = vpow.pop %v3054
      %v3056 = vmul.f32 %v2752, 1.442695
      %v3057 = vpow.pop %v3056
      %v3058 = vmul.f32 %v2753, 1.442695
      %v3059 = vpow.pop %v3058
      %v3060 = vmul.f32 %v2754, 1.442695
      %v3061 = vpow.pop %v3060
      %v3062 = vmul.f32 %v2755, 1.442695
      %v3063 = vpow.pop %v3062
      %v3064 = vmul.f32 %v2756, 1.442695
      %v3065 = vpow.pop %v3064
      %v3066 = vmul.f32 %v2757, 1.442695
      %v3067 = vpow.pop %v3066
      %v3068 = vmul.f32 %v2758, 1.442695
      %v3069 = vpow.pop %v3068
      %v3070 = vmul.f32 %v2759, 1.442695
      %v3071 = vpow.pop %v3070
      %v3072 = vmul.f32 %v2760, 1.442695
      %v3073 = vpow.pop %v3072
      %v3074 = vmul.f32 %v2761, 1.442695
      %v3075 = vpow.pop %v3074
      %v3076 = vmul.f32 %v2762, 1.442695
      %v3077 = vpow.pop %v3076
      %v3078 = vmul.f32 %v2763, 1.442695
      %v3079 = vpow.pop %v3078
      %v3080 = vmul.f32 %v2764, 1.442695
      %v3081 = vpow.pop %v3080
      %v3082 = vmul.f32 %v2765, 1.442695
      %v3083 = vpow.pop %v3082
      %v3084 = vmul.f32 %v2766, 1.442695
      %v3085 = vpow.pop %v3084
      %v3086 = vmul.f32 %v2767, 1.442695
      %v3087 = vpow.pop %v3086
      %v3088 = vmul.f32 %v2768, 1.442695
      %v3089 = vpow.pop %v3088
      %v3090 = vmul.f32 %v2769, 1.442695
      %v3091 = vpow.pop %v3090
      %v3092 = vmul.f32 %v2770, 1.442695
      %v3093 = vpow.pop %v3092
      %v3094 = vmul.f32 %v2771, 1.442695
      %v3095 = vpow.pop %v3094
      %v3096 = vmul.f32 %v2772, 1.442695
      %v3097 = vpow.pop %v3096
      %v3098 = vmul.f32 %v2773, 1.442695
      %v3099 = vpow.pop %v3098
      %v3100 = vmul.f32 %v2774, 1.442695
      %v3101 = vpow.pop %v3100
      %v3102 = vmul.f32 %v2775, 1.442695
      %v3103 = vpow.pop %v3102
      %v3104 = vmul.f32 %v2776, 1.442695
      %v3105 = vpow.pop %v3104
      %v3106 = vmul.f32 %v2777, 1.442695
      %v3107 = vpow.pop %v3106
      %v3108 = vmul.f32 %v2778, 1.442695
      %v3109 = vpow.pop %v3108
      %v3110 = vmul.f32 %v2779, 1.442695
      %v3111 = vpow.pop %v3110
      %v3112 = vmul.f32 %v2780, 1.442695
      %v3113 = vpow.pop %v3112
      %v3114 = vmul.f32 %v2781, 1.442695
      %v3115 = vpow.pop %v3114
      %v3116 = vmul.f32 %v2782, 1.442695
      %v3117 = vpow.pop %v3116
      %v3118 = vmul.f32 %v2783, 1.442695
      %v3119 = vpow.pop %v3118
      %v3120 = vmul.f32 %v2784, 1.442695
      %v3121 = vpow.pop %v3120
      %v3122 = vmul.f32 %v2785, 1.442695
      %v3123 = vpow.pop %v3122
      %v3124 = vmul.f32 %v2786, 1.442695
      %v3125 = vpow.pop %v3124
      %v3126 = vmul.f32 %v2787, 1.442695
      %v3127 = vpow.pop %v3126
      %v3128 = vmul.f32 %v2788, 1.442695
      %v3129 = vpow.pop %v3128
      %v3130 = vmul.f32 %v2789, 1.442695
      %v3131 = vpow.pop %v3130
      %v3132 = vmul.f32 %v2790, 1.442695
      %v3133 = vpow.pop %v3132
      %v3134 = vmul.f32 %v2791, 1.442695
      %v3135 = vpow.pop %v3134
      %v3136 = vmul.f32 %v2792, 1.442695
      %v3137 = vpow.pop %v3136
      %v3138 = vmul.f32 %v2793, 1.442695
      %v3139 = vpow.pop %v3138
      %v3140 = vmul.f32 %v2794, 1.442695
      %v3141 = vpow.pop %v3140
      %v3142 = vmul.f32 %v2795, 1.442695
      %v3143 = vpow.pop %v3142
      %v3144 = vmul.f32 %v2796, 1.442695
      %v3145 = vpow.pop %v3144
      %v3146 = vmul.f32 %v2797, 1.442695
      %v3147 = vpow.pop %v3146
      %v3148 = vmul.f32 %v2798, 1.442695
      %v3149 = vpow.pop %v3148
      %v3150 = vmul.f32 %v2799, 1.442695
      %v3151 = vpow.pop %v3150
      %v3152 = vmul.f32 %v2800, 1.442695
      %v3153 = vpow.pop %v3152
      %v3154 = vmul.f32 %v2801, 1.442695
      %v3155 = vpow.pop %v3154
      %v3156 = vmul.f32 %v2802, 1.442695
      %v3157 = vpow.pop %v3156
      %v3158 = vmul.f32 %v2803, 1.442695
      %v3159 = vpow.pop %v3158
      %v3160 = vmul.f32 %v2804, 1.442695
      %v3161 = vpow.pop %v3160
      %v3162 = vmul.f32 %v2805, 1.442695
      %v3163 = vpow.pop %v3162
      %v3164 = vmul.f32 %v2806, 1.442695
      %v3165 = vpow.pop %v3164
      %v3166 = vmul.f32 %v2807, 1.442695
      %v3167 = vpow.pop %v3166
      %v3168 = vmul.f32 %v2808, 1.442695
      %v3169 = vpow.pop %v3168
      %v3170 = vmul.f32 %v2809, 1.442695
      %v3171 = vpow.pop %v3170
      %v3172 = vmul.f32 %v2810, 1.442695
      %v3173 = vpow.pop %v3172
      %v3174 = vmul.f32 %v2811, 1.442695
      %v3175 = vpow.pop %v3174
      %v3176 = vmul.f32 %v2812, 1.442695
      %v3177 = vpow.pop %v3176
      %v3178 = vmul.f32 %v2813, 1.442695
      %v3179 = vpow.pop %v3178
      %v3180 = vmul.f32 %v2814, 1.442695
      %v3181 = vpow.pop %v3180
      %v3182 = vmul.f32 %v2815, 1.442695
      %v3183 = vpow.pop %v3182
      %v3184 = vmul.f32 %v2816, 1.442695
      %v3185 = vpow.pop %v3184
      %v3186 = vmul.f32 %v2817, 1.442695
      %v3187 = vpow.pop %v3186
      %v3188 = vmul.f32 %v2818, 1.442695
      %v3189 = vpow.pop %v3188
      %v3190 = vmul.f32 %v2819, 1.442695
      %v3191 = vpow.pop %v3190
      %v3192 = vmul.f32 %v2820, 1.442695
      %v3193 = vpow.pop %v3192
      %v3194 = vmul.f32 %v2821, 1.442695
      %v3195 = vpow.pop %v3194
      %v3196 = vmul.f32 %v2822, 1.442695
      %v3197 = vpow.pop %v3196
      %v3198 = vmul.f32 %v2823, 1.442695
      %v3199 = vpow.pop %v3198
      %v3200 = vmul.f32 %v2824, 1.442695
      %v3201 = vpow.pop %v3200
      %v3202 = vmul.f32 %v2825, 1.442695
      %v3203 = vpow.pop %v3202
      %v3204 = vmul.f32 %v2826, 1.442695
      %v3205 = vpow.pop %v3204
      %v3206 = vmul.f32 %v2827, 1.442695
      %v3207 = vpow.pop %v3206
      %v3208 = vmul.f32 %v2828, 1.442695
      %v3209 = vpow.pop %v3208
      %v3210 = vmul.f32 %v2829, 1.442695
      %v3211 = vpow.pop %v3210
      %v3212 = vmul.f32 %v2830, 1.442695
      %v3213 = vpow.pop %v3212
      %v3214 = vmul.f32 %v2831, 1.442695
      %v3215 = vpow.pop %v3214
      %v3216 = vmul.f32 %v2832, 1.442695
      %v3217 = vpow.pop %v3216
      %v3218 = vmul.f32 %v2833, 1.442695
      %v3219 = vpow.pop %v3218
      %v3220 = vmul.f32 %v2834, 1.442695
      %v3221 = vpow.pop %v3220
      %v3222 = vmul.f32 %v2835, 1.442695
      %v3223 = vpow.pop %v3222
      %v3224 = vmul.f32 %v2836, 1.442695
      %v3225 = vpow.pop %v3224
      %v3226 = vmul.f32 %v2837, 1.442695
      %v3227 = vpow.pop %v3226
      %v3228 = vmul.f32 %v2838, 1.442695
      %v3229 = vpow.pop %v3228
      %v3230 = vmul.f32 %v2839, 1.442695
      %v3231 = vpow.pop %v3230
      %v3232 = vmul.f32 %v2840, 1.442695
      %v3233 = vpow.pop %v3232
      %v3234 = vmul.f32 %v2841, 1.442695
      %v3235 = vpow.pop %v3234
      %v3236 = vmul.f32 %v2842, 1.442695
      %v3237 = vpow.pop %v3236
      %v3238 = vmul.f32 %v2843, 1.442695
      %v3239 = vpow.pop %v3238
      %v3240 = vmul.f32 %v2844, 1.442695
      %v3241 = vpow.pop %v3240
      %v3242 = vmul.f32 %v2845, 1.442695
      %v3243 = vpow.pop %v3242
      %v3244 = vmul.f32 %v2846, 1.442695
      %v3245 = vpow.pop %v3244
      %v3246 = vmul.f32 %v2847, 1.442695
      %v3247 = vpow.pop %v3246
      %v3248 = vmul.f32 %v2848, 1.442695
      %v3249 = vpow.pop %v3248
      %v3250 = vmul.f32 %v2849, 1.442695
      %v3251 = vpow.pop %v3250
      %v3252 = vmul.f32 %v2850, 1.442695
      %v3253 = vpow.pop %v3252
      %v3254 = vmul.f32 %v2851, 1.442695
      %v3255 = vpow.pop %v3254
      %v3256 = vmul.f32 %v2852, 1.442695
      %v3257 = vpow.pop %v3256
      %v3258 = vmul.f32 %v2853, 1.442695
      %v3259 = vpow.pop %v3258
      %v3260 = vmul.f32 %v2854, 1.442695
      %v3261 = vpow.pop %v3260
      %v3262 = vmul.f32 %v2855, 1.442695
      %v3263 = vpow.pop %v3262
      %v3264 = vmul.f32 %v2856, 1.442695
      %v3265 = vpow.pop %v3264
      %v3266 = vmul.f32 %v2857, 1.442695
      %v3267 = vpow.pop %v3266
      %v3268 = vmul.f32 %v2858, 1.442695
      %v3269 = vpow.pop %v3268
      %v3270 = vmul.f32 %v2859, 1.442695
      %v3271 = vpow.pop %v3270
      %v3272 = vmul.f32 %v2860, 1.442695
      %v3273 = vpow.pop %v3272
      %v3274 = vmul.f32 %v2861, 1.442695
      %v3275 = vpow.pop %v3274
      %v3276 = vmul.f32 %v2862, 1.442695
      %v3277 = vpow.pop %v3276
      %v3278 = vmul.f32 %v2863, 1.442695
      %v3279 = vpow.pop %v3278
      %v3280 = vmul.f32 %v2864, 1.442695
      %v3281 = vpow.pop %v3280
      %v3282 = vmul.f32 %v2865, 1.442695
      %v3283 = vpow.pop %v3282
      %v3284 = vmul.f32 %v2866, 1.442695
      %v3285 = vpow.pop %v3284
      %v3286 = vmul.f32 %v2867, 1.442695
      %v3287 = vpow.pop %v3286
      %v3288 = vmul.f32 %v2868, 1.442695
      %v3289 = vpow.pop %v3288
      %v3290 = vmul.f32 %v2869, 1.442695
      %v3291 = vpow.pop %v3290
      %v3292 = vmul.f32 %v2870, 1.442695
      %v3293 = vpow.pop %v3292
      %v3294 = vmul.f32 %v2871, 1.442695
      %v3295 = vpow.pop %v3294
      %v3296 = vmul.f32 %v2872, 1.442695
      %v3297 = vpow.pop %v3296
      %v3298 = vmul.f32 %v2873, 1.442695
      %v3299 = vpow.pop %v3298
      %v3300 = vmul.f32 %v2874, 1.442695
      %v3301 = vpow.pop %v3300
      %v3302 = vmul.f32 %v2875, 1.442695
      %v3303 = vpow.pop %v3302
      %v3304 = vmul.f32 %v2876, 1.442695
      %v3305 = vpow.pop %v3304
      %v3306 = vmul.f32 %v2877, 1.442695
      %v3307 = vpow.pop %v3306
      %v3308 = vmul.f32 %v2878, 1.442695
      %v3309 = vpow.pop %v3308
      %v3310 = vmul.f32 %v2879, 1.442695
      %v3311 = vpow.pop %v3310
      %v3312 = vmul.f32 %v2880, 1.442695
      %v3313 = vpow.pop %v3312
      %v3314 = vmul.f32 %v2881, 1.442695
      %v3315 = vpow.pop %v3314
      %v3316 = vmul.f32 %v2882, 1.442695
      %v3317 = vpow.pop %v3316
      %v3318 = vmul.f32 %v2883, 1.442695
      %v3319 = vpow.pop %v3318
      %v3320 = vmul.f32 %v2884, 1.442695
      %v3321 = vpow.pop %v3320
      %v3322 = vmul.f32 %v2885, 1.442695
      %v3323 = vpow.pop %v3322
      %v3324 = vmul.f32 %v2886, 1.442695
      %v3325 = vpow.pop %v3324
      %v3326 = vmul.f32 %v2887, 1.442695
      %v3327 = vpow.pop %v3326
      %v3328 = vmul.f32 %v2888, 1.442695
      %v3329 = vpow.pop %v3328
      %v3330 = vmul.f32 %v2889, 1.442695
      %v3331 = vpow.pop %v3330
      %v3332 = vmul.f32 %v2890, 1.442695
      %v3333 = vpow.pop %v3332
      %v3334 = vmul.f32 %v2891, 1.442695
      %v3335 = vpow.pop %v3334
      %v3336 = vmul.f32 %v2892, 1.442695
      %v3337 = vpow.pop %v3336
      %v3338 = vmul.f32 %v2893, 1.442695
      %v3339 = vpow.pop %v3338
      %v3340 = vmul.f32 %v2894, 1.442695
      %v3341 = vpow.pop %v3340
      %v3342 = vmul.f32 %v2895, 1.442695
      %v3343 = vpow.pop %v3342
      %v3344 = vmul.f32 %v2896, 1.442695
      %v3345 = vpow.pop %v3344
      %v3346 = vmul.f32 %v2897, 1.442695
      %v3347 = vpow.pop %v3346
      %v3348 = vmul.f32 %v2898, 1.442695
      %v3349 = vpow.pop %v3348
      %v3350 = vmul.f32 %v2899, 1.442695
      %v3351 = vpow.pop %v3350
      %v3352 = vmul.f32 %v2900, 1.442695
      %v3353 = vpow.pop %v3352
      %v3354 = vmul.f32 %v2901, 1.442695
      %v3355 = vpow.pop %v3354
      %v3356 = vmul.f32 %v2902, 1.442695
      %v3357 = vpow.pop %v3356
      %v3358 = vmul.f32 %v2903, 1.442695
      %v3359 = vpow.pop %v3358
      %v3360 = vmul.f32 %v2904, 1.442695
      %v3361 = vpow.pop %v3360
      %v3362 = vmul.f32 %v2905, 1.442695
      %v3363 = vpow.pop %v3362
      %v3364 = vmul.f32 %v2906, 1.442695
      %v3365 = vpow.pop %v3364
      %v3366 = vmul.f32 %v2907, 1.442695
      %v3367 = vpow.pop %v3366
      %v3368 = vmul.f32 %v2908, 1.442695
      %v3369 = vpow.pop %v3368
      %v3370 = vmul.f32 %v2909, 1.442695
      %v3371 = vpow.pop %v3370
      %v3372 = vmul.f32 %v2910, 1.442695
      %v3373 = vpow.pop %v3372
      %v3374 = vmul.f32 %v2911, 1.442695
      %v3375 = vpow.pop %v3374
      %v3376 = vmul.f32 %v2912, 1.442695
      %v3377 = vpow.pop %v3376
      %v3378 = vmul.f32 %v2913, 1.442695
      %v3379 = vpow.pop %v3378
      %v3380 = vmul.f32 %v2914, 1.442695
      %v3381 = vpow.pop %v3380
      %v3382 = vmul.f32 %v2915, 1.442695
      %v3383 = vpow.pop %v3382
      %v3384 = vmul.f32 %v2916, 1.442695
      %v3385 = vpow.pop %v3384
      %v3386 = vmul.f32 %v2917, 1.442695
      %v3387 = vpow.pop %v3386
      %v3388 = vmul.f32 %v2918, 1.442695
      %v3389 = vpow.pop %v3388
      %v3390 = vmul.f32 %v2919, 1.442695
      %v3391 = vpow.pop %v3390
      %v3392 = vmul.f32 %v2920, 1.442695
      %v3393 = vpow.pop %v3392
      %v3394 = vmul.f32 %v2921, 1.442695
      %v3395 = vpow.pop %v3394
      %v3396 = vmul.f32 %v2922, 1.442695
      %v3397 = vpow.pop %v3396
      %v3398 = vmul.f32 %v2923, 1.442695
      %v3399 = vpow.pop %v3398
      %v3400 = vmul.f32 %v2924, 1.442695
      %v3401 = vpow.pop %v3400
      %v3402 = vmul.f32 %v2925, 1.442695
      %v3403 = vpow.pop %v3402
      %v3404 = vmul.f32 %v2926, 1.442695
      %v3405 = vpow.pop %v3404
      %v3406 = vmul.f32 %v2927, 1.442695
      %v3407 = vpow.pop %v3406
      %v3408 = vmul.f32 %v2928, 1.442695
      %v3409 = vpow.pop %v3408
      %v3410 = vmul.f32 %v2929, 1.442695
      %v3411 = vpow.pop %v3410
      %v3412 = vmul.f32 %v2930, 1.442695
      %v3413 = vpow.pop %v3412
      %v3414 = vmul.f32 %v2931, 1.442695
      %v3415 = vpow.pop %v3414
      %v3416 = vmul.f32 %v2932, 1.442695
      %v3417 = vpow.pop %v3416
      %v3418 = vmul.f32 %v2933, 1.442695
      %v3419 = vpow.pop %v3418
      %v3420 = vmul.f32 %v2934, 1.442695
      %v3421 = vpow.pop %v3420
      %v3422 = vmul.f32 %v2935, 1.442695
      %v3423 = vpow.pop %v3422
      %v3424 = vmul.f32 %v2936, 1.442695
      %v3425 = vpow.pop %v3424
      %v3426 = vmul.f32 %v2937, 1.442695
      %v3427 = vpow.pop %v3426
      %v3428 = vmul.f32 %v2938, 1.442695
      %v3429 = vpow.pop %v3428
      %v3430 = vmul.f32 %v2939, 1.442695
      %v3431 = vpow.pop %v3430
      %v3432 = vmul.f32 %v2940, 1.442695
      %v3433 = vpow.pop %v3432
      %v3434 = vmul.f32 %v2941, 1.442695
      %v3435 = vpow.pop %v3434
      %v3436 = vmul.f32 %v2942, 1.442695
      %v3437 = vpow.pop %v3436
      %v3438 = vmul.f32 %v2943, 1.442695
      %v3439 = vpow.pop %v3438
      %v3440 = vmul.f32 %v2944, 1.442695
      %v3441 = vpow.pop %v3440
      %v3442 = vmul.f32 %v2945, 1.442695
      %v3443 = vpow.pop %v3442
      %v3444 = vmul.f32 %v2946, 1.442695
      %v3445 = vpow.pop %v3444
      %v3446 = vmul.f32 %v2947, 1.442695
      %v3447 = vpow.pop %v3446
      %v3448 = vmul.f32 %v2948, 1.442695
      %v3449 = vpow.pop %v3448
      %v3450 = vmul.f32 %v2949, 1.442695
      %v3451 = vpow.pop %v3450
      %v3452 = vmul.f32 %v2950, 1.442695
      %v3453 = vpow.pop %v3452
      %v3454 = vmul.f32 %v2951, 1.442695
      %v3455 = vpow.pop %v3454
      %v3456 = vmul.f32 %v2952, 1.442695
      %v3457 = vpow.pop %v3456
      %v3458 = vmul.f32 %v2953, 1.442695
      %v3459 = vpow.pop %v3458
      %v3460 = vmul.f32 %v2954, 1.442695
      %v3461 = vpow.pop %v3460
      %v3462 = vmul.f32 %v2955, 1.442695
      %v3463 = vpow.pop %v3462
      %v3464 = vmul.f32 %v2956, 1.442695
      %v3465 = vpow.pop %v3464
      %v3466 = vmul.f32 %v2957, 1.442695
      %v3467 = vpow.pop %v3466
      %v3468 = vmul.f32 %v2958, 1.442695
      %v3469 = vpow.pop %v3468
      %v3470 = vmul.f32 %v2959, 1.442695
      %v3471 = vpow.pop %v3470
      %v3472 = vld [vmem:[#allocation3] sm:$0xff]
      %v3473 = vld [vmem:[#allocation3 + $0x8] sm:$0xff]
      %v3474 = vld [vmem:[#allocation3 + $0x10] sm:$0xff]
      %v3475 = vld [vmem:[#allocation3 + $0x18] sm:$0xff]
      %v3476 = vld [vmem:[#allocation3 + $0x20] sm:$0xff]
      %v3477 = vld [vmem:[#allocation3 + $0x28] sm:$0xff]
      %v3478 = vld [vmem:[#allocation3 + $0x30] sm:$0xff]
      %v3479 = vld [vmem:[#allocation3 + $0x38] sm:$0xff]
      %v3480 = vld [vmem:[#allocation3 + $0x40] sm:$0xff]
      %v3481 = vld [vmem:[#allocation3 + $0x48] sm:$0xff]
      %v3482 = vld [vmem:[#allocation3 + $0x50] sm:$0xff]
      %v3483 = vld [vmem:[#allocation3 + $0x58] sm:$0xff]
      %v3484 = vld [vmem:[#allocation3 + $0x60] sm:$0xff]
      %v3485 = vld [vmem:[#allocation3 + $0x68] sm:$0xff]
      %v3486 = vld [vmem:[#allocation3 + $0x70] sm:$0xff]
      %v3487 = vld [vmem:[#allocation3 + $0x78] sm:$0xff]
      %v3488 = vld [vmem:[#allocation3 + $0x80] sm:$0xff]
      %v3489 = vld [vmem:[#allocation3 + $0x88] sm:$0xff]
      %v3490 = vld [vmem:[#allocation3 + $0x90] sm:$0xff]
      %v3491 = vld [vmem:[#allocation3 + $0x98] sm:$0xff]
      %v3492 = vld [vmem:[#allocation3 + $0xa0] sm:$0xff]
      %v3493 = vld [vmem:[#allocation3 + $0xa8] sm:$0xff]
      %v3494 = vld [vmem:[#allocation3 + $0xb0] sm:$0xff]
      %v3495 = vld [vmem:[#allocation3 + $0xb8] sm:$0xff]
      %v3496 = vld [vmem:[#allocation3 + $0xc0] sm:$0xff]
      %v3497 = vld [vmem:[#allocation3 + $0xc8] sm:$0xff]
      %v3498 = vld [vmem:[#allocation3 + $0xd0] sm:$0xff]
      %v3499 = vld [vmem:[#allocation3 + $0xd8] sm:$0xff]
      %v3500 = vld [vmem:[#allocation3 + $0xe0] sm:$0xff]
      %v3501 = vld [vmem:[#allocation3 + $0xe8] sm:$0xff]
      %v3502 = vld [vmem:[#allocation3 + $0xf0] sm:$0xff]
      %v3503 = vld [vmem:[#allocation3 + $0xf8] sm:$0xff]
      %v3504 = vld [vmem:[#allocation3 + $0x100] sm:$0xff]
      %v3505 = vld [vmem:[#allocation3 + $0x108] sm:$0xff]
      %v3506 = vld [vmem:[#allocation3 + $0x110] sm:$0xff]
      %v3507 = vld [vmem:[#allocation3 + $0x118] sm:$0xff]
      %v3508 = vld [vmem:[#allocation3 + $0x120] sm:$0xff]
      %v3509 = vld [vmem:[#allocation3 + $0x128] sm:$0xff]
      %v3510 = vld [vmem:[#allocation3 + $0x130] sm:$0xff]
      %v3511 = vld [vmem:[#allocation3 + $0x138] sm:$0xff]
      %v3512 = vld [vmem:[#allocation3 + $0x140] sm:$0xff]
      %v3513 = vld [vmem:[#allocation3 + $0x148] sm:$0xff]
      %v3514 = vld [vmem:[#allocation3 + $0x150] sm:$0xff]
      %v3515 = vld [vmem:[#allocation3 + $0x158] sm:$0xff]
      %v3516 = vld [vmem:[#allocation3 + $0x160] sm:$0xff]
      %v3517 = vld [vmem:[#allocation3 + $0x168] sm:$0xff]
      %v3518 = vld [vmem:[#allocation3 + $0x170] sm:$0xff]
      %v3519 = vld [vmem:[#allocation3 + $0x178] sm:$0xff]
      %v3520 = vld [vmem:[#allocation3 + $0x180] sm:$0xff]
      %v3521 = vld [vmem:[#allocation3 + $0x188] sm:$0xff]
      %v3522 = vld [vmem:[#allocation3 + $0x190] sm:$0xff]
      %v3523 = vld [vmem:[#allocation3 + $0x198] sm:$0xff]
      %v3524 = vld [vmem:[#allocation3 + $0x1a0] sm:$0xff]
      %v3525 = vld [vmem:[#allocation3 + $0x1a8] sm:$0xff]
      %v3526 = vld [vmem:[#allocation3 + $0x1b0] sm:$0xff]
      %v3527 = vld [vmem:[#allocation3 + $0x1b8] sm:$0xff]
      %v3528 = vld [vmem:[#allocation3 + $0x1c0] sm:$0xff]
      %v3529 = vld [vmem:[#allocation3 + $0x1c8] sm:$0xff]
      %v3530 = vld [vmem:[#allocation3 + $0x1d0] sm:$0xff]
      %v3531 = vld [vmem:[#allocation3 + $0x1d8] sm:$0xff]
      %v3532 = vld [vmem:[#allocation3 + $0x1e0] sm:$0xff]
      %v3533 = vld [vmem:[#allocation3 + $0x1e8] sm:$0xff]
      %v3534 = vld [vmem:[#allocation3 + $0x1f0] sm:$0xff]
      %v3535 = vld [vmem:[#allocation3 + $0x1f8] sm:$0xff]
      %v3536 = vmul.f32 %v2257, %v3472
      %v3537 = vmul.f32 %v2259, %v3473
      %v3538 = vmul.f32 %v2261, %v3474
      %v3539 = vmul.f32 %v2263, %v3475
      %v3540 = vmul.f32 %v2265, %v3476
      %v3541 = vmul.f32 %v2267, %v3477
      %v3542 = vmul.f32 %v2269, %v3478
      %v3543 = vmul.f32 %v2271, %v3479
      %v3544 = vmul.f32 %v2273, %v3480
      %v3545 = vmul.f32 %v2275, %v3481
      %v3546 = vmul.f32 %v2277, %v3482
      %v3547 = vmul.f32 %v2279, %v3483
      %v3548 = vmul.f32 %v2281, %v3484
      %v3549 = vmul.f32 %v2283, %v3485
      %v3550 = vmul.f32 %v2285, %v3486
      %v3551 = vmul.f32 %v2287, %v3487
      %v3552 = vmul.f32 %v2289, %v3488
      %v3553 = vmul.f32 %v2291, %v3489
      %v3554 = vmul.f32 %v2293, %v3490
      %v3555 = vmul.f32 %v2295, %v3491
      %v3556 = vmul.f32 %v2297, %v3492
      %v3557 = vmul.f32 %v2299, %v3493
      %v3558 = vmul.f32 %v2301, %v3494
      %v3559 = vmul.f32 %v2303, %v3495
      %v3560 = vmul.f32 %v2305, %v3496
      %v3561 = vmul.f32 %v2307, %v3497
      %v3562 = vmul.f32 %v2309, %v3498
      %v3563 = vmul.f32 %v2311, %v3499
      %v3564 = vmul.f32 %v2313, %v3500
      %v3565 = vmul.f32 %v2315, %v3501
      %v3566 = vmul.f32 %v2317, %v3502
      %v3567 = vmul.f32 %v2319, %v3503
      %v3568 = vmul.f32 %v2321, %v3504
      %v3569 = vmul.f32 %v2323, %v3505
      %v3570 = vmul.f32 %v2325, %v3506
      %v3571 = vmul.f32 %v2327, %v3507
      %v3572 = vmul.f32 %v2329, %v3508
      %v3573 = vmul.f32 %v2331, %v3509
      %v3574 = vmul.f32 %v2333, %v3510
      %v3575 = vmul.f32 %v2335, %v3511
      %v3576 = vmul.f32 %v2337, %v3512
      %v3577 = vmul.f32 %v2339, %v3513
      %v3578 = vmul.f32 %v2341, %v3514
      %v3579 = vmul.f32 %v2343, %v3515
      %v3580 = vmul.f32 %v2345, %v3516
      %v3581 = vmul.f32 %v2347, %v3517
      %v3582 = vmul.f32 %v2349, %v3518
      %v3583 = vmul.f32 %v2351, %v3519
      %v3584 = vmul.f32 %v2353, %v3520
      %v3585 = vmul.f32 %v2355, %v3521
      %v3586 = vmul.f32 %v2357, %v3522
      %v3587 = vmul.f32 %v2359, %v3523
      %v3588 = vmul.f32 %v2361, %v3524
      %v3589 = vmul.f32 %v2363, %v3525
      %v3590 = vmul.f32 %v2365, %v3526
      %v3591 = vmul.f32 %v2367, %v3527
      %v3592 = vmul.f32 %v2369, %v3528
      %v3593 = vmul.f32 %v2371, %v3529
      %v3594 = vmul.f32 %v2373, %v3530
      %v3595 = vmul.f32 %v2375, %v3531
      %v3596 = vmul.f32 %v2377, %v3532
      %v3597 = vmul.f32 %v2379, %v3533
      %v3598 = vmul.f32 %v2381, %v3534
      %v3599 = vmul.f32 %v2383, %v3535
      %v3600 = vadd.f32 %v2961, %v2963
      %v3601 = vadd.f32 %v3600, %v2965
      %v3602 = vadd.f32 %v3601, %v2967
      %3603 = vadd.xlane.f32.xlu0 %v3602
      %v3604 = vpop.xlane.xlu0 %3603
      %v3605 = vadd.f32 %v2969, %v2971
      %v3606 = vadd.f32 %v3605, %v2973
      %v3607 = vadd.f32 %v3606, %v2975
      %3608 = vadd.xlane.f32.xlu0 %v3607
      %v3609 = vpop.xlane.xlu0 %3608
      %v3610 = vadd.f32 %v2977, %v2979
      %v3611 = vadd.f32 %v3610, %v2981
      %v3612 = vadd.f32 %v3611, %v2983
      %3613 = vadd.xlane.f32.xlu0 %v3612
      %v3614 = vpop.xlane.xlu0 %3613
      %v3615 = vadd.f32 %v2985, %v2987
      %v3616 = vadd.f32 %v3615, %v2989
      %v3617 = vadd.f32 %v3616, %v2991
      %3618 = vadd.xlane.f32.xlu0 %v3617
      %v3619 = vpop.xlane.xlu0 %3618
      %v3620 = vadd.f32 %v2993, %v2995
      %v3621 = vadd.f32 %v3620, %v2997
      %v3622 = vadd.f32 %v3621, %v2999
      %3623 = vadd.xlane.f32.xlu0 %v3622
      %v3624 = vpop.xlane.xlu0 %3623
      %v3625 = vadd.f32 %v3001, %v3003
      %v3626 = vadd.f32 %v3625, %v3005
      %v3627 = vadd.f32 %v3626, %v3007
      %3628 = vadd.xlane.f32.xlu0 %v3627
      %v3629 = vpop.xlane.xlu0 %3628
      %v3630 = vadd.f32 %v3009, %v3011
      %v3631 = vadd.f32 %v3630, %v3013
      %v3632 = vadd.f32 %v3631, %v3015
      %3633 = vadd.xlane.f32.xlu0 %v3632
      %v3634 = vpop.xlane.xlu0 %3633
      %v3635 = vadd.f32 %v3017, %v3019
      %v3636 = vadd.f32 %v3635, %v3021
      %v3637 = vadd.f32 %v3636, %v3023
      %3638 = vadd.xlane.f32.xlu0 %v3637
      %v3639 = vpop.xlane.xlu0 %3638
      %v3640 = vadd.f32 %v3025, %v3027
      %v3641 = vadd.f32 %v3640, %v3029
      %v3642 = vadd.f32 %v3641, %v3031
      %3643 = vadd.xlane.f32.xlu0 %v3642
      %v3644 = vpop.xlane.xlu0 %3643
      %v3645 = vadd.f32 %v3033, %v3035
      %v3646 = vadd.f32 %v3645, %v3037
      %v3647 = vadd.f32 %v3646, %v3039
      %3648 = vadd.xlane.f32.xlu0 %v3647
      %v3649 = vpop.xlane.xlu0 %3648
      %v3650 = vadd.f32 %v3041, %v3043
      %v3651 = vadd.f32 %v3650, %v3045
      %v3652 = vadd.f32 %v3651, %v3047
      %3653 = vadd.xlane.f32.xlu0 %v3652
      %v3654 = vpop.xlane.xlu0 %3653
      %v3655 = vadd.f32 %v3049, %v3051
      %v3656 = vadd.f32 %v3655, %v3053
      %v3657 = vadd.f32 %v3656, %v3055
      %3658 = vadd.xlane.f32.xlu0 %v3657
      %v3659 = vpop.xlane.xlu0 %3658
      %v3660 = vadd.f32 %v3057, %v3059
      %v3661 = vadd.f32 %v3660, %v3061
      %v3662 = vadd.f32 %v3661, %v3063
      %3663 = vadd.xlane.f32.xlu0 %v3662
      %v3664 = vpop.xlane.xlu0 %3663
      %v3665 = vadd.f32 %v3065, %v3067
      %v3666 = vadd.f32 %v3665, %v3069
      %v3667 = vadd.f32 %v3666, %v3071
      %3668 = vadd.xlane.f32.xlu0 %v3667
      %v3669 = vpop.xlane.xlu0 %3668
      %v3670 = vadd.f32 %v3073, %v3075
      %v3671 = vadd.f32 %v3670, %v3077
      %v3672 = vadd.f32 %v3671, %v3079
      %3673 = vadd.xlane.f32.xlu0 %v3672
      %v3674 = vpop.xlane.xlu0 %3673
      %v3675 = vadd.f32 %v3081, %v3083
      %v3676 = vadd.f32 %v3675, %v3085
      %v3677 = vadd.f32 %v3676, %v3087
      %3678 = vadd.xlane.f32.xlu0 %v3677
      %v3679 = vpop.xlane.xlu0 %3678
      %v3680 = vadd.f32 %v3089, %v3091
      %v3681 = vadd.f32 %v3680, %v3093
      %v3682 = vadd.f32 %v3681, %v3095
      %3683 = vadd.xlane.f32.xlu0 %v3682
      %v3684 = vpop.xlane.xlu0 %3683
      %v3685 = vadd.f32 %v3097, %v3099
      %v3686 = vadd.f32 %v3685, %v3101
      %v3687 = vadd.f32 %v3686, %v3103
      %3688 = vadd.xlane.f32.xlu0 %v3687
      %v3689 = vpop.xlane.xlu0 %3688
      %v3690 = vadd.f32 %v3105, %v3107
      %v3691 = vadd.f32 %v3690, %v3109
      %v3692 = vadd.f32 %v3691, %v3111
      %3693 = vadd.xlane.f32.xlu0 %v3692
      %v3694 = vpop.xlane.xlu0 %3693
      %v3695 = vadd.f32 %v3113, %v3115
      %v3696 = vadd.f32 %v3695, %v3117
      %v3697 = vadd.f32 %v3696, %v3119
      %3698 = vadd.xlane.f32.xlu0 %v3697
      %v3699 = vpop.xlane.xlu0 %3698
      %v3700 = vadd.f32 %v3121, %v3123
      %v3701 = vadd.f32 %v3700, %v3125
      %v3702 = vadd.f32 %v3701, %v3127
      %3703 = vadd.xlane.f32.xlu0 %v3702
      %v3704 = vpop.xlane.xlu0 %3703
      %v3705 = vadd.f32 %v3129, %v3131
      %v3706 = vadd.f32 %v3705, %v3133
      %v3707 = vadd.f32 %v3706, %v3135
      %3708 = vadd.xlane.f32.xlu0 %v3707
      %v3709 = vpop.xlane.xlu0 %3708
      %v3710 = vadd.f32 %v3137, %v3139
      %v3711 = vadd.f32 %v3710, %v3141
      %v3712 = vadd.f32 %v3711, %v3143
      %3713 = vadd.xlane.f32.xlu0 %v3712
      %v3714 = vpop.xlane.xlu0 %3713
      %v3715 = vadd.f32 %v3145, %v3147
      %v3716 = vadd.f32 %v3715, %v3149
      %v3717 = vadd.f32 %v3716, %v3151
      %3718 = vadd.xlane.f32.xlu0 %v3717
      %v3719 = vpop.xlane.xlu0 %3718
      %v3720 = vadd.f32 %v3153, %v3155
      %v3721 = vadd.f32 %v3720, %v3157
      %v3722 = vadd.f32 %v3721, %v3159
      %3723 = vadd.xlane.f32.xlu0 %v3722
      %v3724 = vpop.xlane.xlu0 %3723
      %v3725 = vadd.f32 %v3161, %v3163
      %v3726 = vadd.f32 %v3725, %v3165
      %v3727 = vadd.f32 %v3726, %v3167
      %3728 = vadd.xlane.f32.xlu0 %v3727
      %v3729 = vpop.xlane.xlu0 %3728
      %v3730 = vadd.f32 %v3169, %v3171
      %v3731 = vadd.f32 %v3730, %v3173
      %v3732 = vadd.f32 %v3731, %v3175
      %3733 = vadd.xlane.f32.xlu0 %v3732
      %v3734 = vpop.xlane.xlu0 %3733
      %v3735 = vadd.f32 %v3177, %v3179
      %v3736 = vadd.f32 %v3735, %v3181
      %v3737 = vadd.f32 %v3736, %v3183
      %3738 = vadd.xlane.f32.xlu0 %v3737
      %v3739 = vpop.xlane.xlu0 %3738
      %v3740 = vadd.f32 %v3185, %v3187
      %v3741 = vadd.f32 %v3740, %v3189
      %v3742 = vadd.f32 %v3741, %v3191
      %3743 = vadd.xlane.f32.xlu0 %v3742
      %v3744 = vpop.xlane.xlu0 %3743
      %v3745 = vadd.f32 %v3193, %v3195
      %v3746 = vadd.f32 %v3745, %v3197
      %v3747 = vadd.f32 %v3746, %v3199
      %3748 = vadd.xlane.f32.xlu0 %v3747
      %v3749 = vpop.xlane.xlu0 %3748
      %v3750 = vadd.f32 %v3201, %v3203
      %v3751 = vadd.f32 %v3750, %v3205
      %v3752 = vadd.f32 %v3751, %v3207
      %3753 = vadd.xlane.f32.xlu0 %v3752
      %v3754 = vpop.xlane.xlu0 %3753
      %v3755 = vadd.f32 %v3209, %v3211
      %v3756 = vadd.f32 %v3755, %v3213
      %v3757 = vadd.f32 %v3756, %v3215
      %3758 = vadd.xlane.f32.xlu0 %v3757
      %v3759 = vpop.xlane.xlu0 %3758
      %v3760 = vadd.f32 %v3217, %v3219
      %v3761 = vadd.f32 %v3760, %v3221
      %v3762 = vadd.f32 %v3761, %v3223
      %3763 = vadd.xlane.f32.xlu0 %v3762
      %v3764 = vpop.xlane.xlu0 %3763
      %v3765 = vadd.f32 %v3225, %v3227
      %v3766 = vadd.f32 %v3765, %v3229
      %v3767 = vadd.f32 %v3766, %v3231
      %3768 = vadd.xlane.f32.xlu0 %v3767
      %v3769 = vpop.xlane.xlu0 %3768
      %v3770 = vadd.f32 %v3233, %v3235
      %v3771 = vadd.f32 %v3770, %v3237
      %v3772 = vadd.f32 %v3771, %v3239
      %3773 = vadd.xlane.f32.xlu0 %v3772
      %v3774 = vpop.xlane.xlu0 %3773
      %v3775 = vadd.f32 %v3241, %v3243
      %v3776 = vadd.f32 %v3775, %v3245
      %v3777 = vadd.f32 %v3776, %v3247
      %3778 = vadd.xlane.f32.xlu0 %v3777
      %v3779 = vpop.xlane.xlu0 %3778
      %v3780 = vadd.f32 %v3249, %v3251
      %v3781 = vadd.f32 %v3780, %v3253
      %v3782 = vadd.f32 %v3781, %v3255
      %3783 = vadd.xlane.f32.xlu0 %v3782
      %v3784 = vpop.xlane.xlu0 %3783
      %v3785 = vadd.f32 %v3257, %v3259
      %v3786 = vadd.f32 %v3785, %v3261
      %v3787 = vadd.f32 %v3786, %v3263
      %3788 = vadd.xlane.f32.xlu0 %v3787
      %v3789 = vpop.xlane.xlu0 %3788
      %v3790 = vadd.f32 %v3265, %v3267
      %v3791 = vadd.f32 %v3790, %v3269
      %v3792 = vadd.f32 %v3791, %v3271
      %3793 = vadd.xlane.f32.xlu0 %v3792
      %v3794 = vpop.xlane.xlu0 %3793
      %v3795 = vadd.f32 %v3273, %v3275
      %v3796 = vadd.f32 %v3795, %v3277
      %v3797 = vadd.f32 %v3796, %v3279
      %3798 = vadd.xlane.f32.xlu0 %v3797
      %v3799 = vpop.xlane.xlu0 %3798
      %v3800 = vadd.f32 %v3281, %v3283
      %v3801 = vadd.f32 %v3800, %v3285
      %v3802 = vadd.f32 %v3801, %v3287
      %3803 = vadd.xlane.f32.xlu0 %v3802
      %v3804 = vpop.xlane.xlu0 %3803
      %v3805 = vadd.f32 %v3289, %v3291
      %v3806 = vadd.f32 %v3805, %v3293
      %v3807 = vadd.f32 %v3806, %v3295
      %3808 = vadd.xlane.f32.xlu0 %v3807
      %v3809 = vpop.xlane.xlu0 %3808
      %v3810 = vadd.f32 %v3297, %v3299
      %v3811 = vadd.f32 %v3810, %v3301
      %v3812 = vadd.f32 %v3811, %v3303
      %3813 = vadd.xlane.f32.xlu0 %v3812
      %v3814 = vpop.xlane.xlu0 %3813
      %v3815 = vadd.f32 %v3305, %v3307
      %v3816 = vadd.f32 %v3815, %v3309
      %v3817 = vadd.f32 %v3816, %v3311
      %3818 = vadd.xlane.f32.xlu0 %v3817
      %v3819 = vpop.xlane.xlu0 %3818
      %v3820 = vadd.f32 %v3313, %v3315
      %v3821 = vadd.f32 %v3820, %v3317
      %v3822 = vadd.f32 %v3821, %v3319
      %3823 = vadd.xlane.f32.xlu0 %v3822
      %v3824 = vpop.xlane.xlu0 %3823
      %v3825 = vadd.f32 %v3321, %v3323
      %v3826 = vadd.f32 %v3825, %v3325
      %v3827 = vadd.f32 %v3826, %v3327
      %3828 = vadd.xlane.f32.xlu0 %v3827
      %v3829 = vpop.xlane.xlu0 %3828
      %v3830 = vadd.f32 %v3329, %v3331
      %v3831 = vadd.f32 %v3830, %v3333
      %v3832 = vadd.f32 %v3831, %v3335
      %3833 = vadd.xlane.f32.xlu0 %v3832
      %v3834 = vpop.xlane.xlu0 %3833
      %v3835 = vadd.f32 %v3337, %v3339
      %v3836 = vadd.f32 %v3835, %v3341
      %v3837 = vadd.f32 %v3836, %v3343
      %3838 = vadd.xlane.f32.xlu0 %v3837
      %v3839 = vpop.xlane.xlu0 %3838
      %v3840 = vadd.f32 %v3345, %v3347
      %v3841 = vadd.f32 %v3840, %v3349
      %v3842 = vadd.f32 %v3841, %v3351
      %3843 = vadd.xlane.f32.xlu0 %v3842
      %v3844 = vpop.xlane.xlu0 %3843
      %v3845 = vadd.f32 %v3353, %v3355
      %v3846 = vadd.f32 %v3845, %v3357
      %v3847 = vadd.f32 %v3846, %v3359
      %3848 = vadd.xlane.f32.xlu0 %v3847
      %v3849 = vpop.xlane.xlu0 %3848
      %v3850 = vadd.f32 %v3361, %v3363
      %v3851 = vadd.f32 %v3850, %v3365
      %v3852 = vadd.f32 %v3851, %v3367
      %3853 = vadd.xlane.f32.xlu0 %v3852
      %v3854 = vpop.xlane.xlu0 %3853
      %v3855 = vadd.f32 %v3369, %v3371
      %v3856 = vadd.f32 %v3855, %v3373
      %v3857 = vadd.f32 %v3856, %v3375
      %3858 = vadd.xlane.f32.xlu0 %v3857
      %v3859 = vpop.xlane.xlu0 %3858
      %v3860 = vadd.f32 %v3377, %v3379
      %v3861 = vadd.f32 %v3860, %v3381
      %v3862 = vadd.f32 %v3861, %v3383
      %3863 = vadd.xlane.f32.xlu0 %v3862
      %v3864 = vpop.xlane.xlu0 %3863
      %v3865 = vadd.f32 %v3385, %v3387
      %v3866 = vadd.f32 %v3865, %v3389
      %v3867 = vadd.f32 %v3866, %v3391
      %3868 = vadd.xlane.f32.xlu0 %v3867
      %v3869 = vpop.xlane.xlu0 %3868
      %v3870 = vadd.f32 %v3393, %v3395
      %v3871 = vadd.f32 %v3870, %v3397
      %v3872 = vadd.f32 %v3871, %v3399
      %3873 = vadd.xlane.f32.xlu0 %v3872
      %v3874 = vpop.xlane.xlu0 %3873
      %v3875 = vadd.f32 %v3401, %v3403
      %v3876 = vadd.f32 %v3875, %v3405
      %v3877 = vadd.f32 %v3876, %v3407
      %3878 = vadd.xlane.f32.xlu0 %v3877
      %v3879 = vpop.xlane.xlu0 %3878
      %v3880 = vadd.f32 %v3409, %v3411
      %v3881 = vadd.f32 %v3880, %v3413
      %v3882 = vadd.f32 %v3881, %v3415
      %3883 = vadd.xlane.f32.xlu0 %v3882
      %v3884 = vpop.xlane.xlu0 %3883
      %v3885 = vadd.f32 %v3417, %v3419
      %v3886 = vadd.f32 %v3885, %v3421
      %v3887 = vadd.f32 %v3886, %v3423
      %3888 = vadd.xlane.f32.xlu0 %v3887
      %v3889 = vpop.xlane.xlu0 %3888
      %v3890 = vadd.f32 %v3425, %v3427
      %v3891 = vadd.f32 %v3890, %v3429
      %v3892 = vadd.f32 %v3891, %v3431
      %3893 = vadd.xlane.f32.xlu0 %v3892
      %v3894 = vpop.xlane.xlu0 %3893
      %v3895 = vadd.f32 %v3433, %v3435
      %v3896 = vadd.f32 %v3895, %v3437
      %v3897 = vadd.f32 %v3896, %v3439
      %3898 = vadd.xlane.f32.xlu0 %v3897
      %v3899 = vpop.xlane.xlu0 %3898
      %v3900 = vadd.f32 %v3441, %v3443
      %v3901 = vadd.f32 %v3900, %v3445
      %v3902 = vadd.f32 %v3901, %v3447
      %3903 = vadd.xlane.f32.xlu0 %v3902
      %v3904 = vpop.xlane.xlu0 %3903
      %v3905 = vadd.f32 %v3449, %v3451
      %v3906 = vadd.f32 %v3905, %v3453
      %v3907 = vadd.f32 %v3906, %v3455
      %3908 = vadd.xlane.f32.xlu0 %v3907
      %v3909 = vpop.xlane.xlu0 %3908
      %v3910 = vadd.f32 %v3457, %v3459
      %v3911 = vadd.f32 %v3910, %v3461
      %v3912 = vadd.f32 %v3911, %v3463
      %3913 = vadd.xlane.f32.xlu0 %v3912
      %v3914 = vpop.xlane.xlu0 %3913
      %v3915 = vadd.f32 %v3465, %v3467
      %v3916 = vadd.f32 %v3915, %v3469
      %v3917 = vadd.f32 %v3916, %v3471
      %3918 = vadd.xlane.f32.xlu0 %v3917
      %v3919 = vpop.xlane.xlu0 %3918
      %v3920 = vadd.f32 %v3536, %v3604
      %v3921 = vadd.f32 %v3537, %v3609
      %v3922 = vadd.f32 %v3538, %v3614
      %v3923 = vadd.f32 %v3539, %v3619
      %v3924 = vadd.f32 %v3540, %v3624
      %v3925 = vadd.f32 %v3541, %v3629
      %v3926 = vadd.f32 %v3542, %v3634
      %v3927 = vadd.f32 %v3543, %v3639
      %v3928 = vadd.f32 %v3544, %v3644
      %v3929 = vadd.f32 %v3545, %v3649
      %v3930 = vadd.f32 %v3546, %v3654
      %v3931 = vadd.f32 %v3547, %v3659
      %v3932 = vadd.f32 %v3548, %v3664
      %v3933 = vadd.f32 %v3549, %v3669
      %v3934 = vadd.f32 %v3550, %v3674
      %v3935 = vadd.f32 %v3551, %v3679
      %v3936 = vadd.f32 %v3552, %v3684
      %v3937 = vadd.f32 %v3553, %v3689
      %v3938 = vadd.f32 %v3554, %v3694
      %v3939 = vadd.f32 %v3555, %v3699
      %v3940 = vadd.f32 %v3556, %v3704
      %v3941 = vadd.f32 %v3557, %v3709
      %v3942 = vadd.f32 %v3558, %v3714
      %v3943 = vadd.f32 %v3559, %v3719
      %v3944 = vadd.f32 %v3560, %v3724
      %v3945 = vadd.f32 %v3561, %v3729
      %v3946 = vadd.f32 %v3562, %v3734
      %v3947 = vadd.f32 %v3563, %v3739
      %v3948 = vadd.f32 %v3564, %v3744
      %v3949 = vadd.f32 %v3565, %v3749
      %v3950 = vadd.f32 %v3566, %v3754
      %v3951 = vadd.f32 %v3567, %v3759
      %v3952 = vadd.f32 %v3568, %v3764
      %v3953 = vadd.f32 %v3569, %v3769
      %v3954 = vadd.f32 %v3570, %v3774
      %v3955 = vadd.f32 %v3571, %v3779
      %v3956 = vadd.f32 %v3572, %v3784
      %v3957 = vadd.f32 %v3573, %v3789
      %v3958 = vadd.f32 %v3574, %v3794
      %v3959 = vadd.f32 %v3575, %v3799
      %v3960 = vadd.f32 %v3576, %v3804
      %v3961 = vadd.f32 %v3577, %v3809
      %v3962 = vadd.f32 %v3578, %v3814
      %v3963 = vadd.f32 %v3579, %v3819
      %v3964 = vadd.f32 %v3580, %v3824
      %v3965 = vadd.f32 %v3581, %v3829
      %v3966 = vadd.f32 %v3582, %v3834
      %v3967 = vadd.f32 %v3583, %v3839
      %v3968 = vadd.f32 %v3584, %v3844
      %v3969 = vadd.f32 %v3585, %v3849
      %v3970 = vadd.f32 %v3586, %v3854
      %v3971 = vadd.f32 %v3587, %v3859
      %v3972 = vadd.f32 %v3588, %v3864
      %v3973 = vadd.f32 %v3589, %v3869
      %v3974 = vadd.f32 %v3590, %v3874
      %v3975 = vadd.f32 %v3591, %v3879
      %v3976 = vadd.f32 %v3592, %v3884
      %v3977 = vadd.f32 %v3593, %v3889
      %v3978 = vadd.f32 %v3594, %v3894
      %v3979 = vadd.f32 %v3595, %v3899
      %v3980 = vadd.f32 %v3596, %v3904
      %v3981 = vadd.f32 %v3597, %v3909
      %v3982 = vadd.f32 %v3598, %v3914
      %v3983 = vadd.f32 %v3599, %v3919
      %vm3984 = vcmask 7168
      %3985 = vst.msk [vmem:[#allocation3] sm:$0xff] %vm3984, %v3920
      %3986 = vst.msk [vmem:[#allocation3 + $0x8] sm:$0xff] %vm3984, %v3921
      %3987 = vst.msk [vmem:[#allocation3 + $0x10] sm:$0xff] %vm3984, %v3922
      %3988 = vst.msk [vmem:[#allocation3 + $0x18] sm:$0xff] %vm3984, %v3923
      %3989 = vst.msk [vmem:[#allocation3 + $0x20] sm:$0xff] %vm3984, %v3924
      %3990 = vst.msk [vmem:[#allocation3 + $0x28] sm:$0xff] %vm3984, %v3925
      %3991 = vst.msk [vmem:[#allocation3 + $0x30] sm:$0xff] %vm3984, %v3926
      %3992 = vst.msk [vmem:[#allocation3 + $0x38] sm:$0xff] %vm3984, %v3927
      %3993 = vst.msk [vmem:[#allocation3 + $0x40] sm:$0xff] %vm3984, %v3928
      %3994 = vst.msk [vmem:[#allocation3 + $0x48] sm:$0xff] %vm3984, %v3929
      %3995 = vst.msk [vmem:[#allocation3 + $0x50] sm:$0xff] %vm3984, %v3930
      %3996 = vst.msk [vmem:[#allocation3 + $0x58] sm:$0xff] %vm3984, %v3931
      %3997 = vst.msk [vmem:[#allocation3 + $0x60] sm:$0xff] %vm3984, %v3932
      %3998 = vst.msk [vmem:[#allocation3 + $0x68] sm:$0xff] %vm3984, %v3933
      %3999 = vst.msk [vmem:[#allocation3 + $0x70] sm:$0xff] %vm3984, %v3934
      %4000 = vst.msk [vmem:[#allocation3 + $0x78] sm:$0xff] %vm3984, %v3935
      %4001 = vst.msk [vmem:[#allocation3 + $0x80] sm:$0xff] %vm3984, %v3936
      %4002 = vst.msk [vmem:[#allocation3 + $0x88] sm:$0xff] %vm3984, %v3937
      %4003 = vst.msk [vmem:[#allocation3 + $0x90] sm:$0xff] %vm3984, %v3938
      %4004 = vst.msk [vmem:[#allocation3 + $0x98] sm:$0xff] %vm3984, %v3939
      %4005 = vst.msk [vmem:[#allocation3 + $0xa0] sm:$0xff] %vm3984, %v3940
      %4006 = vst.msk [vmem:[#allocation3 + $0xa8] sm:$0xff] %vm3984, %v3941
      %4007 = vst.msk [vmem:[#allocation3 + $0xb0] sm:$0xff] %vm3984, %v3942
      %4008 = vst.msk [vmem:[#allocation3 + $0xb8] sm:$0xff] %vm3984, %v3943
      %4009 = vst.msk [vmem:[#allocation3 + $0xc0] sm:$0xff] %vm3984, %v3944
      %4010 = vst.msk [vmem:[#allocation3 + $0xc8] sm:$0xff] %vm3984, %v3945
      %4011 = vst.msk [vmem:[#allocation3 + $0xd0] sm:$0xff] %vm3984, %v3946
      %4012 = vst.msk [vmem:[#allocation3 + $0xd8] sm:$0xff] %vm3984, %v3947
      %4013 = vst.msk [vmem:[#allocation3 + $0xe0] sm:$0xff] %vm3984, %v3948
      %4014 = vst.msk [vmem:[#allocation3 + $0xe8] sm:$0xff] %vm3984, %v3949
      %4015 = vst.msk [vmem:[#allocation3 + $0xf0] sm:$0xff] %vm3984, %v3950
      %4016 = vst.msk [vmem:[#allocation3 + $0xf8] sm:$0xff] %vm3984, %v3951
      %4017 = vst.msk [vmem:[#allocation3 + $0x100] sm:$0xff] %vm3984, %v3952
      %4018 = vst.msk [vmem:[#allocation3 + $0x108] sm:$0xff] %vm3984, %v3953
      %4019 = vst.msk [vmem:[#allocation3 + $0x110] sm:$0xff] %vm3984, %v3954
      %4020 = vst.msk [vmem:[#allocation3 + $0x118] sm:$0xff] %vm3984, %v3955
      %4021 = vst.msk [vmem:[#allocation3 + $0x120] sm:$0xff] %vm3984, %v3956
      %4022 = vst.msk [vmem:[#allocation3 + $0x128] sm:$0xff] %vm3984, %v3957
      %4023 = vst.msk [vmem:[#allocation3 + $0x130] sm:$0xff] %vm3984, %v3958
      %4024 = vst.msk [vmem:[#allocation3 + $0x138] sm:$0xff] %vm3984, %v3959
      %4025 = vst.msk [vmem:[#allocation3 + $0x140] sm:$0xff] %vm3984, %v3960
      %4026 = vst.msk [vmem:[#allocation3 + $0x148] sm:$0xff] %vm3984, %v3961
      %4027 = vst.msk [vmem:[#allocation3 + $0x150] sm:$0xff] %vm3984, %v3962
      %4028 = vst.msk [vmem:[#allocation3 + $0x158] sm:$0xff] %vm3984, %v3963
      %4029 = vst.msk [vmem:[#allocation3 + $0x160] sm:$0xff] %vm3984, %v3964
      %4030 = vst.msk [vmem:[#allocation3 + $0x168] sm:$0xff] %vm3984, %v3965
      %4031 = vst.msk [vmem:[#allocation3 + $0x170] sm:$0xff] %vm3984, %v3966
      %4032 = vst.msk [vmem:[#allocation3 + $0x178] sm:$0xff] %vm3984, %v3967
      %4033 = vst.msk [vmem:[#allocation3 + $0x180] sm:$0xff] %vm3984, %v3968
      %4034 = vst.msk [vmem:[#allocation3 + $0x188] sm:$0xff] %vm3984, %v3969
      %4035 = vst.msk [vmem:[#allocation3 + $0x190] sm:$0xff] %vm3984, %v3970
      %4036 = vst.msk [vmem:[#allocation3 + $0x198] sm:$0xff] %vm3984, %v3971
      %4037 = vst.msk [vmem:[#allocation3 + $0x1a0] sm:$0xff] %vm3984, %v3972
      %4038 = vst.msk [vmem:[#allocation3 + $0x1a8] sm:$0xff] %vm3984, %v3973
      %4039 = vst.msk [vmem:[#allocation3 + $0x1b0] sm:$0xff] %vm3984, %v3974
      %4040 = vst.msk [vmem:[#allocation3 + $0x1b8] sm:$0xff] %vm3984, %v3975
      %4041 = vst.msk [vmem:[#allocation3 + $0x1c0] sm:$0xff] %vm3984, %v3976
      %4042 = vst.msk [vmem:[#allocation3 + $0x1c8] sm:$0xff] %vm3984, %v3977
      %4043 = vst.msk [vmem:[#allocation3 + $0x1d0] sm:$0xff] %vm3984, %v3978
      %4044 = vst.msk [vmem:[#allocation3 + $0x1d8] sm:$0xff] %vm3984, %v3979
      %4045 = vst.msk [vmem:[#allocation3 + $0x1e0] sm:$0xff] %vm3984, %v3980
      %4046 = vst.msk [vmem:[#allocation3 + $0x1e8] sm:$0xff] %vm3984, %v3981
      %4047 = vst.msk [vmem:[#allocation3 + $0x1f0] sm:$0xff] %vm3984, %v3982
      %4048 = vst.msk [vmem:[#allocation3 + $0x1f8] sm:$0xff] %vm3984, %v3983
      %v4049 = vld [vmem:[#allocation4] sm:$0xff]
      %v4050 = vld [vmem:[#allocation4 + $0x8] sm:$0xff]
      %v4051 = vld [vmem:[#allocation4 + $0x10] sm:$0xff]
      %v4052 = vld [vmem:[#allocation4 + $0x18] sm:$0xff]
      %v4053 = vld [vmem:[#allocation4 + $0x20] sm:$0xff]
      %v4054 = vld [vmem:[#allocation4 + $0x28] sm:$0xff]
      %v4055 = vld [vmem:[#allocation4 + $0x30] sm:$0xff]
      %v4056 = vld [vmem:[#allocation4 + $0x38] sm:$0xff]
      %v4057 = vld [vmem:[#allocation4 + $0x40] sm:$0xff]
      %v4058 = vld [vmem:[#allocation4 + $0x48] sm:$0xff]
      %v4059 = vld [vmem:[#allocation4 + $0x50] sm:$0xff]
      %v4060 = vld [vmem:[#allocation4 + $0x58] sm:$0xff]
      %v4061 = vld [vmem:[#allocation4 + $0x60] sm:$0xff]
      %v4062 = vld [vmem:[#allocation4 + $0x68] sm:$0xff]
      %v4063 = vld [vmem:[#allocation4 + $0x70] sm:$0xff]
      %v4064 = vld [vmem:[#allocation4 + $0x78] sm:$0xff]
      %v4065 = vld [vmem:[#allocation4 + $0x80] sm:$0xff]
      %v4066 = vld [vmem:[#allocation4 + $0x88] sm:$0xff]
      %v4067 = vld [vmem:[#allocation4 + $0x90] sm:$0xff]
      %v4068 = vld [vmem:[#allocation4 + $0x98] sm:$0xff]
      %v4069 = vld [vmem:[#allocation4 + $0xa0] sm:$0xff]
      %v4070 = vld [vmem:[#allocation4 + $0xa8] sm:$0xff]
      %v4071 = vld [vmem:[#allocation4 + $0xb0] sm:$0xff]
      %v4072 = vld [vmem:[#allocation4 + $0xb8] sm:$0xff]
      %v4073 = vld [vmem:[#allocation4 + $0xc0] sm:$0xff]
      %v4074 = vld [vmem:[#allocation4 + $0xc8] sm:$0xff]
      %v4075 = vld [vmem:[#allocation4 + $0xd0] sm:$0xff]
      %v4076 = vld [vmem:[#allocation4 + $0xd8] sm:$0xff]
      %v4077 = vld [vmem:[#allocation4 + $0xe0] sm:$0xff]
      %v4078 = vld [vmem:[#allocation4 + $0xe8] sm:$0xff]
      %v4079 = vld [vmem:[#allocation4 + $0xf0] sm:$0xff]
      %v4080 = vld [vmem:[#allocation4 + $0xf8] sm:$0xff]
      %v4081 = vld [vmem:[#allocation4 + $0x100] sm:$0xff]
      %v4082 = vld [vmem:[#allocation4 + $0x108] sm:$0xff]
      %v4083 = vld [vmem:[#allocation4 + $0x110] sm:$0xff]
      %v4084 = vld [vmem:[#allocation4 + $0x118] sm:$0xff]
      %v4085 = vld [vmem:[#allocation4 + $0x120] sm:$0xff]
      %v4086 = vld [vmem:[#allocation4 + $0x128] sm:$0xff]
      %v4087 = vld [vmem:[#allocation4 + $0x130] sm:$0xff]
      %v4088 = vld [vmem:[#allocation4 + $0x138] sm:$0xff]
      %v4089 = vld [vmem:[#allocation4 + $0x140] sm:$0xff]
      %v4090 = vld [vmem:[#allocation4 + $0x148] sm:$0xff]
      %v4091 = vld [vmem:[#allocation4 + $0x150] sm:$0xff]
      %v4092 = vld [vmem:[#allocation4 + $0x158] sm:$0xff]
      %v4093 = vld [vmem:[#allocation4 + $0x160] sm:$0xff]
      %v4094 = vld [vmem:[#allocation4 + $0x168] sm:$0xff]
      %v4095 = vld [vmem:[#allocation4 + $0x170] sm:$0xff]
      %v4096 = vld [vmem:[#allocation4 + $0x178] sm:$0xff]
      %v4097 = vld [vmem:[#allocation4 + $0x180] sm:$0xff]
      %v4098 = vld [vmem:[#allocation4 + $0x188] sm:$0xff]
      %v4099 = vld [vmem:[#allocation4 + $0x190] sm:$0xff]
      %v4100 = vld [vmem:[#allocation4 + $0x198] sm:$0xff]
      %v4101 = vld [vmem:[#allocation4 + $0x1a0] sm:$0xff]
      %v4102 = vld [vmem:[#allocation4 + $0x1a8] sm:$0xff]
      %v4103 = vld [vmem:[#allocation4 + $0x1b0] sm:$0xff]
      %v4104 = vld [vmem:[#allocation4 + $0x1b8] sm:$0xff]
      %v4105 = vld [vmem:[#allocation4 + $0x1c0] sm:$0xff]
      %v4106 = vld [vmem:[#allocation4 + $0x1c8] sm:$0xff]
      %v4107 = vld [vmem:[#allocation4 + $0x1d0] sm:$0xff]
      %v4108 = vld [vmem:[#allocation4 + $0x1d8] sm:$0xff]
      %v4109 = vld [vmem:[#allocation4 + $0x1e0] sm:$0xff]
      %v4110 = vld [vmem:[#allocation4 + $0x1e8] sm:$0xff]
      %v4111 = vld [vmem:[#allocation4 + $0x1f0] sm:$0xff]
      %v4112 = vld [vmem:[#allocation4 + $0x1f8] sm:$0xff]
      %4114 = vset.pattern.permute.xlu0 0
      %4115 = vperm.xlu0 %4114, %v2257
      %v4116 = vpop.permute.xlu0 %4115
      %4119 = vset.pattern.permute.xlu0 0
      %4120 = vperm.xlu0 %4119, %v2259
      %v4121 = vpop.permute.xlu0 %4120
      %4124 = vset.pattern.permute.xlu0 0
      %4125 = vperm.xlu0 %4124, %v2261
      %v4126 = vpop.permute.xlu0 %4125
      %4129 = vset.pattern.permute.xlu0 0
      %4130 = vperm.xlu0 %4129, %v2263
      %v4131 = vpop.permute.xlu0 %4130
      %4134 = vset.pattern.permute.xlu0 0
      %4135 = vperm.xlu0 %4134, %v2265
      %v4136 = vpop.permute.xlu0 %4135
      %4139 = vset.pattern.permute.xlu0 0
      %4140 = vperm.xlu0 %4139, %v2267
      %v4141 = vpop.permute.xlu0 %4140
      %4144 = vset.pattern.permute.xlu0 0
      %4145 = vperm.xlu0 %4144, %v2269
      %v4146 = vpop.permute.xlu0 %4145
      %4149 = vset.pattern.permute.xlu0 0
      %4150 = vperm.xlu0 %4149, %v2271
      %v4151 = vpop.permute.xlu0 %4150
      %4154 = vset.pattern.permute.xlu0 0
      %4155 = vperm.xlu0 %4154, %v2273
      %v4156 = vpop.permute.xlu0 %4155
      %4159 = vset.pattern.permute.xlu0 0
      %4160 = vperm.xlu0 %4159, %v2275
      %v4161 = vpop.permute.xlu0 %4160
      %4164 = vset.pattern.permute.xlu0 0
      %4165 = vperm.xlu0 %4164, %v2277
      %v4166 = vpop.permute.xlu0 %4165
      %4169 = vset.pattern.permute.xlu0 0
      %4170 = vperm.xlu0 %4169, %v2279
      %v4171 = vpop.permute.xlu0 %4170
      %4174 = vset.pattern.permute.xlu0 0
      %4175 = vperm.xlu0 %4174, %v2281
      %v4176 = vpop.permute.xlu0 %4175
      %4179 = vset.pattern.permute.xlu0 0
      %4180 = vperm.xlu0 %4179, %v2283
      %v4181 = vpop.permute.xlu0 %4180
      %4184 = vset.pattern.permute.xlu0 0
      %4185 = vperm.xlu0 %4184, %v2285
      %v4186 = vpop.permute.xlu0 %4185
      %4189 = vset.pattern.permute.xlu0 0
      %4190 = vperm.xlu0 %4189, %v2287
      %v4191 = vpop.permute.xlu0 %4190
      %4194 = vset.pattern.permute.xlu0 0
      %4195 = vperm.xlu0 %4194, %v2289
      %v4196 = vpop.permute.xlu0 %4195
      %4199 = vset.pattern.permute.xlu0 0
      %4200 = vperm.xlu0 %4199, %v2291
      %v4201 = vpop.permute.xlu0 %4200
      %4204 = vset.pattern.permute.xlu0 0
      %4205 = vperm.xlu0 %4204, %v2293
      %v4206 = vpop.permute.xlu0 %4205
      %4209 = vset.pattern.permute.xlu0 0
      %4210 = vperm.xlu0 %4209, %v2295
      %v4211 = vpop.permute.xlu0 %4210
      %4214 = vset.pattern.permute.xlu0 0
      %4215 = vperm.xlu0 %4214, %v2297
      %v4216 = vpop.permute.xlu0 %4215
      %4219 = vset.pattern.permute.xlu0 0
      %4220 = vperm.xlu0 %4219, %v2299
      %v4221 = vpop.permute.xlu0 %4220
      %4224 = vset.pattern.permute.xlu0 0
      %4225 = vperm.xlu0 %4224, %v2301
      %v4226 = vpop.permute.xlu0 %4225
      %4229 = vset.pattern.permute.xlu0 0
      %4230 = vperm.xlu0 %4229, %v2303
      %v4231 = vpop.permute.xlu0 %4230
      %4234 = vset.pattern.permute.xlu0 0
      %4235 = vperm.xlu0 %4234, %v2305
      %v4236 = vpop.permute.xlu0 %4235
      %4239 = vset.pattern.permute.xlu0 0
      %4240 = vperm.xlu0 %4239, %v2307
      %v4241 = vpop.permute.xlu0 %4240
      %4244 = vset.pattern.permute.xlu0 0
      %4245 = vperm.xlu0 %4244, %v2309
      %v4246 = vpop.permute.xlu0 %4245
      %4249 = vset.pattern.permute.xlu0 0
      %4250 = vperm.xlu0 %4249, %v2311
      %v4251 = vpop.permute.xlu0 %4250
      %4254 = vset.pattern.permute.xlu0 0
      %4255 = vperm.xlu0 %4254, %v2313
      %v4256 = vpop.permute.xlu0 %4255
      %4259 = vset.pattern.permute.xlu0 0
      %4260 = vperm.xlu0 %4259, %v2315
      %v4261 = vpop.permute.xlu0 %4260
      %4264 = vset.pattern.permute.xlu0 0
      %4265 = vperm.xlu0 %4264, %v2317
      %v4266 = vpop.permute.xlu0 %4265
      %4269 = vset.pattern.permute.xlu0 0
      %4270 = vperm.xlu0 %4269, %v2319
      %v4271 = vpop.permute.xlu0 %4270
      %4274 = vset.pattern.permute.xlu0 0
      %4275 = vperm.xlu0 %4274, %v2321
      %v4276 = vpop.permute.xlu0 %4275
      %4279 = vset.pattern.permute.xlu0 0
      %4280 = vperm.xlu0 %4279, %v2323
      %v4281 = vpop.permute.xlu0 %4280
      %4284 = vset.pattern.permute.xlu0 0
      %4285 = vperm.xlu0 %4284, %v2325
      %v4286 = vpop.permute.xlu0 %4285
      %4289 = vset.pattern.permute.xlu0 0
      %4290 = vperm.xlu0 %4289, %v2327
      %v4291 = vpop.permute.xlu0 %4290
      %4294 = vset.pattern.permute.xlu0 0
      %4295 = vperm.xlu0 %4294, %v2329
      %v4296 = vpop.permute.xlu0 %4295
      %4299 = vset.pattern.permute.xlu0 0
      %4300 = vperm.xlu0 %4299, %v2331
      %v4301 = vpop.permute.xlu0 %4300
      %4304 = vset.pattern.permute.xlu0 0
      %4305 = vperm.xlu0 %4304, %v2333
      %v4306 = vpop.permute.xlu0 %4305
      %4309 = vset.pattern.permute.xlu0 0
      %4310 = vperm.xlu0 %4309, %v2335
      %v4311 = vpop.permute.xlu0 %4310
      %4314 = vset.pattern.permute.xlu0 0
      %4315 = vperm.xlu0 %4314, %v2337
      %v4316 = vpop.permute.xlu0 %4315
      %4319 = vset.pattern.permute.xlu0 0
      %4320 = vperm.xlu0 %4319, %v2339
      %v4321 = vpop.permute.xlu0 %4320
      %4324 = vset.pattern.permute.xlu0 0
      %4325 = vperm.xlu0 %4324, %v2341
      %v4326 = vpop.permute.xlu0 %4325
      %4329 = vset.pattern.permute.xlu0 0
      %4330 = vperm.xlu0 %4329, %v2343
      %v4331 = vpop.permute.xlu0 %4330
      %4334 = vset.pattern.permute.xlu0 0
      %4335 = vperm.xlu0 %4334, %v2345
      %v4336 = vpop.permute.xlu0 %4335
      %4339 = vset.pattern.permute.xlu0 0
      %4340 = vperm.xlu0 %4339, %v2347
      %v4341 = vpop.permute.xlu0 %4340
      %4344 = vset.pattern.permute.xlu0 0
      %4345 = vperm.xlu0 %4344, %v2349
      %v4346 = vpop.permute.xlu0 %4345
      %4349 = vset.pattern.permute.xlu0 0
      %4350 = vperm.xlu0 %4349, %v2351
      %v4351 = vpop.permute.xlu0 %4350
      %4354 = vset.pattern.permute.xlu0 0
      %4355 = vperm.xlu0 %4354, %v2353
      %v4356 = vpop.permute.xlu0 %4355
      %4359 = vset.pattern.permute.xlu0 0
      %4360 = vperm.xlu0 %4359, %v2355
      %v4361 = vpop.permute.xlu0 %4360
      %4364 = vset.pattern.permute.xlu0 0
      %4365 = vperm.xlu0 %4364, %v2357
      %v4366 = vpop.permute.xlu0 %4365
      %4369 = vset.pattern.permute.xlu0 0
      %4370 = vperm.xlu0 %4369, %v2359
      %v4371 = vpop.permute.xlu0 %4370
      %4374 = vset.pattern.permute.xlu0 0
      %4375 = vperm.xlu0 %4374, %v2361
      %v4376 = vpop.permute.xlu0 %4375
      %4379 = vset.pattern.permute.xlu0 0
      %4380 = vperm.xlu0 %4379, %v2363
      %v4381 = vpop.permute.xlu0 %4380
      %4384 = vset.pattern.permute.xlu0 0
      %4385 = vperm.xlu0 %4384, %v2365
      %v4386 = vpop.permute.xlu0 %4385
      %4389 = vset.pattern.permute.xlu0 0
      %4390 = vperm.xlu0 %4389, %v2367
      %v4391 = vpop.permute.xlu0 %4390
      %4394 = vset.pattern.permute.xlu0 0
      %4395 = vperm.xlu0 %4394, %v2369
      %v4396 = vpop.permute.xlu0 %4395
      %4399 = vset.pattern.permute.xlu0 0
      %4400 = vperm.xlu0 %4399, %v2371
      %v4401 = vpop.permute.xlu0 %4400
      %4404 = vset.pattern.permute.xlu0 0
      %4405 = vperm.xlu0 %4404, %v2373
      %v4406 = vpop.permute.xlu0 %4405
      %4409 = vset.pattern.permute.xlu0 0
      %4410 = vperm.xlu0 %4409, %v2375
      %v4411 = vpop.permute.xlu0 %4410
      %4414 = vset.pattern.permute.xlu0 0
      %4415 = vperm.xlu0 %4414, %v2377
      %v4416 = vpop.permute.xlu0 %4415
      %4419 = vset.pattern.permute.xlu0 0
      %4420 = vperm.xlu0 %4419, %v2379
      %v4421 = vpop.permute.xlu0 %4420
      %4424 = vset.pattern.permute.xlu0 0
      %4425 = vperm.xlu0 %4424, %v2381
      %v4426 = vpop.permute.xlu0 %4425
      %4429 = vset.pattern.permute.xlu0 0
      %4430 = vperm.xlu0 %4429, %v2383
      %v4431 = vpop.permute.xlu0 %4430
      %v4433 = vmul.f32 %v4116, %v4049
      %v4434 = vmul.f32 %v4121, %v4050
      %v4435 = vmul.f32 %v4126, %v4051
      %v4436 = vmul.f32 %v4131, %v4052
      %v4437 = vmul.f32 %v4136, %v4053
      %v4438 = vmul.f32 %v4141, %v4054
      %v4439 = vmul.f32 %v4146, %v4055
      %v4440 = vmul.f32 %v4151, %v4056
      %v4441 = vmul.f32 %v4156, %v4057
      %v4442 = vmul.f32 %v4161, %v4058
      %v4443 = vmul.f32 %v4166, %v4059
      %v4444 = vmul.f32 %v4171, %v4060
      %v4445 = vmul.f32 %v4176, %v4061
      %v4446 = vmul.f32 %v4181, %v4062
      %v4447 = vmul.f32 %v4186, %v4063
      %v4448 = vmul.f32 %v4191, %v4064
      %v4449 = vmul.f32 %v4196, %v4065
      %v4450 = vmul.f32 %v4201, %v4066
      %v4451 = vmul.f32 %v4206, %v4067
      %v4452 = vmul.f32 %v4211, %v4068
      %v4453 = vmul.f32 %v4216, %v4069
      %v4454 = vmul.f32 %v4221, %v4070
      %v4455 = vmul.f32 %v4226, %v4071
      %v4456 = vmul.f32 %v4231, %v4072
      %v4457 = vmul.f32 %v4236, %v4073
      %v4458 = vmul.f32 %v4241, %v4074
      %v4459 = vmul.f32 %v4246, %v4075
      %v4460 = vmul.f32 %v4251, %v4076
      %v4461 = vmul.f32 %v4256, %v4077
      %v4462 = vmul.f32 %v4261, %v4078
      %v4463 = vmul.f32 %v4266, %v4079
      %v4464 = vmul.f32 %v4271, %v4080
      %v4465 = vmul.f32 %v4276, %v4081
      %v4466 = vmul.f32 %v4281, %v4082
      %v4467 = vmul.f32 %v4286, %v4083
      %v4468 = vmul.f32 %v4291, %v4084
      %v4469 = vmul.f32 %v4296, %v4085
      %v4470 = vmul.f32 %v4301, %v4086
      %v4471 = vmul.f32 %v4306, %v4087
      %v4472 = vmul.f32 %v4311, %v4088
      %v4473 = vmul.f32 %v4316, %v4089
      %v4474 = vmul.f32 %v4321, %v4090
      %v4475 = vmul.f32 %v4326, %v4091
      %v4476 = vmul.f32 %v4331, %v4092
      %v4477 = vmul.f32 %v4336, %v4093
      %v4478 = vmul.f32 %v4341, %v4094
      %v4479 = vmul.f32 %v4346, %v4095
      %v4480 = vmul.f32 %v4351, %v4096
      %v4481 = vmul.f32 %v4356, %v4097
      %v4482 = vmul.f32 %v4361, %v4098
      %v4483 = vmul.f32 %v4366, %v4099
      %v4484 = vmul.f32 %v4371, %v4100
      %v4485 = vmul.f32 %v4376, %v4101
      %v4486 = vmul.f32 %v4381, %v4102
      %v4487 = vmul.f32 %v4386, %v4103
      %v4488 = vmul.f32 %v4391, %v4104
      %v4489 = vmul.f32 %v4396, %v4105
      %v4490 = vmul.f32 %v4401, %v4106
      %v4491 = vmul.f32 %v4406, %v4107
      %v4492 = vmul.f32 %v4411, %v4108
      %v4493 = vmul.f32 %v4416, %v4109
      %v4494 = vmul.f32 %v4421, %v4110
      %v4495 = vmul.f32 %v4426, %v4111
      %v4496 = vmul.f32 %v4431, %v4112
      %v4497 = vpack.c.bf16 %v2969, %v2961
      %v4498 = vpack.c.bf16 %v2971, %v2963
      %v4499 = vpack.c.bf16 %v2973, %v2965
      %v4500 = vpack.c.bf16 %v2975, %v2967
      %v4501 = vpack.c.bf16 %v2985, %v2977
      %v4502 = vpack.c.bf16 %v2987, %v2979
      %v4503 = vpack.c.bf16 %v2989, %v2981
      %v4504 = vpack.c.bf16 %v2991, %v2983
      %v4505 = vpack.c.bf16 %v3001, %v2993
      %v4506 = vpack.c.bf16 %v3003, %v2995
      %v4507 = vpack.c.bf16 %v3005, %v2997
      %v4508 = vpack.c.bf16 %v3007, %v2999
      %v4509 = vpack.c.bf16 %v3017, %v3009
      %v4510 = vpack.c.bf16 %v3019, %v3011
      %v4511 = vpack.c.bf16 %v3021, %v3013
      %v4512 = vpack.c.bf16 %v3023, %v3015
      %v4513 = vpack.c.bf16 %v3033, %v3025
      %v4514 = vpack.c.bf16 %v3035, %v3027
      %v4515 = vpack.c.bf16 %v3037, %v3029
      %v4516 = vpack.c.bf16 %v3039, %v3031
      %v4517 = vpack.c.bf16 %v3049, %v3041
      %v4518 = vpack.c.bf16 %v3051, %v3043
      %v4519 = vpack.c.bf16 %v3053, %v3045
      %v4520 = vpack.c.bf16 %v3055, %v3047
      %v4521 = vpack.c.bf16 %v3065, %v3057
      %v4522 = vpack.c.bf16 %v3067, %v3059
      %v4523 = vpack.c.bf16 %v3069, %v3061
      %v4524 = vpack.c.bf16 %v3071, %v3063
      %v4525 = vpack.c.bf16 %v3081, %v3073
      %v4526 = vpack.c.bf16 %v3083, %v3075
      %v4527 = vpack.c.bf16 %v3085, %v3077
      %v4528 = vpack.c.bf16 %v3087, %v3079
      %v4529 = vpack.c.bf16 %v3097, %v3089
      %v4530 = vpack.c.bf16 %v3099, %v3091
      %v4531 = vpack.c.bf16 %v3101, %v3093
      %v4532 = vpack.c.bf16 %v3103, %v3095
      %v4533 = vpack.c.bf16 %v3113, %v3105
      %v4534 = vpack.c.bf16 %v3115, %v3107
      %v4535 = vpack.c.bf16 %v3117, %v3109
      %v4536 = vpack.c.bf16 %v3119, %v3111
      %v4537 = vpack.c.bf16 %v3129, %v3121
      %v4538 = vpack.c.bf16 %v3131, %v3123
      %v4539 = vpack.c.bf16 %v3133, %v3125
      %v4540 = vpack.c.bf16 %v3135, %v3127
      %v4541 = vpack.c.bf16 %v3145, %v3137
      %v4542 = vpack.c.bf16 %v3147, %v3139
      %v4543 = vpack.c.bf16 %v3149, %v3141
      %v4544 = vpack.c.bf16 %v3151, %v3143
      %v4545 = vpack.c.bf16 %v3161, %v3153
      %v4546 = vpack.c.bf16 %v3163, %v3155
      %v4547 = vpack.c.bf16 %v3165, %v3157
      %v4548 = vpack.c.bf16 %v3167, %v3159
      %v4549 = vpack.c.bf16 %v3177, %v3169
      %v4550 = vpack.c.bf16 %v3179, %v3171
      %v4551 = vpack.c.bf16 %v3181, %v3173
      %v4552 = vpack.c.bf16 %v3183, %v3175
      %v4553 = vpack.c.bf16 %v3193, %v3185
      %v4554 = vpack.c.bf16 %v3195, %v3187
      %v4555 = vpack.c.bf16 %v3197, %v3189
      %v4556 = vpack.c.bf16 %v3199, %v3191
      %v4557 = vpack.c.bf16 %v3209, %v3201
      %v4558 = vpack.c.bf16 %v3211, %v3203
      %v4559 = vpack.c.bf16 %v3213, %v3205
      %v4560 = vpack.c.bf16 %v3215, %v3207
      %v4561 = vpack.c.bf16 %v3225, %v3217
      %v4562 = vpack.c.bf16 %v3227, %v3219
      %v4563 = vpack.c.bf16 %v3229, %v3221
      %v4564 = vpack.c.bf16 %v3231, %v3223
      %v4565 = vpack.c.bf16 %v3241, %v3233
      %v4566 = vpack.c.bf16 %v3243, %v3235
      %v4567 = vpack.c.bf16 %v3245, %v3237
      %v4568 = vpack.c.bf16 %v3247, %v3239
      %v4569 = vpack.c.bf16 %v3257, %v3249
      %v4570 = vpack.c.bf16 %v3259, %v3251
      %v4571 = vpack.c.bf16 %v3261, %v3253
      %v4572 = vpack.c.bf16 %v3263, %v3255
      %v4573 = vpack.c.bf16 %v3273, %v3265
      %v4574 = vpack.c.bf16 %v3275, %v3267
      %v4575 = vpack.c.bf16 %v3277, %v3269
      %v4576 = vpack.c.bf16 %v3279, %v3271
      %v4577 = vpack.c.bf16 %v3289, %v3281
      %v4578 = vpack.c.bf16 %v3291, %v3283
      %v4579 = vpack.c.bf16 %v3293, %v3285
      %v4580 = vpack.c.bf16 %v3295, %v3287
      %v4581 = vpack.c.bf16 %v3305, %v3297
      %v4582 = vpack.c.bf16 %v3307, %v3299
      %v4583 = vpack.c.bf16 %v3309, %v3301
      %v4584 = vpack.c.bf16 %v3311, %v3303
      %v4585 = vpack.c.bf16 %v3321, %v3313
      %v4586 = vpack.c.bf16 %v3323, %v3315
      %v4587 = vpack.c.bf16 %v3325, %v3317
      %v4588 = vpack.c.bf16 %v3327, %v3319
      %v4589 = vpack.c.bf16 %v3337, %v3329
      %v4590 = vpack.c.bf16 %v3339, %v3331
      %v4591 = vpack.c.bf16 %v3341, %v3333
      %v4592 = vpack.c.bf16 %v3343, %v3335
      %v4593 = vpack.c.bf16 %v3353, %v3345
      %v4594 = vpack.c.bf16 %v3355, %v3347
      %v4595 = vpack.c.bf16 %v3357, %v3349
      %v4596 = vpack.c.bf16 %v3359, %v3351
      %v4597 = vpack.c.bf16 %v3369, %v3361
      %v4598 = vpack.c.bf16 %v3371, %v3363
      %v4599 = vpack.c.bf16 %v3373, %v3365
      %v4600 = vpack.c.bf16 %v3375, %v3367
      %v4601 = vpack.c.bf16 %v3385, %v3377
      %v4602 = vpack.c.bf16 %v3387, %v3379
      %v4603 = vpack.c.bf16 %v3389, %v3381
      %v4604 = vpack.c.bf16 %v3391, %v3383
      %v4605 = vpack.c.bf16 %v3401, %v3393
      %v4606 = vpack.c.bf16 %v3403, %v3395
      %v4607 = vpack.c.bf16 %v3405, %v3397
      %v4608 = vpack.c.bf16 %v3407, %v3399
      %v4609 = vpack.c.bf16 %v3417, %v3409
      %v4610 = vpack.c.bf16 %v3419, %v3411
      %v4611 = vpack.c.bf16 %v3421, %v3413
      %v4612 = vpack.c.bf16 %v3423, %v3415
      %v4613 = vpack.c.bf16 %v3433, %v3425
      %v4614 = vpack.c.bf16 %v3435, %v3427
      %v4615 = vpack.c.bf16 %v3437, %v3429
      %v4616 = vpack.c.bf16 %v3439, %v3431
      %v4617 = vpack.c.bf16 %v3449, %v3441
      %v4618 = vpack.c.bf16 %v3451, %v3443
      %v4619 = vpack.c.bf16 %v3453, %v3445
      %v4620 = vpack.c.bf16 %v3455, %v3447
      %v4621 = vpack.c.bf16 %v3465, %v3457
      %v4622 = vpack.c.bf16 %v3467, %v3459
      %v4623 = vpack.c.bf16 %v3469, %v3461
      %v4624 = vpack.c.bf16 %v3471, %v3463
      %v4641 = vunpack.c.l.b16 %v685
      %v4642 = vunpack.c.h.b16 %v685
      %v4643 = vunpack.c.l.b16 %v686
      %v4644 = vunpack.c.h.b16 %v686
      %v4645 = vunpack.c.l.b16 %v687
      %v4646 = vunpack.c.h.b16 %v687
      %v4647 = vunpack.c.l.b16 %v688
      %v4648 = vunpack.c.h.b16 %v688
      %v4649 = vunpack.c.l.b16 %v689
      %v4650 = vunpack.c.h.b16 %v689
      %v4651 = vunpack.c.l.b16 %v690
      %v4652 = vunpack.c.h.b16 %v690
      %v4653 = vunpack.c.l.b16 %v691
      %v4654 = vunpack.c.h.b16 %v691
      %v4655 = vunpack.c.l.b16 %v692
      %v4656 = vunpack.c.h.b16 %v692
      %v4657 = vunpack.c.l.b16 %v693
      %v4658 = vunpack.c.h.b16 %v693
      %v4659 = vunpack.c.l.b16 %v694
      %v4660 = vunpack.c.h.b16 %v694
      %v4661 = vunpack.c.l.b16 %v695
      %v4662 = vunpack.c.h.b16 %v695
      %v4663 = vunpack.c.l.b16 %v696
      %v4664 = vunpack.c.h.b16 %v696
      %v4665 = vunpack.c.l.b16 %v697
      %v4666 = vunpack.c.h.b16 %v697
      %v4667 = vunpack.c.l.b16 %v698
      %v4668 = vunpack.c.h.b16 %v698
      %v4669 = vunpack.c.l.b16 %v699
      %v4670 = vunpack.c.h.b16 %v699
      %v4671 = vunpack.c.l.b16 %v700
      %v4672 = vunpack.c.h.b16 %v700
      %v4673 = vpack.c.b16 %v4645, %v4641
      %v4674 = vpack.c.b16 %v4646, %v4642
      %v4675 = vpack.c.b16 %v4647, %v4643
      %v4676 = vpack.c.b16 %v4648, %v4644
      %v4677 = vpack.c.b16 %v4653, %v4649
      %v4678 = vpack.c.b16 %v4654, %v4650
      %v4679 = vpack.c.b16 %v4655, %v4651
      %v4680 = vpack.c.b16 %v4656, %v4652
      %v4681 = vpack.c.b16 %v4661, %v4657
      %v4682 = vpack.c.b16 %v4662, %v4658
      %v4683 = vpack.c.b16 %v4663, %v4659
      %v4684 = vpack.c.b16 %v4664, %v4660
      %v4685 = vpack.c.b16 %v4669, %v4665
      %v4686 = vpack.c.b16 %v4670, %v4666
      %v4687 = vpack.c.b16 %v4671, %v4667
      %v4688 = vpack.c.b16 %v4672, %v4668
      %4705 = vmatprep.subr.bf16.mxu0 0
      %4706 = vmatpush1.bf16.xpose.msra.mxu0 0
      %4707 = vmatprep.subr.bf16.mxu0 0
      %4708 = vmatpush1.bf16.xpose.msra.mxu0 0
      %4709 = vmatprep.subr.bf16.mxu0 0
      %4710 = vmatpush1.bf16.xpose.msra.mxu0 0
      %4711 = vmatprep.subr.bf16.mxu0 0
      %4712 = vmatpush1.bf16.xpose.msra.mxu0 0
      %4713 = vmatprep.subr.bf16.mxu0 %v4686
      %4714 = vmatpush1.bf16.xpose.msra.mxu0 %v4685
      %4715 = vmatprep.subr.bf16.mxu0 %v4682
      %4716 = vmatpush1.bf16.xpose.msra.mxu0 %v4681
      %4717 = vmatprep.subr.bf16.mxu0 %v4678
      %4718 = vmatpush1.bf16.xpose.msra.mxu0 %v4677
      %4719 = vmatprep.subr.bf16.mxu0 %v4674
      %4720 = vmatpush1.bf16.xpose.msra.mxu0 %v4673
      %4721 = vmatprep.subr.bf16.mxu0 0
      %4722 = vmatpush2.bf16.xpose.msra.mxu0 0
      %4723 = vmatprep.subr.bf16.mxu0 0
      %4724 = vmatpush2.bf16.xpose.msra.mxu0 0
      %4725 = vmatprep.subr.bf16.mxu0 0
      %4726 = vmatpush2.bf16.xpose.msra.mxu0 0
      %4727 = vmatprep.subr.bf16.mxu0 0
      %4728 = vmatpush2.bf16.xpose.msra.mxu0 0
      %4729 = vmatprep.subr.bf16.mxu0 0
      %4730 = vmatpush2.bf16.xpose.msra.mxu0 0
      %4731 = vmatprep.subr.bf16.mxu0 0
      %4732 = vmatpush2.bf16.xpose.msra.mxu0 0
      %4733 = vmatprep.subr.bf16.mxu0 0
      %4734 = vmatpush2.bf16.xpose.msra.mxu0 0
      %4735 = vmatprep.subr.bf16.mxu0 0
      %4736 = vmatpush2.bf16.xpose.msra.mxu0 0
      %4737 = vmatprep.mubr.bf16.mxu0 %v4498
      %4738 = vmatmul.mubr.bf16.gmra.mxu0 %v4497
      %v4739 = vpop.f32.mrf.mxu0
      %v4740 = vadd.f32 0.0, %v4739
      %v4741 = vpop.f32.mrf.mxu0
      %v4742 = vpop.f32.mrf.mxu0
      %v4743 = vadd.f32 0.0, %v4742
      %v4744 = vpop.f32.mrf.mxu0
      %4745 = vmatprep.mubr.bf16.mxu0 %v4502
      %4746 = vmatmul.mubr.bf16.gmra.mxu0 %v4501
      %v4747 = vpop.f32.mrf.mxu0
      %v4748 = vadd.f32 0.0, %v4747
      %v4749 = vpop.f32.mrf.mxu0
      %v4750 = vpop.f32.mrf.mxu0
      %v4751 = vadd.f32 0.0, %v4750
      %v4752 = vpop.f32.mrf.mxu0
      %4753 = vmatprep.mubr.bf16.mxu0 %v4506
      %4754 = vmatmul.mubr.bf16.gmra.mxu0 %v4505
      %v4755 = vpop.f32.mrf.mxu0
      %v4756 = vadd.f32 0.0, %v4755
      %v4757 = vpop.f32.mrf.mxu0
      %v4758 = vpop.f32.mrf.mxu0
      %v4759 = vadd.f32 0.0, %v4758
      %v4760 = vpop.f32.mrf.mxu0
      %4761 = vmatprep.mubr.bf16.mxu0 %v4510
      %4762 = vmatmul.mubr.bf16.gmra.mxu0 %v4509
      %v4763 = vpop.f32.mrf.mxu0
      %v4764 = vadd.f32 0.0, %v4763
      %v4765 = vpop.f32.mrf.mxu0
      %v4766 = vpop.f32.mrf.mxu0
      %v4767 = vadd.f32 0.0, %v4766
      %v4768 = vpop.f32.mrf.mxu0
      %4769 = vmatprep.mubr.bf16.mxu0 %v4514
      %4770 = vmatmul.mubr.bf16.gmra.mxu0 %v4513
      %v4771 = vpop.f32.mrf.mxu0
      %v4772 = vadd.f32 0.0, %v4771
      %v4773 = vpop.f32.mrf.mxu0
      %v4774 = vpop.f32.mrf.mxu0
      %v4775 = vadd.f32 0.0, %v4774
      %v4776 = vpop.f32.mrf.mxu0
      %4777 = vmatprep.mubr.bf16.mxu0 %v4518
      %4778 = vmatmul.mubr.bf16.gmra.mxu0 %v4517
      %v4779 = vpop.f32.mrf.mxu0
      %v4780 = vadd.f32 0.0, %v4779
      %v4781 = vpop.f32.mrf.mxu0
      %v4782 = vpop.f32.mrf.mxu0
      %v4783 = vadd.f32 0.0, %v4782
      %v4784 = vpop.f32.mrf.mxu0
      %4785 = vmatprep.mubr.bf16.mxu0 %v4522
      %4786 = vmatmul.mubr.bf16.gmra.mxu0 %v4521
      %v4787 = vpop.f32.mrf.mxu0
      %v4788 = vadd.f32 0.0, %v4787
      %v4789 = vpop.f32.mrf.mxu0
      %v4790 = vpop.f32.mrf.mxu0
      %v4791 = vadd.f32 0.0, %v4790
      %v4792 = vpop.f32.mrf.mxu0
      %4793 = vmatprep.mubr.bf16.mxu0 %v4526
      %4794 = vmatmul.mubr.bf16.gmra.mxu0 %v4525
      %v4795 = vpop.f32.mrf.mxu0
      %v4796 = vadd.f32 0.0, %v4795
      %v4797 = vpop.f32.mrf.mxu0
      %v4798 = vpop.f32.mrf.mxu0
      %v4799 = vadd.f32 0.0, %v4798
      %v4800 = vpop.f32.mrf.mxu0
      %4801 = vmatprep.mubr.bf16.mxu0 %v4530
      %4802 = vmatmul.mubr.bf16.gmra.mxu0 %v4529
      %v4803 = vpop.f32.mrf.mxu0
      %v4804 = vadd.f32 0.0, %v4803
      %v4805 = vpop.f32.mrf.mxu0
      %v4806 = vpop.f32.mrf.mxu0
      %v4807 = vadd.f32 0.0, %v4806
      %v4808 = vpop.f32.mrf.mxu0
      %4809 = vmatprep.mubr.bf16.mxu0 %v4534
      %4810 = vmatmul.mubr.bf16.gmra.mxu0 %v4533
      %v4811 = vpop.f32.mrf.mxu0
      %v4812 = vadd.f32 0.0, %v4811
      %v4813 = vpop.f32.mrf.mxu0
      %v4814 = vpop.f32.mrf.mxu0
      %v4815 = vadd.f32 0.0, %v4814
      %v4816 = vpop.f32.mrf.mxu0
      %4817 = vmatprep.mubr.bf16.mxu0 %v4538
      %4818 = vmatmul.mubr.bf16.gmra.mxu0 %v4537
      %v4819 = vpop.f32.mrf.mxu0
      %v4820 = vadd.f32 0.0, %v4819
      %v4821 = vpop.f32.mrf.mxu0
      %v4822 = vpop.f32.mrf.mxu0
      %v4823 = vadd.f32 0.0, %v4822
      %v4824 = vpop.f32.mrf.mxu0
      %4825 = vmatprep.mubr.bf16.mxu0 %v4542
      %4826 = vmatmul.mubr.bf16.gmra.mxu0 %v4541
      %v4827 = vpop.f32.mrf.mxu0
      %v4828 = vadd.f32 0.0, %v4827
      %v4829 = vpop.f32.mrf.mxu0
      %v4830 = vpop.f32.mrf.mxu0
      %v4831 = vadd.f32 0.0, %v4830
      %v4832 = vpop.f32.mrf.mxu0
      %4833 = vmatprep.mubr.bf16.mxu0 %v4546
      %4834 = vmatmul.mubr.bf16.gmra.mxu0 %v4545
      %v4835 = vpop.f32.mrf.mxu0
      %v4836 = vadd.f32 0.0, %v4835
      %v4837 = vpop.f32.mrf.mxu0
      %v4838 = vpop.f32.mrf.mxu0
      %v4839 = vadd.f32 0.0, %v4838
      %v4840 = vpop.f32.mrf.mxu0
      %4841 = vmatprep.mubr.bf16.mxu0 %v4550
      %4842 = vmatmul.mubr.bf16.gmra.mxu0 %v4549
      %v4843 = vpop.f32.mrf.mxu0
      %v4844 = vadd.f32 0.0, %v4843
      %v4845 = vpop.f32.mrf.mxu0
      %v4846 = vpop.f32.mrf.mxu0
      %v4847 = vadd.f32 0.0, %v4846
      %v4848 = vpop.f32.mrf.mxu0
      %4849 = vmatprep.mubr.bf16.mxu0 %v4554
      %4850 = vmatmul.mubr.bf16.gmra.mxu0 %v4553
      %v4851 = vpop.f32.mrf.mxu0
      %v4852 = vadd.f32 0.0, %v4851
      %v4853 = vpop.f32.mrf.mxu0
      %v4854 = vpop.f32.mrf.mxu0
      %v4855 = vadd.f32 0.0, %v4854
      %v4856 = vpop.f32.mrf.mxu0
      %4857 = vmatprep.mubr.bf16.mxu0 %v4558
      %4858 = vmatmul.mubr.bf16.gmra.mxu0 %v4557
      %v4859 = vpop.f32.mrf.mxu0
      %v4860 = vadd.f32 0.0, %v4859
      %v4861 = vpop.f32.mrf.mxu0
      %v4862 = vpop.f32.mrf.mxu0
      %v4863 = vadd.f32 0.0, %v4862
      %v4864 = vpop.f32.mrf.mxu0
      %4865 = vmatprep.mubr.bf16.mxu0 %v4562
      %4866 = vmatmul.mubr.bf16.gmra.mxu0 %v4561
      %v4867 = vpop.f32.mrf.mxu0
      %v4868 = vadd.f32 0.0, %v4867
      %v4869 = vpop.f32.mrf.mxu0
      %v4870 = vpop.f32.mrf.mxu0
      %v4871 = vadd.f32 0.0, %v4870
      %v4872 = vpop.f32.mrf.mxu0
      %4873 = vmatprep.mubr.bf16.mxu0 %v4566
      %4874 = vmatmul.mubr.bf16.gmra.mxu0 %v4565
      %v4875 = vpop.f32.mrf.mxu0
      %v4876 = vadd.f32 0.0, %v4875
      %v4877 = vpop.f32.mrf.mxu0
      %v4878 = vpop.f32.mrf.mxu0
      %v4879 = vadd.f32 0.0, %v4878
      %v4880 = vpop.f32.mrf.mxu0
      %4881 = vmatprep.mubr.bf16.mxu0 %v4570
      %4882 = vmatmul.mubr.bf16.gmra.mxu0 %v4569
      %v4883 = vpop.f32.mrf.mxu0
      %v4884 = vadd.f32 0.0, %v4883
      %v4885 = vpop.f32.mrf.mxu0
      %v4886 = vpop.f32.mrf.mxu0
      %v4887 = vadd.f32 0.0, %v4886
      %v4888 = vpop.f32.mrf.mxu0
      %4889 = vmatprep.mubr.bf16.mxu0 %v4574
      %4890 = vmatmul.mubr.bf16.gmra.mxu0 %v4573
      %v4891 = vpop.f32.mrf.mxu0
      %v4892 = vadd.f32 0.0, %v4891
      %v4893 = vpop.f32.mrf.mxu0
      %v4894 = vpop.f32.mrf.mxu0
      %v4895 = vadd.f32 0.0, %v4894
      %v4896 = vpop.f32.mrf.mxu0
      %4897 = vmatprep.mubr.bf16.mxu0 %v4578
      %4898 = vmatmul.mubr.bf16.gmra.mxu0 %v4577
      %v4899 = vpop.f32.mrf.mxu0
      %v4900 = vadd.f32 0.0, %v4899
      %v4901 = vpop.f32.mrf.mxu0
      %v4902 = vpop.f32.mrf.mxu0
      %v4903 = vadd.f32 0.0, %v4902
      %v4904 = vpop.f32.mrf.mxu0
      %4905 = vmatprep.mubr.bf16.mxu0 %v4582
      %4906 = vmatmul.mubr.bf16.gmra.mxu0 %v4581
      %v4907 = vpop.f32.mrf.mxu0
      %v4908 = vadd.f32 0.0, %v4907
      %v4909 = vpop.f32.mrf.mxu0
      %v4910 = vpop.f32.mrf.mxu0
      %v4911 = vadd.f32 0.0, %v4910
      %v4912 = vpop.f32.mrf.mxu0
      %4913 = vmatprep.mubr.bf16.mxu0 %v4586
      %4914 = vmatmul.mubr.bf16.gmra.mxu0 %v4585
      %v4915 = vpop.f32.mrf.mxu0
      %v4916 = vadd.f32 0.0, %v4915
      %v4917 = vpop.f32.mrf.mxu0
      %v4918 = vpop.f32.mrf.mxu0
      %v4919 = vadd.f32 0.0, %v4918
      %v4920 = vpop.f32.mrf.mxu0
      %4921 = vmatprep.mubr.bf16.mxu0 %v4590
      %4922 = vmatmul.mubr.bf16.gmra.mxu0 %v4589
      %v4923 = vpop.f32.mrf.mxu0
      %v4924 = vadd.f32 0.0, %v4923
      %v4925 = vpop.f32.mrf.mxu0
      %v4926 = vpop.f32.mrf.mxu0
      %v4927 = vadd.f32 0.0, %v4926
      %v4928 = vpop.f32.mrf.mxu0
      %4929 = vmatprep.mubr.bf16.mxu0 %v4594
      %4930 = vmatmul.mubr.bf16.gmra.mxu0 %v4593
      %v4931 = vpop.f32.mrf.mxu0
      %v4932 = vadd.f32 0.0, %v4931
      %v4933 = vpop.f32.mrf.mxu0
      %v4934 = vpop.f32.mrf.mxu0
      %v4935 = vadd.f32 0.0, %v4934
      %v4936 = vpop.f32.mrf.mxu0
      %4937 = vmatprep.mubr.bf16.mxu0 %v4598
      %4938 = vmatmul.mubr.bf16.gmra.mxu0 %v4597
      %v4939 = vpop.f32.mrf.mxu0
      %v4940 = vadd.f32 0.0, %v4939
      %v4941 = vpop.f32.mrf.mxu0
      %v4942 = vpop.f32.mrf.mxu0
      %v4943 = vadd.f32 0.0, %v4942
      %v4944 = vpop.f32.mrf.mxu0
      %4945 = vmatprep.mubr.bf16.mxu0 %v4602
      %4946 = vmatmul.mubr.bf16.gmra.mxu0 %v4601
      %v4947 = vpop.f32.mrf.mxu0
      %v4948 = vadd.f32 0.0, %v4947
      %v4949 = vpop.f32.mrf.mxu0
      %v4950 = vpop.f32.mrf.mxu0
      %v4951 = vadd.f32 0.0, %v4950
      %v4952 = vpop.f32.mrf.mxu0
      %4953 = vmatprep.mubr.bf16.mxu0 %v4606
      %4954 = vmatmul.mubr.bf16.gmra.mxu0 %v4605
      %v4955 = vpop.f32.mrf.mxu0
      %v4956 = vadd.f32 0.0, %v4955
      %v4957 = vpop.f32.mrf.mxu0
      %v4958 = vpop.f32.mrf.mxu0
      %v4959 = vadd.f32 0.0, %v4958
      %v4960 = vpop.f32.mrf.mxu0
      %4961 = vmatprep.mubr.bf16.mxu0 %v4610
      %4962 = vmatmul.mubr.bf16.gmra.mxu0 %v4609
      %v4963 = vpop.f32.mrf.mxu0
      %v4964 = vadd.f32 0.0, %v4963
      %v4965 = vpop.f32.mrf.mxu0
      %v4966 = vpop.f32.mrf.mxu0
      %v4967 = vadd.f32 0.0, %v4966
      %v4968 = vpop.f32.mrf.mxu0
      %4969 = vmatprep.mubr.bf16.mxu0 %v4614
      %4970 = vmatmul.mubr.bf16.gmra.mxu0 %v4613
      %v4971 = vpop.f32.mrf.mxu0
      %v4972 = vadd.f32 0.0, %v4971
      %v4973 = vpop.f32.mrf.mxu0
      %v4974 = vpop.f32.mrf.mxu0
      %v4975 = vadd.f32 0.0, %v4974
      %v4976 = vpop.f32.mrf.mxu0
      %4977 = vmatprep.mubr.bf16.mxu0 %v4618
      %4978 = vmatmul.mubr.bf16.gmra.mxu0 %v4617
      %v4979 = vpop.f32.mrf.mxu0
      %v4980 = vadd.f32 0.0, %v4979
      %v4981 = vpop.f32.mrf.mxu0
      %v4982 = vpop.f32.mrf.mxu0
      %v4983 = vadd.f32 0.0, %v4982
      %v4984 = vpop.f32.mrf.mxu0
      %4985 = vmatprep.mubr.bf16.mxu0 %v4622
      %4986 = vmatmul.mubr.bf16.gmra.mxu0 %v4621
      %v4987 = vpop.f32.mrf.mxu0
      %v4988 = vadd.f32 0.0, %v4987
      %v4989 = vpop.f32.mrf.mxu0
      %v4990 = vpop.f32.mrf.mxu0
      %v4991 = vadd.f32 0.0, %v4990
      %v4992 = vpop.f32.mrf.mxu0
      %4993 = vdwg.mxu0
      %4994 = vmatprep.subr.bf16.mxu0 0
      %4995 = vmatpush1.bf16.xpose.msra.mxu0 0
      %4996 = vmatprep.subr.bf16.mxu0 0
      %4997 = vmatpush1.bf16.xpose.msra.mxu0 0
      %4998 = vmatprep.subr.bf16.mxu0 0
      %4999 = vmatpush1.bf16.xpose.msra.mxu0 0
      %5000 = vmatprep.subr.bf16.mxu0 0
      %5001 = vmatpush1.bf16.xpose.msra.mxu0 0
      %5002 = vmatprep.subr.bf16.mxu0 %v4688
      %5003 = vmatpush1.bf16.xpose.msra.mxu0 %v4687
      %5004 = vmatprep.subr.bf16.mxu0 %v4684
      %5005 = vmatpush1.bf16.xpose.msra.mxu0 %v4683
      %5006 = vmatprep.subr.bf16.mxu0 %v4680
      %5007 = vmatpush1.bf16.xpose.msra.mxu0 %v4679
      %5008 = vmatprep.subr.bf16.mxu0 %v4676
      %5009 = vmatpush1.bf16.xpose.msra.mxu0 %v4675
      %5010 = vmatprep.subr.bf16.mxu0 0
      %5011 = vmatpush2.bf16.xpose.msra.mxu0 0
      %5012 = vmatprep.subr.bf16.mxu0 0
      %5013 = vmatpush2.bf16.xpose.msra.mxu0 0
      %5014 = vmatprep.subr.bf16.mxu0 0
      %5015 = vmatpush2.bf16.xpose.msra.mxu0 0
      %5016 = vmatprep.subr.bf16.mxu0 0
      %5017 = vmatpush2.bf16.xpose.msra.mxu0 0
      %5018 = vmatprep.subr.bf16.mxu0 0
      %5019 = vmatpush2.bf16.xpose.msra.mxu0 0
      %5020 = vmatprep.subr.bf16.mxu0 0
      %5021 = vmatpush2.bf16.xpose.msra.mxu0 0
      %5022 = vmatprep.subr.bf16.mxu0 0
      %5023 = vmatpush2.bf16.xpose.msra.mxu0 0
      %5024 = vmatprep.subr.bf16.mxu0 0
      %5025 = vmatpush2.bf16.xpose.msra.mxu0 0
      %5026 = vmatprep.mubr.bf16.mxu0 %v4500
      %5027 = vmatmul.mubr.bf16.gmra.mxu0 %v4499
      %v5028 = vpop.f32.mrf.mxu0
      %v5029 = vadd.f32 %v4740, %v5028
      %v5030 = vpop.f32.mrf.mxu0
      %v5031 = vpop.f32.mrf.mxu0
      %v5032 = vadd.f32 %v4743, %v5031
      %v5033 = vpop.f32.mrf.mxu0
      %5034 = vmatprep.mubr.bf16.mxu0 %v4504
      %5035 = vmatmul.mubr.bf16.gmra.mxu0 %v4503
      %v5036 = vpop.f32.mrf.mxu0
      %v5037 = vadd.f32 %v4748, %v5036
      %v5038 = vpop.f32.mrf.mxu0
      %v5039 = vpop.f32.mrf.mxu0
      %v5040 = vadd.f32 %v4751, %v5039
      %v5041 = vpop.f32.mrf.mxu0
      %5042 = vmatprep.mubr.bf16.mxu0 %v4508
      %5043 = vmatmul.mubr.bf16.gmra.mxu0 %v4507
      %v5044 = vpop.f32.mrf.mxu0
      %v5045 = vadd.f32 %v4756, %v5044
      %v5046 = vpop.f32.mrf.mxu0
      %v5047 = vpop.f32.mrf.mxu0
      %v5048 = vadd.f32 %v4759, %v5047
      %v5049 = vpop.f32.mrf.mxu0
      %5050 = vmatprep.mubr.bf16.mxu0 %v4512
      %5051 = vmatmul.mubr.bf16.gmra.mxu0 %v4511
      %v5052 = vpop.f32.mrf.mxu0
      %v5053 = vadd.f32 %v4764, %v5052
      %v5054 = vpop.f32.mrf.mxu0
      %v5055 = vpop.f32.mrf.mxu0
      %v5056 = vadd.f32 %v4767, %v5055
      %v5057 = vpop.f32.mrf.mxu0
      %5058 = vmatprep.mubr.bf16.mxu0 %v4516
      %5059 = vmatmul.mubr.bf16.gmra.mxu0 %v4515
      %v5060 = vpop.f32.mrf.mxu0
      %v5061 = vadd.f32 %v4772, %v5060
      %v5062 = vpop.f32.mrf.mxu0
      %v5063 = vpop.f32.mrf.mxu0
      %v5064 = vadd.f32 %v4775, %v5063
      %v5065 = vpop.f32.mrf.mxu0
      %5066 = vmatprep.mubr.bf16.mxu0 %v4520
      %5067 = vmatmul.mubr.bf16.gmra.mxu0 %v4519
      %v5068 = vpop.f32.mrf.mxu0
      %v5069 = vadd.f32 %v4780, %v5068
      %v5070 = vpop.f32.mrf.mxu0
      %v5071 = vpop.f32.mrf.mxu0
      %v5072 = vadd.f32 %v4783, %v5071
      %v5073 = vpop.f32.mrf.mxu0
      %5074 = vmatprep.mubr.bf16.mxu0 %v4524
      %5075 = vmatmul.mubr.bf16.gmra.mxu0 %v4523
      %v5076 = vpop.f32.mrf.mxu0
      %v5077 = vadd.f32 %v4788, %v5076
      %v5078 = vpop.f32.mrf.mxu0
      %v5079 = vpop.f32.mrf.mxu0
      %v5080 = vadd.f32 %v4791, %v5079
      %v5081 = vpop.f32.mrf.mxu0
      %5082 = vmatprep.mubr.bf16.mxu0 %v4528
      %5083 = vmatmul.mubr.bf16.gmra.mxu0 %v4527
      %v5084 = vpop.f32.mrf.mxu0
      %v5085 = vadd.f32 %v4796, %v5084
      %v5086 = vpop.f32.mrf.mxu0
      %v5087 = vpop.f32.mrf.mxu0
      %v5088 = vadd.f32 %v4799, %v5087
      %v5089 = vpop.f32.mrf.mxu0
      %5090 = vmatprep.mubr.bf16.mxu0 %v4532
      %5091 = vmatmul.mubr.bf16.gmra.mxu0 %v4531
      %v5092 = vpop.f32.mrf.mxu0
      %v5093 = vadd.f32 %v4804, %v5092
      %v5094 = vpop.f32.mrf.mxu0
      %v5095 = vpop.f32.mrf.mxu0
      %v5096 = vadd.f32 %v4807, %v5095
      %v5097 = vpop.f32.mrf.mxu0
      %5098 = vmatprep.mubr.bf16.mxu0 %v4536
      %5099 = vmatmul.mubr.bf16.gmra.mxu0 %v4535
      %v5100 = vpop.f32.mrf.mxu0
      %v5101 = vadd.f32 %v4812, %v5100
      %v5102 = vpop.f32.mrf.mxu0
      %v5103 = vpop.f32.mrf.mxu0
      %v5104 = vadd.f32 %v4815, %v5103
      %v5105 = vpop.f32.mrf.mxu0
      %5106 = vmatprep.mubr.bf16.mxu0 %v4540
      %5107 = vmatmul.mubr.bf16.gmra.mxu0 %v4539
      %v5108 = vpop.f32.mrf.mxu0
      %v5109 = vadd.f32 %v4820, %v5108
      %v5110 = vpop.f32.mrf.mxu0
      %v5111 = vpop.f32.mrf.mxu0
      %v5112 = vadd.f32 %v4823, %v5111
      %v5113 = vpop.f32.mrf.mxu0
      %5114 = vmatprep.mubr.bf16.mxu0 %v4544
      %5115 = vmatmul.mubr.bf16.gmra.mxu0 %v4543
      %v5116 = vpop.f32.mrf.mxu0
      %v5117 = vadd.f32 %v4828, %v5116
      %v5118 = vpop.f32.mrf.mxu0
      %v5119 = vpop.f32.mrf.mxu0
      %v5120 = vadd.f32 %v4831, %v5119
      %v5121 = vpop.f32.mrf.mxu0
      %5122 = vmatprep.mubr.bf16.mxu0 %v4548
      %5123 = vmatmul.mubr.bf16.gmra.mxu0 %v4547
      %v5124 = vpop.f32.mrf.mxu0
      %v5125 = vadd.f32 %v4836, %v5124
      %v5126 = vpop.f32.mrf.mxu0
      %v5127 = vpop.f32.mrf.mxu0
      %v5128 = vadd.f32 %v4839, %v5127
      %v5129 = vpop.f32.mrf.mxu0
      %5130 = vmatprep.mubr.bf16.mxu0 %v4552
      %5131 = vmatmul.mubr.bf16.gmra.mxu0 %v4551
      %v5132 = vpop.f32.mrf.mxu0
      %v5133 = vadd.f32 %v4844, %v5132
      %v5134 = vpop.f32.mrf.mxu0
      %v5135 = vpop.f32.mrf.mxu0
      %v5136 = vadd.f32 %v4847, %v5135
      %v5137 = vpop.f32.mrf.mxu0
      %5138 = vmatprep.mubr.bf16.mxu0 %v4556
      %5139 = vmatmul.mubr.bf16.gmra.mxu0 %v4555
      %v5140 = vpop.f32.mrf.mxu0
      %v5141 = vadd.f32 %v4852, %v5140
      %v5142 = vpop.f32.mrf.mxu0
      %v5143 = vpop.f32.mrf.mxu0
      %v5144 = vadd.f32 %v4855, %v5143
      %v5145 = vpop.f32.mrf.mxu0
      %5146 = vmatprep.mubr.bf16.mxu0 %v4560
      %5147 = vmatmul.mubr.bf16.gmra.mxu0 %v4559
      %v5148 = vpop.f32.mrf.mxu0
      %v5149 = vadd.f32 %v4860, %v5148
      %v5150 = vpop.f32.mrf.mxu0
      %v5151 = vpop.f32.mrf.mxu0
      %v5152 = vadd.f32 %v4863, %v5151
      %v5153 = vpop.f32.mrf.mxu0
      %5154 = vmatprep.mubr.bf16.mxu0 %v4564
      %5155 = vmatmul.mubr.bf16.gmra.mxu0 %v4563
      %v5156 = vpop.f32.mrf.mxu0
      %v5157 = vadd.f32 %v4868, %v5156
      %v5158 = vpop.f32.mrf.mxu0
      %v5159 = vpop.f32.mrf.mxu0
      %v5160 = vadd.f32 %v4871, %v5159
      %v5161 = vpop.f32.mrf.mxu0
      %5162 = vmatprep.mubr.bf16.mxu0 %v4568
      %5163 = vmatmul.mubr.bf16.gmra.mxu0 %v4567
      %v5164 = vpop.f32.mrf.mxu0
      %v5165 = vadd.f32 %v4876, %v5164
      %v5166 = vpop.f32.mrf.mxu0
      %v5167 = vpop.f32.mrf.mxu0
      %v5168 = vadd.f32 %v4879, %v5167
      %v5169 = vpop.f32.mrf.mxu0
      %5170 = vmatprep.mubr.bf16.mxu0 %v4572
      %5171 = vmatmul.mubr.bf16.gmra.mxu0 %v4571
      %v5172 = vpop.f32.mrf.mxu0
      %v5173 = vadd.f32 %v4884, %v5172
      %v5174 = vpop.f32.mrf.mxu0
      %v5175 = vpop.f32.mrf.mxu0
      %v5176 = vadd.f32 %v4887, %v5175
      %v5177 = vpop.f32.mrf.mxu0
      %5178 = vmatprep.mubr.bf16.mxu0 %v4576
      %5179 = vmatmul.mubr.bf16.gmra.mxu0 %v4575
      %v5180 = vpop.f32.mrf.mxu0
      %v5181 = vadd.f32 %v4892, %v5180
      %v5182 = vpop.f32.mrf.mxu0
      %v5183 = vpop.f32.mrf.mxu0
      %v5184 = vadd.f32 %v4895, %v5183
      %v5185 = vpop.f32.mrf.mxu0
      %5186 = vmatprep.mubr.bf16.mxu0 %v4580
      %5187 = vmatmul.mubr.bf16.gmra.mxu0 %v4579
      %v5188 = vpop.f32.mrf.mxu0
      %v5189 = vadd.f32 %v4900, %v5188
      %v5190 = vpop.f32.mrf.mxu0
      %v5191 = vpop.f32.mrf.mxu0
      %v5192 = vadd.f32 %v4903, %v5191
      %v5193 = vpop.f32.mrf.mxu0
      %5194 = vmatprep.mubr.bf16.mxu0 %v4584
      %5195 = vmatmul.mubr.bf16.gmra.mxu0 %v4583
      %v5196 = vpop.f32.mrf.mxu0
      %v5197 = vadd.f32 %v4908, %v5196
      %v5198 = vpop.f32.mrf.mxu0
      %v5199 = vpop.f32.mrf.mxu0
      %v5200 = vadd.f32 %v4911, %v5199
      %v5201 = vpop.f32.mrf.mxu0
      %5202 = vmatprep.mubr.bf16.mxu0 %v4588
      %5203 = vmatmul.mubr.bf16.gmra.mxu0 %v4587
      %v5204 = vpop.f32.mrf.mxu0
      %v5205 = vadd.f32 %v4916, %v5204
      %v5206 = vpop.f32.mrf.mxu0
      %v5207 = vpop.f32.mrf.mxu0
      %v5208 = vadd.f32 %v4919, %v5207
      %v5209 = vpop.f32.mrf.mxu0
      %5210 = vmatprep.mubr.bf16.mxu0 %v4592
      %5211 = vmatmul.mubr.bf16.gmra.mxu0 %v4591
      %v5212 = vpop.f32.mrf.mxu0
      %v5213 = vadd.f32 %v4924, %v5212
      %v5214 = vpop.f32.mrf.mxu0
      %v5215 = vpop.f32.mrf.mxu0
      %v5216 = vadd.f32 %v4927, %v5215
      %v5217 = vpop.f32.mrf.mxu0
      %5218 = vmatprep.mubr.bf16.mxu0 %v4596
      %5219 = vmatmul.mubr.bf16.gmra.mxu0 %v4595
      %v5220 = vpop.f32.mrf.mxu0
      %v5221 = vadd.f32 %v4932, %v5220
      %v5222 = vpop.f32.mrf.mxu0
      %v5223 = vpop.f32.mrf.mxu0
      %v5224 = vadd.f32 %v4935, %v5223
      %v5225 = vpop.f32.mrf.mxu0
      %5226 = vmatprep.mubr.bf16.mxu0 %v4600
      %5227 = vmatmul.mubr.bf16.gmra.mxu0 %v4599
      %v5228 = vpop.f32.mrf.mxu0
      %v5229 = vadd.f32 %v4940, %v5228
      %v5230 = vpop.f32.mrf.mxu0
      %v5231 = vpop.f32.mrf.mxu0
      %v5232 = vadd.f32 %v4943, %v5231
      %v5233 = vpop.f32.mrf.mxu0
      %5234 = vmatprep.mubr.bf16.mxu0 %v4604
      %5235 = vmatmul.mubr.bf16.gmra.mxu0 %v4603
      %v5236 = vpop.f32.mrf.mxu0
      %v5237 = vadd.f32 %v4948, %v5236
      %v5238 = vpop.f32.mrf.mxu0
      %v5239 = vpop.f32.mrf.mxu0
      %v5240 = vadd.f32 %v4951, %v5239
      %v5241 = vpop.f32.mrf.mxu0
      %5242 = vmatprep.mubr.bf16.mxu0 %v4608
      %5243 = vmatmul.mubr.bf16.gmra.mxu0 %v4607
      %v5244 = vpop.f32.mrf.mxu0
      %v5245 = vadd.f32 %v4956, %v5244
      %v5246 = vpop.f32.mrf.mxu0
      %v5247 = vpop.f32.mrf.mxu0
      %v5248 = vadd.f32 %v4959, %v5247
      %v5249 = vpop.f32.mrf.mxu0
      %5250 = vmatprep.mubr.bf16.mxu0 %v4612
      %5251 = vmatmul.mubr.bf16.gmra.mxu0 %v4611
      %v5252 = vpop.f32.mrf.mxu0
      %v5253 = vadd.f32 %v4964, %v5252
      %v5254 = vpop.f32.mrf.mxu0
      %v5255 = vpop.f32.mrf.mxu0
      %v5256 = vadd.f32 %v4967, %v5255
      %v5257 = vpop.f32.mrf.mxu0
      %5258 = vmatprep.mubr.bf16.mxu0 %v4616
      %5259 = vmatmul.mubr.bf16.gmra.mxu0 %v4615
      %v5260 = vpop.f32.mrf.mxu0
      %v5261 = vadd.f32 %v4972, %v5260
      %v5262 = vpop.f32.mrf.mxu0
      %v5263 = vpop.f32.mrf.mxu0
      %v5264 = vadd.f32 %v4975, %v5263
      %v5265 = vpop.f32.mrf.mxu0
      %5266 = vmatprep.mubr.bf16.mxu0 %v4620
      %5267 = vmatmul.mubr.bf16.gmra.mxu0 %v4619
      %v5268 = vpop.f32.mrf.mxu0
      %v5269 = vadd.f32 %v4980, %v5268
      %v5270 = vpop.f32.mrf.mxu0
      %v5271 = vpop.f32.mrf.mxu0
      %v5272 = vadd.f32 %v4983, %v5271
      %v5273 = vpop.f32.mrf.mxu0
      %5274 = vmatprep.mubr.bf16.mxu0 %v4624
      %5275 = vmatmul.mubr.bf16.gmra.mxu0 %v4623
      %v5276 = vpop.f32.mrf.mxu0
      %v5277 = vadd.f32 %v4988, %v5276
      %v5278 = vpop.f32.mrf.mxu0
      %v5279 = vpop.f32.mrf.mxu0
      %v5280 = vadd.f32 %v4991, %v5279
      %v5281 = vpop.f32.mrf.mxu0
      %5282 = vdwg.mxu0
      %v5283 = vadd.f32 %v4433, %v5029
      %v5284 = vadd.f32 %v4434, %v5032
      %v5285 = vadd.f32 %v4435, %v5037
      %v5286 = vadd.f32 %v4436, %v5040
      %v5287 = vadd.f32 %v4437, %v5045
      %v5288 = vadd.f32 %v4438, %v5048
      %v5289 = vadd.f32 %v4439, %v5053
      %v5290 = vadd.f32 %v4440, %v5056
      %v5291 = vadd.f32 %v4441, %v5061
      %v5292 = vadd.f32 %v4442, %v5064
      %v5293 = vadd.f32 %v4443, %v5069
      %v5294 = vadd.f32 %v4444, %v5072
      %v5295 = vadd.f32 %v4445, %v5077
      %v5296 = vadd.f32 %v4446, %v5080
      %v5297 = vadd.f32 %v4447, %v5085
      %v5298 = vadd.f32 %v4448, %v5088
      %v5299 = vadd.f32 %v4449, %v5093
      %v5300 = vadd.f32 %v4450, %v5096
      %v5301 = vadd.f32 %v4451, %v5101
      %v5302 = vadd.f32 %v4452, %v5104
      %v5303 = vadd.f32 %v4453, %v5109
      %v5304 = vadd.f32 %v4454, %v5112
      %v5305 = vadd.f32 %v4455, %v5117
      %v5306 = vadd.f32 %v4456, %v5120
      %v5307 = vadd.f32 %v4457, %v5125
      %v5308 = vadd.f32 %v4458, %v5128
      %v5309 = vadd.f32 %v4459, %v5133
      %v5310 = vadd.f32 %v4460, %v5136
      %v5311 = vadd.f32 %v4461, %v5141
      %v5312 = vadd.f32 %v4462, %v5144
      %v5313 = vadd.f32 %v4463, %v5149
      %v5314 = vadd.f32 %v4464, %v5152
      %v5315 = vadd.f32 %v4465, %v5157
      %v5316 = vadd.f32 %v4466, %v5160
      %v5317 = vadd.f32 %v4467, %v5165
      %v5318 = vadd.f32 %v4468, %v5168
      %v5319 = vadd.f32 %v4469, %v5173
      %v5320 = vadd.f32 %v4470, %v5176
      %v5321 = vadd.f32 %v4471, %v5181
      %v5322 = vadd.f32 %v4472, %v5184
      %v5323 = vadd.f32 %v4473, %v5189
      %v5324 = vadd.f32 %v4474, %v5192
      %v5325 = vadd.f32 %v4475, %v5197
      %v5326 = vadd.f32 %v4476, %v5200
      %v5327 = vadd.f32 %v4477, %v5205
      %v5328 = vadd.f32 %v4478, %v5208
      %v5329 = vadd.f32 %v4479, %v5213
      %v5330 = vadd.f32 %v4480, %v5216
      %v5331 = vadd.f32 %v4481, %v5221
      %v5332 = vadd.f32 %v4482, %v5224
      %v5333 = vadd.f32 %v4483, %v5229
      %v5334 = vadd.f32 %v4484, %v5232
      %v5335 = vadd.f32 %v4485, %v5237
      %v5336 = vadd.f32 %v4486, %v5240
      %v5337 = vadd.f32 %v4487, %v5245
      %v5338 = vadd.f32 %v4488, %v5248
      %v5339 = vadd.f32 %v4489, %v5253
      %v5340 = vadd.f32 %v4490, %v5256
      %v5341 = vadd.f32 %v4491, %v5261
      %v5342 = vadd.f32 %v4492, %v5264
      %v5343 = vadd.f32 %v4493, %v5269
      %v5344 = vadd.f32 %v4494, %v5272
      %v5345 = vadd.f32 %v4495, %v5277
      %v5346 = vadd.f32 %v4496, %v5280
      %5347 = vst.msk [vmem:[#allocation4] sm:$0xff] %vm941, %v5283
      %5348 = vst.msk [vmem:[#allocation4 + $0x8] sm:$0xff] %vm941, %v5284
      %5349 = vst.msk [vmem:[#allocation4 + $0x10] sm:$0xff] %vm941, %v5285
      %5350 = vst.msk [vmem:[#allocation4 + $0x18] sm:$0xff] %vm941, %v5286
      %5351 = vst.msk [vmem:[#allocation4 + $0x20] sm:$0xff] %vm941, %v5287
      %5352 = vst.msk [vmem:[#allocation4 + $0x28] sm:$0xff] %vm941, %v5288
      %5353 = vst.msk [vmem:[#allocation4 + $0x30] sm:$0xff] %vm941, %v5289
      %5354 = vst.msk [vmem:[#allocation4 + $0x38] sm:$0xff] %vm941, %v5290
      %5355 = vst.msk [vmem:[#allocation4 + $0x40] sm:$0xff] %vm941, %v5291
      %5356 = vst.msk [vmem:[#allocation4 + $0x48] sm:$0xff] %vm941, %v5292
      %5357 = vst.msk [vmem:[#allocation4 + $0x50] sm:$0xff] %vm941, %v5293
      %5358 = vst.msk [vmem:[#allocation4 + $0x58] sm:$0xff] %vm941, %v5294
      %5359 = vst.msk [vmem:[#allocation4 + $0x60] sm:$0xff] %vm941, %v5295
      %5360 = vst.msk [vmem:[#allocation4 + $0x68] sm:$0xff] %vm941, %v5296
      %5361 = vst.msk [vmem:[#allocation4 + $0x70] sm:$0xff] %vm941, %v5297
      %5362 = vst.msk [vmem:[#allocation4 + $0x78] sm:$0xff] %vm941, %v5298
      %5363 = vst.msk [vmem:[#allocation4 + $0x80] sm:$0xff] %vm941, %v5299
      %5364 = vst.msk [vmem:[#allocation4 + $0x88] sm:$0xff] %vm941, %v5300
      %5365 = vst.msk [vmem:[#allocation4 + $0x90] sm:$0xff] %vm941, %v5301
      %5366 = vst.msk [vmem:[#allocation4 + $0x98] sm:$0xff] %vm941, %v5302
      %5367 = vst.msk [vmem:[#allocation4 + $0xa0] sm:$0xff] %vm941, %v5303
      %5368 = vst.msk [vmem:[#allocation4 + $0xa8] sm:$0xff] %vm941, %v5304
      %5369 = vst.msk [vmem:[#allocation4 + $0xb0] sm:$0xff] %vm941, %v5305
      %5370 = vst.msk [vmem:[#allocation4 + $0xb8] sm:$0xff] %vm941, %v5306
      %5371 = vst.msk [vmem:[#allocation4 + $0xc0] sm:$0xff] %vm941, %v5307
      %5372 = vst.msk [vmem:[#allocation4 + $0xc8] sm:$0xff] %vm941, %v5308
      %5373 = vst.msk [vmem:[#allocation4 + $0xd0] sm:$0xff] %vm941, %v5309
      %5374 = vst.msk [vmem:[#allocation4 + $0xd8] sm:$0xff] %vm941, %v5310
      %5375 = vst.msk [vmem:[#allocation4 + $0xe0] sm:$0xff] %vm941, %v5311
      %5376 = vst.msk [vmem:[#allocation4 + $0xe8] sm:$0xff] %vm941, %v5312
      %5377 = vst.msk [vmem:[#allocation4 + $0xf0] sm:$0xff] %vm941, %v5313
      %5378 = vst.msk [vmem:[#allocation4 + $0xf8] sm:$0xff] %vm941, %v5314
      %5379 = vst.msk [vmem:[#allocation4 + $0x100] sm:$0xff] %vm941, %v5315
      %5380 = vst.msk [vmem:[#allocation4 + $0x108] sm:$0xff] %vm941, %v5316
      %5381 = vst.msk [vmem:[#allocation4 + $0x110] sm:$0xff] %vm941, %v5317
      %5382 = vst.msk [vmem:[#allocation4 + $0x118] sm:$0xff] %vm941, %v5318
      %5383 = vst.msk [vmem:[#allocation4 + $0x120] sm:$0xff] %vm941, %v5319
      %5384 = vst.msk [vmem:[#allocation4 + $0x128] sm:$0xff] %vm941, %v5320
      %5385 = vst.msk [vmem:[#allocation4 + $0x130] sm:$0xff] %vm941, %v5321
      %5386 = vst.msk [vmem:[#allocation4 + $0x138] sm:$0xff] %vm941, %v5322
      %5387 = vst.msk [vmem:[#allocation4 + $0x140] sm:$0xff] %vm941, %v5323
      %5388 = vst.msk [vmem:[#allocation4 + $0x148] sm:$0xff] %vm941, %v5324
      %5389 = vst.msk [vmem:[#allocation4 + $0x150] sm:$0xff] %vm941, %v5325
      %5390 = vst.msk [vmem:[#allocation4 + $0x158] sm:$0xff] %vm941, %v5326
      %5391 = vst.msk [vmem:[#allocation4 + $0x160] sm:$0xff] %vm941, %v5327
      %5392 = vst.msk [vmem:[#allocation4 + $0x168] sm:$0xff] %vm941, %v5328
      %5393 = vst.msk [vmem:[#allocation4 + $0x170] sm:$0xff] %vm941, %v5329
      %5394 = vst.msk [vmem:[#allocation4 + $0x178] sm:$0xff] %vm941, %v5330
      %5395 = vst.msk [vmem:[#allocation4 + $0x180] sm:$0xff] %vm941, %v5331
      %5396 = vst.msk [vmem:[#allocation4 + $0x188] sm:$0xff] %vm941, %v5332
      %5397 = vst.msk [vmem:[#allocation4 + $0x190] sm:$0xff] %vm941, %v5333
      %5398 = vst.msk [vmem:[#allocation4 + $0x198] sm:$0xff] %vm941, %v5334
      %5399 = vst.msk [vmem:[#allocation4 + $0x1a0] sm:$0xff] %vm941, %v5335
      %5400 = vst.msk [vmem:[#allocation4 + $0x1a8] sm:$0xff] %vm941, %v5336
      %5401 = vst.msk [vmem:[#allocation4 + $0x1b0] sm:$0xff] %vm941, %v5337
      %5402 = vst.msk [vmem:[#allocation4 + $0x1b8] sm:$0xff] %vm941, %v5338
      %5403 = vst.msk [vmem:[#allocation4 + $0x1c0] sm:$0xff] %vm941, %v5339
      %5404 = vst.msk [vmem:[#allocation4 + $0x1c8] sm:$0xff] %vm941, %v5340
      %5405 = vst.msk [vmem:[#allocation4 + $0x1d0] sm:$0xff] %vm941, %v5341
      %5406 = vst.msk [vmem:[#allocation4 + $0x1d8] sm:$0xff] %vm941, %v5342
      %5407 = vst.msk [vmem:[#allocation4 + $0x1e0] sm:$0xff] %vm941, %v5343
      %5408 = vst.msk [vmem:[#allocation4 + $0x1e8] sm:$0xff] %vm941, %v5344
      %5409 = vst.msk [vmem:[#allocation4 + $0x1f0] sm:$0xff] %vm941, %v5345
      %5410 = vst.msk [vmem:[#allocation4 + $0x1f8] sm:$0xff] %vm941, %v5346
      %5411 = vst.msk [vmem:[#allocation2] sm:$0xff] %vm3984, %v2128
      %5412 = vst.msk [vmem:[#allocation2 + $0x8] sm:$0xff] %vm3984, %v2129
      %5413 = vst.msk [vmem:[#allocation2 + $0x10] sm:$0xff] %vm3984, %v2130
      %5414 = vst.msk [vmem:[#allocation2 + $0x18] sm:$0xff] %vm3984, %v2131
      %5415 = vst.msk [vmem:[#allocation2 + $0x20] sm:$0xff] %vm3984, %v2132
      %5416 = vst.msk [vmem:[#allocation2 + $0x28] sm:$0xff] %vm3984, %v2133
      %5417 = vst.msk [vmem:[#allocation2 + $0x30] sm:$0xff] %vm3984, %v2134
      %5418 = vst.msk [vmem:[#allocation2 + $0x38] sm:$0xff] %vm3984, %v2135
      %5419 = vst.msk [vmem:[#allocation2 + $0x40] sm:$0xff] %vm3984, %v2136
      %5420 = vst.msk [vmem:[#allocation2 + $0x48] sm:$0xff] %vm3984, %v2137
      %5421 = vst.msk [vmem:[#allocation2 + $0x50] sm:$0xff] %vm3984, %v2138
      %5422 = vst.msk [vmem:[#allocation2 + $0x58] sm:$0xff] %vm3984, %v2139
      %5423 = vst.msk [vmem:[#allocation2 + $0x60] sm:$0xff] %vm3984, %v2140
      %5424 = vst.msk [vmem:[#allocation2 + $0x68] sm:$0xff] %vm3984, %v2141
      %5425 = vst.msk [vmem:[#allocation2 + $0x70] sm:$0xff] %vm3984, %v2142
      %5426 = vst.msk [vmem:[#allocation2 + $0x78] sm:$0xff] %vm3984, %v2143
      %5427 = vst.msk [vmem:[#allocation2 + $0x80] sm:$0xff] %vm3984, %v2144
      %5428 = vst.msk [vmem:[#allocation2 + $0x88] sm:$0xff] %vm3984, %v2145
      %5429 = vst.msk [vmem:[#allocation2 + $0x90] sm:$0xff] %vm3984, %v2146
      %5430 = vst.msk [vmem:[#allocation2 + $0x98] sm:$0xff] %vm3984, %v2147
      %5431 = vst.msk [vmem:[#allocation2 + $0xa0] sm:$0xff] %vm3984, %v2148
      %5432 = vst.msk [vmem:[#allocation2 + $0xa8] sm:$0xff] %vm3984, %v2149
      %5433 = vst.msk [vmem:[#allocation2 + $0xb0] sm:$0xff] %vm3984, %v2150
      %5434 = vst.msk [vmem:[#allocation2 + $0xb8] sm:$0xff] %vm3984, %v2151
      %5435 = vst.msk [vmem:[#allocation2 + $0xc0] sm:$0xff] %vm3984, %v2152
      %5436 = vst.msk [vmem:[#allocation2 + $0xc8] sm:$0xff] %vm3984, %v2153
      %5437 = vst.msk [vmem:[#allocation2 + $0xd0] sm:$0xff] %vm3984, %v2154
      %5438 = vst.msk [vmem:[#allocation2 + $0xd8] sm:$0xff] %vm3984, %v2155
      %5439 = vst.msk [vmem:[#allocation2 + $0xe0] sm:$0xff] %vm3984, %v2156
      %5440 = vst.msk [vmem:[#allocation2 + $0xe8] sm:$0xff] %vm3984, %v2157
      %5441 = vst.msk [vmem:[#allocation2 + $0xf0] sm:$0xff] %vm3984, %v2158
      %5442 = vst.msk [vmem:[#allocation2 + $0xf8] sm:$0xff] %vm3984, %v2159
      %5443 = vst.msk [vmem:[#allocation2 + $0x100] sm:$0xff] %vm3984, %v2160
      %5444 = vst.msk [vmem:[#allocation2 + $0x108] sm:$0xff] %vm3984, %v2161
      %5445 = vst.msk [vmem:[#allocation2 + $0x110] sm:$0xff] %vm3984, %v2162
      %5446 = vst.msk [vmem:[#allocation2 + $0x118] sm:$0xff] %vm3984, %v2163
      %5447 = vst.msk [vmem:[#allocation2 + $0x120] sm:$0xff] %vm3984, %v2164
      %5448 = vst.msk [vmem:[#allocation2 + $0x128] sm:$0xff] %vm3984, %v2165
      %5449 = vst.msk [vmem:[#allocation2 + $0x130] sm:$0xff] %vm3984, %v2166
      %5450 = vst.msk [vmem:[#allocation2 + $0x138] sm:$0xff] %vm3984, %v2167
      %5451 = vst.msk [vmem:[#allocation2 + $0x140] sm:$0xff] %vm3984, %v2168
      %5452 = vst.msk [vmem:[#allocation2 + $0x148] sm:$0xff] %vm3984, %v2169
      %5453 = vst.msk [vmem:[#allocation2 + $0x150] sm:$0xff] %vm3984, %v2170
      %5454 = vst.msk [vmem:[#allocation2 + $0x158] sm:$0xff] %vm3984, %v2171
      %5455 = vst.msk [vmem:[#allocation2 + $0x160] sm:$0xff] %vm3984, %v2172
      %5456 = vst.msk [vmem:[#allocation2 + $0x168] sm:$0xff] %vm3984, %v2173
      %5457 = vst.msk [vmem:[#allocation2 + $0x170] sm:$0xff] %vm3984, %v2174
      %5458 = vst.msk [vmem:[#allocation2 + $0x178] sm:$0xff] %vm3984, %v2175
      %5459 = vst.msk [vmem:[#allocation2 + $0x180] sm:$0xff] %vm3984, %v2176
      %5460 = vst.msk [vmem:[#allocation2 + $0x188] sm:$0xff] %vm3984, %v2177
      %5461 = vst.msk [vmem:[#allocation2 + $0x190] sm:$0xff] %vm3984, %v2178
      %5462 = vst.msk [vmem:[#allocation2 + $0x198] sm:$0xff] %vm3984, %v2179
      %5463 = vst.msk [vmem:[#allocation2 + $0x1a0] sm:$0xff] %vm3984, %v2180
      %5464 = vst.msk [vmem:[#allocation2 + $0x1a8] sm:$0xff] %vm3984, %v2181
      %5465 = vst.msk [vmem:[#allocation2 + $0x1b0] sm:$0xff] %vm3984, %v2182
      %5466 = vst.msk [vmem:[#allocation2 + $0x1b8] sm:$0xff] %vm3984, %v2183
      %5467 = vst.msk [vmem:[#allocation2 + $0x1c0] sm:$0xff] %vm3984, %v2184
      %5468 = vst.msk [vmem:[#allocation2 + $0x1c8] sm:$0xff] %vm3984, %v2185
      %5469 = vst.msk [vmem:[#allocation2 + $0x1d0] sm:$0xff] %vm3984, %v2186
      %5470 = vst.msk [vmem:[#allocation2 + $0x1d8] sm:$0xff] %vm3984, %v2187
      %5471 = vst.msk [vmem:[#allocation2 + $0x1e0] sm:$0xff] %vm3984, %v2188
      %5472 = vst.msk [vmem:[#allocation2 + $0x1e8] sm:$0xff] %vm3984, %v2189
      %5473 = vst.msk [vmem:[#allocation2 + $0x1f0] sm:$0xff] %vm3984, %v2190
      %5474 = vst.msk [vmem:[#allocation2 + $0x1f8] sm:$0xff] %vm3984, %v2191
      // Predicated region
      $region49: #{attn_block_pallas.5} parent=43 // pred_check
        %p5475 = pneg %p407
      $region50: #{attn_block_pallas.5} parent=43 // pred_check_branch
        %5477 = sbr.rel (%p5475) target = $region52
      $region51: #{attn_block_pallas.5} parent=43 // pred_region
        %v5478 = vld [vmem:[#allocation3] sm:$0xff]
        %v5479 = vld [vmem:[#allocation3 + $0x8] sm:$0xff]
        %v5480 = vld [vmem:[#allocation3 + $0x10] sm:$0xff]
        %v5481 = vld [vmem:[#allocation3 + $0x18] sm:$0xff]
        %v5482 = vld [vmem:[#allocation3 + $0x20] sm:$0xff]
        %v5483 = vld [vmem:[#allocation3 + $0x28] sm:$0xff]
        %v5484 = vld [vmem:[#allocation3 + $0x30] sm:$0xff]
        %v5485 = vld [vmem:[#allocation3 + $0x38] sm:$0xff]
        %v5486 = vld [vmem:[#allocation3 + $0x40] sm:$0xff]
        %v5487 = vld [vmem:[#allocation3 + $0x48] sm:$0xff]
        %v5488 = vld [vmem:[#allocation3 + $0x50] sm:$0xff]
        %v5489 = vld [vmem:[#allocation3 + $0x58] sm:$0xff]
        %v5490 = vld [vmem:[#allocation3 + $0x60] sm:$0xff]
        %v5491 = vld [vmem:[#allocation3 + $0x68] sm:$0xff]
        %v5492 = vld [vmem:[#allocation3 + $0x70] sm:$0xff]
        %v5493 = vld [vmem:[#allocation3 + $0x78] sm:$0xff]
        %v5494 = vld [vmem:[#allocation3 + $0x80] sm:$0xff]
        %v5495 = vld [vmem:[#allocation3 + $0x88] sm:$0xff]
        %v5496 = vld [vmem:[#allocation3 + $0x90] sm:$0xff]
        %v5497 = vld [vmem:[#allocation3 + $0x98] sm:$0xff]
        %v5498 = vld [vmem:[#allocation3 + $0xa0] sm:$0xff]
        %v5499 = vld [vmem:[#allocation3 + $0xa8] sm:$0xff]
        %v5500 = vld [vmem:[#allocation3 + $0xb0] sm:$0xff]
        %v5501 = vld [vmem:[#allocation3 + $0xb8] sm:$0xff]
        %v5502 = vld [vmem:[#allocation3 + $0xc0] sm:$0xff]
        %v5503 = vld [vmem:[#allocation3 + $0xc8] sm:$0xff]
        %v5504 = vld [vmem:[#allocation3 + $0xd0] sm:$0xff]
        %v5505 = vld [vmem:[#allocation3 + $0xd8] sm:$0xff]
        %v5506 = vld [vmem:[#allocation3 + $0xe0] sm:$0xff]
        %v5507 = vld [vmem:[#allocation3 + $0xe8] sm:$0xff]
        %v5508 = vld [vmem:[#allocation3 + $0xf0] sm:$0xff]
        %v5509 = vld [vmem:[#allocation3 + $0xf8] sm:$0xff]
        %v5510 = vld [vmem:[#allocation3 + $0x100] sm:$0xff]
        %v5511 = vld [vmem:[#allocation3 + $0x108] sm:$0xff]
        %v5512 = vld [vmem:[#allocation3 + $0x110] sm:$0xff]
        %v5513 = vld [vmem:[#allocation3 + $0x118] sm:$0xff]
        %v5514 = vld [vmem:[#allocation3 + $0x120] sm:$0xff]
        %v5515 = vld [vmem:[#allocation3 + $0x128] sm:$0xff]
        %v5516 = vld [vmem:[#allocation3 + $0x130] sm:$0xff]
        %v5517 = vld [vmem:[#allocation3 + $0x138] sm:$0xff]
        %v5518 = vld [vmem:[#allocation3 + $0x140] sm:$0xff]
        %v5519 = vld [vmem:[#allocation3 + $0x148] sm:$0xff]
        %v5520 = vld [vmem:[#allocation3 + $0x150] sm:$0xff]
        %v5521 = vld [vmem:[#allocation3 + $0x158] sm:$0xff]
        %v5522 = vld [vmem:[#allocation3 + $0x160] sm:$0xff]
        %v5523 = vld [vmem:[#allocation3 + $0x168] sm:$0xff]
        %v5524 = vld [vmem:[#allocation3 + $0x170] sm:$0xff]
        %v5525 = vld [vmem:[#allocation3 + $0x178] sm:$0xff]
        %v5526 = vld [vmem:[#allocation3 + $0x180] sm:$0xff]
        %v5527 = vld [vmem:[#allocation3 + $0x188] sm:$0xff]
        %v5528 = vld [vmem:[#allocation3 + $0x190] sm:$0xff]
        %v5529 = vld [vmem:[#allocation3 + $0x198] sm:$0xff]
        %v5530 = vld [vmem:[#allocation3 + $0x1a0] sm:$0xff]
        %v5531 = vld [vmem:[#allocation3 + $0x1a8] sm:$0xff]
        %v5532 = vld [vmem:[#allocation3 + $0x1b0] sm:$0xff]
        %v5533 = vld [vmem:[#allocation3 + $0x1b8] sm:$0xff]
        %v5534 = vld [vmem:[#allocation3 + $0x1c0] sm:$0xff]
        %v5535 = vld [vmem:[#allocation3 + $0x1c8] sm:$0xff]
        %v5536 = vld [vmem:[#allocation3 + $0x1d0] sm:$0xff]
        %v5537 = vld [vmem:[#allocation3 + $0x1d8] sm:$0xff]
        %v5538 = vld [vmem:[#allocation3 + $0x1e0] sm:$0xff]
        %v5539 = vld [vmem:[#allocation3 + $0x1e8] sm:$0xff]
        %v5540 = vld [vmem:[#allocation3 + $0x1f0] sm:$0xff]
        %v5541 = vld [vmem:[#allocation3 + $0x1f8] sm:$0xff]
        %v5542 = vrcp.pop %v5478
        %v5543 = vrcp.pop %v5479
        %v5544 = vrcp.pop %v5480
        %v5545 = vrcp.pop %v5481
        %v5546 = vrcp.pop %v5482
        %v5547 = vrcp.pop %v5483
        %v5548 = vrcp.pop %v5484
        %v5549 = vrcp.pop %v5485
        %v5550 = vrcp.pop %v5486
        %v5551 = vrcp.pop %v5487
        %v5552 = vrcp.pop %v5488
        %v5553 = vrcp.pop %v5489
        %v5554 = vrcp.pop %v5490
        %v5555 = vrcp.pop %v5491
        %v5556 = vrcp.pop %v5492
        %v5557 = vrcp.pop %v5493
        %v5558 = vrcp.pop %v5494
        %v5559 = vrcp.pop %v5495
        %v5560 = vrcp.pop %v5496
        %v5561 = vrcp.pop %v5497
        %v5562 = vrcp.pop %v5498
        %v5563 = vrcp.pop %v5499
        %v5564 = vrcp.pop %v5500
        %v5565 = vrcp.pop %v5501
        %v5566 = vrcp.pop %v5502
        %v5567 = vrcp.pop %v5503
        %v5568 = vrcp.pop %v5504
        %v5569 = vrcp.pop %v5505
        %v5570 = vrcp.pop %v5506
        %v5571 = vrcp.pop %v5507
        %v5572 = vrcp.pop %v5508
        %v5573 = vrcp.pop %v5509
        %v5574 = vrcp.pop %v5510
        %v5575 = vrcp.pop %v5511
        %v5576 = vrcp.pop %v5512
        %v5577 = vrcp.pop %v5513
        %v5578 = vrcp.pop %v5514
        %v5579 = vrcp.pop %v5515
        %v5580 = vrcp.pop %v5516
        %v5581 = vrcp.pop %v5517
        %v5582 = vrcp.pop %v5518
        %v5583 = vrcp.pop %v5519
        %v5584 = vrcp.pop %v5520
        %v5585 = vrcp.pop %v5521
        %v5586 = vrcp.pop %v5522
        %v5587 = vrcp.pop %v5523
        %v5588 = vrcp.pop %v5524
        %v5589 = vrcp.pop %v5525
        %v5590 = vrcp.pop %v5526
        %v5591 = vrcp.pop %v5527
        %v5592 = vrcp.pop %v5528
        %v5593 = vrcp.pop %v5529
        %v5594 = vrcp.pop %v5530
        %v5595 = vrcp.pop %v5531
        %v5596 = vrcp.pop %v5532
        %v5597 = vrcp.pop %v5533
        %v5598 = vrcp.pop %v5534
        %v5599 = vrcp.pop %v5535
        %v5600 = vrcp.pop %v5536
        %v5601 = vrcp.pop %v5537
        %v5602 = vrcp.pop %v5538
        %v5603 = vrcp.pop %v5539
        %v5604 = vrcp.pop %v5540
        %v5605 = vrcp.pop %v5541
        %v5606 = vld [vmem:[#allocation4] sm:$0xff]
        %v5607 = vld [vmem:[#allocation4 + $0x8] sm:$0xff]
        %v5608 = vld [vmem:[#allocation4 + $0x10] sm:$0xff]
        %v5609 = vld [vmem:[#allocation4 + $0x18] sm:$0xff]
        %v5610 = vld [vmem:[#allocation4 + $0x20] sm:$0xff]
        %v5611 = vld [vmem:[#allocation4 + $0x28] sm:$0xff]
        %v5612 = vld [vmem:[#allocation4 + $0x30] sm:$0xff]
        %v5613 = vld [vmem:[#allocation4 + $0x38] sm:$0xff]
        %v5614 = vld [vmem:[#allocation4 + $0x40] sm:$0xff]
        %v5615 = vld [vmem:[#allocation4 + $0x48] sm:$0xff]
        %v5616 = vld [vmem:[#allocation4 + $0x50] sm:$0xff]
        %v5617 = vld [vmem:[#allocation4 + $0x58] sm:$0xff]
        %v5618 = vld [vmem:[#allocation4 + $0x60] sm:$0xff]
        %v5619 = vld [vmem:[#allocation4 + $0x68] sm:$0xff]
        %v5620 = vld [vmem:[#allocation4 + $0x70] sm:$0xff]
        %v5621 = vld [vmem:[#allocation4 + $0x78] sm:$0xff]
        %v5622 = vld [vmem:[#allocation4 + $0x80] sm:$0xff]
        %v5623 = vld [vmem:[#allocation4 + $0x88] sm:$0xff]
        %v5624 = vld [vmem:[#allocation4 + $0x90] sm:$0xff]
        %v5625 = vld [vmem:[#allocation4 + $0x98] sm:$0xff]
        %v5626 = vld [vmem:[#allocation4 + $0xa0] sm:$0xff]
        %v5627 = vld [vmem:[#allocation4 + $0xa8] sm:$0xff]
        %v5628 = vld [vmem:[#allocation4 + $0xb0] sm:$0xff]
        %v5629 = vld [vmem:[#allocation4 + $0xb8] sm:$0xff]
        %v5630 = vld [vmem:[#allocation4 + $0xc0] sm:$0xff]
        %v5631 = vld [vmem:[#allocation4 + $0xc8] sm:$0xff]
        %v5632 = vld [vmem:[#allocation4 + $0xd0] sm:$0xff]
        %v5633 = vld [vmem:[#allocation4 + $0xd8] sm:$0xff]
        %v5634 = vld [vmem:[#allocation4 + $0xe0] sm:$0xff]
        %v5635 = vld [vmem:[#allocation4 + $0xe8] sm:$0xff]
        %v5636 = vld [vmem:[#allocation4 + $0xf0] sm:$0xff]
        %v5637 = vld [vmem:[#allocation4 + $0xf8] sm:$0xff]
        %v5638 = vld [vmem:[#allocation4 + $0x100] sm:$0xff]
        %v5639 = vld [vmem:[#allocation4 + $0x108] sm:$0xff]
        %v5640 = vld [vmem:[#allocation4 + $0x110] sm:$0xff]
        %v5641 = vld [vmem:[#allocation4 + $0x118] sm:$0xff]
        %v5642 = vld [vmem:[#allocation4 + $0x120] sm:$0xff]
        %v5643 = vld [vmem:[#allocation4 + $0x128] sm:$0xff]
        %v5644 = vld [vmem:[#allocation4 + $0x130] sm:$0xff]
        %v5645 = vld [vmem:[#allocation4 + $0x138] sm:$0xff]
        %v5646 = vld [vmem:[#allocation4 + $0x140] sm:$0xff]
        %v5647 = vld [vmem:[#allocation4 + $0x148] sm:$0xff]
        %v5648 = vld [vmem:[#allocation4 + $0x150] sm:$0xff]
        %v5649 = vld [vmem:[#allocation4 + $0x158] sm:$0xff]
        %v5650 = vld [vmem:[#allocation4 + $0x160] sm:$0xff]
        %v5651 = vld [vmem:[#allocation4 + $0x168] sm:$0xff]
        %v5652 = vld [vmem:[#allocation4 + $0x170] sm:$0xff]
        %v5653 = vld [vmem:[#allocation4 + $0x178] sm:$0xff]
        %v5654 = vld [vmem:[#allocation4 + $0x180] sm:$0xff]
        %v5655 = vld [vmem:[#allocation4 + $0x188] sm:$0xff]
        %v5656 = vld [vmem:[#allocation4 + $0x190] sm:$0xff]
        %v5657 = vld [vmem:[#allocation4 + $0x198] sm:$0xff]
        %v5658 = vld [vmem:[#allocation4 + $0x1a0] sm:$0xff]
        %v5659 = vld [vmem:[#allocation4 + $0x1a8] sm:$0xff]
        %v5660 = vld [vmem:[#allocation4 + $0x1b0] sm:$0xff]
        %v5661 = vld [vmem:[#allocation4 + $0x1b8] sm:$0xff]
        %v5662 = vld [vmem:[#allocation4 + $0x1c0] sm:$0xff]
        %v5663 = vld [vmem:[#allocation4 + $0x1c8] sm:$0xff]
        %v5664 = vld [vmem:[#allocation4 + $0x1d0] sm:$0xff]
        %v5665 = vld [vmem:[#allocation4 + $0x1d8] sm:$0xff]
        %v5666 = vld [vmem:[#allocation4 + $0x1e0] sm:$0xff]
        %v5667 = vld [vmem:[#allocation4 + $0x1e8] sm:$0xff]
        %v5668 = vld [vmem:[#allocation4 + $0x1f0] sm:$0xff]
        %v5669 = vld [vmem:[#allocation4 + $0x1f8] sm:$0xff]
        %5671 = vset.pattern.permute.xlu0 0
        %5672 = vperm.xlu0 %5671, %v5542
        %v5673 = vpop.permute.xlu0 %5672
        %5676 = vset.pattern.permute.xlu0 0
        %5677 = vperm.xlu0 %5676, %v5543
        %v5678 = vpop.permute.xlu0 %5677
        %5681 = vset.pattern.permute.xlu0 0
        %5682 = vperm.xlu0 %5681, %v5544
        %v5683 = vpop.permute.xlu0 %5682
        %5686 = vset.pattern.permute.xlu0 0
        %5687 = vperm.xlu0 %5686, %v5545
        %v5688 = vpop.permute.xlu0 %5687
        %5691 = vset.pattern.permute.xlu0 0
        %5692 = vperm.xlu0 %5691, %v5546
        %v5693 = vpop.permute.xlu0 %5692
        %5696 = vset.pattern.permute.xlu0 0
        %5697 = vperm.xlu0 %5696, %v5547
        %v5698 = vpop.permute.xlu0 %5697
        %5701 = vset.pattern.permute.xlu0 0
        %5702 = vperm.xlu0 %5701, %v5548
        %v5703 = vpop.permute.xlu0 %5702
        %5706 = vset.pattern.permute.xlu0 0
        %5707 = vperm.xlu0 %5706, %v5549
        %v5708 = vpop.permute.xlu0 %5707
        %5711 = vset.pattern.permute.xlu0 0
        %5712 = vperm.xlu0 %5711, %v5550
        %v5713 = vpop.permute.xlu0 %5712
        %5716 = vset.pattern.permute.xlu0 0
        %5717 = vperm.xlu0 %5716, %v5551
        %v5718 = vpop.permute.xlu0 %5717
        %5721 = vset.pattern.permute.xlu0 0
        %5722 = vperm.xlu0 %5721, %v5552
        %v5723 = vpop.permute.xlu0 %5722
        %5726 = vset.pattern.permute.xlu0 0
        %5727 = vperm.xlu0 %5726, %v5553
        %v5728 = vpop.permute.xlu0 %5727
        %5731 = vset.pattern.permute.xlu0 0
        %5732 = vperm.xlu0 %5731, %v5554
        %v5733 = vpop.permute.xlu0 %5732
        %5736 = vset.pattern.permute.xlu0 0
        %5737 = vperm.xlu0 %5736, %v5555
        %v5738 = vpop.permute.xlu0 %5737
        %5741 = vset.pattern.permute.xlu0 0
        %5742 = vperm.xlu0 %5741, %v5556
        %v5743 = vpop.permute.xlu0 %5742
        %5746 = vset.pattern.permute.xlu0 0
        %5747 = vperm.xlu0 %5746, %v5557
        %v5748 = vpop.permute.xlu0 %5747
        %5751 = vset.pattern.permute.xlu0 0
        %5752 = vperm.xlu0 %5751, %v5558
        %v5753 = vpop.permute.xlu0 %5752
        %5756 = vset.pattern.permute.xlu0 0
        %5757 = vperm.xlu0 %5756, %v5559
        %v5758 = vpop.permute.xlu0 %5757
        %5761 = vset.pattern.permute.xlu0 0
        %5762 = vperm.xlu0 %5761, %v5560
        %v5763 = vpop.permute.xlu0 %5762
        %5766 = vset.pattern.permute.xlu0 0
        %5767 = vperm.xlu0 %5766, %v5561
        %v5768 = vpop.permute.xlu0 %5767
        %5771 = vset.pattern.permute.xlu0 0
        %5772 = vperm.xlu0 %5771, %v5562
        %v5773 = vpop.permute.xlu0 %5772
        %5776 = vset.pattern.permute.xlu0 0
        %5777 = vperm.xlu0 %5776, %v5563
        %v5778 = vpop.permute.xlu0 %5777
        %5781 = vset.pattern.permute.xlu0 0
        %5782 = vperm.xlu0 %5781, %v5564
        %v5783 = vpop.permute.xlu0 %5782
        %5786 = vset.pattern.permute.xlu0 0
        %5787 = vperm.xlu0 %5786, %v5565
        %v5788 = vpop.permute.xlu0 %5787
        %5791 = vset.pattern.permute.xlu0 0
        %5792 = vperm.xlu0 %5791, %v5566
        %v5793 = vpop.permute.xlu0 %5792
        %5796 = vset.pattern.permute.xlu0 0
        %5797 = vperm.xlu0 %5796, %v5567
        %v5798 = vpop.permute.xlu0 %5797
        %5801 = vset.pattern.permute.xlu0 0
        %5802 = vperm.xlu0 %5801, %v5568
        %v5803 = vpop.permute.xlu0 %5802
        %5806 = vset.pattern.permute.xlu0 0
        %5807 = vperm.xlu0 %5806, %v5569
        %v5808 = vpop.permute.xlu0 %5807
        %5811 = vset.pattern.permute.xlu0 0
        %5812 = vperm.xlu0 %5811, %v5570
        %v5813 = vpop.permute.xlu0 %5812
        %5816 = vset.pattern.permute.xlu0 0
        %5817 = vperm.xlu0 %5816, %v5571
        %v5818 = vpop.permute.xlu0 %5817
        %5821 = vset.pattern.permute.xlu0 0
        %5822 = vperm.xlu0 %5821, %v5572
        %v5823 = vpop.permute.xlu0 %5822
        %5826 = vset.pattern.permute.xlu0 0
        %5827 = vperm.xlu0 %5826, %v5573
        %v5828 = vpop.permute.xlu0 %5827
        %5831 = vset.pattern.permute.xlu0 0
        %5832 = vperm.xlu0 %5831, %v5574
        %v5833 = vpop.permute.xlu0 %5832
        %5836 = vset.pattern.permute.xlu0 0
        %5837 = vperm.xlu0 %5836, %v5575
        %v5838 = vpop.permute.xlu0 %5837
        %5841 = vset.pattern.permute.xlu0 0
        %5842 = vperm.xlu0 %5841, %v5576
        %v5843 = vpop.permute.xlu0 %5842
        %5846 = vset.pattern.permute.xlu0 0
        %5847 = vperm.xlu0 %5846, %v5577
        %v5848 = vpop.permute.xlu0 %5847
        %5851 = vset.pattern.permute.xlu0 0
        %5852 = vperm.xlu0 %5851, %v5578
        %v5853 = vpop.permute.xlu0 %5852
        %5856 = vset.pattern.permute.xlu0 0
        %5857 = vperm.xlu0 %5856, %v5579
        %v5858 = vpop.permute.xlu0 %5857
        %5861 = vset.pattern.permute.xlu0 0
        %5862 = vperm.xlu0 %5861, %v5580
        %v5863 = vpop.permute.xlu0 %5862
        %5866 = vset.pattern.permute.xlu0 0
        %5867 = vperm.xlu0 %5866, %v5581
        %v5868 = vpop.permute.xlu0 %5867
        %5871 = vset.pattern.permute.xlu0 0
        %5872 = vperm.xlu0 %5871, %v5582
        %v5873 = vpop.permute.xlu0 %5872
        %5876 = vset.pattern.permute.xlu0 0
        %5877 = vperm.xlu0 %5876, %v5583
        %v5878 = vpop.permute.xlu0 %5877
        %5881 = vset.pattern.permute.xlu0 0
        %5882 = vperm.xlu0 %5881, %v5584
        %v5883 = vpop.permute.xlu0 %5882
        %5886 = vset.pattern.permute.xlu0 0
        %5887 = vperm.xlu0 %5886, %v5585
        %v5888 = vpop.permute.xlu0 %5887
        %5891 = vset.pattern.permute.xlu0 0
        %5892 = vperm.xlu0 %5891, %v5586
        %v5893 = vpop.permute.xlu0 %5892
        %5896 = vset.pattern.permute.xlu0 0
        %5897 = vperm.xlu0 %5896, %v5587
        %v5898 = vpop.permute.xlu0 %5897
        %5901 = vset.pattern.permute.xlu0 0
        %5902 = vperm.xlu0 %5901, %v5588
        %v5903 = vpop.permute.xlu0 %5902
        %5906 = vset.pattern.permute.xlu0 0
        %5907 = vperm.xlu0 %5906, %v5589
        %v5908 = vpop.permute.xlu0 %5907
        %5911 = vset.pattern.permute.xlu0 0
        %5912 = vperm.xlu0 %5911, %v5590
        %v5913 = vpop.permute.xlu0 %5912
        %5916 = vset.pattern.permute.xlu0 0
        %5917 = vperm.xlu0 %5916, %v5591
        %v5918 = vpop.permute.xlu0 %5917
        %5921 = vset.pattern.permute.xlu0 0
        %5922 = vperm.xlu0 %5921, %v5592
        %v5923 = vpop.permute.xlu0 %5922
        %5926 = vset.pattern.permute.xlu0 0
        %5927 = vperm.xlu0 %5926, %v5593
        %v5928 = vpop.permute.xlu0 %5927
        %5931 = vset.pattern.permute.xlu0 0
        %5932 = vperm.xlu0 %5931, %v5594
        %v5933 = vpop.permute.xlu0 %5932
        %5936 = vset.pattern.permute.xlu0 0
        %5937 = vperm.xlu0 %5936, %v5595
        %v5938 = vpop.permute.xlu0 %5937
        %5941 = vset.pattern.permute.xlu0 0
        %5942 = vperm.xlu0 %5941, %v5596
        %v5943 = vpop.permute.xlu0 %5942
        %5946 = vset.pattern.permute.xlu0 0
        %5947 = vperm.xlu0 %5946, %v5597
        %v5948 = vpop.permute.xlu0 %5947
        %5951 = vset.pattern.permute.xlu0 0
        %5952 = vperm.xlu0 %5951, %v5598
        %v5953 = vpop.permute.xlu0 %5952
        %5956 = vset.pattern.permute.xlu0 0
        %5957 = vperm.xlu0 %5956, %v5599
        %v5958 = vpop.permute.xlu0 %5957
        %5961 = vset.pattern.permute.xlu0 0
        %5962 = vperm.xlu0 %5961, %v5600
        %v5963 = vpop.permute.xlu0 %5962
        %5966 = vset.pattern.permute.xlu0 0
        %5967 = vperm.xlu0 %5966, %v5601
        %v5968 = vpop.permute.xlu0 %5967
        %5971 = vset.pattern.permute.xlu0 0
        %5972 = vperm.xlu0 %5971, %v5602
        %v5973 = vpop.permute.xlu0 %5972
        %5976 = vset.pattern.permute.xlu0 0
        %5977 = vperm.xlu0 %5976, %v5603
        %v5978 = vpop.permute.xlu0 %5977
        %5981 = vset.pattern.permute.xlu0 0
        %5982 = vperm.xlu0 %5981, %v5604
        %v5983 = vpop.permute.xlu0 %5982
        %5986 = vset.pattern.permute.xlu0 0
        %5987 = vperm.xlu0 %5986, %v5605
        %v5988 = vpop.permute.xlu0 %5987
        %v5990 = vmul.f32 %v5606, %v5673
        %v5991 = vmul.f32 %v5607, %v5678
        %v5992 = vmul.f32 %v5608, %v5683
        %v5993 = vmul.f32 %v5609, %v5688
        %v5994 = vmul.f32 %v5610, %v5693
        %v5995 = vmul.f32 %v5611, %v5698
        %v5996 = vmul.f32 %v5612, %v5703
        %v5997 = vmul.f32 %v5613, %v5708
        %v5998 = vmul.f32 %v5614, %v5713
        %v5999 = vmul.f32 %v5615, %v5718
        %v6000 = vmul.f32 %v5616, %v5723
        %v6001 = vmul.f32 %v5617, %v5728
        %v6002 = vmul.f32 %v5618, %v5733
        %v6003 = vmul.f32 %v5619, %v5738
        %v6004 = vmul.f32 %v5620, %v5743
        %v6005 = vmul.f32 %v5621, %v5748
        %v6006 = vmul.f32 %v5622, %v5753
        %v6007 = vmul.f32 %v5623, %v5758
        %v6008 = vmul.f32 %v5624, %v5763
        %v6009 = vmul.f32 %v5625, %v5768
        %v6010 = vmul.f32 %v5626, %v5773
        %v6011 = vmul.f32 %v5627, %v5778
        %v6012 = vmul.f32 %v5628, %v5783
        %v6013 = vmul.f32 %v5629, %v5788
        %v6014 = vmul.f32 %v5630, %v5793
        %v6015 = vmul.f32 %v5631, %v5798
        %v6016 = vmul.f32 %v5632, %v5803
        %v6017 = vmul.f32 %v5633, %v5808
        %v6018 = vmul.f32 %v5634, %v5813
        %v6019 = vmul.f32 %v5635, %v5818
        %v6020 = vmul.f32 %v5636, %v5823
        %v6021 = vmul.f32 %v5637, %v5828
        %v6022 = vmul.f32 %v5638, %v5833
        %v6023 = vmul.f32 %v5639, %v5838
        %v6024 = vmul.f32 %v5640, %v5843
        %v6025 = vmul.f32 %v5641, %v5848
        %v6026 = vmul.f32 %v5642, %v5853
        %v6027 = vmul.f32 %v5643, %v5858
        %v6028 = vmul.f32 %v5644, %v5863
        %v6029 = vmul.f32 %v5645, %v5868
        %v6030 = vmul.f32 %v5646, %v5873
        %v6031 = vmul.f32 %v5647, %v5878
        %v6032 = vmul.f32 %v5648, %v5883
        %v6033 = vmul.f32 %v5649, %v5888
        %v6034 = vmul.f32 %v5650, %v5893
        %v6035 = vmul.f32 %v5651, %v5898
        %v6036 = vmul.f32 %v5652, %v5903
        %v6037 = vmul.f32 %v5653, %v5908
        %v6038 = vmul.f32 %v5654, %v5913
        %v6039 = vmul.f32 %v5655, %v5918
        %v6040 = vmul.f32 %v5656, %v5923
        %v6041 = vmul.f32 %v5657, %v5928
        %v6042 = vmul.f32 %v5658, %v5933
        %v6043 = vmul.f32 %v5659, %v5938
        %v6044 = vmul.f32 %v5660, %v5943
        %v6045 = vmul.f32 %v5661, %v5948
        %v6046 = vmul.f32 %v5662, %v5953
        %v6047 = vmul.f32 %v5663, %v5958
        %v6048 = vmul.f32 %v5664, %v5963
        %v6049 = vmul.f32 %v5665, %v5968
        %v6050 = vmul.f32 %v5666, %v5973
        %v6051 = vmul.f32 %v5667, %v5978
        %v6052 = vmul.f32 %v5668, %v5983
        %v6053 = vmul.f32 %v5669, %v5988
        %v6054 = vpack.c.bf16 %v5991, %v5990
        %v6055 = vpack.c.bf16 %v5993, %v5992
        %v6056 = vpack.c.bf16 %v5995, %v5994
        %v6057 = vpack.c.bf16 %v5997, %v5996
        %v6058 = vpack.c.bf16 %v5999, %v5998
        %v6059 = vpack.c.bf16 %v6001, %v6000
        %v6060 = vpack.c.bf16 %v6003, %v6002
        %v6061 = vpack.c.bf16 %v6005, %v6004
        %v6062 = vpack.c.bf16 %v6007, %v6006
        %v6063 = vpack.c.bf16 %v6009, %v6008
        %v6064 = vpack.c.bf16 %v6011, %v6010
        %v6065 = vpack.c.bf16 %v6013, %v6012
        %v6066 = vpack.c.bf16 %v6015, %v6014
        %v6067 = vpack.c.bf16 %v6017, %v6016
        %v6068 = vpack.c.bf16 %v6019, %v6018
        %v6069 = vpack.c.bf16 %v6021, %v6020
        %v6070 = vpack.c.bf16 %v6023, %v6022
        %v6071 = vpack.c.bf16 %v6025, %v6024
        %v6072 = vpack.c.bf16 %v6027, %v6026
        %v6073 = vpack.c.bf16 %v6029, %v6028
        %v6074 = vpack.c.bf16 %v6031, %v6030
        %v6075 = vpack.c.bf16 %v6033, %v6032
        %v6076 = vpack.c.bf16 %v6035, %v6034
        %v6077 = vpack.c.bf16 %v6037, %v6036
        %v6078 = vpack.c.bf16 %v6039, %v6038
        %v6079 = vpack.c.bf16 %v6041, %v6040
        %v6080 = vpack.c.bf16 %v6043, %v6042
        %v6081 = vpack.c.bf16 %v6045, %v6044
        %v6082 = vpack.c.bf16 %v6047, %v6046
        %v6083 = vpack.c.bf16 %v6049, %v6048
        %v6084 = vpack.c.bf16 %v6051, %v6050
        %v6085 = vpack.c.bf16 %v6053, %v6052
        %v6086 = vld [vmem:[%s4] sm:$0xf]
        %v6087 = vld [vmem:[%s4 + $0x4] sm:$0xf]
        %v6088 = vld [vmem:[%s4 + $0x8] sm:$0xf]
        %v6089 = vld [vmem:[%s4 + $0xc] sm:$0xf]
        %v6090 = vld [vmem:[%s4 + $0x10] sm:$0xf]
        %v6091 = vld [vmem:[%s4 + $0x14] sm:$0xf]
        %v6092 = vld [vmem:[%s4 + $0x18] sm:$0xf]
        %v6093 = vld [vmem:[%s4 + $0x1c] sm:$0xf]
        %v6102 = vunpack.c.l.b16 %v6086
        %v6103 = vunpack.c.l.b16 %v6087
        %v6104 = vunpack.c.l.b16 %v6088
        %v6105 = vunpack.c.l.b16 %v6089
        %v6106 = vunpack.c.l.b16 %v6090
        %v6107 = vunpack.c.l.b16 %v6091
        %v6108 = vunpack.c.l.b16 %v6092
        %v6109 = vunpack.c.l.b16 %v6093
        %v6110 = vpack.c.b16 %v6103, %v6102
        %v6111 = vpack.c.b16 %v6105, %v6104
        %v6112 = vpack.c.b16 %v6107, %v6106
        %v6113 = vpack.c.b16 %v6109, %v6108
        %v6115 = vsel %vm941, %v6110, 0
        %v6118 = vsel %vm941, %v6111, 0
        %v6121 = vsel %vm941, %v6112, 0
        %v6124 = vsel %vm941, %v6113, 0
        %v6127 = vsel %vm941, %v6054, 0
        %v6130 = vsel %vm941, %v6055, 0
        %v6133 = vsel %vm941, %v6056, 0
        %v6136 = vsel %vm941, %v6057, 0
        %v6139 = vsel %vm941, %v6058, 0
        %v6142 = vsel %vm941, %v6059, 0
        %v6145 = vsel %vm941, %v6060, 0
        %v6148 = vsel %vm941, %v6061, 0
        %v6151 = vsel %vm941, %v6062, 0
        %v6154 = vsel %vm941, %v6063, 0
        %v6157 = vsel %vm941, %v6064, 0
        %v6160 = vsel %vm941, %v6065, 0
        %v6163 = vsel %vm941, %v6066, 0
        %v6166 = vsel %vm941, %v6067, 0
        %v6169 = vsel %vm941, %v6068, 0
        %v6172 = vsel %vm941, %v6069, 0
        %v6175 = vsel %vm941, %v6070, 0
        %v6178 = vsel %vm941, %v6071, 0
        %v6181 = vsel %vm941, %v6072, 0
        %v6184 = vsel %vm941, %v6073, 0
        %v6187 = vsel %vm941, %v6074, 0
        %v6190 = vsel %vm941, %v6075, 0
        %v6193 = vsel %vm941, %v6076, 0
        %v6196 = vsel %vm941, %v6077, 0
        %v6199 = vsel %vm941, %v6078, 0
        %v6202 = vsel %vm941, %v6079, 0
        %v6205 = vsel %vm941, %v6080, 0
        %v6208 = vsel %vm941, %v6081, 0
        %v6211 = vsel %vm941, %v6082, 0
        %v6214 = vsel %vm941, %v6083, 0
        %v6217 = vsel %vm941, %v6084, 0
        %v6220 = vsel %vm941, %v6085, 0
        %6222 = vmatprep.subr.bf16.mxu0 0
        %6223 = vmatpush1.bf16.xpose.msra.mxu0 %v6148
        %6224 = vmatprep.subr.bf16.mxu0 0
        %6225 = vmatpush1.bf16.xpose.msra.mxu0 %v6145
        %6226 = vmatprep.subr.bf16.mxu0 0
        %6227 = vmatpush1.bf16.xpose.msra.mxu0 %v6142
        %6228 = vmatprep.subr.bf16.mxu0 0
        %6229 = vmatpush1.bf16.xpose.msra.mxu0 %v6139
        %6230 = vmatprep.subr.bf16.mxu0 0
        %6231 = vmatpush1.bf16.xpose.msra.mxu0 %v6136
        %6232 = vmatprep.subr.bf16.mxu0 0
        %6233 = vmatpush1.bf16.xpose.msra.mxu0 %v6133
        %6234 = vmatprep.subr.bf16.mxu0 0
        %6235 = vmatpush1.bf16.xpose.msra.mxu0 %v6130
        %6236 = vmatprep.subr.bf16.mxu0 0
        %6237 = vmatpush1.bf16.xpose.msra.mxu0 %v6127
        %6238 = vmatprep.subr.bf16.mxu0 0
        %6239 = vmatpush2.bf16.xpose.msra.mxu0 %v6172
        %6240 = vmatprep.subr.bf16.mxu0 0
        %6241 = vmatpush2.bf16.xpose.msra.mxu0 %v6169
        %6242 = vmatprep.subr.bf16.mxu0 0
        %6243 = vmatpush2.bf16.xpose.msra.mxu0 %v6166
        %6244 = vmatprep.subr.bf16.mxu0 0
        %6245 = vmatpush2.bf16.xpose.msra.mxu0 %v6163
        %6246 = vmatprep.subr.bf16.mxu0 0
        %6247 = vmatpush2.bf16.xpose.msra.mxu0 %v6160
        %6248 = vmatprep.subr.bf16.mxu0 0
        %6249 = vmatpush2.bf16.xpose.msra.mxu0 %v6157
        %6250 = vmatprep.subr.bf16.mxu0 0
        %6251 = vmatpush2.bf16.xpose.msra.mxu0 %v6154
        %6252 = vmatprep.subr.bf16.mxu0 0
        %6253 = vmatpush2.bf16.xpose.msra.mxu0 %v6151
        %6254 = vmatprep.mubr.bf16.mxu0 0
        %6255 = vmatmul.mubr.bf16.gmra.mxu0 %v6115
        %v6256 = vpop.f32.mrf.mxu0
        %v6257 = vadd.f32 0.0, %v6256
        %v6258 = vpop.f32.mrf.mxu0
        %v6259 = vadd.f32 0.0, %v6258
        %v6260 = vpop.f32.mrf.mxu0
        %v6261 = vadd.f32 0.0, %v6260
        %v6262 = vpop.f32.mrf.mxu0
        %v6263 = vadd.f32 0.0, %v6262
        %6264 = vmatprep.mubr.bf16.mxu0 0
        %6265 = vmatmul.mubr.bf16.gmra.mxu0 %v6118
        %v6266 = vpop.f32.mrf.mxu0
        %v6267 = vadd.f32 0.0, %v6266
        %v6268 = vpop.f32.mrf.mxu0
        %v6269 = vadd.f32 0.0, %v6268
        %v6270 = vpop.f32.mrf.mxu0
        %v6271 = vadd.f32 0.0, %v6270
        %v6272 = vpop.f32.mrf.mxu0
        %v6273 = vadd.f32 0.0, %v6272
        %6274 = vmatprep.mubr.bf16.mxu0 0
        %6275 = vmatmul.mubr.bf16.gmra.mxu0 %v6121
        %v6276 = vpop.f32.mrf.mxu0
        %v6277 = vadd.f32 0.0, %v6276
        %v6278 = vpop.f32.mrf.mxu0
        %v6279 = vadd.f32 0.0, %v6278
        %v6280 = vpop.f32.mrf.mxu0
        %v6281 = vadd.f32 0.0, %v6280
        %v6282 = vpop.f32.mrf.mxu0
        %v6283 = vadd.f32 0.0, %v6282
        %6284 = vmatprep.mubr.bf16.mxu0 0
        %6285 = vmatmul.mubr.bf16.gmra.mxu0 %v6124
        %v6286 = vpop.f32.mrf.mxu0
        %v6287 = vadd.f32 0.0, %v6286
        %v6288 = vpop.f32.mrf.mxu0
        %v6289 = vadd.f32 0.0, %v6288
        %v6290 = vpop.f32.mrf.mxu0
        %v6291 = vadd.f32 0.0, %v6290
        %v6292 = vpop.f32.mrf.mxu0
        %v6293 = vadd.f32 0.0, %v6292
        %6294 = vdwg.mxu0
        %6295 = vmatprep.subr.bf16.mxu0 0
        %6296 = vmatpush1.bf16.xpose.msra.mxu0 %v6196
        %6297 = vmatprep.subr.bf16.mxu0 0
        %6298 = vmatpush1.bf16.xpose.msra.mxu0 %v6193
        %6299 = vmatprep.subr.bf16.mxu0 0
        %6300 = vmatpush1.bf16.xpose.msra.mxu0 %v6190
        %6301 = vmatprep.subr.bf16.mxu0 0
        %6302 = vmatpush1.bf16.xpose.msra.mxu0 %v6187
        %6303 = vmatprep.subr.bf16.mxu0 0
        %6304 = vmatpush1.bf16.xpose.msra.mxu0 %v6184
        %6305 = vmatprep.subr.bf16.mxu0 0
        %6306 = vmatpush1.bf16.xpose.msra.mxu0 %v6181
        %6307 = vmatprep.subr.bf16.mxu0 0
        %6308 = vmatpush1.bf16.xpose.msra.mxu0 %v6178
        %6309 = vmatprep.subr.bf16.mxu0 0
        %6310 = vmatpush1.bf16.xpose.msra.mxu0 %v6175
        %6311 = vmatprep.subr.bf16.mxu0 0
        %6312 = vmatpush2.bf16.xpose.msra.mxu0 %v6220
        %6313 = vmatprep.subr.bf16.mxu0 0
        %6314 = vmatpush2.bf16.xpose.msra.mxu0 %v6217
        %6315 = vmatprep.subr.bf16.mxu0 0
        %6316 = vmatpush2.bf16.xpose.msra.mxu0 %v6214
        %6317 = vmatprep.subr.bf16.mxu0 0
        %6318 = vmatpush2.bf16.xpose.msra.mxu0 %v6211
        %6319 = vmatprep.subr.bf16.mxu0 0
        %6320 = vmatpush2.bf16.xpose.msra.mxu0 %v6208
        %6321 = vmatprep.subr.bf16.mxu0 0
        %6322 = vmatpush2.bf16.xpose.msra.mxu0 %v6205
        %6323 = vmatprep.subr.bf16.mxu0 0
        %6324 = vmatpush2.bf16.xpose.msra.mxu0 %v6202
        %6325 = vmatprep.subr.bf16.mxu0 0
        %6326 = vmatpush2.bf16.xpose.msra.mxu0 %v6199
        %6327 = vmatprep.mubr.bf16.mxu0 0
        %6328 = vmatmul.mubr.bf16.gmra.mxu0 %v6115
        %v6329 = vpop.f32.mrf.mxu0
        %v6330 = vadd.f32 0.0, %v6329
        %v6331 = vpop.f32.mrf.mxu0
        %v6332 = vadd.f32 0.0, %v6331
        %v6333 = vpop.f32.mrf.mxu0
        %v6334 = vadd.f32 0.0, %v6333
        %v6335 = vpop.f32.mrf.mxu0
        %v6336 = vadd.f32 0.0, %v6335
        %6337 = vmatprep.mubr.bf16.mxu0 0
        %6338 = vmatmul.mubr.bf16.gmra.mxu0 %v6118
        %v6339 = vpop.f32.mrf.mxu0
        %v6340 = vadd.f32 0.0, %v6339
        %v6341 = vpop.f32.mrf.mxu0
        %v6342 = vadd.f32 0.0, %v6341
        %v6343 = vpop.f32.mrf.mxu0
        %v6344 = vadd.f32 0.0, %v6343
        %v6345 = vpop.f32.mrf.mxu0
        %v6346 = vadd.f32 0.0, %v6345
        %6347 = vmatprep.mubr.bf16.mxu0 0
        %6348 = vmatmul.mubr.bf16.gmra.mxu0 %v6121
        %v6349 = vpop.f32.mrf.mxu0
        %v6350 = vadd.f32 0.0, %v6349
        %v6351 = vpop.f32.mrf.mxu0
        %v6352 = vadd.f32 0.0, %v6351
        %v6353 = vpop.f32.mrf.mxu0
        %v6354 = vadd.f32 0.0, %v6353
        %v6355 = vpop.f32.mrf.mxu0
        %v6356 = vadd.f32 0.0, %v6355
        %6357 = vmatprep.mubr.bf16.mxu0 0
        %6358 = vmatmul.mubr.bf16.gmra.mxu0 %v6124
        %v6359 = vpop.f32.mrf.mxu0
        %v6360 = vadd.f32 0.0, %v6359
        %v6361 = vpop.f32.mrf.mxu0
        %v6362 = vadd.f32 0.0, %v6361
        %v6363 = vpop.f32.mrf.mxu0
        %v6364 = vadd.f32 0.0, %v6363
        %v6365 = vpop.f32.mrf.mxu0
        %v6366 = vadd.f32 0.0, %v6365
        %6367 = vdwg.mxu0
        %v6368 = vld [vmem:[%s394] sm:$0xff]
        %v6369 = vld [vmem:[%s394 + $0x8] sm:$0xff]
        %v6370 = vld [vmem:[%s394 + $0x10] sm:$0xff]
        %v6371 = vld [vmem:[%s394 + $0x18] sm:$0xff]
        %v6372 = vld [vmem:[%s394 + $0x20] sm:$0xff]
        %v6373 = vld [vmem:[%s394 + $0x28] sm:$0xff]
        %v6374 = vld [vmem:[%s394 + $0x30] sm:$0xff]
        %v6375 = vld [vmem:[%s394 + $0x38] sm:$0xff]
        %v6376 = vld [vmem:[%s394 + $0x40] sm:$0xff]
        %v6377 = vld [vmem:[%s394 + $0x48] sm:$0xff]
        %v6378 = vld [vmem:[%s394 + $0x50] sm:$0xff]
        %v6379 = vld [vmem:[%s394 + $0x58] sm:$0xff]
        %v6380 = vld [vmem:[%s394 + $0x60] sm:$0xff]
        %v6381 = vld [vmem:[%s394 + $0x68] sm:$0xff]
        %v6382 = vld [vmem:[%s394 + $0x70] sm:$0xff]
        %v6383 = vld [vmem:[%s394 + $0x78] sm:$0xff]
        %v6384 = vld [vmem:[%s394 + $0x80] sm:$0xff]
        %v6385 = vld [vmem:[%s394 + $0x88] sm:$0xff]
        %v6386 = vld [vmem:[%s394 + $0x90] sm:$0xff]
        %v6387 = vld [vmem:[%s394 + $0x98] sm:$0xff]
        %v6388 = vld [vmem:[%s394 + $0xa0] sm:$0xff]
        %v6389 = vld [vmem:[%s394 + $0xa8] sm:$0xff]
        %v6390 = vld [vmem:[%s394 + $0xb0] sm:$0xff]
        %v6391 = vld [vmem:[%s394 + $0xb8] sm:$0xff]
        %v6392 = vld [vmem:[%s394 + $0xc0] sm:$0xff]
        %v6393 = vld [vmem:[%s394 + $0xc8] sm:$0xff]
        %v6394 = vld [vmem:[%s394 + $0xd0] sm:$0xff]
        %v6395 = vld [vmem:[%s394 + $0xd8] sm:$0xff]
        %v6396 = vld [vmem:[%s394 + $0xe0] sm:$0xff]
        %v6397 = vld [vmem:[%s394 + $0xe8] sm:$0xff]
        %v6398 = vld [vmem:[%s394 + $0xf0] sm:$0xff]
        %v6399 = vld [vmem:[%s394 + $0xf8] sm:$0xff]
        %v6400 = vadd.f32 %v6368, %v6257
        %v6401 = vadd.f32 %v6369, %v6259
        %v6402 = vadd.f32 %v6370, %v6330
        %v6403 = vadd.f32 %v6371, %v6332
        %v6404 = vadd.f32 %v6372, %v6261
        %v6405 = vadd.f32 %v6373, %v6263
        %v6406 = vadd.f32 %v6374, %v6334
        %v6407 = vadd.f32 %v6375, %v6336
        %v6408 = vadd.f32 %v6376, %v6267
        %v6409 = vadd.f32 %v6377, %v6269
        %v6410 = vadd.f32 %v6378, %v6340
        %v6411 = vadd.f32 %v6379, %v6342
        %v6412 = vadd.f32 %v6380, %v6271
        %v6413 = vadd.f32 %v6381, %v6273
        %v6414 = vadd.f32 %v6382, %v6344
        %v6415 = vadd.f32 %v6383, %v6346
        %v6416 = vadd.f32 %v6384, %v6277
        %v6417 = vadd.f32 %v6385, %v6279
        %v6418 = vadd.f32 %v6386, %v6350
        %v6419 = vadd.f32 %v6387, %v6352
        %v6420 = vadd.f32 %v6388, %v6281
        %v6421 = vadd.f32 %v6389, %v6283
        %v6422 = vadd.f32 %v6390, %v6354
        %v6423 = vadd.f32 %v6391, %v6356
        %v6424 = vadd.f32 %v6392, %v6287
        %v6425 = vadd.f32 %v6393, %v6289
        %v6426 = vadd.f32 %v6394, %v6360
        %v6427 = vadd.f32 %v6395, %v6362
        %v6428 = vadd.f32 %v6396, %v6291
        %v6429 = vadd.f32 %v6397, %v6293
        %v6430 = vadd.f32 %v6398, %v6364
        %v6431 = vadd.f32 %v6399, %v6366
        %v6432 = vld [vmem:[%s5] sm:$0xff]
        %v6433 = vld [vmem:[%s5 + $0x8] sm:$0xff]
        %v6434 = vld [vmem:[%s5 + $0x10] sm:$0xff]
        %v6435 = vld [vmem:[%s5 + $0x18] sm:$0xff]
        %v6436 = vld [vmem:[%s5 + $0x20] sm:$0xff]
        %v6437 = vld [vmem:[%s5 + $0x28] sm:$0xff]
        %v6438 = vld [vmem:[%s5 + $0x30] sm:$0xff]
        %v6439 = vld [vmem:[%s5 + $0x38] sm:$0xff]
        %6441 = vset.pattern.permute.xlu0 0
        %6442 = vperm.xlu0 %6441, %v6432
        %v6443 = vpop.permute.xlu0 %6442
        %6446 = vset.pattern.permute.xlu0 0
        %6447 = vperm.xlu0 %6446, %v6433
        %v6448 = vpop.permute.xlu0 %6447
        %6451 = vset.pattern.permute.xlu0 0
        %6452 = vperm.xlu0 %6451, %v6434
        %v6453 = vpop.permute.xlu0 %6452
        %6456 = vset.pattern.permute.xlu0 0
        %6457 = vperm.xlu0 %6456, %v6435
        %v6458 = vpop.permute.xlu0 %6457
        %6461 = vset.pattern.permute.xlu0 0
        %6462 = vperm.xlu0 %6461, %v6436
        %v6463 = vpop.permute.xlu0 %6462
        %6466 = vset.pattern.permute.xlu0 0
        %6467 = vperm.xlu0 %6466, %v6437
        %v6468 = vpop.permute.xlu0 %6467
        %6471 = vset.pattern.permute.xlu0 0
        %6472 = vperm.xlu0 %6471, %v6438
        %v6473 = vpop.permute.xlu0 %6472
        %6476 = vset.pattern.permute.xlu0 0
        %6477 = vperm.xlu0 %6476, %v6439
        %v6478 = vpop.permute.xlu0 %6477
        %v6480 = vadd.f32 %v6400, %v6443
        %v6481 = vadd.f32 %v6401, %v6443
        %v6482 = vadd.f32 %v6402, %v6443
        %v6483 = vadd.f32 %v6403, %v6443
        %v6484 = vadd.f32 %v6404, %v6448
        %v6485 = vadd.f32 %v6405, %v6448
        %v6486 = vadd.f32 %v6406, %v6448
        %v6487 = vadd.f32 %v6407, %v6448
        %v6488 = vadd.f32 %v6408, %v6453
        %v6489 = vadd.f32 %v6409, %v6453
        %v6490 = vadd.f32 %v6410, %v6453
        %v6491 = vadd.f32 %v6411, %v6453
        %v6492 = vadd.f32 %v6412, %v6458
        %v6493 = vadd.f32 %v6413, %v6458
        %v6494 = vadd.f32 %v6414, %v6458
        %v6495 = vadd.f32 %v6415, %v6458
        %v6496 = vadd.f32 %v6416, %v6463
        %v6497 = vadd.f32 %v6417, %v6463
        %v6498 = vadd.f32 %v6418, %v6463
        %v6499 = vadd.f32 %v6419, %v6463
        %v6500 = vadd.f32 %v6420, %v6468
        %v6501 = vadd.f32 %v6421, %v6468
        %v6502 = vadd.f32 %v6422, %v6468
        %v6503 = vadd.f32 %v6423, %v6468
        %v6504 = vadd.f32 %v6424, %v6473
        %v6505 = vadd.f32 %v6425, %v6473
        %v6506 = vadd.f32 %v6426, %v6473
        %v6507 = vadd.f32 %v6427, %v6473
        %v6508 = vadd.f32 %v6428, %v6478
        %v6509 = vadd.f32 %v6429, %v6478
        %v6510 = vadd.f32 %v6430, %v6478
        %v6511 = vadd.f32 %v6431, %v6478
        %6512 = vst [vmem:[%s404] sm:$0xff] %v6480
        %6513 = vst [vmem:[%s404 + $0x8] sm:$0xff] %v6481
        %6514 = vst [vmem:[%s404 + $0x10] sm:$0xff] %v6482
        %6515 = vst [vmem:[%s404 + $0x18] sm:$0xff] %v6483
        %6516 = vst [vmem:[%s404 + $0x20] sm:$0xff] %v6484
        %6517 = vst [vmem:[%s404 + $0x28] sm:$0xff] %v6485
        %6518 = vst [vmem:[%s404 + $0x30] sm:$0xff] %v6486
        %6519 = vst [vmem:[%s404 + $0x38] sm:$0xff] %v6487
        %6520 = vst [vmem:[%s404 + $0x40] sm:$0xff] %v6488
        %6521 = vst [vmem:[%s404 + $0x48] sm:$0xff] %v6489
        %6522 = vst [vmem:[%s404 + $0x50] sm:$0xff] %v6490
        %6523 = vst [vmem:[%s404 + $0x58] sm:$0xff] %v6491
        %6524 = vst [vmem:[%s404 + $0x60] sm:$0xff] %v6492
        %6525 = vst [vmem:[%s404 + $0x68] sm:$0xff] %v6493
        %6526 = vst [vmem:[%s404 + $0x70] sm:$0xff] %v6494
        %6527 = vst [vmem:[%s404 + $0x78] sm:$0xff] %v6495
        %6528 = vst [vmem:[%s404 + $0x80] sm:$0xff] %v6496
        %6529 = vst [vmem:[%s404 + $0x88] sm:$0xff] %v6497
        %6530 = vst [vmem:[%s404 + $0x90] sm:$0xff] %v6498
        %6531 = vst [vmem:[%s404 + $0x98] sm:$0xff] %v6499
        %6532 = vst [vmem:[%s404 + $0xa0] sm:$0xff] %v6500
        %6533 = vst [vmem:[%s404 + $0xa8] sm:$0xff] %v6501
        %6534 = vst [vmem:[%s404 + $0xb0] sm:$0xff] %v6502
        %6535 = vst [vmem:[%s404 + $0xb8] sm:$0xff] %v6503
        %6536 = vst [vmem:[%s404 + $0xc0] sm:$0xff] %v6504
        %6537 = vst [vmem:[%s404 + $0xc8] sm:$0xff] %v6505
        %6538 = vst [vmem:[%s404 + $0xd0] sm:$0xff] %v6506
        %6539 = vst [vmem:[%s404 + $0xd8] sm:$0xff] %v6507
        %6540 = vst [vmem:[%s404 + $0xe0] sm:$0xff] %v6508
        %6541 = vst [vmem:[%s404 + $0xe8] sm:$0xff] %v6509
        %6542 = vst [vmem:[%s404 + $0xf0] sm:$0xff] %v6510
        %6543 = vst [vmem:[%s404 + $0xf8] sm:$0xff] %v6511
      $region52: #{attn_block_pallas.5} parent=43 // pred_fallthru
        _
      %s6544 = smul.u32 4, %s23
      %p6545 = scmp.lt.s32.totalorder %s22, 1
      %s6546 = scalar_select %p6545, %s22, 1
      %p6547 = scmp.lt.s32.totalorder %s6544, 3
      %s6548 = scalar_select %p6547, %s6544, 3
      %s6549 = smul.addr %s6546, 32
      %s6550 = sadd.s32 %s6548, %s6549
      %s6551 = smul.addr %s6550, 8
      %s6552 = scalar_lea.vmem %s6, %s6551
      // Predicated region
      $region53: #{attn_block_pallas.5} parent=43 // pred_check
        %p6553 = pneg %p210
      $region54: #{attn_block_pallas.5} parent=43 // pred_check_branch
        %6555 = sbr.rel (%p6553) target = $region56
      $region55: #{attn_block_pallas.5} parent=43 // pred_region
        %s6556 = smul.u32 4, %s23
      $region56: #{attn_block_pallas.5} parent=43 // pred_fallthru
        _
    $region44: #{attn_block_pallas.5} parent=5 // pred_fallthru
      _
    %p6557 = scmp.le.s32.totalorder 2, %s12
    // Predicated region
    $region57: #{attn_block_pallas.5} parent=5 // pred_check
      %p6558 = pneg %p6557
    $region58: #{attn_block_pallas.5} parent=5 // pred_check_branch
      %6560 = sbr.rel (%p6558) target = $region60
    $region59: #{attn_block_pallas.5} parent=5 // pred_region
      %s6561 = ssub.s32 %s12, 2
      // Predicated region
      $region61: #{attn_block_pallas.5} parent=59 // pred_check
        %p6562 = pneg %p216
      $region62: #{attn_block_pallas.5} parent=59 // pred_check_branch
        %6564 = sbr.rel (%p6562) target = $region64
      $region63: #{attn_block_pallas.5} parent=59 // pred_region
        %s6565 = smul.u32 4, %s26
        %p6566 = scmp.lt.s32.totalorder %s25, 1
        %s6567 = scalar_select %p6566, %s25, 1
        %p6568 = scmp.lt.s32.totalorder %s6565, 3
        %s6569 = scalar_select %p6568, %s6565, 3
        %s6570 = smul.addr %s6567, 32
        %s6571 = sadd.s32 %s6569, %s6570
        %s6572 = smul.addr %s6571, 8
        %s6573 = scalar_lea.vmem %s6, %s6572
      $region64: #{attn_block_pallas.5} parent=59 // pred_fallthru
        _
    $region60: #{attn_block_pallas.5} parent=5 // pred_fallthru
      _
  $region6: #{attn_block_pallas.5} parent=0 // loop_footer
    %s16 = sadd.s32 1, %s12
  $region7: #{attn_block_pallas.5} parent=0 // loop_footer_branch
    %11 = sbr.rel target = $region3
  $region8: #{attn_block_pallas.5} parent=0 // loop_exit
    _

</llo_original>
